<compile_context>
chip_gen: v7x
topology: tpu7x:2x2x1
jax: 0.10.0
libtpu: 0.0.40
codegen_flags: <defaults>
</compile_context>

<pallas_src>
import functools
import math

import jax
import jax.numpy as jnp
from jax import lax
from jax.experimental import pallas as pl
from jax.experimental.pallas import tpu as pltpu

LN_EPS = 1e-5
INV_SQRT2 = 0.7071067811865476
LANE = 128
MAX_LANES = 2048          # upper bound for the packed lane width per grid step


def _token_mixing_kernel(x_ref, gamma_ref, beta_ref, oh_ref, oht_ref,
                         w1_ref, b1_ref, w2_ref, b2_ref, o_ref,
                         *, segments, inv_c, high_precision_stats):
    # x_ref block: (S, L) with L = bt*C; column k holds batch k//C, channel k%C.
    x = x_ref[...].astype(jnp.float32)                          # (S, L)

    # --- LayerNorm over C (segment-wise along the lane dim) -----------------
    if segments == 1:
        mean = jnp.mean(x, axis=-1, keepdims=True)
        d = x - mean
        var = jnp.mean(d * d, axis=-1, keepdims=True)
    else:
        # Factorized segment stats: two thin matmuls per statistic
        # ((S,L)@(L,bt) then (S,bt)@(bt,L)) instead of an (L,L) block-diagonal
        # fp32 matmul; one-hot entries are exact, stats stay effectively fp32.
        hp = lax.Precision.HIGHEST if high_precision_stats else None
        s1 = jnp.dot(x, oh_ref[...], preferred_element_type=jnp.float32,
                     precision=hp)                              # (S, bt) sums
        mean = jnp.dot(s1, oht_ref[...], preferred_element_type=jnp.float32,
                       precision=hp) * inv_c                    # broadcast (S, L)
        d = x - mean
        s2 = jnp.dot(d * d, oh_ref[...], preferred_element_type=jnp.float32,
                     precision=hp)
        var = jnp.dot(s2, oht_ref[...], preferred_element_type=jnp.float32,
                      precision=hp) * inv_c
    xn = d * lax.rsqrt(var + LN_EPS) * gamma_ref[...] + beta_ref[...]

    # --- fc1 (token mixing): hT = w1 @ xn + b1 -> (H, L) --------------------
    cd = w1_ref.dtype                                           # bf16 (or f32)
    h = jnp.dot(w1_ref[...], xn.astype(cd),
                preferred_element_type=jnp.float32) + b1_ref[...]
    # Exact (erf) GELU, matching PyTorch nn.GELU() default.  (tanh approx would
    # move to the EUP slot; only worth it if the VALU slot ever binds.)
    h = 0.5 * h * (1.0 + lax.erf(h * INV_SQRT2))

    # --- fc2: yT = w2 @ gelu(hT) + b2 -> (S, L) ------------------------------
    y = jnp.dot(w2_ref[...], h.astype(cd),
                preferred_element_type=jnp.float32) + b2_ref[...]

    # --- residual add + lane-dense store -------------------------------------
    o_ref[...] = (y + x).astype(o_ref.dtype)


def _vmem_physical_bytes():
    try:
        return int(pltpu.get_tpu_info().vmem_capacity_bytes)
    except Exception:
        return 64 * 1024 * 1024        # conservative fallback (v7x per-TC VMEM)


def _bw_eff(lane_width):
    """Measured Pallas HBM-BW fraction vs. tile lane width (mem-bound regime)."""
    if lane_width >= 1024:
        return 0.86
    if lane_width >= 512:
        return 0.85
    if lane_width >= 256:
        return 0.63
    if lane_width >= 128:
        return 0.29
    return 0.15


def _pick_block_batch(B, C, S, H, x_itemsize, w_itemsize, vmem_budget):
    """Batch elements packed per grid step; lane width L = bt*C is lane-dense."""
    bt_min = LANE // math.gcd(C, LANE)             # smallest lane-dense bt
    # VMEM accounting: resident weights (single-buffered) + per-lane cost of the
    # double-buffered in/out slabs and the fp32 temporaries (xn/d, h, y).
    fixed = 2 * S * H * w_itemsize + (H + S) * 4 + (1 << 20)
    per_lane = 2 * 2 * S * x_itemsize + (3 * S + H) * 4
    max_l = max(bt_min * C,
                min(MAX_LANES, (vmem_budget - fixed) // max(per_lane, 1)))
    k_batch = -(-B // bt_min)                      # one block spans whole batch
    k_vmem = max(1, max_l // (bt_min * C))
    best_bt, best_score = bt_min, -1.0
    for k in range(1, max(1, min(k_batch, k_vmem)) + 1):
        bt = k * bt_min
        L = bt * C
        grid = -(-B // bt)
        waste = (grid * bt - B) / (grid * bt)      # padded (thrown-away) columns
        score = (_bw_eff(L) * (1.0 - waste)
                 * (1.0 if grid >= 2 else 0.6)     # feed both v7x TensorCores
                 * (1.02 if L % 256 == 0 else 1.0))  # fill 256-wide MXU (v6e/v7x)
        if score > best_score:
            best_bt, best_score = bt, score
    # If lane-dense padding would be mostly garbage (tiny awkward shapes),
    # fall back to a single full-width block instead.
    if (-(-B // best_bt)) * best_bt > 4 * B:
        best_bt = B
    return best_bt


def token_mixing_mlp(x, gamma, beta, w1, b1, w2, b2,
                     compute_dtype=jnp.bfloat16, block_batch=None,
                     stream_dtype=None):
    """x: (B, S, C). Returns (B, S, C) = TokenMixingMLP(x) in eval mode."""
    B, S, C = x.shape
    H = w1.shape[0]
    assert w1.shape == (H, S) and w2.shape == (S, H)
    assert gamma.shape == (C,) and beta.shape == (C,)
    assert b1.shape == (H,) and b2.shape == (S,)

    out_dtype = x.dtype
    if stream_dtype is not None:          # optional bf16 streaming of x / out
        x = x.astype(stream_dtype)

    w_itemsize = jnp.dtype(compute_dtype).itemsize
    x_itemsize = jnp.dtype(x.dtype).itemsize
    vmem_budget = int(_vmem_physical_bytes() * 0.80)   # ~102 MiB v5e/v6e, ~51 MiB v7x

    if block_batch is None:
        bt = _pick_block_batch(B, C, S, H, x_itemsize, w_itemsize, vmem_budget)
    else:
        bt = max(1, int(block_batch))
        if (bt * C) % LANE != 0 and bt < B:
            bt_min = LANE // math.gcd(C, LANE)
            bt = -(-bt // bt_min) * bt_min           # round up to lane-dense

    Bp = -(-B // bt) * bt                            # pad batch to multiple of bt
    if Bp != B:
        x = jnp.concatenate([x, jnp.zeros((Bp - B, S, C), x.dtype)], axis=0)

    # Pack batch into the lane dim (wrapper-side layout plumbing, outside the
    # kernel): (Bp, S, C) -> (S, Bp*C).
    x_p = jnp.transpose(x, (1, 0, 2)).reshape(S, Bp * C)

    L = bt * C                                       # lane width per grid step
    grid = (Bp // bt,)
    segments = bt

    if segments > 1:
        seg = jnp.arange(L, dtype=jnp.int32) // C
        oh = (seg[:, None] == jnp.arange(segments, dtype=jnp.int32)[None, :]
              ).astype(jnp.float32)                  # (L, bt) one-hot
        oht = oh.T                                   # (bt, L)
    else:
        oh = jnp.zeros((8, LANE), jnp.float32)       # unused dummies
        oht = jnp.zeros((8, LANE), jnp.float32)

    gamma_t = jnp.tile(gamma.astype(jnp.float32), bt).reshape(1, L)
    beta_t = jnp.tile(beta.astype(jnp.float32), bt).reshape(1, L)
    w1c = w1.astype(compute_dtype)                   # (H, S)
    w2c = w2.astype(compute_dtype)                   # (S, H)
    b1c = b1.astype(jnp.float32).reshape(H, 1)       # column bias
    b2c = b2.astype(jnp.float32).reshape(S, 1)       # column bias

    # VMEM need: resident params (single-buffered) + double-buffered in/out
    # slabs + fp32 temporaries (xn/d, h, y); clamped to the generation budget.
    need = (2 * S * H * w_itemsize
            + (H + S + 2 * L) * 4 + 2 * oh.size * 4
            + 2 * 2 * S * L * x_itemsize
            + (3 * S + H) * L * 4)
    vmem_limit = int(min(vmem_budget, max(32 * 1024 * 1024, int(1.5 * need))))

    out_shape = jax.ShapeDtypeStruct((S, Bp * C), x.dtype)

    def run(single_buffer_invariants, high_precision_stats):
        kernel = functools.partial(
            _token_mixing_kernel, segments=segments, inv_c=1.0 / C,
            high_precision_stats=high_precision_stats)

        def inv_spec(shape):
            idx = lambda i: (0,) * len(shape)
            if single_buffer_invariants:
                # Grid-invariant operands: single-buffer to halve their VMEM
                # footprint (matters most on v7x's 64 MiB VMEM).
                return pl.BlockSpec(shape, idx, pipeline_mode=pl.Buffered(1))
            return pl.BlockSpec(shape, idx)

        return pl.pallas_call(
            kernel,
            out_shape=out_shape,
            grid_spec=pltpu.PrefetchScalarGridSpec(
                num_scalar_prefetch=0,
                grid=grid,
                in_specs=[
                    pl.BlockSpec((S, L), lambda i: (0, i)),   # x (packed, streamed)
                    inv_spec(gamma_t.shape),                  # gamma (tiled)
                    inv_spec(beta_t.shape),                   # beta  (tiled)
                    inv_spec(oh.shape),                       # segment one-hot
                    inv_spec(oht.shape),                      # its transpose
                    inv_spec((H, S)),                         # w1
                    inv_spec((H, 1)),                         # b1
                    inv_spec((S, H)),                         # w2
                    inv_spec((S, 1)),                         # b2
                ],
                out_specs=pl.BlockSpec((S, L), lambda i: (0, i)),
            ),
            compiler_params=pltpu.CompilerParams(
                dimension_semantics=("parallel",),
                vmem_limit_bytes=vmem_limit),
        )(x_p, gamma_t, beta_t, oh, oht, w1c, b1c, w2c, b2c)

    # Robustness ladder: prefer single-buffered invariants + HIGHEST-precision
    # stats; fall back gracefully if the installed Pallas rejects either.
    last_err = None
    out_p = None
    for single_buf, hi_prec in ((True, True), (False, True), (False, False)):
        try:
            out_p = run(single_buf, hi_prec)
            break
        except Exception as e:                       # noqa: BLE001
            last_err = e
    if out_p is None:
        raise last_err

    # Unpack: (S, Bp*C) -> (Bp, S, C), drop batch padding.
    out = out_p.reshape(S, Bp, C).transpose(1, 0, 2)[:B]
    return out.astype(out_dtype)


def token_mixing_mlp_ref(x, gamma, beta, w1, b1, w2, b2):
    """Pure-JAX fp32 reference (mirrors the PyTorch forward in eval mode)."""
    identity = x
    mean = jnp.mean(x, axis=-1, keepdims=True)
    var = jnp.mean((x - mean) ** 2, axis=-1, keepdims=True)
    xn = (x - mean) / jnp.sqrt(var + LN_EPS) * gamma + beta
    xt = jnp.swapaxes(xn, 1, 2)                                # (B, C, S)
    h = xt @ w1.T + b1
    h = 0.5 * h * (1.0 + lax.erf(h * INV_SQRT2))
    y = h @ w2.T + b2
    return jnp.swapaxes(y, 1, 2) + identity


if __name__ == "__main__":
    def run_case(B, S, C, H, key):
        kx, kg, kb, kw1, kb1, kw2, kb2 = jax.random.split(key, 7)
        x = jax.random.normal(kx, (B, S, C), dtype=jnp.float32)
        gamma = 1.0 + 0.1 * jax.random.normal(kg, (C,), dtype=jnp.float32)
        beta = 0.1 * jax.random.normal(kb, (C,), dtype=jnp.float32)
        w1 = 0.1 * jax.random.normal(kw1, (H, S), dtype=jnp.float32)  # fc1: S->H
        b1 = 0.1 * jax.random.normal(kb1, (H,), dtype=jnp.float32)
        w2 = 0.1 * jax.random.normal(kw2, (S, H), dtype=jnp.float32)  # fc2: H->S
        b2 = 0.1 * jax.random.normal(kb2, (S,), dtype=jnp.float32)

        ref = token_mixing_mlp_ref(x, gamma, beta, w1, b1, w2, b2)

        out_bf16 = jax.block_until_ready(
            token_mixing_mlp(x, gamma, beta, w1, b1, w2, b2))
        assert out_bf16.shape == (B, S, C)
        assert jnp.allclose(out_bf16, ref, atol=2e-2, rtol=2e-2), \
            f"bf16-compute mismatch (B={B},S={S},C={C},H={H})"

        out_f32 = jax.block_until_ready(
            token_mixing_mlp(x, gamma, beta, w1, b1, w2, b2,
                             compute_dtype=jnp.float32))
        assert out_f32.shape == (B, S, C)
        assert jnp.allclose(out_f32, ref, atol=1e-4, rtol=1e-4), \
            f"fp32-compute mismatch (B={B},S={S},C={C},H={H})"

    key = jax.random.PRNGKey(0)
    k1, k2, k3 = jax.random.split(key, 3)
    # Case 1: module-implied small shapes; C < 128 so batch is packed into the
    # lane dim (segments > 1 factorized-LN path; batch padded 2 -> 4).
    run_case(B=2, S=16, C=32, H=64, key=k1)
    # Case 2: odd batch with a padding remainder — padded columns must not leak
    # into real outputs (explicit guard requested by review).
    run_case(B=3, S=16, C=32, H=64, key=k2)
    # Case 3: wide channels (C=256) -> segments == 1 lane-reduction path with a
    # 2-step "parallel" grid (exercises the multi-step / both-TC layout).
    run_case(B=2, S=8, C=256, H=32, key=k3)

    print("KERNEL_OK")
</pallas_src>

<mosaic_0001>
module attributes {stable_mosaic.version = 11 : i64} {
  func.func @_token_mixing_kernel(%arg0: i32, %arg1: memref<16x128xf32, #tpu.memory_space<vmem>>, %arg2: memref<1x128xf32, #tpu.memory_space<vmem>>, %arg3: memref<1x128xf32, #tpu.memory_space<vmem>>, %arg4: memref<128x4xf32, #tpu.memory_space<vmem>>, %arg5: memref<4x128xf32, #tpu.memory_space<vmem>>, %arg6: memref<64x16xbf16, #tpu.memory_space<vmem>>, %arg7: memref<64x1xf32, #tpu.memory_space<vmem>>, %arg8: memref<16x64xbf16, #tpu.memory_space<vmem>>, %arg9: memref<16x1xf32, #tpu.memory_space<vmem>>, %arg10: memref<16x128xf32, #tpu.memory_space<vmem>>) attributes {dimension_semantics = [#tpu.dimension_semantics<parallel>], iteration_bounds = array<i64: 1>, scalar_prefetch = 0 : i64, scratch_operands = 0 : i64, tpu.core_type = #tpu.core_type<tc>, window_params = [{transform_indices = @transform_0, window_bounds = array<i64: 16, 128>}, {pipeline_mode = #tpu.pipeline_mode<synchronous>, transform_indices = @transform_1, window_bounds = array<i64: 1, 128>}, {pipeline_mode = #tpu.pipeline_mode<synchronous>, transform_indices = @transform_2, window_bounds = array<i64: 1, 128>}, {pipeline_mode = #tpu.pipeline_mode<synchronous>, transform_indices = @transform_3, window_bounds = array<i64: 128, 4>}, {pipeline_mode = #tpu.pipeline_mode<synchronous>, transform_indices = @transform_4, window_bounds = array<i64: 4, 128>}, {pipeline_mode = #tpu.pipeline_mode<synchronous>, transform_indices = @transform_5, window_bounds = array<i64: 64, 16>}, {pipeline_mode = #tpu.pipeline_mode<synchronous>, transform_indices = @transform_6, window_bounds = array<i64: 64, 1>}, {pipeline_mode = #tpu.pipeline_mode<synchronous>, transform_indices = @transform_7, window_bounds = array<i64: 16, 64>}, {pipeline_mode = #tpu.pipeline_mode<synchronous>, transform_indices = @transform_8, window_bounds = array<i64: 16, 1>}, {transform_indices = @transform_9, window_bounds = array<i64: 16, 128>}]} {
    %c0 = arith.constant 0 : index
    %c0_0 = arith.constant 0 : index
    %0 = vector.load %arg1[%c0, %c0_0] : memref<16x128xf32, #tpu.memory_space<vmem>>, vector<16x128xf32>
    %c0_1 = arith.constant 0 : index
    %c0_2 = arith.constant 0 : index
    %1 = vector.load %arg4[%c0_1, %c0_2] : memref<128x4xf32, #tpu.memory_space<vmem>>, vector<128x4xf32>
    %cst = arith.constant dense<0.000000e+00> : vector<16x4xf32>
    %2 = tpu.matmul %0, %1, %cst {dimension_numbers = #tpu.dot_dimension_numbers<[1], [0], [0], [1], [0, 0, 1, 1], [], []>, precision = #tpu.contract_precision<fp32>} : vector<16x128xf32>, vector<128x4xf32>, vector<16x4xf32> -> vector<16x4xf32>
    %c0_3 = arith.constant 0 : index
    %c0_4 = arith.constant 0 : index
    %3 = vector.load %arg5[%c0_3, %c0_4] : memref<4x128xf32, #tpu.memory_space<vmem>>, vector<4x128xf32>
    %cst_5 = arith.constant dense<0.000000e+00> : vector<16x128xf32>
    %4 = tpu.matmul %2, %3, %cst_5 {dimension_numbers = #tpu.dot_dimension_numbers<[1], [0], [0], [1], [0, 0, 1, 1], [], []>, precision = #tpu.contract_precision<fp32>} : vector<16x4xf32>, vector<4x128xf32>, vector<16x128xf32> -> vector<16x128xf32>
    %cst_6 = arith.constant 3.125000e-02 : f32
    %5 = vector.broadcast %cst_6 : f32 to vector<16x128xf32>
    %6 = arith.mulf %4, %5 : vector<16x128xf32>
    %7 = arith.subf %0, %6 : vector<16x128xf32>
    %8 = arith.mulf %7, %7 : vector<16x128xf32>
    %c0_7 = arith.constant 0 : index
    %c0_8 = arith.constant 0 : index
    %9 = vector.load %arg4[%c0_7, %c0_8] : memref<128x4xf32, #tpu.memory_space<vmem>>, vector<128x4xf32>
    %cst_9 = arith.constant dense<0.000000e+00> : vector<16x4xf32>
    %10 = tpu.matmul %8, %9, %cst_9 {dimension_numbers = #tpu.dot_dimension_numbers<[1], [0], [0], [1], [0, 0, 1, 1], [], []>, precision = #tpu.contract_precision<fp32>} : vector<16x128xf32>, vector<128x4xf32>, vector<16x4xf32> -> vector<16x4xf32>
    %c0_10 = arith.constant 0 : index
    %c0_11 = arith.constant 0 : index
    %11 = vector.load %arg5[%c0_10, %c0_11] : memref<4x128xf32, #tpu.memory_space<vmem>>, vector<4x128xf32>
    %cst_12 = arith.constant dense<0.000000e+00> : vector<16x128xf32>
    %12 = tpu.matmul %10, %11, %cst_12 {dimension_numbers = #tpu.dot_dimension_numbers<[1], [0], [0], [1], [0, 0, 1, 1], [], []>, precision = #tpu.contract_precision<fp32>} : vector<16x4xf32>, vector<4x128xf32>, vector<16x128xf32> -> vector<16x128xf32>
    %cst_13 = arith.constant 3.125000e-02 : f32
    %13 = vector.broadcast %cst_13 : f32 to vector<16x128xf32>
    %14 = arith.mulf %12, %13 : vector<16x128xf32>
    %cst_14 = arith.constant 9.99999974E-6 : f32
    %15 = vector.broadcast %cst_14 : f32 to vector<16x128xf32>
    %16 = arith.addf %14, %15 : vector<16x128xf32>
    %17 = math.rsqrt %16 : vector<16x128xf32>
    %18 = arith.mulf %7, %17 : vector<16x128xf32>
    %c0_15 = arith.constant 0 : index
    %c0_16 = arith.constant 0 : index
    %19 = vector.load %arg2[%c0_15, %c0_16] : memref<1x128xf32, #tpu.memory_space<vmem>>, vector<1x128xf32>
    %20 = vector.broadcast %19 : vector<1x128xf32> to vector<16x128xf32>
    %21 = arith.mulf %18, %20 : vector<16x128xf32>
    %c0_17 = arith.constant 0 : index
    %c0_18 = arith.constant 0 : index
    %22 = vector.load %arg3[%c0_17, %c0_18] : memref<1x128xf32, #tpu.memory_space<vmem>>, vector<1x128xf32>
    %23 = vector.broadcast %22 : vector<1x128xf32> to vector<16x128xf32>
    %24 = arith.addf %21, %23 : vector<16x128xf32>
    %c0_19 = arith.constant 0 : index
    %c0_20 = arith.constant 0 : index
    %25 = vector.load %arg6[%c0_19, %c0_20] : memref<64x16xbf16, #tpu.memory_space<vmem>>, vector<64x16xbf16>
    %26 = arith.truncf %24 : vector<16x128xf32> to vector<16x128xbf16>
    %cst_21 = arith.constant dense<0.000000e+00> : vector<64x128xf32>
    %27 = tpu.matmul %25, %26, %cst_21 {dimension_numbers = #tpu.dot_dimension_numbers<[1], [0], [0], [1], [0, 0, 1, 1], [], []>} : vector<64x16xbf16>, vector<16x128xbf16>, vector<64x128xf32> -> vector<64x128xf32>
    %c0_22 = arith.constant 0 : index
    %c0_23 = arith.constant 0 : index
    %28 = vector.load %arg7[%c0_22, %c0_23] : memref<64x1xf32, #tpu.memory_space<vmem>>, vector<64x1xf32>
    %29 = vector.broadcast %28 : vector<64x1xf32> to vector<64x128xf32>
    %30 = arith.addf %27, %29 : vector<64x128xf32>
    %cst_24 = arith.constant 5.000000e-01 : f32
    %31 = vector.broadcast %cst_24 : f32 to vector<64x128xf32>
    %32 = arith.mulf %31, %30 : vector<64x128xf32>
    %cst_25 = arith.constant 0.707106769 : f32
    %33 = vector.broadcast %cst_25 : f32 to vector<64x128xf32>
    %34 = arith.mulf %30, %33 : vector<64x128xf32>
    %35 = math.erf %34 : vector<64x128xf32>
    %cst_26 = arith.constant 1.000000e+00 : f32
    %36 = vector.broadcast %cst_26 : f32 to vector<64x128xf32>
    %37 = arith.addf %36, %35 : vector<64x128xf32>
    %38 = arith.mulf %32, %37 : vector<64x128xf32>
    %c0_27 = arith.constant 0 : index
    %c0_28 = arith.constant 0 : index
    %39 = vector.load %arg8[%c0_27, %c0_28] : memref<16x64xbf16, #tpu.memory_space<vmem>>, vector<16x64xbf16>
    %40 = arith.truncf %38 : vector<64x128xf32> to vector<64x128xbf16>
    %cst_29 = arith.constant dense<0.000000e+00> : vector<16x128xf32>
    %41 = tpu.matmul %39, %40, %cst_29 {dimension_numbers = #tpu.dot_dimension_numbers<[1], [0], [0], [1], [0, 0, 1, 1], [], []>} : vector<16x64xbf16>, vector<64x128xbf16>, vector<16x128xf32> -> vector<16x128xf32>
    %c0_30 = arith.constant 0 : index
    %c0_31 = arith.constant 0 : index
    %42 = vector.load %arg9[%c0_30, %c0_31] : memref<16x1xf32, #tpu.memory_space<vmem>>, vector<16x1xf32>
    %43 = vector.broadcast %42 : vector<16x1xf32> to vector<16x128xf32>
    %44 = arith.addf %41, %43 : vector<16x128xf32>
    %45 = arith.addf %44, %0 : vector<16x128xf32>
    %c0_32 = arith.constant 0 : index
    %c0_33 = arith.constant 0 : index
    %46 = vector.load %arg10[%c0_32, %c0_33] : memref<16x128xf32, #tpu.memory_space<vmem>>, vector<16x128xf32>
    tpu.vector_store %arg10[%c0_32, %c0_33], %45 {strides = array<i32>} : memref<16x128xf32, #tpu.memory_space<vmem>>, vector<16x128xf32>,
    return
  }
  func.func @transform_0(%arg0: i32) -> (i32, i32) {
    %c0_i32 = arith.constant 0 : i32
    %c0_i32_0 = arith.constant 0 : i32
    return %c0_i32, %arg0 : i32, i32
  }
  func.func @transform_1(%arg0: i32) -> (i32, i32) {
    %c0_i32 = arith.constant 0 : i32
    %c0_i32_0 = arith.constant 0 : i32
    %c0_i32_1 = arith.constant 0 : i32
    return %c0_i32, %c0_i32_0 : i32, i32
  }
  func.func @transform_2(%arg0: i32) -> (i32, i32) {
    %c0_i32 = arith.constant 0 : i32
    %c0_i32_0 = arith.constant 0 : i32
    %c0_i32_1 = arith.constant 0 : i32
    return %c0_i32, %c0_i32_0 : i32, i32
  }
  func.func @transform_3(%arg0: i32) -> (i32, i32) {
    %c0_i32 = arith.constant 0 : i32
    %c0_i32_0 = arith.constant 0 : i32
    %c0_i32_1 = arith.constant 0 : i32
    return %c0_i32, %c0_i32_0 : i32, i32
  }
  func.func @transform_4(%arg0: i32) -> (i32, i32) {
    %c0_i32 = arith.constant 0 : i32
    %c0_i32_0 = arith.constant 0 : i32
    %c0_i32_1 = arith.constant 0 : i32
    return %c0_i32, %c0_i32_0 : i32, i32
  }
  func.func @transform_5(%arg0: i32) -> (i32, i32) {
    %c0_i32 = arith.constant 0 : i32
    %c0_i32_0 = arith.constant 0 : i32
    %c0_i32_1 = arith.constant 0 : i32
    return %c0_i32, %c0_i32_0 : i32, i32
  }
  func.func @transform_6(%arg0: i32) -> (i32, i32) {
    %c0_i32 = arith.constant 0 : i32
    %c0_i32_0 = arith.constant 0 : i32
    %c0_i32_1 = arith.constant 0 : i32
    return %c0_i32, %c0_i32_0 : i32, i32
  }
  func.func @transform_7(%arg0: i32) -> (i32, i32) {
    %c0_i32 = arith.constant 0 : i32
    %c0_i32_0 = arith.constant 0 : i32
    %c0_i32_1 = arith.constant 0 : i32
    return %c0_i32, %c0_i32_0 : i32, i32
  }
  func.func @transform_8(%arg0: i32) -> (i32, i32) {
    %c0_i32 = arith.constant 0 : i32
    %c0_i32_0 = arith.constant 0 : i32
    %c0_i32_1 = arith.constant 0 : i32
    return %c0_i32, %c0_i32_0 : i32, i32
  }
  func.func @transform_9(%arg0: i32) -> (i32, i32) {
    %c0_i32 = arith.constant 0 : i32
    %c0_i32_0 = arith.constant 0 : i32
    return %c0_i32, %arg0 : i32, i32
  }
}

module attributes {stable_mosaic.version = 11 : i64} {
  func.func @_token_mixing_kernel(%arg0: i32, %arg1: memref<16x128xf32, #tpu.memory_space<vmem>>, %arg2: memref<1x128xf32, #tpu.memory_space<vmem>>, %arg3: memref<1x128xf32, #tpu.memory_space<vmem>>, %arg4: memref<128x4xf32, #tpu.memory_space<vmem>>, %arg5: memref<4x128xf32, #tpu.memory_space<vmem>>, %arg6: memref<64x16xbf16, #tpu.memory_space<vmem>>, %arg7: memref<64x1xf32, #tpu.memory_space<vmem>>, %arg8: memref<16x64xbf16, #tpu.memory_space<vmem>>, %arg9: memref<16x1xf32, #tpu.memory_space<vmem>>, %arg10: memref<16x128xf32, #tpu.memory_space<vmem>>) attributes {dimension_semantics = [#tpu.dimension_semantics<parallel>], iteration_bounds = array<i64: 1>, scalar_prefetch = 0 : i64, scratch_operands = 0 : i64, tpu.core_type = #tpu.core_type<tc>, window_params = [{transform_indices = @transform_0, window_bounds = array<i64: 16, 128>}, {pipeline_mode = #tpu.pipeline_mode<synchronous>, transform_indices = @transform_1, window_bounds = array<i64: 1, 128>}, {pipeline_mode = #tpu.pipeline_mode<synchronous>, transform_indices = @transform_2, window_bounds = array<i64: 1, 128>}, {pipeline_mode = #tpu.pipeline_mode<synchronous>, transform_indices = @transform_3, window_bounds = array<i64: 128, 4>}, {pipeline_mode = #tpu.pipeline_mode<synchronous>, transform_indices = @transform_4, window_bounds = array<i64: 4, 128>}, {pipeline_mode = #tpu.pipeline_mode<synchronous>, transform_indices = @transform_5, window_bounds = array<i64: 64, 16>}, {pipeline_mode = #tpu.pipeline_mode<synchronous>, transform_indices = @transform_6, window_bounds = array<i64: 64, 1>}, {pipeline_mode = #tpu.pipeline_mode<synchronous>, transform_indices = @transform_7, window_bounds = array<i64: 16, 64>}, {pipeline_mode = #tpu.pipeline_mode<synchronous>, transform_indices = @transform_8, window_bounds = array<i64: 16, 1>}, {transform_indices = @transform_9, window_bounds = array<i64: 16, 128>}]} {
    %c0 = arith.constant 0 : index
    %c0_0 = arith.constant 0 : index
    %0 = vector.load %arg1[%c0, %c0_0] : memref<16x128xf32, #tpu.memory_space<vmem>>, vector<16x128xf32>
    %c0_1 = arith.constant 0 : index
    %c0_2 = arith.constant 0 : index
    %1 = vector.load %arg4[%c0_1, %c0_2] : memref<128x4xf32, #tpu.memory_space<vmem>>, vector<128x4xf32>
    %cst = arith.constant dense<0.000000e+00> : vector<16x4xf32>
    %2 = tpu.matmul %0, %1, %cst {dimension_numbers = #tpu.dot_dimension_numbers<[1], [0], [0], [1], [0, 0, 1, 1], [], []>, precision = #tpu.contract_precision<fp32>} : vector<16x128xf32>, vector<128x4xf32>, vector<16x4xf32> -> vector<16x4xf32>
    %c0_3 = arith.constant 0 : index
    %c0_4 = arith.constant 0 : index
    %3 = vector.load %arg5[%c0_3, %c0_4] : memref<4x128xf32, #tpu.memory_space<vmem>>, vector<4x128xf32>
    %cst_5 = arith.constant dense<0.000000e+00> : vector<16x128xf32>
    %4 = tpu.matmul %2, %3, %cst_5 {dimension_numbers = #tpu.dot_dimension_numbers<[1], [0], [0], [1], [0, 0, 1, 1], [], []>, precision = #tpu.contract_precision<fp32>} : vector<16x4xf32>, vector<4x128xf32>, vector<16x128xf32> -> vector<16x128xf32>
    %cst_6 = arith.constant 3.125000e-02 : f32
    %5 = vector.broadcast %cst_6 : f32 to vector<16x128xf32>
    %6 = arith.mulf %4, %5 : vector<16x128xf32>
    %7 = arith.subf %0, %6 : vector<16x128xf32>
    %8 = arith.mulf %7, %7 : vector<16x128xf32>
    %c0_7 = arith.constant 0 : index
    %c0_8 = arith.constant 0 : index
    %9 = vector.load %arg4[%c0_7, %c0_8] : memref<128x4xf32, #tpu.memory_space<vmem>>, vector<128x4xf32>
    %cst_9 = arith.constant dense<0.000000e+00> : vector<16x4xf32>
    %10 = tpu.matmul %8, %9, %cst_9 {dimension_numbers = #tpu.dot_dimension_numbers<[1], [0], [0], [1], [0, 0, 1, 1], [], []>, precision = #tpu.contract_precision<fp32>} : vector<16x128xf32>, vector<128x4xf32>, vector<16x4xf32> -> vector<16x4xf32>
    %c0_10 = arith.constant 0 : index
    %c0_11 = arith.constant 0 : index
    %11 = vector.load %arg5[%c0_10, %c0_11] : memref<4x128xf32, #tpu.memory_space<vmem>>, vector<4x128xf32>
    %cst_12 = arith.constant dense<0.000000e+00> : vector<16x128xf32>
    %12 = tpu.matmul %10, %11, %cst_12 {dimension_numbers = #tpu.dot_dimension_numbers<[1], [0], [0], [1], [0, 0, 1, 1], [], []>, precision = #tpu.contract_precision<fp32>} : vector<16x4xf32>, vector<4x128xf32>, vector<16x128xf32> -> vector<16x128xf32>
    %cst_13 = arith.constant 3.125000e-02 : f32
    %13 = vector.broadcast %cst_13 : f32 to vector<16x128xf32>
    %14 = arith.mulf %12, %13 : vector<16x128xf32>
    %cst_14 = arith.constant 9.99999974E-6 : f32
    %15 = vector.broadcast %cst_14 : f32 to vector<16x128xf32>
    %16 = arith.addf %14, %15 : vector<16x128xf32>
    %17 = math.rsqrt %16 : vector<16x128xf32>
    %18 = arith.mulf %7, %17 : vector<16x128xf32>
    %c0_15 = arith.constant 0 : index
    %c0_16 = arith.constant 0 : index
    %19 = vector.load %arg2[%c0_15, %c0_16] : memref<1x128xf32, #tpu.memory_space<vmem>>, vector<1x128xf32>
    %20 = vector.broadcast %19 : vector<1x128xf32> to vector<16x128xf32>
    %21 = arith.mulf %18, %20 : vector<16x128xf32>
    %c0_17 = arith.constant 0 : index
    %c0_18 = arith.constant 0 : index
    %22 = vector.load %arg3[%c0_17, %c0_18] : memref<1x128xf32, #tpu.memory_space<vmem>>, vector<1x128xf32>
    %23 = vector.broadcast %22 : vector<1x128xf32> to vector<16x128xf32>
    %24 = arith.addf %21, %23 : vector<16x128xf32>
    %c0_19 = arith.constant 0 : index
    %c0_20 = arith.constant 0 : index
    %25 = vector.load %arg6[%c0_19, %c0_20] : memref<64x16xbf16, #tpu.memory_space<vmem>>, vector<64x16xbf16>
    %26 = arith.truncf %24 : vector<16x128xf32> to vector<16x128xbf16>
    %cst_21 = arith.constant dense<0.000000e+00> : vector<64x128xf32>
    %27 = tpu.matmul %25, %26, %cst_21 {dimension_numbers = #tpu.dot_dimension_numbers<[1], [0], [0], [1], [0, 0, 1, 1], [], []>} : vector<64x16xbf16>, vector<16x128xbf16>, vector<64x128xf32> -> vector<64x128xf32>
    %c0_22 = arith.constant 0 : index
    %c0_23 = arith.constant 0 : index
    %28 = vector.load %arg7[%c0_22, %c0_23] : memref<64x1xf32, #tpu.memory_space<vmem>>, vector<64x1xf32>
    %29 = vector.broadcast %28 : vector<64x1xf32> to vector<64x128xf32>
    %30 = arith.addf %27, %29 : vector<64x128xf32>
    %cst_24 = arith.constant 5.000000e-01 : f32
    %31 = vector.broadcast %cst_24 : f32 to vector<64x128xf32>
    %32 = arith.mulf %31, %30 : vector<64x128xf32>
    %cst_25 = arith.constant 0.707106769 : f32
    %33 = vector.broadcast %cst_25 : f32 to vector<64x128xf32>
    %34 = arith.mulf %30, %33 : vector<64x128xf32>
    %35 = math.erf %34 : vector<64x128xf32>
    %cst_26 = arith.constant 1.000000e+00 : f32
    %36 = vector.broadcast %cst_26 : f32 to vector<64x128xf32>
    %37 = arith.addf %36, %35 : vector<64x128xf32>
    %38 = arith.mulf %32, %37 : vector<64x128xf32>
    %c0_27 = arith.constant 0 : index
    %c0_28 = arith.constant 0 : index
    %39 = vector.load %arg8[%c0_27, %c0_28] : memref<16x64xbf16, #tpu.memory_space<vmem>>, vector<16x64xbf16>
    %40 = arith.truncf %38 : vector<64x128xf32> to vector<64x128xbf16>
    %cst_29 = arith.constant dense<0.000000e+00> : vector<16x128xf32>
    %41 = tpu.matmul %39, %40, %cst_29 {dimension_numbers = #tpu.dot_dimension_numbers<[1], [0], [0], [1], [0, 0, 1, 1], [], []>} : vector<16x64xbf16>, vector<64x128xbf16>, vector<16x128xf32> -> vector<16x128xf32>
    %c0_30 = arith.constant 0 : index
    %c0_31 = arith.constant 0 : index
    %42 = vector.load %arg9[%c0_30, %c0_31] : memref<16x1xf32, #tpu.memory_space<vmem>>, vector<16x1xf32>
    %43 = vector.broadcast %42 : vector<16x1xf32> to vector<16x128xf32>
    %44 = arith.addf %41, %43 : vector<16x128xf32>
    %45 = arith.addf %44, %0 : vector<16x128xf32>
    %c0_32 = arith.constant 0 : index
    %c0_33 = arith.constant 0 : index
    %46 = vector.load %arg10[%c0_32, %c0_33] : memref<16x128xf32, #tpu.memory_space<vmem>>, vector<16x128xf32>
    tpu.vector_store %arg10[%c0_32, %c0_33], %45 {strides = array<i32>} : memref<16x128xf32, #tpu.memory_space<vmem>>, vector<16x128xf32>,
    return
  }
  func.func @transform_0(%arg0: i32) -> (i32, i32) {
    %c0_i32 = arith.constant 0 : i32
    %c0_i32_0 = arith.constant 0 : i32
    return %c0_i32, %arg0 : i32, i32
  }
  func.func @transform_1(%arg0: i32) -> (i32, i32) {
    %c0_i32 = arith.constant 0 : i32
    %c0_i32_0 = arith.constant 0 : i32
    %c0_i32_1 = arith.constant 0 : i32
    return %c0_i32, %c0_i32_0 : i32, i32
  }
  func.func @transform_2(%arg0: i32) -> (i32, i32) {
    %c0_i32 = arith.constant 0 : i32
    %c0_i32_0 = arith.constant 0 : i32
    %c0_i32_1 = arith.constant 0 : i32
    return %c0_i32, %c0_i32_0 : i32, i32
  }
  func.func @transform_3(%arg0: i32) -> (i32, i32) {
    %c0_i32 = arith.constant 0 : i32
    %c0_i32_0 = arith.constant 0 : i32
    %c0_i32_1 = arith.constant 0 : i32
    return %c0_i32, %c0_i32_0 : i32, i32
  }
  func.func @transform_4(%arg0: i32) -> (i32, i32) {
    %c0_i32 = arith.constant 0 : i32
    %c0_i32_0 = arith.constant 0 : i32
    %c0_i32_1 = arith.constant 0 : i32
    return %c0_i32, %c0_i32_0 : i32, i32
  }
  func.func @transform_5(%arg0: i32) -> (i32, i32) {
    %c0_i32 = arith.constant 0 : i32
    %c0_i32_0 = arith.constant 0 : i32
    %c0_i32_1 = arith.constant 0 : i32
    return %c0_i32, %c0_i32_0 : i32, i32
  }
  func.func @transform_6(%arg0: i32) -> (i32, i32) {
    %c0_i32 = arith.constant 0 : i32
    %c0_i32_0 = arith.constant 0 : i32
    %c0_i32_1 = arith.constant 0 : i32
    return %c0_i32, %c0_i32_0 : i32, i32
  }
  func.func @transform_7(%arg0: i32) -> (i32, i32) {
    %c0_i32 = arith.constant 0 : i32
    %c0_i32_0 = arith.constant 0 : i32
    %c0_i32_1 = arith.constant 0 : i32
    return %c0_i32, %c0_i32_0 : i32, i32
  }
  func.func @transform_8(%arg0: i32) -> (i32, i32) {
    %c0_i32 = arith.constant 0 : i32
    %c0_i32_0 = arith.constant 0 : i32
    %c0_i32_1 = arith.constant 0 : i32
    return %c0_i32, %c0_i32_0 : i32, i32
  }
  func.func @transform_9(%arg0: i32) -> (i32, i32) {
    %c0_i32 = arith.constant 0 : i32
    %c0_i32_0 = arith.constant 0 : i32
    return %c0_i32, %arg0 : i32, i32
  }
}

module attributes {stable_mosaic.version = 11 : i64} {
  func.func @_token_mixing_kernel(%arg0: i32, %arg1: memref<16x128xf32, #tpu.memory_space<vmem>>, %arg2: memref<1x128xf32, #tpu.memory_space<vmem>>, %arg3: memref<1x128xf32, #tpu.memory_space<vmem>>, %arg4: memref<128x4xf32, #tpu.memory_space<vmem>>, %arg5: memref<4x128xf32, #tpu.memory_space<vmem>>, %arg6: memref<64x16xbf16, #tpu.memory_space<vmem>>, %arg7: memref<64x1xf32, #tpu.memory_space<vmem>>, %arg8: memref<16x64xbf16, #tpu.memory_space<vmem>>, %arg9: memref<16x1xf32, #tpu.memory_space<vmem>>, %arg10: memref<16x128xf32, #tpu.memory_space<vmem>>) attributes {dimension_semantics = [#tpu.dimension_semantics<parallel>], iteration_bounds = array<i64: 1>, scalar_prefetch = 0 : i64, scratch_operands = 0 : i64, tpu.core_type = #tpu.core_type<tc>, window_params = [{transform_indices = @transform_0, window_bounds = array<i64: 16, 128>}, {pipeline_mode = #tpu.pipeline_mode<synchronous>, transform_indices = @transform_1, window_bounds = array<i64: 1, 128>}, {pipeline_mode = #tpu.pipeline_mode<synchronous>, transform_indices = @transform_2, window_bounds = array<i64: 1, 128>}, {pipeline_mode = #tpu.pipeline_mode<synchronous>, transform_indices = @transform_3, window_bounds = array<i64: 128, 4>}, {pipeline_mode = #tpu.pipeline_mode<synchronous>, transform_indices = @transform_4, window_bounds = array<i64: 4, 128>}, {pipeline_mode = #tpu.pipeline_mode<synchronous>, transform_indices = @transform_5, window_bounds = array<i64: 64, 16>}, {pipeline_mode = #tpu.pipeline_mode<synchronous>, transform_indices = @transform_6, window_bounds = array<i64: 64, 1>}, {pipeline_mode = #tpu.pipeline_mode<synchronous>, transform_indices = @transform_7, window_bounds = array<i64: 16, 64>}, {pipeline_mode = #tpu.pipeline_mode<synchronous>, transform_indices = @transform_8, window_bounds = array<i64: 16, 1>}, {transform_indices = @transform_9, window_bounds = array<i64: 16, 128>}]} {
    %c0 = arith.constant 0 : index
    %c0_0 = arith.constant 0 : index
    %0 = vector.load %arg1[%c0, %c0_0] : memref<16x128xf32, #tpu.memory_space<vmem>>, vector<16x128xf32>
    %c0_1 = arith.constant 0 : index
    %c0_2 = arith.constant 0 : index
    %1 = vector.load %arg4[%c0_1, %c0_2] : memref<128x4xf32, #tpu.memory_space<vmem>>, vector<128x4xf32>
    %cst = arith.constant dense<0.000000e+00> : vector<16x4xf32>
    %2 = tpu.matmul %0, %1, %cst {dimension_numbers = #tpu.dot_dimension_numbers<[1], [0], [0], [1], [0, 0, 1, 1], [], []>} : vector<16x128xf32>, vector<128x4xf32>, vector<16x4xf32> -> vector<16x4xf32>
    %c0_3 = arith.constant 0 : index
    %c0_4 = arith.constant 0 : index
    %3 = vector.load %arg5[%c0_3, %c0_4] : memref<4x128xf32, #tpu.memory_space<vmem>>, vector<4x128xf32>
    %cst_5 = arith.constant dense<0.000000e+00> : vector<16x128xf32>
    %4 = tpu.matmul %2, %3, %cst_5 {dimension_numbers = #tpu.dot_dimension_numbers<[1], [0], [0], [1], [0, 0, 1, 1], [], []>} : vector<16x4xf32>, vector<4x128xf32>, vector<16x128xf32> -> vector<16x128xf32>
    %cst_6 = arith.constant 3.125000e-02 : f32
    %5 = vector.broadcast %cst_6 : f32 to vector<16x128xf32>
    %6 = arith.mulf %4, %5 : vector<16x128xf32>
    %7 = arith.subf %0, %6 : vector<16x128xf32>
    %8 = arith.mulf %7, %7 : vector<16x128xf32>
    %c0_7 = arith.constant 0 : index
    %c0_8 = arith.constant 0 : index
    %9 = vector.load %arg4[%c0_7, %c0_8] : memref<128x4xf32, #tpu.memory_space<vmem>>, vector<128x4xf32>
    %cst_9 = arith.constant dense<0.000000e+00> : vector<16x4xf32>
    %10 = tpu.matmul %8, %9, %cst_9 {dimension_numbers = #tpu.dot_dimension_numbers<[1], [0], [0], [1], [0, 0, 1, 1], [], []>} : vector<16x128xf32>, vector<128x4xf32>, vector<16x4xf32> -> vector<16x4xf32>
    %c0_10 = arith.constant 0 : index
    %c0_11 = arith.constant 0 : index
    %11 = vector.load %arg5[%c0_10, %c0_11] : memref<4x128xf32, #tpu.memory_space<vmem>>, vector<4x128xf32>
    %cst_12 = arith.constant dense<0.000000e+00> : vector<16x128xf32>
    %12 = tpu.matmul %10, %11, %cst_12 {dimension_numbers = #tpu.dot_dimension_numbers<[1], [0], [0], [1], [0, 0, 1, 1], [], []>} : vector<16x4xf32>, vector<4x128xf32>, vector<16x128xf32> -> vector<16x128xf32>
    %cst_13 = arith.constant 3.125000e-02 : f32
    %13 = vector.broadcast %cst_13 : f32 to vector<16x128xf32>
    %14 = arith.mulf %12, %13 : vector<16x128xf32>
    %cst_14 = arith.constant 9.99999974E-6 : f32
    %15 = vector.broadcast %cst_14 : f32 to vector<16x128xf32>
    %16 = arith.addf %14, %15 : vector<16x128xf32>
    %17 = math.rsqrt %16 : vector<16x128xf32>
    %18 = arith.mulf %7, %17 : vector<16x128xf32>
    %c0_15 = arith.constant 0 : index
    %c0_16 = arith.constant 0 : index
    %19 = vector.load %arg2[%c0_15, %c0_16] : memref<1x128xf32, #tpu.memory_space<vmem>>, vector<1x128xf32>
    %20 = vector.broadcast %19 : vector<1x128xf32> to vector<16x128xf32>
    %21 = arith.mulf %18, %20 : vector<16x128xf32>
    %c0_17 = arith.constant 0 : index
    %c0_18 = arith.constant 0 : index
    %22 = vector.load %arg3[%c0_17, %c0_18] : memref<1x128xf32, #tpu.memory_space<vmem>>, vector<1x128xf32>
    %23 = vector.broadcast %22 : vector<1x128xf32> to vector<16x128xf32>
    %24 = arith.addf %21, %23 : vector<16x128xf32>
    %c0_19 = arith.constant 0 : index
    %c0_20 = arith.constant 0 : index
    %25 = vector.load %arg6[%c0_19, %c0_20] : memref<64x16xbf16, #tpu.memory_space<vmem>>, vector<64x16xbf16>
    %26 = arith.truncf %24 : vector<16x128xf32> to vector<16x128xbf16>
    %cst_21 = arith.constant dense<0.000000e+00> : vector<64x128xf32>
    %27 = tpu.matmul %25, %26, %cst_21 {dimension_numbers = #tpu.dot_dimension_numbers<[1], [0], [0], [1], [0, 0, 1, 1], [], []>} : vector<64x16xbf16>, vector<16x128xbf16>, vector<64x128xf32> -> vector<64x128xf32>
    %c0_22 = arith.constant 0 : index
    %c0_23 = arith.constant 0 : index
    %28 = vector.load %arg7[%c0_22, %c0_23] : memref<64x1xf32, #tpu.memory_space<vmem>>, vector<64x1xf32>
    %29 = vector.broadcast %28 : vector<64x1xf32> to vector<64x128xf32>
    %30 = arith.addf %27, %29 : vector<64x128xf32>
    %cst_24 = arith.constant 5.000000e-01 : f32
    %31 = vector.broadcast %cst_24 : f32 to vector<64x128xf32>
    %32 = arith.mulf %31, %30 : vector<64x128xf32>
    %cst_25 = arith.constant 0.707106769 : f32
    %33 = vector.broadcast %cst_25 : f32 to vector<64x128xf32>
    %34 = arith.mulf %30, %33 : vector<64x128xf32>
    %35 = math.erf %34 : vector<64x128xf32>
    %cst_26 = arith.constant 1.000000e+00 : f32
    %36 = vector.broadcast %cst_26 : f32 to vector<64x128xf32>
    %37 = arith.addf %36, %35 : vector<64x128xf32>
    %38 = arith.mulf %32, %37 : vector<64x128xf32>
    %c0_27 = arith.constant 0 : index
    %c0_28 = arith.constant 0 : index
    %39 = vector.load %arg8[%c0_27, %c0_28] : memref<16x64xbf16, #tpu.memory_space<vmem>>, vector<16x64xbf16>
    %40 = arith.truncf %38 : vector<64x128xf32> to vector<64x128xbf16>
    %cst_29 = arith.constant dense<0.000000e+00> : vector<16x128xf32>
    %41 = tpu.matmul %39, %40, %cst_29 {dimension_numbers = #tpu.dot_dimension_numbers<[1], [0], [0], [1], [0, 0, 1, 1], [], []>} : vector<16x64xbf16>, vector<64x128xbf16>, vector<16x128xf32> -> vector<16x128xf32>
    %c0_30 = arith.constant 0 : index
    %c0_31 = arith.constant 0 : index
    %42 = vector.load %arg9[%c0_30, %c0_31] : memref<16x1xf32, #tpu.memory_space<vmem>>, vector<16x1xf32>
    %43 = vector.broadcast %42 : vector<16x1xf32> to vector<16x128xf32>
    %44 = arith.addf %41, %43 : vector<16x128xf32>
    %45 = arith.addf %44, %0 : vector<16x128xf32>
    %c0_32 = arith.constant 0 : index
    %c0_33 = arith.constant 0 : index
    %46 = vector.load %arg10[%c0_32, %c0_33] : memref<16x128xf32, #tpu.memory_space<vmem>>, vector<16x128xf32>
    tpu.vector_store %arg10[%c0_32, %c0_33], %45 {strides = array<i32>} : memref<16x128xf32, #tpu.memory_space<vmem>>, vector<16x128xf32>,
    return
  }
  func.func @transform_0(%arg0: i32) -> (i32, i32) {
    %c0_i32 = arith.constant 0 : i32
    %c0_i32_0 = arith.constant 0 : i32
    return %c0_i32, %arg0 : i32, i32
  }
  func.func @transform_1(%arg0: i32) -> (i32, i32) {
    %c0_i32 = arith.constant 0 : i32
    %c0_i32_0 = arith.constant 0 : i32
    %c0_i32_1 = arith.constant 0 : i32
    return %c0_i32, %c0_i32_0 : i32, i32
  }
  func.func @transform_2(%arg0: i32) -> (i32, i32) {
    %c0_i32 = arith.constant 0 : i32
    %c0_i32_0 = arith.constant 0 : i32
    %c0_i32_1 = arith.constant 0 : i32
    return %c0_i32, %c0_i32_0 : i32, i32
  }
  func.func @transform_3(%arg0: i32) -> (i32, i32) {
    %c0_i32 = arith.constant 0 : i32
    %c0_i32_0 = arith.constant 0 : i32
    %c0_i32_1 = arith.constant 0 : i32
    return %c0_i32, %c0_i32_0 : i32, i32
  }
  func.func @transform_4(%arg0: i32) -> (i32, i32) {
    %c0_i32 = arith.constant 0 : i32
    %c0_i32_0 = arith.constant 0 : i32
    %c0_i32_1 = arith.constant 0 : i32
    return %c0_i32, %c0_i32_0 : i32, i32
  }
  func.func @transform_5(%arg0: i32) -> (i32, i32) {
    %c0_i32 = arith.constant 0 : i32
    %c0_i32_0 = arith.constant 0 : i32
    %c0_i32_1 = arith.constant 0 : i32
    return %c0_i32, %c0_i32_0 : i32, i32
  }
  func.func @transform_6(%arg0: i32) -> (i32, i32) {
    %c0_i32 = arith.constant 0 : i32
    %c0_i32_0 = arith.constant 0 : i32
    %c0_i32_1 = arith.constant 0 : i32
    return %c0_i32, %c0_i32_0 : i32, i32
  }
  func.func @transform_7(%arg0: i32) -> (i32, i32) {
    %c0_i32 = arith.constant 0 : i32
    %c0_i32_0 = arith.constant 0 : i32
    %c0_i32_1 = arith.constant 0 : i32
    return %c0_i32, %c0_i32_0 : i32, i32
  }
  func.func @transform_8(%arg0: i32) -> (i32, i32) {
    %c0_i32 = arith.constant 0 : i32
    %c0_i32_0 = arith.constant 0 : i32
    %c0_i32_1 = arith.constant 0 : i32
    return %c0_i32, %c0_i32_0 : i32, i32
  }
  func.func @transform_9(%arg0: i32) -> (i32, i32) {
    %c0_i32 = arith.constant 0 : i32
    %c0_i32_0 = arith.constant 0 : i32
    return %c0_i32, %arg0 : i32, i32
  }
}

</mosaic_0001>

<llo_original>
// kernel: tpu_custom_call.1
$region0: #{tpu_custom_call.1}
  #allocation0 [shape = 'u32[]', space=smem, size = 0x4, offset = 0x4, fixed_abs, tag = 'smem constant byte address 0x4 - core index']
  #allocation1 [shape = 'u32[144,128]{1,0:T(1,128)}', space=vmem, size = 0x12000, scoped, tag = 'internal scratch']
  %s0 = inlined_call_operand.vmem [shape: f32[16,128], index: 0, kind: input, shape index: {}]
  %s1 = inlined_call_operand.vmem [shape: f32[1,128], index: 1, kind: input, shape index: {}]
  %s2 = inlined_call_operand.vmem [shape: f32[1,128], index: 2, kind: input, shape index: {}]
  %s3 = inlined_call_operand.vmem [shape: f32[128,4], index: 3, kind: input, shape index: {}]
  %s4 = inlined_call_operand.vmem [shape: f32[4,128], index: 4, kind: input, shape index: {}]
  %s5 = inlined_call_operand.vmem [shape: bf16[64,16], index: 5, kind: input, shape index: {}]
  %s6 = inlined_call_operand.vmem [shape: f32[64,1], index: 6, kind: input, shape index: {}]
  %s7 = inlined_call_operand.vmem [shape: bf16[16,64], index: 7, kind: input, shape index: {}]
  %s8 = inlined_call_operand.vmem [shape: f32[16,1], index: 8, kind: input, shape index: {}]
  %s9 = inlined_call_operand.hbm [shape: f32[16,128], index: 9, kind: output, shape index: {}]
  %s10 = sld [smem:[#allocation0]]
  $region46: #{tpu_custom_call.1} parent=0
    _
  %s12 = ssub.s32 1, %s10
  %s13 = scalar_select 0, %s12, %s10
  $region1: #{tpu_custom_call.1} parent=0
    #allocation2 [shape = 'u8[8192]{0}', space=vmem, size = 0x2000, scoped, tag = 'output window, operand 0, single buffered']
    #allocation3 [shape = 's32[1]{0}', space=sflag, size = 0x4, scoped, tag = 'scoped memory for tpu_custom_call.1']
    %14 = vsyncpa [#allocation3], 0
    // Predicated region
    $region2: #{tpu_custom_call.1} parent=1 // pred_check
      _
    $region3: #{tpu_custom_call.1} parent=1 // pred_check_branch
      %16 = sbr.rel (0) target = $region5
    $region4: #{tpu_custom_call.1} parent=1 // pred_region
      _
    $region5: #{tpu_custom_call.1} parent=1 // pred_fallthru
      _
    // Predicated region
    $region6: #{tpu_custom_call.1} parent=1 // pred_check
      _
    $region7: #{tpu_custom_call.1} parent=1 // pred_check_branch
      %18 = sbr.rel (0) target = $region9
    $region8: #{tpu_custom_call.1} parent=1 // pred_region
      _
    $region9: #{tpu_custom_call.1} parent=1 // pred_fallthru
      _
    // Predicated region
    $region10: #{tpu_custom_call.1} parent=1 // pred_check
      _
    $region11: #{tpu_custom_call.1} parent=1 // pred_check_branch
      %20 = sbr.rel (0) target = $region13
    $region12: #{tpu_custom_call.1} parent=1 // pred_region
      _
    $region13: #{tpu_custom_call.1} parent=1 // pred_fallthru
      _
    // Predicated region
    $region14: #{tpu_custom_call.1} parent=1 // pred_check
      _
    $region15: #{tpu_custom_call.1} parent=1 // pred_check_branch
      %22 = sbr.rel (0) target = $region17
    $region16: #{tpu_custom_call.1} parent=1 // pred_region
      _
    $region17: #{tpu_custom_call.1} parent=1 // pred_fallthru
      _
    // Predicated region
    $region18: #{tpu_custom_call.1} parent=1 // pred_check
      _
    $region19: #{tpu_custom_call.1} parent=1 // pred_check_branch
      %24 = sbr.rel (0) target = $region21
    $region20: #{tpu_custom_call.1} parent=1 // pred_region
      _
    $region21: #{tpu_custom_call.1} parent=1 // pred_fallthru
      _
    // Predicated region
    $region22: #{tpu_custom_call.1} parent=1 // pred_check
      _
    $region23: #{tpu_custom_call.1} parent=1 // pred_check_branch
      %26 = sbr.rel (0) target = $region25
    $region24: #{tpu_custom_call.1} parent=1 // pred_region
      _
    $region25: #{tpu_custom_call.1} parent=1 // pred_fallthru
      _
    // Predicated region
    $region26: #{tpu_custom_call.1} parent=1 // pred_check
      _
    $region27: #{tpu_custom_call.1} parent=1 // pred_check_branch
      %28 = sbr.rel (0) target = $region29
    $region28: #{tpu_custom_call.1} parent=1 // pred_region
      _
    $region29: #{tpu_custom_call.1} parent=1 // pred_fallthru
      _
    // Predicated region
    $region30: #{tpu_custom_call.1} parent=1 // pred_check
      _
    $region31: #{tpu_custom_call.1} parent=1 // pred_check_branch
      %30 = sbr.rel (0) target = $region33
    $region32: #{tpu_custom_call.1} parent=1 // pred_region
      _
    $region33: #{tpu_custom_call.1} parent=1 // pred_fallthru
      _
    // Predicated region
    $region34: #{tpu_custom_call.1} parent=1 // pred_check
      _
    $region35: #{tpu_custom_call.1} parent=1 // pred_check_branch
      %32 = sbr.rel (0) target = $region37
    $region36: #{tpu_custom_call.1} parent=1 // pred_region
      _
    $region37: #{tpu_custom_call.1} parent=1 // pred_fallthru
      _
    %v34 = vld [vmem:[%s0] sm:$0xff]
    %v35 = vld [vmem:[%s0 + $0x8] sm:$0xff]
    %v36 = vld [vmem:[%s3] sm:$0xff]
    %v37 = vld [vmem:[%s3 + $0x8] sm:$0xff]
    %v38 = vld [vmem:[%s3 + $0x10] sm:$0xff]
    %v39 = vld [vmem:[%s3 + $0x18] sm:$0xff]
    %v40 = vld [vmem:[%s3 + $0x20] sm:$0xff]
    %v41 = vld [vmem:[%s3 + $0x28] sm:$0xff]
    %v42 = vld [vmem:[%s3 + $0x30] sm:$0xff]
    %v43 = vld [vmem:[%s3 + $0x38] sm:$0xff]
    %v44 = vld [vmem:[%s3 + $0x40] sm:$0xff]
    %v45 = vld [vmem:[%s3 + $0x48] sm:$0xff]
    %v46 = vld [vmem:[%s3 + $0x50] sm:$0xff]
    %v47 = vld [vmem:[%s3 + $0x58] sm:$0xff]
    %v48 = vld [vmem:[%s3 + $0x60] sm:$0xff]
    %v49 = vld [vmem:[%s3 + $0x68] sm:$0xff]
    %v50 = vld [vmem:[%s3 + $0x70] sm:$0xff]
    %v51 = vld [vmem:[%s3 + $0x78] sm:$0xff]
    %52 = vmatprep.subr.mxu0 0.0
    %v53 = vand.u32 %v36, 4294901760
    %54 = vmatpush1.msra.mxu0 %v53
    %55 = vmatprep.subr.mxu0 0.0
    %v56 = vand.u32 %v37, 4294901760
    %57 = vmatpush1.msra.mxu0 %v56
    %58 = vmatprep.subr.mxu0 0.0
    %v59 = vand.u32 %v38, 4294901760
    %60 = vmatpush1.msra.mxu0 %v59
    %61 = vmatprep.subr.mxu0 0.0
    %v62 = vand.u32 %v39, 4294901760
    %63 = vmatpush1.msra.mxu0 %v62
    %64 = vmatprep.subr.mxu0 0.0
    %v65 = vand.u32 %v40, 4294901760
    %66 = vmatpush1.msra.mxu0 %v65
    %67 = vmatprep.subr.mxu0 0.0
    %v68 = vand.u32 %v41, 4294901760
    %69 = vmatpush1.msra.mxu0 %v68
    %70 = vmatprep.subr.mxu0 0.0
    %v71 = vand.u32 %v42, 4294901760
    %72 = vmatpush1.msra.mxu0 %v71
    %73 = vmatprep.subr.mxu0 0.0
    %v74 = vand.u32 %v43, 4294901760
    %75 = vmatpush1.msra.mxu0 %v74
    %76 = vmatprep.subr.mxu0 0.0
    %v77 = vand.u32 %v44, 4294901760
    %78 = vmatpush1.msra.mxu0 %v77
    %79 = vmatprep.subr.mxu0 0.0
    %v80 = vand.u32 %v45, 4294901760
    %81 = vmatpush1.msra.mxu0 %v80
    %82 = vmatprep.subr.mxu0 0.0
    %v83 = vand.u32 %v46, 4294901760
    %84 = vmatpush1.msra.mxu0 %v83
    %85 = vmatprep.subr.mxu0 0.0
    %v86 = vand.u32 %v47, 4294901760
    %87 = vmatpush1.msra.mxu0 %v86
    %88 = vmatprep.subr.mxu0 0.0
    %v89 = vand.u32 %v48, 4294901760
    %90 = vmatpush1.msra.mxu0 %v89
    %91 = vmatprep.subr.mxu0 0.0
    %v92 = vand.u32 %v49, 4294901760
    %93 = vmatpush1.msra.mxu0 %v92
    %94 = vmatprep.subr.mxu0 0.0
    %v95 = vand.u32 %v50, 4294901760
    %96 = vmatpush1.msra.mxu0 %v95
    %97 = vmatprep.subr.mxu0 0.0
    %v98 = vand.u32 %v51, 4294901760
    %99 = vmatpush1.msra.mxu0 %v98
    %100 = vmatprep.subr.mxu0 0.0
    %101 = vmatpush1.msra.mxu0 0.0
    %102 = vmatprep.subr.mxu0 0.0
    %103 = vmatpush1.msra.mxu0 0.0
    %104 = vmatprep.subr.mxu0 0.0
    %105 = vmatpush1.msra.mxu0 0.0
    %106 = vmatprep.subr.mxu0 0.0
    %107 = vmatpush1.msra.mxu0 0.0
    %108 = vmatprep.subr.mxu0 0.0
    %109 = vmatpush1.msra.mxu0 0.0
    %110 = vmatprep.subr.mxu0 0.0
    %111 = vmatpush1.msra.mxu0 0.0
    %112 = vmatprep.subr.mxu0 0.0
    %113 = vmatpush1.msra.mxu0 0.0
    %114 = vmatprep.subr.mxu0 0.0
    %115 = vmatpush1.msra.mxu0 0.0
    %116 = vmatprep.subr.mxu0 0.0
    %117 = vmatpush1.msra.mxu0 0.0
    %118 = vmatprep.subr.mxu0 0.0
    %119 = vmatpush1.msra.mxu0 0.0
    %120 = vmatprep.subr.mxu0 0.0
    %121 = vmatpush1.msra.mxu0 0.0
    %122 = vmatprep.subr.mxu0 0.0
    %123 = vmatpush1.msra.mxu0 0.0
    %124 = vmatprep.subr.mxu0 0.0
    %125 = vmatpush1.msra.mxu0 0.0
    %126 = vmatprep.subr.mxu0 0.0
    %127 = vmatpush1.msra.mxu0 0.0
    %128 = vmatprep.subr.mxu0 0.0
    %129 = vmatpush1.msra.mxu0 0.0
    %130 = vmatprep.subr.mxu0 0.0
    %131 = vmatpush1.msra.mxu0 0.0
    %132 = vmatprep.mubr.f32.mxu0 0.0
    %v133 = vand.u32 %v34, 4294901760
    %v134 = vsub.f32 %v34, %v133
    %v135 = vand.u32 %v134, 4294901760
    %v136 = vsub.f32 %v134, %v135
    %v137 = vand.u32 %v136, 4294901760
    %138 = vmatmul.mubr.f32.gmra.mrb[0].mxu0 %v137
    %v139 = vpop.f32.mrb[0].mxu0
    %v140 = vadd.f32 0.0, %v139
    %v141 = vpop.f32.mrb[0].mxu0
    %142 = vmatprep.mubr.f32.mxu0 0.0
    %v143 = vand.u32 %v35, 4294901760
    %v144 = vsub.f32 %v35, %v143
    %v145 = vand.u32 %v144, 4294901760
    %v146 = vsub.f32 %v144, %v145
    %v147 = vand.u32 %v146, 4294901760
    %148 = vmatmul.mubr.f32.gmra.mrb[0].mxu0 %v147
    %v149 = vpop.f32.mrb[0].mxu0
    %v150 = vadd.f32 0.0, %v149
    %v151 = vpop.f32.mrb[0].mxu0
    %152 = vdwg.mxu0
    %153 = vmatprep.subr.mxu0 0.0
    %v154 = vand.u32 %v36, 4294901760
    %v155 = vsub.f32 %v36, %v154
    %v156 = vand.u32 %v155, 4294901760
    %v157 = vsub.f32 %v155, %v156
    %v158 = vand.u32 %v157, 4294901760
    %159 = vmatpush1.msra.mxu0 %v158
    %160 = vmatprep.subr.mxu0 0.0
    %v161 = vand.u32 %v37, 4294901760
    %v162 = vsub.f32 %v37, %v161
    %v163 = vand.u32 %v162, 4294901760
    %v164 = vsub.f32 %v162, %v163
    %v165 = vand.u32 %v164, 4294901760
    %166 = vmatpush1.msra.mxu0 %v165
    %167 = vmatprep.subr.mxu0 0.0
    %v168 = vand.u32 %v38, 4294901760
    %v169 = vsub.f32 %v38, %v168
    %v170 = vand.u32 %v169, 4294901760
    %v171 = vsub.f32 %v169, %v170
    %v172 = vand.u32 %v171, 4294901760
    %173 = vmatpush1.msra.mxu0 %v172
    %174 = vmatprep.subr.mxu0 0.0
    %v175 = vand.u32 %v39, 4294901760
    %v176 = vsub.f32 %v39, %v175
    %v177 = vand.u32 %v176, 4294901760
    %v178 = vsub.f32 %v176, %v177
    %v179 = vand.u32 %v178, 4294901760
    %180 = vmatpush1.msra.mxu0 %v179
    %181 = vmatprep.subr.mxu0 0.0
    %v182 = vand.u32 %v40, 4294901760
    %v183 = vsub.f32 %v40, %v182
    %v184 = vand.u32 %v183, 4294901760
    %v185 = vsub.f32 %v183, %v184
    %v186 = vand.u32 %v185, 4294901760
    %187 = vmatpush1.msra.mxu0 %v186
    %188 = vmatprep.subr.mxu0 0.0
    %v189 = vand.u32 %v41, 4294901760
    %v190 = vsub.f32 %v41, %v189
    %v191 = vand.u32 %v190, 4294901760
    %v192 = vsub.f32 %v190, %v191
    %v193 = vand.u32 %v192, 4294901760
    %194 = vmatpush1.msra.mxu0 %v193
    %195 = vmatprep.subr.mxu0 0.0
    %v196 = vand.u32 %v42, 4294901760
    %v197 = vsub.f32 %v42, %v196
    %v198 = vand.u32 %v197, 4294901760
    %v199 = vsub.f32 %v197, %v198
    %v200 = vand.u32 %v199, 4294901760
    %201 = vmatpush1.msra.mxu0 %v200
    %202 = vmatprep.subr.mxu0 0.0
    %v203 = vand.u32 %v43, 4294901760
    %v204 = vsub.f32 %v43, %v203
    %v205 = vand.u32 %v204, 4294901760
    %v206 = vsub.f32 %v204, %v205
    %v207 = vand.u32 %v206, 4294901760
    %208 = vmatpush1.msra.mxu0 %v207
    %209 = vmatprep.subr.mxu0 0.0
    %v210 = vand.u32 %v44, 4294901760
    %v211 = vsub.f32 %v44, %v210
    %v212 = vand.u32 %v211, 4294901760
    %v213 = vsub.f32 %v211, %v212
    %v214 = vand.u32 %v213, 4294901760
    %215 = vmatpush1.msra.mxu0 %v214
    %216 = vmatprep.subr.mxu0 0.0
    %v217 = vand.u32 %v45, 4294901760
    %v218 = vsub.f32 %v45, %v217
    %v219 = vand.u32 %v218, 4294901760
    %v220 = vsub.f32 %v218, %v219
    %v221 = vand.u32 %v220, 4294901760
    %222 = vmatpush1.msra.mxu0 %v221
    %223 = vmatprep.subr.mxu0 0.0
    %v224 = vand.u32 %v46, 4294901760
    %v225 = vsub.f32 %v46, %v224
    %v226 = vand.u32 %v225, 4294901760
    %v227 = vsub.f32 %v225, %v226
    %v228 = vand.u32 %v227, 4294901760
    %229 = vmatpush1.msra.mxu0 %v228
    %230 = vmatprep.subr.mxu0 0.0
    %v231 = vand.u32 %v47, 4294901760
    %v232 = vsub.f32 %v47, %v231
    %v233 = vand.u32 %v232, 4294901760
    %v234 = vsub.f32 %v232, %v233
    %v235 = vand.u32 %v234, 4294901760
    %236 = vmatpush1.msra.mxu0 %v235
    %237 = vmatprep.subr.mxu0 0.0
    %v238 = vand.u32 %v48, 4294901760
    %v239 = vsub.f32 %v48, %v238
    %v240 = vand.u32 %v239, 4294901760
    %v241 = vsub.f32 %v239, %v240
    %v242 = vand.u32 %v241, 4294901760
    %243 = vmatpush1.msra.mxu0 %v242
    %244 = vmatprep.subr.mxu0 0.0
    %v245 = vand.u32 %v49, 4294901760
    %v246 = vsub.f32 %v49, %v245
    %v247 = vand.u32 %v246, 4294901760
    %v248 = vsub.f32 %v246, %v247
    %v249 = vand.u32 %v248, 4294901760
    %250 = vmatpush1.msra.mxu0 %v249
    %251 = vmatprep.subr.mxu0 0.0
    %v252 = vand.u32 %v50, 4294901760
    %v253 = vsub.f32 %v50, %v252
    %v254 = vand.u32 %v253, 4294901760
    %v255 = vsub.f32 %v253, %v254
    %v256 = vand.u32 %v255, 4294901760
    %257 = vmatpush1.msra.mxu0 %v256
    %258 = vmatprep.subr.mxu0 0.0
    %v259 = vand.u32 %v51, 4294901760
    %v260 = vsub.f32 %v51, %v259
    %v261 = vand.u32 %v260, 4294901760
    %v262 = vsub.f32 %v260, %v261
    %v263 = vand.u32 %v262, 4294901760
    %264 = vmatpush1.msra.mxu0 %v263
    %265 = vmatprep.subr.mxu0 0.0
    %266 = vmatpush1.msra.mxu0 0.0
    %267 = vmatprep.subr.mxu0 0.0
    %268 = vmatpush1.msra.mxu0 0.0
    %269 = vmatprep.subr.mxu0 0.0
    %270 = vmatpush1.msra.mxu0 0.0
    %271 = vmatprep.subr.mxu0 0.0
    %272 = vmatpush1.msra.mxu0 0.0
    %273 = vmatprep.subr.mxu0 0.0
    %274 = vmatpush1.msra.mxu0 0.0
    %275 = vmatprep.subr.mxu0 0.0
    %276 = vmatpush1.msra.mxu0 0.0
    %277 = vmatprep.subr.mxu0 0.0
    %278 = vmatpush1.msra.mxu0 0.0
    %279 = vmatprep.subr.mxu0 0.0
    %280 = vmatpush1.msra.mxu0 0.0
    %281 = vmatprep.subr.mxu0 0.0
    %282 = vmatpush1.msra.mxu0 0.0
    %283 = vmatprep.subr.mxu0 0.0
    %284 = vmatpush1.msra.mxu0 0.0
    %285 = vmatprep.subr.mxu0 0.0
    %286 = vmatpush1.msra.mxu0 0.0
    %287 = vmatprep.subr.mxu0 0.0
    %288 = vmatpush1.msra.mxu0 0.0
    %289 = vmatprep.subr.mxu0 0.0
    %290 = vmatpush1.msra.mxu0 0.0
    %291 = vmatprep.subr.mxu0 0.0
    %292 = vmatpush1.msra.mxu0 0.0
    %293 = vmatprep.subr.mxu0 0.0
    %294 = vmatpush1.msra.mxu0 0.0
    %295 = vmatprep.subr.mxu0 0.0
    %296 = vmatpush1.msra.mxu0 0.0
    %297 = vmatprep.mubr.f32.mxu0 0.0
    %v298 = vand.u32 %v34, 4294901760
    %299 = vmatmul.mubr.f32.gmra.mrb[0].mxu0 %v298
    %v300 = vpop.f32.mrb[0].mxu0
    %v301 = vadd.f32 %v140, %v300
    %v302 = vpop.f32.mrb[0].mxu0
    %303 = vmatprep.mubr.f32.mxu0 0.0
    %v304 = vand.u32 %v35, 4294901760
    %305 = vmatmul.mubr.f32.gmra.mrb[0].mxu0 %v304
    %v306 = vpop.f32.mrb[0].mxu0
    %v307 = vadd.f32 %v150, %v306
    %v308 = vpop.f32.mrb[0].mxu0
    %309 = vdwg.mxu0
    %310 = vmatprep.subr.mxu0 0.0
    %v311 = vand.u32 %v36, 4294901760
    %v312 = vsub.f32 %v36, %v311
    %313 = vmatpush1.msra.mxu0 %v312
    %314 = vmatprep.subr.mxu0 0.0
    %v315 = vand.u32 %v37, 4294901760
    %v316 = vsub.f32 %v37, %v315
    %317 = vmatpush1.msra.mxu0 %v316
    %318 = vmatprep.subr.mxu0 0.0
    %v319 = vand.u32 %v38, 4294901760
    %v320 = vsub.f32 %v38, %v319
    %321 = vmatpush1.msra.mxu0 %v320
    %322 = vmatprep.subr.mxu0 0.0
    %v323 = vand.u32 %v39, 4294901760
    %v324 = vsub.f32 %v39, %v323
    %325 = vmatpush1.msra.mxu0 %v324
    %326 = vmatprep.subr.mxu0 0.0
    %v327 = vand.u32 %v40, 4294901760
    %v328 = vsub.f32 %v40, %v327
    %329 = vmatpush1.msra.mxu0 %v328
    %330 = vmatprep.subr.mxu0 0.0
    %v331 = vand.u32 %v41, 4294901760
    %v332 = vsub.f32 %v41, %v331
    %333 = vmatpush1.msra.mxu0 %v332
    %334 = vmatprep.subr.mxu0 0.0
    %v335 = vand.u32 %v42, 4294901760
    %v336 = vsub.f32 %v42, %v335
    %337 = vmatpush1.msra.mxu0 %v336
    %338 = vmatprep.subr.mxu0 0.0
    %v339 = vand.u32 %v43, 4294901760
    %v340 = vsub.f32 %v43, %v339
    %341 = vmatpush1.msra.mxu0 %v340
    %342 = vmatprep.subr.mxu0 0.0
    %v343 = vand.u32 %v44, 4294901760
    %v344 = vsub.f32 %v44, %v343
    %345 = vmatpush1.msra.mxu0 %v344
    %346 = vmatprep.subr.mxu0 0.0
    %v347 = vand.u32 %v45, 4294901760
    %v348 = vsub.f32 %v45, %v347
    %349 = vmatpush1.msra.mxu0 %v348
    %350 = vmatprep.subr.mxu0 0.0
    %v351 = vand.u32 %v46, 4294901760
    %v352 = vsub.f32 %v46, %v351
    %353 = vmatpush1.msra.mxu0 %v352
    %354 = vmatprep.subr.mxu0 0.0
    %v355 = vand.u32 %v47, 4294901760
    %v356 = vsub.f32 %v47, %v355
    %357 = vmatpush1.msra.mxu0 %v356
    %358 = vmatprep.subr.mxu0 0.0
    %v359 = vand.u32 %v48, 4294901760
    %v360 = vsub.f32 %v48, %v359
    %361 = vmatpush1.msra.mxu0 %v360
    %362 = vmatprep.subr.mxu0 0.0
    %v363 = vand.u32 %v49, 4294901760
    %v364 = vsub.f32 %v49, %v363
    %365 = vmatpush1.msra.mxu0 %v364
    %366 = vmatprep.subr.mxu0 0.0
    %v367 = vand.u32 %v50, 4294901760
    %v368 = vsub.f32 %v50, %v367
    %369 = vmatpush1.msra.mxu0 %v368
    %370 = vmatprep.subr.mxu0 0.0
    %v371 = vand.u32 %v51, 4294901760
    %v372 = vsub.f32 %v51, %v371
    %373 = vmatpush1.msra.mxu0 %v372
    %374 = vmatprep.subr.mxu0 0.0
    %375 = vmatpush1.msra.mxu0 0.0
    %376 = vmatprep.subr.mxu0 0.0
    %377 = vmatpush1.msra.mxu0 0.0
    %378 = vmatprep.subr.mxu0 0.0
    %379 = vmatpush1.msra.mxu0 0.0
    %380 = vmatprep.subr.mxu0 0.0
    %381 = vmatpush1.msra.mxu0 0.0
    %382 = vmatprep.subr.mxu0 0.0
    %383 = vmatpush1.msra.mxu0 0.0
    %384 = vmatprep.subr.mxu0 0.0
    %385 = vmatpush1.msra.mxu0 0.0
    %386 = vmatprep.subr.mxu0 0.0
    %387 = vmatpush1.msra.mxu0 0.0
    %388 = vmatprep.subr.mxu0 0.0
    %389 = vmatpush1.msra.mxu0 0.0
    %390 = vmatprep.subr.mxu0 0.0
    %391 = vmatpush1.msra.mxu0 0.0
    %392 = vmatprep.subr.mxu0 0.0
    %393 = vmatpush1.msra.mxu0 0.0
    %394 = vmatprep.subr.mxu0 0.0
    %395 = vmatpush1.msra.mxu0 0.0
    %396 = vmatprep.subr.mxu0 0.0
    %397 = vmatpush1.msra.mxu0 0.0
    %398 = vmatprep.subr.mxu0 0.0
    %399 = vmatpush1.msra.mxu0 0.0
    %400 = vmatprep.subr.mxu0 0.0
    %401 = vmatpush1.msra.mxu0 0.0
    %402 = vmatprep.subr.mxu0 0.0
    %403 = vmatpush1.msra.mxu0 0.0
    %404 = vmatprep.subr.mxu0 0.0
    %405 = vmatpush1.msra.mxu0 0.0
    %406 = vmatprep.mubr.f32.mxu0 0.0
    %v407 = vand.u32 %v34, 4294901760
    %v408 = vsub.f32 %v34, %v407
    %409 = vmatmul.mubr.f32.gmra.mrb[0].mxu0 %v408
    %v410 = vpop.f32.mrb[0].mxu0
    %v411 = vadd.f32 %v301, %v410
    %v412 = vpop.f32.mrb[0].mxu0
    %413 = vmatprep.mubr.f32.mxu0 0.0
    %v414 = vand.u32 %v35, 4294901760
    %v415 = vsub.f32 %v35, %v414
    %416 = vmatmul.mubr.f32.gmra.mrb[0].mxu0 %v415
    %v417 = vpop.f32.mrb[0].mxu0
    %v418 = vadd.f32 %v307, %v417
    %v419 = vpop.f32.mrb[0].mxu0
    %420 = vdwg.mxu0
    %421 = vmatprep.subr.mxu0 0.0
    %v422 = vand.u32 %v36, 4294901760
    %423 = vmatpush1.msra.mxu0 %v422
    %424 = vmatprep.subr.mxu0 0.0
    %v425 = vand.u32 %v37, 4294901760
    %426 = vmatpush1.msra.mxu0 %v425
    %427 = vmatprep.subr.mxu0 0.0
    %v428 = vand.u32 %v38, 4294901760
    %429 = vmatpush1.msra.mxu0 %v428
    %430 = vmatprep.subr.mxu0 0.0
    %v431 = vand.u32 %v39, 4294901760
    %432 = vmatpush1.msra.mxu0 %v431
    %433 = vmatprep.subr.mxu0 0.0
    %v434 = vand.u32 %v40, 4294901760
    %435 = vmatpush1.msra.mxu0 %v434
    %436 = vmatprep.subr.mxu0 0.0
    %v437 = vand.u32 %v41, 4294901760
    %438 = vmatpush1.msra.mxu0 %v437
    %439 = vmatprep.subr.mxu0 0.0
    %v440 = vand.u32 %v42, 4294901760
    %441 = vmatpush1.msra.mxu0 %v440
    %442 = vmatprep.subr.mxu0 0.0
    %v443 = vand.u32 %v43, 4294901760
    %444 = vmatpush1.msra.mxu0 %v443
    %445 = vmatprep.subr.mxu0 0.0
    %v446 = vand.u32 %v44, 4294901760
    %447 = vmatpush1.msra.mxu0 %v446
    %448 = vmatprep.subr.mxu0 0.0
    %v449 = vand.u32 %v45, 4294901760
    %450 = vmatpush1.msra.mxu0 %v449
    %451 = vmatprep.subr.mxu0 0.0
    %v452 = vand.u32 %v46, 4294901760
    %453 = vmatpush1.msra.mxu0 %v452
    %454 = vmatprep.subr.mxu0 0.0
    %v455 = vand.u32 %v47, 4294901760
    %456 = vmatpush1.msra.mxu0 %v455
    %457 = vmatprep.subr.mxu0 0.0
    %v458 = vand.u32 %v48, 4294901760
    %459 = vmatpush1.msra.mxu0 %v458
    %460 = vmatprep.subr.mxu0 0.0
    %v461 = vand.u32 %v49, 4294901760
    %462 = vmatpush1.msra.mxu0 %v461
    %463 = vmatprep.subr.mxu0 0.0
    %v464 = vand.u32 %v50, 4294901760
    %465 = vmatpush1.msra.mxu0 %v464
    %466 = vmatprep.subr.mxu0 0.0
    %v467 = vand.u32 %v51, 4294901760
    %468 = vmatpush1.msra.mxu0 %v467
    %469 = vmatprep.subr.mxu0 0.0
    %470 = vmatpush1.msra.mxu0 0.0
    %471 = vmatprep.subr.mxu0 0.0
    %472 = vmatpush1.msra.mxu0 0.0
    %473 = vmatprep.subr.mxu0 0.0
    %474 = vmatpush1.msra.mxu0 0.0
    %475 = vmatprep.subr.mxu0 0.0
    %476 = vmatpush1.msra.mxu0 0.0
    %477 = vmatprep.subr.mxu0 0.0
    %478 = vmatpush1.msra.mxu0 0.0
    %479 = vmatprep.subr.mxu0 0.0
    %480 = vmatpush1.msra.mxu0 0.0
    %481 = vmatprep.subr.mxu0 0.0
    %482 = vmatpush1.msra.mxu0 0.0
    %483 = vmatprep.subr.mxu0 0.0
    %484 = vmatpush1.msra.mxu0 0.0
    %485 = vmatprep.subr.mxu0 0.0
    %486 = vmatpush1.msra.mxu0 0.0
    %487 = vmatprep.subr.mxu0 0.0
    %488 = vmatpush1.msra.mxu0 0.0
    %489 = vmatprep.subr.mxu0 0.0
    %490 = vmatpush1.msra.mxu0 0.0
    %491 = vmatprep.subr.mxu0 0.0
    %492 = vmatpush1.msra.mxu0 0.0
    %493 = vmatprep.subr.mxu0 0.0
    %494 = vmatpush1.msra.mxu0 0.0
    %495 = vmatprep.subr.mxu0 0.0
    %496 = vmatpush1.msra.mxu0 0.0
    %497 = vmatprep.subr.mxu0 0.0
    %498 = vmatpush1.msra.mxu0 0.0
    %499 = vmatprep.subr.mxu0 0.0
    %500 = vmatpush1.msra.mxu0 0.0
    %501 = vmatprep.mubr.f32.mxu0 0.0
    %v502 = vand.u32 %v34, 4294901760
    %v503 = vsub.f32 %v34, %v502
    %v504 = vand.u32 %v503, 4294901760
    %505 = vmatmul.mubr.f32.gmra.mrb[0].mxu0 %v504
    %v506 = vpop.f32.mrb[0].mxu0
    %v507 = vadd.f32 %v411, %v506
    %v508 = vpop.f32.mrb[0].mxu0
    %509 = vmatprep.mubr.f32.mxu0 0.0
    %v510 = vand.u32 %v35, 4294901760
    %v511 = vsub.f32 %v35, %v510
    %v512 = vand.u32 %v511, 4294901760
    %513 = vmatmul.mubr.f32.gmra.mrb[0].mxu0 %v512
    %v514 = vpop.f32.mrb[0].mxu0
    %v515 = vadd.f32 %v418, %v514
    %v516 = vpop.f32.mrb[0].mxu0
    %517 = vdwg.mxu0
    %518 = vmatprep.subr.mxu0 0.0
    %v519 = vand.u32 %v36, 4294901760
    %v520 = vsub.f32 %v36, %v519
    %v521 = vand.u32 %v520, 4294901760
    %522 = vmatpush1.msra.mxu0 %v521
    %523 = vmatprep.subr.mxu0 0.0
    %v524 = vand.u32 %v37, 4294901760
    %v525 = vsub.f32 %v37, %v524
    %v526 = vand.u32 %v525, 4294901760
    %527 = vmatpush1.msra.mxu0 %v526
    %528 = vmatprep.subr.mxu0 0.0
    %v529 = vand.u32 %v38, 4294901760
    %v530 = vsub.f32 %v38, %v529
    %v531 = vand.u32 %v530, 4294901760
    %532 = vmatpush1.msra.mxu0 %v531
    %533 = vmatprep.subr.mxu0 0.0
    %v534 = vand.u32 %v39, 4294901760
    %v535 = vsub.f32 %v39, %v534
    %v536 = vand.u32 %v535, 4294901760
    %537 = vmatpush1.msra.mxu0 %v536
    %538 = vmatprep.subr.mxu0 0.0
    %v539 = vand.u32 %v40, 4294901760
    %v540 = vsub.f32 %v40, %v539
    %v541 = vand.u32 %v540, 4294901760
    %542 = vmatpush1.msra.mxu0 %v541
    %543 = vmatprep.subr.mxu0 0.0
    %v544 = vand.u32 %v41, 4294901760
    %v545 = vsub.f32 %v41, %v544
    %v546 = vand.u32 %v545, 4294901760
    %547 = vmatpush1.msra.mxu0 %v546
    %548 = vmatprep.subr.mxu0 0.0
    %v549 = vand.u32 %v42, 4294901760
    %v550 = vsub.f32 %v42, %v549
    %v551 = vand.u32 %v550, 4294901760
    %552 = vmatpush1.msra.mxu0 %v551
    %553 = vmatprep.subr.mxu0 0.0
    %v554 = vand.u32 %v43, 4294901760
    %v555 = vsub.f32 %v43, %v554
    %v556 = vand.u32 %v555, 4294901760
    %557 = vmatpush1.msra.mxu0 %v556
    %558 = vmatprep.subr.mxu0 0.0
    %v559 = vand.u32 %v44, 4294901760
    %v560 = vsub.f32 %v44, %v559
    %v561 = vand.u32 %v560, 4294901760
    %562 = vmatpush1.msra.mxu0 %v561
    %563 = vmatprep.subr.mxu0 0.0
    %v564 = vand.u32 %v45, 4294901760
    %v565 = vsub.f32 %v45, %v564
    %v566 = vand.u32 %v565, 4294901760
    %567 = vmatpush1.msra.mxu0 %v566
    %568 = vmatprep.subr.mxu0 0.0
    %v569 = vand.u32 %v46, 4294901760
    %v570 = vsub.f32 %v46, %v569
    %v571 = vand.u32 %v570, 4294901760
    %572 = vmatpush1.msra.mxu0 %v571
    %573 = vmatprep.subr.mxu0 0.0
    %v574 = vand.u32 %v47, 4294901760
    %v575 = vsub.f32 %v47, %v574
    %v576 = vand.u32 %v575, 4294901760
    %577 = vmatpush1.msra.mxu0 %v576
    %578 = vmatprep.subr.mxu0 0.0
    %v579 = vand.u32 %v48, 4294901760
    %v580 = vsub.f32 %v48, %v579
    %v581 = vand.u32 %v580, 4294901760
    %582 = vmatpush1.msra.mxu0 %v581
    %583 = vmatprep.subr.mxu0 0.0
    %v584 = vand.u32 %v49, 4294901760
    %v585 = vsub.f32 %v49, %v584
    %v586 = vand.u32 %v585, 4294901760
    %587 = vmatpush1.msra.mxu0 %v586
    %588 = vmatprep.subr.mxu0 0.0
    %v589 = vand.u32 %v50, 4294901760
    %v590 = vsub.f32 %v50, %v589
    %v591 = vand.u32 %v590, 4294901760
    %592 = vmatpush1.msra.mxu0 %v591
    %593 = vmatprep.subr.mxu0 0.0
    %v594 = vand.u32 %v51, 4294901760
    %v595 = vsub.f32 %v51, %v594
    %v596 = vand.u32 %v595, 4294901760
    %597 = vmatpush1.msra.mxu0 %v596
    %598 = vmatprep.subr.mxu0 0.0
    %599 = vmatpush1.msra.mxu0 0.0
    %600 = vmatprep.subr.mxu0 0.0
    %601 = vmatpush1.msra.mxu0 0.0
    %602 = vmatprep.subr.mxu0 0.0
    %603 = vmatpush1.msra.mxu0 0.0
    %604 = vmatprep.subr.mxu0 0.0
    %605 = vmatpush1.msra.mxu0 0.0
    %606 = vmatprep.subr.mxu0 0.0
    %607 = vmatpush1.msra.mxu0 0.0
    %608 = vmatprep.subr.mxu0 0.0
    %609 = vmatpush1.msra.mxu0 0.0
    %610 = vmatprep.subr.mxu0 0.0
    %611 = vmatpush1.msra.mxu0 0.0
    %612 = vmatprep.subr.mxu0 0.0
    %613 = vmatpush1.msra.mxu0 0.0
    %614 = vmatprep.subr.mxu0 0.0
    %615 = vmatpush1.msra.mxu0 0.0
    %616 = vmatprep.subr.mxu0 0.0
    %617 = vmatpush1.msra.mxu0 0.0
    %618 = vmatprep.subr.mxu0 0.0
    %619 = vmatpush1.msra.mxu0 0.0
    %620 = vmatprep.subr.mxu0 0.0
    %621 = vmatpush1.msra.mxu0 0.0
    %622 = vmatprep.subr.mxu0 0.0
    %623 = vmatpush1.msra.mxu0 0.0
    %624 = vmatprep.subr.mxu0 0.0
    %625 = vmatpush1.msra.mxu0 0.0
    %626 = vmatprep.subr.mxu0 0.0
    %627 = vmatpush1.msra.mxu0 0.0
    %628 = vmatprep.subr.mxu0 0.0
    %629 = vmatpush1.msra.mxu0 0.0
    %630 = vmatprep.mubr.f32.mxu0 0.0
    %v631 = vand.u32 %v34, 4294901760
    %632 = vmatmul.mubr.f32.gmra.mrb[0].mxu0 %v631
    %v633 = vpop.f32.mrb[0].mxu0
    %v634 = vadd.f32 %v507, %v633
    %v635 = vpop.f32.mrb[0].mxu0
    %636 = vmatprep.mubr.f32.mxu0 0.0
    %v637 = vand.u32 %v35, 4294901760
    %638 = vmatmul.mubr.f32.gmra.mrb[0].mxu0 %v637
    %v639 = vpop.f32.mrb[0].mxu0
    %v640 = vadd.f32 %v515, %v639
    %v641 = vpop.f32.mrb[0].mxu0
    %642 = vdwg.mxu0
    %643 = vmatprep.subr.mxu0 0.0
    %v644 = vand.u32 %v36, 4294901760
    %645 = vmatpush1.msra.mxu0 %v644
    %646 = vmatprep.subr.mxu0 0.0
    %v647 = vand.u32 %v37, 4294901760
    %648 = vmatpush1.msra.mxu0 %v647
    %649 = vmatprep.subr.mxu0 0.0
    %v650 = vand.u32 %v38, 4294901760
    %651 = vmatpush1.msra.mxu0 %v650
    %652 = vmatprep.subr.mxu0 0.0
    %v653 = vand.u32 %v39, 4294901760
    %654 = vmatpush1.msra.mxu0 %v653
    %655 = vmatprep.subr.mxu0 0.0
    %v656 = vand.u32 %v40, 4294901760
    %657 = vmatpush1.msra.mxu0 %v656
    %658 = vmatprep.subr.mxu0 0.0
    %v659 = vand.u32 %v41, 4294901760
    %660 = vmatpush1.msra.mxu0 %v659
    %661 = vmatprep.subr.mxu0 0.0
    %v662 = vand.u32 %v42, 4294901760
    %663 = vmatpush1.msra.mxu0 %v662
    %664 = vmatprep.subr.mxu0 0.0
    %v665 = vand.u32 %v43, 4294901760
    %666 = vmatpush1.msra.mxu0 %v665
    %667 = vmatprep.subr.mxu0 0.0
    %v668 = vand.u32 %v44, 4294901760
    %669 = vmatpush1.msra.mxu0 %v668
    %670 = vmatprep.subr.mxu0 0.0
    %v671 = vand.u32 %v45, 4294901760
    %672 = vmatpush1.msra.mxu0 %v671
    %673 = vmatprep.subr.mxu0 0.0
    %v674 = vand.u32 %v46, 4294901760
    %675 = vmatpush1.msra.mxu0 %v674
    %676 = vmatprep.subr.mxu0 0.0
    %v677 = vand.u32 %v47, 4294901760
    %678 = vmatpush1.msra.mxu0 %v677
    %679 = vmatprep.subr.mxu0 0.0
    %v680 = vand.u32 %v48, 4294901760
    %681 = vmatpush1.msra.mxu0 %v680
    %682 = vmatprep.subr.mxu0 0.0
    %v683 = vand.u32 %v49, 4294901760
    %684 = vmatpush1.msra.mxu0 %v683
    %685 = vmatprep.subr.mxu0 0.0
    %v686 = vand.u32 %v50, 4294901760
    %687 = vmatpush1.msra.mxu0 %v686
    %688 = vmatprep.subr.mxu0 0.0
    %v689 = vand.u32 %v51, 4294901760
    %690 = vmatpush1.msra.mxu0 %v689
    %691 = vmatprep.subr.mxu0 0.0
    %692 = vmatpush1.msra.mxu0 0.0
    %693 = vmatprep.subr.mxu0 0.0
    %694 = vmatpush1.msra.mxu0 0.0
    %695 = vmatprep.subr.mxu0 0.0
    %696 = vmatpush1.msra.mxu0 0.0
    %697 = vmatprep.subr.mxu0 0.0
    %698 = vmatpush1.msra.mxu0 0.0
    %699 = vmatprep.subr.mxu0 0.0
    %700 = vmatpush1.msra.mxu0 0.0
    %701 = vmatprep.subr.mxu0 0.0
    %702 = vmatpush1.msra.mxu0 0.0
    %703 = vmatprep.subr.mxu0 0.0
    %704 = vmatpush1.msra.mxu0 0.0
    %705 = vmatprep.subr.mxu0 0.0
    %706 = vmatpush1.msra.mxu0 0.0
    %707 = vmatprep.subr.mxu0 0.0
    %708 = vmatpush1.msra.mxu0 0.0
    %709 = vmatprep.subr.mxu0 0.0
    %710 = vmatpush1.msra.mxu0 0.0
    %711 = vmatprep.subr.mxu0 0.0
    %712 = vmatpush1.msra.mxu0 0.0
    %713 = vmatprep.subr.mxu0 0.0
    %714 = vmatpush1.msra.mxu0 0.0
    %715 = vmatprep.subr.mxu0 0.0
    %716 = vmatpush1.msra.mxu0 0.0
    %717 = vmatprep.subr.mxu0 0.0
    %718 = vmatpush1.msra.mxu0 0.0
    %719 = vmatprep.subr.mxu0 0.0
    %720 = vmatpush1.msra.mxu0 0.0
    %721 = vmatprep.subr.mxu0 0.0
    %722 = vmatpush1.msra.mxu0 0.0
    %723 = vmatprep.mubr.f32.mxu0 0.0
    %v724 = vand.u32 %v34, 4294901760
    %725 = vmatmul.mubr.f32.gmra.mrb[0].mxu0 %v724
    %v726 = vpop.f32.mrb[0].mxu0
    %v727 = vadd.f32 %v634, %v726
    %v728 = vpop.f32.mrb[0].mxu0
    %729 = vmatprep.mubr.f32.mxu0 0.0
    %v730 = vand.u32 %v35, 4294901760
    %731 = vmatmul.mubr.f32.gmra.mrb[0].mxu0 %v730
    %v732 = vpop.f32.mrb[0].mxu0
    %v733 = vadd.f32 %v640, %v732
    %v734 = vpop.f32.mrb[0].mxu0
    %735 = vdwg.mxu0
    %v736 = vld [vmem:[%s4] sm:$0xf]
    %vm737 = vcmask 31744
    %v739 = vsel %vm737, %v727, 0
    %v742 = vsel %vm737, %v733, 0
    %vm744 = vcmask 1043456
    %v746 = vsel %vm744, %v736, 0
    %748 = vmatprep.subr.mxu0 0.0
    %v749 = vand.u32 %v746, 4294901760
    %750 = vmatpush1.msra.mxu0 %v749
    %751 = vmatprep.subr.mxu0 0.0
    %752 = vmatpush1.msra.mxu0 0.0
    %753 = vmatprep.subr.mxu0 0.0
    %754 = vmatpush1.msra.mxu0 0.0
    %755 = vmatprep.subr.mxu0 0.0
    %756 = vmatpush1.msra.mxu0 0.0
    %757 = vmatprep.subr.mxu0 0.0
    %758 = vmatpush1.msra.mxu0 0.0
    %759 = vmatprep.subr.mxu0 0.0
    %760 = vmatpush1.msra.mxu0 0.0
    %761 = vmatprep.subr.mxu0 0.0
    %762 = vmatpush1.msra.mxu0 0.0
    %763 = vmatprep.subr.mxu0 0.0
    %764 = vmatpush1.msra.mxu0 0.0
    %765 = vmatprep.subr.mxu0 0.0
    %766 = vmatpush1.msra.mxu0 0.0
    %767 = vmatprep.subr.mxu0 0.0
    %768 = vmatpush1.msra.mxu0 0.0
    %769 = vmatprep.subr.mxu0 0.0
    %770 = vmatpush1.msra.mxu0 0.0
    %771 = vmatprep.subr.mxu0 0.0
    %772 = vmatpush1.msra.mxu0 0.0
    %773 = vmatprep.subr.mxu0 0.0
    %774 = vmatpush1.msra.mxu0 0.0
    %775 = vmatprep.subr.mxu0 0.0
    %776 = vmatpush1.msra.mxu0 0.0
    %777 = vmatprep.subr.mxu0 0.0
    %778 = vmatpush1.msra.mxu0 0.0
    %779 = vmatprep.subr.mxu0 0.0
    %780 = vmatpush1.msra.mxu0 0.0
    %781 = vmatprep.subr.mxu0 0.0
    %782 = vmatpush1.msra.mxu0 0.0
    %783 = vmatprep.subr.mxu0 0.0
    %784 = vmatpush1.msra.mxu0 0.0
    %785 = vmatprep.subr.mxu0 0.0
    %786 = vmatpush1.msra.mxu0 0.0
    %787 = vmatprep.subr.mxu0 0.0
    %788 = vmatpush1.msra.mxu0 0.0
    %789 = vmatprep.subr.mxu0 0.0
    %790 = vmatpush1.msra.mxu0 0.0
    %791 = vmatprep.subr.mxu0 0.0
    %792 = vmatpush1.msra.mxu0 0.0
    %793 = vmatprep.subr.mxu0 0.0
    %794 = vmatpush1.msra.mxu0 0.0
    %795 = vmatprep.subr.mxu0 0.0
    %796 = vmatpush1.msra.mxu0 0.0
    %797 = vmatprep.subr.mxu0 0.0
    %798 = vmatpush1.msra.mxu0 0.0
    %799 = vmatprep.subr.mxu0 0.0
    %800 = vmatpush1.msra.mxu0 0.0
    %801 = vmatprep.subr.mxu0 0.0
    %802 = vmatpush1.msra.mxu0 0.0
    %803 = vmatprep.subr.mxu0 0.0
    %804 = vmatpush1.msra.mxu0 0.0
    %805 = vmatprep.subr.mxu0 0.0
    %806 = vmatpush1.msra.mxu0 0.0
    %807 = vmatprep.subr.mxu0 0.0
    %808 = vmatpush1.msra.mxu0 0.0
    %809 = vmatprep.subr.mxu0 0.0
    %810 = vmatpush1.msra.mxu0 0.0
    %811 = vmatprep.subr.mxu0 0.0
    %812 = vmatpush1.msra.mxu0 0.0
    %813 = vmatprep.mubr.f32.mxu0 0.0
    %v814 = vand.u32 %v739, 4294901760
    %v815 = vsub.f32 %v739, %v814
    %v816 = vand.u32 %v815, 4294901760
    %v817 = vsub.f32 %v815, %v816
    %v818 = vand.u32 %v817, 4294901760
    %819 = vmatmul.mubr.f32.gmra.mrb[0].mxu0 %v818
    %v820 = vpop.f32.mrb[0].mxu0
    %v821 = vadd.f32 0.0, %v820
    %v822 = vpop.f32.mrb[0].mxu0
    %823 = vmatprep.mubr.f32.mxu0 0.0
    %v824 = vand.u32 %v742, 4294901760
    %v825 = vsub.f32 %v742, %v824
    %v826 = vand.u32 %v825, 4294901760
    %v827 = vsub.f32 %v825, %v826
    %v828 = vand.u32 %v827, 4294901760
    %829 = vmatmul.mubr.f32.gmra.mrb[0].mxu0 %v828
    %v830 = vpop.f32.mrb[0].mxu0
    %v831 = vadd.f32 0.0, %v830
    %v832 = vpop.f32.mrb[0].mxu0
    %833 = vdwg.mxu0
    %834 = vmatprep.subr.mxu0 0.0
    %v835 = vand.u32 %v746, 4294901760
    %v836 = vsub.f32 %v746, %v835
    %v837 = vand.u32 %v836, 4294901760
    %v838 = vsub.f32 %v836, %v837
    %v839 = vand.u32 %v838, 4294901760
    %840 = vmatpush1.msra.mxu0 %v839
    %841 = vmatprep.subr.mxu0 0.0
    %842 = vmatpush1.msra.mxu0 0.0
    %843 = vmatprep.subr.mxu0 0.0
    %844 = vmatpush1.msra.mxu0 0.0
    %845 = vmatprep.subr.mxu0 0.0
    %846 = vmatpush1.msra.mxu0 0.0
    %847 = vmatprep.subr.mxu0 0.0
    %848 = vmatpush1.msra.mxu0 0.0
    %849 = vmatprep.subr.mxu0 0.0
    %850 = vmatpush1.msra.mxu0 0.0
    %851 = vmatprep.subr.mxu0 0.0
    %852 = vmatpush1.msra.mxu0 0.0
    %853 = vmatprep.subr.mxu0 0.0
    %854 = vmatpush1.msra.mxu0 0.0
    %855 = vmatprep.subr.mxu0 0.0
    %856 = vmatpush1.msra.mxu0 0.0
    %857 = vmatprep.subr.mxu0 0.0
    %858 = vmatpush1.msra.mxu0 0.0
    %859 = vmatprep.subr.mxu0 0.0
    %860 = vmatpush1.msra.mxu0 0.0
    %861 = vmatprep.subr.mxu0 0.0
    %862 = vmatpush1.msra.mxu0 0.0
    %863 = vmatprep.subr.mxu0 0.0
    %864 = vmatpush1.msra.mxu0 0.0
    %865 = vmatprep.subr.mxu0 0.0
    %866 = vmatpush1.msra.mxu0 0.0
    %867 = vmatprep.subr.mxu0 0.0
    %868 = vmatpush1.msra.mxu0 0.0
    %869 = vmatprep.subr.mxu0 0.0
    %870 = vmatpush1.msra.mxu0 0.0
    %871 = vmatprep.subr.mxu0 0.0
    %872 = vmatpush1.msra.mxu0 0.0
    %873 = vmatprep.subr.mxu0 0.0
    %874 = vmatpush1.msra.mxu0 0.0
    %875 = vmatprep.subr.mxu0 0.0
    %876 = vmatpush1.msra.mxu0 0.0
    %877 = vmatprep.subr.mxu0 0.0
    %878 = vmatpush1.msra.mxu0 0.0
    %879 = vmatprep.subr.mxu0 0.0
    %880 = vmatpush1.msra.mxu0 0.0
    %881 = vmatprep.subr.mxu0 0.0
    %882 = vmatpush1.msra.mxu0 0.0
    %883 = vmatprep.subr.mxu0 0.0
    %884 = vmatpush1.msra.mxu0 0.0
    %885 = vmatprep.subr.mxu0 0.0
    %886 = vmatpush1.msra.mxu0 0.0
    %887 = vmatprep.subr.mxu0 0.0
    %888 = vmatpush1.msra.mxu0 0.0
    %889 = vmatprep.subr.mxu0 0.0
    %890 = vmatpush1.msra.mxu0 0.0
    %891 = vmatprep.subr.mxu0 0.0
    %892 = vmatpush1.msra.mxu0 0.0
    %893 = vmatprep.subr.mxu0 0.0
    %894 = vmatpush1.msra.mxu0 0.0
    %895 = vmatprep.subr.mxu0 0.0
    %896 = vmatpush1.msra.mxu0 0.0
    %897 = vmatprep.subr.mxu0 0.0
    %898 = vmatpush1.msra.mxu0 0.0
    %899 = vmatprep.subr.mxu0 0.0
    %900 = vmatpush1.msra.mxu0 0.0
    %901 = vmatprep.subr.mxu0 0.0
    %902 = vmatpush1.msra.mxu0 0.0
    %903 = vmatprep.mubr.f32.mxu0 0.0
    %v904 = vand.u32 %v739, 4294901760
    %905 = vmatmul.mubr.f32.gmra.mrb[0].mxu0 %v904
    %v906 = vpop.f32.mrb[0].mxu0
    %v907 = vadd.f32 %v821, %v906
    %v908 = vpop.f32.mrb[0].mxu0
    %909 = vmatprep.mubr.f32.mxu0 0.0
    %v910 = vand.u32 %v742, 4294901760
    %911 = vmatmul.mubr.f32.gmra.mrb[0].mxu0 %v910
    %v912 = vpop.f32.mrb[0].mxu0
    %v913 = vadd.f32 %v831, %v912
    %v914 = vpop.f32.mrb[0].mxu0
    %915 = vdwg.mxu0
    %916 = vmatprep.subr.mxu0 0.0
    %v917 = vand.u32 %v746, 4294901760
    %v918 = vsub.f32 %v746, %v917
    %919 = vmatpush1.msra.mxu0 %v918
    %920 = vmatprep.subr.mxu0 0.0
    %921 = vmatpush1.msra.mxu0 0.0
    %922 = vmatprep.subr.mxu0 0.0
    %923 = vmatpush1.msra.mxu0 0.0
    %924 = vmatprep.subr.mxu0 0.0
    %925 = vmatpush1.msra.mxu0 0.0
    %926 = vmatprep.subr.mxu0 0.0
    %927 = vmatpush1.msra.mxu0 0.0
    %928 = vmatprep.subr.mxu0 0.0
    %929 = vmatpush1.msra.mxu0 0.0
    %930 = vmatprep.subr.mxu0 0.0
    %931 = vmatpush1.msra.mxu0 0.0
    %932 = vmatprep.subr.mxu0 0.0
    %933 = vmatpush1.msra.mxu0 0.0
    %934 = vmatprep.subr.mxu0 0.0
    %935 = vmatpush1.msra.mxu0 0.0
    %936 = vmatprep.subr.mxu0 0.0
    %937 = vmatpush1.msra.mxu0 0.0
    %938 = vmatprep.subr.mxu0 0.0
    %939 = vmatpush1.msra.mxu0 0.0
    %940 = vmatprep.subr.mxu0 0.0
    %941 = vmatpush1.msra.mxu0 0.0
    %942 = vmatprep.subr.mxu0 0.0
    %943 = vmatpush1.msra.mxu0 0.0
    %944 = vmatprep.subr.mxu0 0.0
    %945 = vmatpush1.msra.mxu0 0.0
    %946 = vmatprep.subr.mxu0 0.0
    %947 = vmatpush1.msra.mxu0 0.0
    %948 = vmatprep.subr.mxu0 0.0
    %949 = vmatpush1.msra.mxu0 0.0
    %950 = vmatprep.subr.mxu0 0.0
    %951 = vmatpush1.msra.mxu0 0.0
    %952 = vmatprep.subr.mxu0 0.0
    %953 = vmatpush1.msra.mxu0 0.0
    %954 = vmatprep.subr.mxu0 0.0
    %955 = vmatpush1.msra.mxu0 0.0
    %956 = vmatprep.subr.mxu0 0.0
    %957 = vmatpush1.msra.mxu0 0.0
    %958 = vmatprep.subr.mxu0 0.0
    %959 = vmatpush1.msra.mxu0 0.0
    %960 = vmatprep.subr.mxu0 0.0
    %961 = vmatpush1.msra.mxu0 0.0
    %962 = vmatprep.subr.mxu0 0.0
    %963 = vmatpush1.msra.mxu0 0.0
    %964 = vmatprep.subr.mxu0 0.0
    %965 = vmatpush1.msra.mxu0 0.0
    %966 = vmatprep.subr.mxu0 0.0
    %967 = vmatpush1.msra.mxu0 0.0
    %968 = vmatprep.subr.mxu0 0.0
    %969 = vmatpush1.msra.mxu0 0.0
    %970 = vmatprep.subr.mxu0 0.0
    %971 = vmatpush1.msra.mxu0 0.0
    %972 = vmatprep.subr.mxu0 0.0
    %973 = vmatpush1.msra.mxu0 0.0
    %974 = vmatprep.subr.mxu0 0.0
    %975 = vmatpush1.msra.mxu0 0.0
    %976 = vmatprep.subr.mxu0 0.0
    %977 = vmatpush1.msra.mxu0 0.0
    %978 = vmatprep.subr.mxu0 0.0
    %979 = vmatpush1.msra.mxu0 0.0
    %980 = vmatprep.subr.mxu0 0.0
    %981 = vmatpush1.msra.mxu0 0.0
    %982 = vmatprep.mubr.f32.mxu0 0.0
    %v983 = vand.u32 %v739, 4294901760
    %v984 = vsub.f32 %v739, %v983
    %985 = vmatmul.mubr.f32.gmra.mrb[0].mxu0 %v984
    %v986 = vpop.f32.mrb[0].mxu0
    %v987 = vadd.f32 %v907, %v986
    %v988 = vpop.f32.mrb[0].mxu0
    %989 = vmatprep.mubr.f32.mxu0 0.0
    %v990 = vand.u32 %v742, 4294901760
    %v991 = vsub.f32 %v742, %v990
    %992 = vmatmul.mubr.f32.gmra.mrb[0].mxu0 %v991
    %v993 = vpop.f32.mrb[0].mxu0
    %v994 = vadd.f32 %v913, %v993
    %v995 = vpop.f32.mrb[0].mxu0
    %996 = vdwg.mxu0
    %997 = vmatprep.subr.mxu0 0.0
    %v998 = vand.u32 %v746, 4294901760
    %999 = vmatpush1.msra.mxu0 %v998
    %1000 = vmatprep.subr.mxu0 0.0
    %1001 = vmatpush1.msra.mxu0 0.0
    %1002 = vmatprep.subr.mxu0 0.0
    %1003 = vmatpush1.msra.mxu0 0.0
    %1004 = vmatprep.subr.mxu0 0.0
    %1005 = vmatpush1.msra.mxu0 0.0
    %1006 = vmatprep.subr.mxu0 0.0
    %1007 = vmatpush1.msra.mxu0 0.0
    %1008 = vmatprep.subr.mxu0 0.0
    %1009 = vmatpush1.msra.mxu0 0.0
    %1010 = vmatprep.subr.mxu0 0.0
    %1011 = vmatpush1.msra.mxu0 0.0
    %1012 = vmatprep.subr.mxu0 0.0
    %1013 = vmatpush1.msra.mxu0 0.0
    %1014 = vmatprep.subr.mxu0 0.0
    %1015 = vmatpush1.msra.mxu0 0.0
    %1016 = vmatprep.subr.mxu0 0.0
    %1017 = vmatpush1.msra.mxu0 0.0
    %1018 = vmatprep.subr.mxu0 0.0
    %1019 = vmatpush1.msra.mxu0 0.0
    %1020 = vmatprep.subr.mxu0 0.0
    %1021 = vmatpush1.msra.mxu0 0.0
    %1022 = vmatprep.subr.mxu0 0.0
    %1023 = vmatpush1.msra.mxu0 0.0
    %1024 = vmatprep.subr.mxu0 0.0
    %1025 = vmatpush1.msra.mxu0 0.0
    %1026 = vmatprep.subr.mxu0 0.0
    %1027 = vmatpush1.msra.mxu0 0.0
    %1028 = vmatprep.subr.mxu0 0.0
    %1029 = vmatpush1.msra.mxu0 0.0
    %1030 = vmatprep.subr.mxu0 0.0
    %1031 = vmatpush1.msra.mxu0 0.0
    %1032 = vmatprep.subr.mxu0 0.0
    %1033 = vmatpush1.msra.mxu0 0.0
    %1034 = vmatprep.subr.mxu0 0.0
    %1035 = vmatpush1.msra.mxu0 0.0
    %1036 = vmatprep.subr.mxu0 0.0
    %1037 = vmatpush1.msra.mxu0 0.0
    %1038 = vmatprep.subr.mxu0 0.0
    %1039 = vmatpush1.msra.mxu0 0.0
    %1040 = vmatprep.subr.mxu0 0.0
    %1041 = vmatpush1.msra.mxu0 0.0
    %1042 = vmatprep.subr.mxu0 0.0
    %1043 = vmatpush1.msra.mxu0 0.0
    %1044 = vmatprep.subr.mxu0 0.0
    %1045 = vmatpush1.msra.mxu0 0.0
    %1046 = vmatprep.subr.mxu0 0.0
    %1047 = vmatpush1.msra.mxu0 0.0
    %1048 = vmatprep.subr.mxu0 0.0
    %1049 = vmatpush1.msra.mxu0 0.0
    %1050 = vmatprep.subr.mxu0 0.0
    %1051 = vmatpush1.msra.mxu0 0.0
    %1052 = vmatprep.subr.mxu0 0.0
    %1053 = vmatpush1.msra.mxu0 0.0
    %1054 = vmatprep.subr.mxu0 0.0
    %1055 = vmatpush1.msra.mxu0 0.0
    %1056 = vmatprep.subr.mxu0 0.0
    %1057 = vmatpush1.msra.mxu0 0.0
    %1058 = vmatprep.subr.mxu0 0.0
    %1059 = vmatpush1.msra.mxu0 0.0
    %1060 = vmatprep.subr.mxu0 0.0
    %1061 = vmatpush1.msra.mxu0 0.0
    %1062 = vmatprep.mubr.f32.mxu0 0.0
    %v1063 = vand.u32 %v739, 4294901760
    %v1064 = vsub.f32 %v739, %v1063
    %v1065 = vand.u32 %v1064, 4294901760
    %1066 = vmatmul.mubr.f32.gmra.mrb[0].mxu0 %v1065
    %v1067 = vpop.f32.mrb[0].mxu0
    %v1068 = vadd.f32 %v987, %v1067
    %v1069 = vpop.f32.mrb[0].mxu0
    %1070 = vmatprep.mubr.f32.mxu0 0.0
    %v1071 = vand.u32 %v742, 4294901760
    %v1072 = vsub.f32 %v742, %v1071
    %v1073 = vand.u32 %v1072, 4294901760
    %1074 = vmatmul.mubr.f32.gmra.mrb[0].mxu0 %v1073
    %v1075 = vpop.f32.mrb[0].mxu0
    %v1076 = vadd.f32 %v994, %v1075
    %v1077 = vpop.f32.mrb[0].mxu0
    %1078 = vdwg.mxu0
    %1079 = vmatprep.subr.mxu0 0.0
    %v1080 = vand.u32 %v746, 4294901760
    %v1081 = vsub.f32 %v746, %v1080
    %v1082 = vand.u32 %v1081, 4294901760
    %1083 = vmatpush1.msra.mxu0 %v1082
    %1084 = vmatprep.subr.mxu0 0.0
    %1085 = vmatpush1.msra.mxu0 0.0
    %1086 = vmatprep.subr.mxu0 0.0
    %1087 = vmatpush1.msra.mxu0 0.0
    %1088 = vmatprep.subr.mxu0 0.0
    %1089 = vmatpush1.msra.mxu0 0.0
    %1090 = vmatprep.subr.mxu0 0.0
    %1091 = vmatpush1.msra.mxu0 0.0
    %1092 = vmatprep.subr.mxu0 0.0
    %1093 = vmatpush1.msra.mxu0 0.0
    %1094 = vmatprep.subr.mxu0 0.0
    %1095 = vmatpush1.msra.mxu0 0.0
    %1096 = vmatprep.subr.mxu0 0.0
    %1097 = vmatpush1.msra.mxu0 0.0
    %1098 = vmatprep.subr.mxu0 0.0
    %1099 = vmatpush1.msra.mxu0 0.0
    %1100 = vmatprep.subr.mxu0 0.0
    %1101 = vmatpush1.msra.mxu0 0.0
    %1102 = vmatprep.subr.mxu0 0.0
    %1103 = vmatpush1.msra.mxu0 0.0
    %1104 = vmatprep.subr.mxu0 0.0
    %1105 = vmatpush1.msra.mxu0 0.0
    %1106 = vmatprep.subr.mxu0 0.0
    %1107 = vmatpush1.msra.mxu0 0.0
    %1108 = vmatprep.subr.mxu0 0.0
    %1109 = vmatpush1.msra.mxu0 0.0
    %1110 = vmatprep.subr.mxu0 0.0
    %1111 = vmatpush1.msra.mxu0 0.0
    %1112 = vmatprep.subr.mxu0 0.0
    %1113 = vmatpush1.msra.mxu0 0.0
    %1114 = vmatprep.subr.mxu0 0.0
    %1115 = vmatpush1.msra.mxu0 0.0
    %1116 = vmatprep.subr.mxu0 0.0
    %1117 = vmatpush1.msra.mxu0 0.0
    %1118 = vmatprep.subr.mxu0 0.0
    %1119 = vmatpush1.msra.mxu0 0.0
    %1120 = vmatprep.subr.mxu0 0.0
    %1121 = vmatpush1.msra.mxu0 0.0
    %1122 = vmatprep.subr.mxu0 0.0
    %1123 = vmatpush1.msra.mxu0 0.0
    %1124 = vmatprep.subr.mxu0 0.0
    %1125 = vmatpush1.msra.mxu0 0.0
    %1126 = vmatprep.subr.mxu0 0.0
    %1127 = vmatpush1.msra.mxu0 0.0
    %1128 = vmatprep.subr.mxu0 0.0
    %1129 = vmatpush1.msra.mxu0 0.0
    %1130 = vmatprep.subr.mxu0 0.0
    %1131 = vmatpush1.msra.mxu0 0.0
    %1132 = vmatprep.subr.mxu0 0.0
    %1133 = vmatpush1.msra.mxu0 0.0
    %1134 = vmatprep.subr.mxu0 0.0
    %1135 = vmatpush1.msra.mxu0 0.0
    %1136 = vmatprep.subr.mxu0 0.0
    %1137 = vmatpush1.msra.mxu0 0.0
    %1138 = vmatprep.subr.mxu0 0.0
    %1139 = vmatpush1.msra.mxu0 0.0
    %1140 = vmatprep.subr.mxu0 0.0
    %1141 = vmatpush1.msra.mxu0 0.0
    %1142 = vmatprep.subr.mxu0 0.0
    %1143 = vmatpush1.msra.mxu0 0.0
    %1144 = vmatprep.subr.mxu0 0.0
    %1145 = vmatpush1.msra.mxu0 0.0
    %1146 = vmatprep.mubr.f32.mxu0 0.0
    %v1147 = vand.u32 %v739, 4294901760
    %1148 = vmatmul.mubr.f32.gmra.mrb[0].mxu0 %v1147
    %v1149 = vpop.f32.mrb[0].mxu0
    %v1150 = vadd.f32 %v1068, %v1149
    %v1151 = vpop.f32.mrb[0].mxu0
    %1152 = vmatprep.mubr.f32.mxu0 0.0
    %v1153 = vand.u32 %v742, 4294901760
    %1154 = vmatmul.mubr.f32.gmra.mrb[0].mxu0 %v1153
    %v1155 = vpop.f32.mrb[0].mxu0
    %v1156 = vadd.f32 %v1076, %v1155
    %v1157 = vpop.f32.mrb[0].mxu0
    %1158 = vdwg.mxu0
    %1159 = vmatprep.subr.mxu0 0.0
    %v1160 = vand.u32 %v746, 4294901760
    %1161 = vmatpush1.msra.mxu0 %v1160
    %1162 = vmatprep.subr.mxu0 0.0
    %1163 = vmatpush1.msra.mxu0 0.0
    %1164 = vmatprep.subr.mxu0 0.0
    %1165 = vmatpush1.msra.mxu0 0.0
    %1166 = vmatprep.subr.mxu0 0.0
    %1167 = vmatpush1.msra.mxu0 0.0
    %1168 = vmatprep.subr.mxu0 0.0
    %1169 = vmatpush1.msra.mxu0 0.0
    %1170 = vmatprep.subr.mxu0 0.0
    %1171 = vmatpush1.msra.mxu0 0.0
    %1172 = vmatprep.subr.mxu0 0.0
    %1173 = vmatpush1.msra.mxu0 0.0
    %1174 = vmatprep.subr.mxu0 0.0
    %1175 = vmatpush1.msra.mxu0 0.0
    %1176 = vmatprep.subr.mxu0 0.0
    %1177 = vmatpush1.msra.mxu0 0.0
    %1178 = vmatprep.subr.mxu0 0.0
    %1179 = vmatpush1.msra.mxu0 0.0
    %1180 = vmatprep.subr.mxu0 0.0
    %1181 = vmatpush1.msra.mxu0 0.0
    %1182 = vmatprep.subr.mxu0 0.0
    %1183 = vmatpush1.msra.mxu0 0.0
    %1184 = vmatprep.subr.mxu0 0.0
    %1185 = vmatpush1.msra.mxu0 0.0
    %1186 = vmatprep.subr.mxu0 0.0
    %1187 = vmatpush1.msra.mxu0 0.0
    %1188 = vmatprep.subr.mxu0 0.0
    %1189 = vmatpush1.msra.mxu0 0.0
    %1190 = vmatprep.subr.mxu0 0.0
    %1191 = vmatpush1.msra.mxu0 0.0
    %1192 = vmatprep.subr.mxu0 0.0
    %1193 = vmatpush1.msra.mxu0 0.0
    %1194 = vmatprep.subr.mxu0 0.0
    %1195 = vmatpush1.msra.mxu0 0.0
    %1196 = vmatprep.subr.mxu0 0.0
    %1197 = vmatpush1.msra.mxu0 0.0
    %1198 = vmatprep.subr.mxu0 0.0
    %1199 = vmatpush1.msra.mxu0 0.0
    %1200 = vmatprep.subr.mxu0 0.0
    %1201 = vmatpush1.msra.mxu0 0.0
    %1202 = vmatprep.subr.mxu0 0.0
    %1203 = vmatpush1.msra.mxu0 0.0
    %1204 = vmatprep.subr.mxu0 0.0
    %1205 = vmatpush1.msra.mxu0 0.0
    %1206 = vmatprep.subr.mxu0 0.0
    %1207 = vmatpush1.msra.mxu0 0.0
    %1208 = vmatprep.subr.mxu0 0.0
    %1209 = vmatpush1.msra.mxu0 0.0
    %1210 = vmatprep.subr.mxu0 0.0
    %1211 = vmatpush1.msra.mxu0 0.0
    %1212 = vmatprep.subr.mxu0 0.0
    %1213 = vmatpush1.msra.mxu0 0.0
    %1214 = vmatprep.subr.mxu0 0.0
    %1215 = vmatpush1.msra.mxu0 0.0
    %1216 = vmatprep.subr.mxu0 0.0
    %1217 = vmatpush1.msra.mxu0 0.0
    %1218 = vmatprep.subr.mxu0 0.0
    %1219 = vmatpush1.msra.mxu0 0.0
    %1220 = vmatprep.subr.mxu0 0.0
    %1221 = vmatpush1.msra.mxu0 0.0
    %1222 = vmatprep.subr.mxu0 0.0
    %1223 = vmatpush1.msra.mxu0 0.0
    %1224 = vmatprep.mubr.f32.mxu0 0.0
    %v1225 = vand.u32 %v739, 4294901760
    %1226 = vmatmul.mubr.f32.gmra.mrb[0].mxu0 %v1225
    %v1227 = vpop.f32.mrb[0].mxu0
    %v1228 = vadd.f32 %v1150, %v1227
    %v1229 = vpop.f32.mrb[0].mxu0
    %1230 = vmatprep.mubr.f32.mxu0 0.0
    %v1231 = vand.u32 %v742, 4294901760
    %1232 = vmatmul.mubr.f32.gmra.mrb[0].mxu0 %v1231
    %v1233 = vpop.f32.mrb[0].mxu0
    %v1234 = vadd.f32 %v1156, %v1233
    %v1235 = vpop.f32.mrb[0].mxu0
    %1236 = vdwg.mxu0
    %v1237 = vmul.f32 %v1228, 0.03125
    %v1238 = vmul.f32 %v1234, 0.03125
    %v1239 = vsub.f32 %v34, %v1237
    %v1240 = vsub.f32 %v35, %v1238
    %v1241 = vmul.f32 %v1239, %v1239
    %v1242 = vmul.f32 %v1240, %v1240
    %1243 = vmatprep.subr.mxu0 0.0
    %v1244 = vand.u32 %v36, 4294901760
    %1245 = vmatpush1.msra.mxu0 %v1244
    %1246 = vmatprep.subr.mxu0 0.0
    %v1247 = vand.u32 %v37, 4294901760
    %1248 = vmatpush1.msra.mxu0 %v1247
    %1249 = vmatprep.subr.mxu0 0.0
    %v1250 = vand.u32 %v38, 4294901760
    %1251 = vmatpush1.msra.mxu0 %v1250
    %1252 = vmatprep.subr.mxu0 0.0
    %v1253 = vand.u32 %v39, 4294901760
    %1254 = vmatpush1.msra.mxu0 %v1253
    %1255 = vmatprep.subr.mxu0 0.0
    %v1256 = vand.u32 %v40, 4294901760
    %1257 = vmatpush1.msra.mxu0 %v1256
    %1258 = vmatprep.subr.mxu0 0.0
    %v1259 = vand.u32 %v41, 4294901760
    %1260 = vmatpush1.msra.mxu0 %v1259
    %1261 = vmatprep.subr.mxu0 0.0
    %v1262 = vand.u32 %v42, 4294901760
    %1263 = vmatpush1.msra.mxu0 %v1262
    %1264 = vmatprep.subr.mxu0 0.0
    %v1265 = vand.u32 %v43, 4294901760
    %1266 = vmatpush1.msra.mxu0 %v1265
    %1267 = vmatprep.subr.mxu0 0.0
    %v1268 = vand.u32 %v44, 4294901760
    %1269 = vmatpush1.msra.mxu0 %v1268
    %1270 = vmatprep.subr.mxu0 0.0
    %v1271 = vand.u32 %v45, 4294901760
    %1272 = vmatpush1.msra.mxu0 %v1271
    %1273 = vmatprep.subr.mxu0 0.0
    %v1274 = vand.u32 %v46, 4294901760
    %1275 = vmatpush1.msra.mxu0 %v1274
    %1276 = vmatprep.subr.mxu0 0.0
    %v1277 = vand.u32 %v47, 4294901760
    %1278 = vmatpush1.msra.mxu0 %v1277
    %1279 = vmatprep.subr.mxu0 0.0
    %v1280 = vand.u32 %v48, 4294901760
    %1281 = vmatpush1.msra.mxu0 %v1280
    %1282 = vmatprep.subr.mxu0 0.0
    %v1283 = vand.u32 %v49, 4294901760
    %1284 = vmatpush1.msra.mxu0 %v1283
    %1285 = vmatprep.subr.mxu0 0.0
    %v1286 = vand.u32 %v50, 4294901760
    %1287 = vmatpush1.msra.mxu0 %v1286
    %1288 = vmatprep.subr.mxu0 0.0
    %v1289 = vand.u32 %v51, 4294901760
    %1290 = vmatpush1.msra.mxu0 %v1289
    %1291 = vmatprep.subr.mxu0 0.0
    %1292 = vmatpush1.msra.mxu0 0.0
    %1293 = vmatprep.subr.mxu0 0.0
    %1294 = vmatpush1.msra.mxu0 0.0
    %1295 = vmatprep.subr.mxu0 0.0
    %1296 = vmatpush1.msra.mxu0 0.0
    %1297 = vmatprep.subr.mxu0 0.0
    %1298 = vmatpush1.msra.mxu0 0.0
    %1299 = vmatprep.subr.mxu0 0.0
    %1300 = vmatpush1.msra.mxu0 0.0
    %1301 = vmatprep.subr.mxu0 0.0
    %1302 = vmatpush1.msra.mxu0 0.0
    %1303 = vmatprep.subr.mxu0 0.0
    %1304 = vmatpush1.msra.mxu0 0.0
    %1305 = vmatprep.subr.mxu0 0.0
    %1306 = vmatpush1.msra.mxu0 0.0
    %1307 = vmatprep.subr.mxu0 0.0
    %1308 = vmatpush1.msra.mxu0 0.0
    %1309 = vmatprep.subr.mxu0 0.0
    %1310 = vmatpush1.msra.mxu0 0.0
    %1311 = vmatprep.subr.mxu0 0.0
    %1312 = vmatpush1.msra.mxu0 0.0
    %1313 = vmatprep.subr.mxu0 0.0
    %1314 = vmatpush1.msra.mxu0 0.0
    %1315 = vmatprep.subr.mxu0 0.0
    %1316 = vmatpush1.msra.mxu0 0.0
    %1317 = vmatprep.subr.mxu0 0.0
    %1318 = vmatpush1.msra.mxu0 0.0
    %1319 = vmatprep.subr.mxu0 0.0
    %1320 = vmatpush1.msra.mxu0 0.0
    %1321 = vmatprep.subr.mxu0 0.0
    %1322 = vmatpush1.msra.mxu0 0.0
    %1323 = vmatprep.mubr.f32.mxu0 0.0
    %v1324 = vand.u32 %v1241, 4294901760
    %v1325 = vsub.f32 %v1241, %v1324
    %v1326 = vand.u32 %v1325, 4294901760
    %v1327 = vsub.f32 %v1325, %v1326
    %v1328 = vand.u32 %v1327, 4294901760
    %1329 = vmatmul.mubr.f32.gmra.mrb[0].mxu0 %v1328
    %v1330 = vpop.f32.mrb[0].mxu0
    %v1331 = vadd.f32 0.0, %v1330
    %v1332 = vpop.f32.mrb[0].mxu0
    %1333 = vmatprep.mubr.f32.mxu0 0.0
    %v1334 = vand.u32 %v1242, 4294901760
    %v1335 = vsub.f32 %v1242, %v1334
    %v1336 = vand.u32 %v1335, 4294901760
    %v1337 = vsub.f32 %v1335, %v1336
    %v1338 = vand.u32 %v1337, 4294901760
    %1339 = vmatmul.mubr.f32.gmra.mrb[0].mxu0 %v1338
    %v1340 = vpop.f32.mrb[0].mxu0
    %v1341 = vadd.f32 0.0, %v1340
    %v1342 = vpop.f32.mrb[0].mxu0
    %1343 = vdwg.mxu0
    %1344 = vmatprep.subr.mxu0 0.0
    %v1345 = vand.u32 %v36, 4294901760
    %v1346 = vsub.f32 %v36, %v1345
    %v1347 = vand.u32 %v1346, 4294901760
    %v1348 = vsub.f32 %v1346, %v1347
    %v1349 = vand.u32 %v1348, 4294901760
    %1350 = vmatpush1.msra.mxu0 %v1349
    %1351 = vmatprep.subr.mxu0 0.0
    %v1352 = vand.u32 %v37, 4294901760
    %v1353 = vsub.f32 %v37, %v1352
    %v1354 = vand.u32 %v1353, 4294901760
    %v1355 = vsub.f32 %v1353, %v1354
    %v1356 = vand.u32 %v1355, 4294901760
    %1357 = vmatpush1.msra.mxu0 %v1356
    %1358 = vmatprep.subr.mxu0 0.0
    %v1359 = vand.u32 %v38, 4294901760
    %v1360 = vsub.f32 %v38, %v1359
    %v1361 = vand.u32 %v1360, 4294901760
    %v1362 = vsub.f32 %v1360, %v1361
    %v1363 = vand.u32 %v1362, 4294901760
    %1364 = vmatpush1.msra.mxu0 %v1363
    %1365 = vmatprep.subr.mxu0 0.0
    %v1366 = vand.u32 %v39, 4294901760
    %v1367 = vsub.f32 %v39, %v1366
    %v1368 = vand.u32 %v1367, 4294901760
    %v1369 = vsub.f32 %v1367, %v1368
    %v1370 = vand.u32 %v1369, 4294901760
    %1371 = vmatpush1.msra.mxu0 %v1370
    %1372 = vmatprep.subr.mxu0 0.0
    %v1373 = vand.u32 %v40, 4294901760
    %v1374 = vsub.f32 %v40, %v1373
    %v1375 = vand.u32 %v1374, 4294901760
    %v1376 = vsub.f32 %v1374, %v1375
    %v1377 = vand.u32 %v1376, 4294901760
    %1378 = vmatpush1.msra.mxu0 %v1377
    %1379 = vmatprep.subr.mxu0 0.0
    %v1380 = vand.u32 %v41, 4294901760
    %v1381 = vsub.f32 %v41, %v1380
    %v1382 = vand.u32 %v1381, 4294901760
    %v1383 = vsub.f32 %v1381, %v1382
    %v1384 = vand.u32 %v1383, 4294901760
    %1385 = vmatpush1.msra.mxu0 %v1384
    %1386 = vmatprep.subr.mxu0 0.0
    %v1387 = vand.u32 %v42, 4294901760
    %v1388 = vsub.f32 %v42, %v1387
    %v1389 = vand.u32 %v1388, 4294901760
    %v1390 = vsub.f32 %v1388, %v1389
    %v1391 = vand.u32 %v1390, 4294901760
    %1392 = vmatpush1.msra.mxu0 %v1391
    %1393 = vmatprep.subr.mxu0 0.0
    %v1394 = vand.u32 %v43, 4294901760
    %v1395 = vsub.f32 %v43, %v1394
    %v1396 = vand.u32 %v1395, 4294901760
    %v1397 = vsub.f32 %v1395, %v1396
    %v1398 = vand.u32 %v1397, 4294901760
    %1399 = vmatpush1.msra.mxu0 %v1398
    %1400 = vmatprep.subr.mxu0 0.0
    %v1401 = vand.u32 %v44, 4294901760
    %v1402 = vsub.f32 %v44, %v1401
    %v1403 = vand.u32 %v1402, 4294901760
    %v1404 = vsub.f32 %v1402, %v1403
    %v1405 = vand.u32 %v1404, 4294901760
    %1406 = vmatpush1.msra.mxu0 %v1405
    %1407 = vmatprep.subr.mxu0 0.0
    %v1408 = vand.u32 %v45, 4294901760
    %v1409 = vsub.f32 %v45, %v1408
    %v1410 = vand.u32 %v1409, 4294901760
    %v1411 = vsub.f32 %v1409, %v1410
    %v1412 = vand.u32 %v1411, 4294901760
    %1413 = vmatpush1.msra.mxu0 %v1412
    %1414 = vmatprep.subr.mxu0 0.0
    %v1415 = vand.u32 %v46, 4294901760
    %v1416 = vsub.f32 %v46, %v1415
    %v1417 = vand.u32 %v1416, 4294901760
    %v1418 = vsub.f32 %v1416, %v1417
    %v1419 = vand.u32 %v1418, 4294901760
    %1420 = vmatpush1.msra.mxu0 %v1419
    %1421 = vmatprep.subr.mxu0 0.0
    %v1422 = vand.u32 %v47, 4294901760
    %v1423 = vsub.f32 %v47, %v1422
    %v1424 = vand.u32 %v1423, 4294901760
    %v1425 = vsub.f32 %v1423, %v1424
    %v1426 = vand.u32 %v1425, 4294901760
    %1427 = vmatpush1.msra.mxu0 %v1426
    %1428 = vmatprep.subr.mxu0 0.0
    %v1429 = vand.u32 %v48, 4294901760
    %v1430 = vsub.f32 %v48, %v1429
    %v1431 = vand.u32 %v1430, 4294901760
    %v1432 = vsub.f32 %v1430, %v1431
    %v1433 = vand.u32 %v1432, 4294901760
    %1434 = vmatpush1.msra.mxu0 %v1433
    %1435 = vmatprep.subr.mxu0 0.0
    %v1436 = vand.u32 %v49, 4294901760
    %v1437 = vsub.f32 %v49, %v1436
    %v1438 = vand.u32 %v1437, 4294901760
    %v1439 = vsub.f32 %v1437, %v1438
    %v1440 = vand.u32 %v1439, 4294901760
    %1441 = vmatpush1.msra.mxu0 %v1440
    %1442 = vmatprep.subr.mxu0 0.0
    %v1443 = vand.u32 %v50, 4294901760
    %v1444 = vsub.f32 %v50, %v1443
    %v1445 = vand.u32 %v1444, 4294901760
    %v1446 = vsub.f32 %v1444, %v1445
    %v1447 = vand.u32 %v1446, 4294901760
    %1448 = vmatpush1.msra.mxu0 %v1447
    %1449 = vmatprep.subr.mxu0 0.0
    %v1450 = vand.u32 %v51, 4294901760
    %v1451 = vsub.f32 %v51, %v1450
    %v1452 = vand.u32 %v1451, 4294901760
    %v1453 = vsub.f32 %v1451, %v1452
    %v1454 = vand.u32 %v1453, 4294901760
    %1455 = vmatpush1.msra.mxu0 %v1454
    %1456 = vmatprep.subr.mxu0 0.0
    %1457 = vmatpush1.msra.mxu0 0.0
    %1458 = vmatprep.subr.mxu0 0.0
    %1459 = vmatpush1.msra.mxu0 0.0
    %1460 = vmatprep.subr.mxu0 0.0
    %1461 = vmatpush1.msra.mxu0 0.0
    %1462 = vmatprep.subr.mxu0 0.0
    %1463 = vmatpush1.msra.mxu0 0.0
    %1464 = vmatprep.subr.mxu0 0.0
    %1465 = vmatpush1.msra.mxu0 0.0
    %1466 = vmatprep.subr.mxu0 0.0
    %1467 = vmatpush1.msra.mxu0 0.0
    %1468 = vmatprep.subr.mxu0 0.0
    %1469 = vmatpush1.msra.mxu0 0.0
    %1470 = vmatprep.subr.mxu0 0.0
    %1471 = vmatpush1.msra.mxu0 0.0
    %1472 = vmatprep.subr.mxu0 0.0
    %1473 = vmatpush1.msra.mxu0 0.0
    %1474 = vmatprep.subr.mxu0 0.0
    %1475 = vmatpush1.msra.mxu0 0.0
    %1476 = vmatprep.subr.mxu0 0.0
    %1477 = vmatpush1.msra.mxu0 0.0
    %1478 = vmatprep.subr.mxu0 0.0
    %1479 = vmatpush1.msra.mxu0 0.0
    %1480 = vmatprep.subr.mxu0 0.0
    %1481 = vmatpush1.msra.mxu0 0.0
    %1482 = vmatprep.subr.mxu0 0.0
    %1483 = vmatpush1.msra.mxu0 0.0
    %1484 = vmatprep.subr.mxu0 0.0
    %1485 = vmatpush1.msra.mxu0 0.0
    %1486 = vmatprep.subr.mxu0 0.0
    %1487 = vmatpush1.msra.mxu0 0.0
    %1488 = vmatprep.mubr.f32.mxu0 0.0
    %v1489 = vand.u32 %v1241, 4294901760
    %1490 = vmatmul.mubr.f32.gmra.mrb[0].mxu0 %v1489
    %v1491 = vpop.f32.mrb[0].mxu0
    %v1492 = vadd.f32 %v1331, %v1491
    %v1493 = vpop.f32.mrb[0].mxu0
    %1494 = vmatprep.mubr.f32.mxu0 0.0
    %v1495 = vand.u32 %v1242, 4294901760
    %1496 = vmatmul.mubr.f32.gmra.mrb[0].mxu0 %v1495
    %v1497 = vpop.f32.mrb[0].mxu0
    %v1498 = vadd.f32 %v1341, %v1497
    %v1499 = vpop.f32.mrb[0].mxu0
    %1500 = vdwg.mxu0
    %1501 = vmatprep.subr.mxu0 0.0
    %v1502 = vand.u32 %v36, 4294901760
    %v1503 = vsub.f32 %v36, %v1502
    %1504 = vmatpush1.msra.mxu0 %v1503
    %1505 = vmatprep.subr.mxu0 0.0
    %v1506 = vand.u32 %v37, 4294901760
    %v1507 = vsub.f32 %v37, %v1506
    %1508 = vmatpush1.msra.mxu0 %v1507
    %1509 = vmatprep.subr.mxu0 0.0
    %v1510 = vand.u32 %v38, 4294901760
    %v1511 = vsub.f32 %v38, %v1510
    %1512 = vmatpush1.msra.mxu0 %v1511
    %1513 = vmatprep.subr.mxu0 0.0
    %v1514 = vand.u32 %v39, 4294901760
    %v1515 = vsub.f32 %v39, %v1514
    %1516 = vmatpush1.msra.mxu0 %v1515
    %1517 = vmatprep.subr.mxu0 0.0
    %v1518 = vand.u32 %v40, 4294901760
    %v1519 = vsub.f32 %v40, %v1518
    %1520 = vmatpush1.msra.mxu0 %v1519
    %1521 = vmatprep.subr.mxu0 0.0
    %v1522 = vand.u32 %v41, 4294901760
    %v1523 = vsub.f32 %v41, %v1522
    %1524 = vmatpush1.msra.mxu0 %v1523
    %1525 = vmatprep.subr.mxu0 0.0
    %v1526 = vand.u32 %v42, 4294901760
    %v1527 = vsub.f32 %v42, %v1526
    %1528 = vmatpush1.msra.mxu0 %v1527
    %1529 = vmatprep.subr.mxu0 0.0
    %v1530 = vand.u32 %v43, 4294901760
    %v1531 = vsub.f32 %v43, %v1530
    %1532 = vmatpush1.msra.mxu0 %v1531
    %1533 = vmatprep.subr.mxu0 0.0
    %v1534 = vand.u32 %v44, 4294901760
    %v1535 = vsub.f32 %v44, %v1534
    %1536 = vmatpush1.msra.mxu0 %v1535
    %1537 = vmatprep.subr.mxu0 0.0
    %v1538 = vand.u32 %v45, 4294901760
    %v1539 = vsub.f32 %v45, %v1538
    %1540 = vmatpush1.msra.mxu0 %v1539
    %1541 = vmatprep.subr.mxu0 0.0
    %v1542 = vand.u32 %v46, 4294901760
    %v1543 = vsub.f32 %v46, %v1542
    %1544 = vmatpush1.msra.mxu0 %v1543
    %1545 = vmatprep.subr.mxu0 0.0
    %v1546 = vand.u32 %v47, 4294901760
    %v1547 = vsub.f32 %v47, %v1546
    %1548 = vmatpush1.msra.mxu0 %v1547
    %1549 = vmatprep.subr.mxu0 0.0
    %v1550 = vand.u32 %v48, 4294901760
    %v1551 = vsub.f32 %v48, %v1550
    %1552 = vmatpush1.msra.mxu0 %v1551
    %1553 = vmatprep.subr.mxu0 0.0
    %v1554 = vand.u32 %v49, 4294901760
    %v1555 = vsub.f32 %v49, %v1554
    %1556 = vmatpush1.msra.mxu0 %v1555
    %1557 = vmatprep.subr.mxu0 0.0
    %v1558 = vand.u32 %v50, 4294901760
    %v1559 = vsub.f32 %v50, %v1558
    %1560 = vmatpush1.msra.mxu0 %v1559
    %1561 = vmatprep.subr.mxu0 0.0
    %v1562 = vand.u32 %v51, 4294901760
    %v1563 = vsub.f32 %v51, %v1562
    %1564 = vmatpush1.msra.mxu0 %v1563
    %1565 = vmatprep.subr.mxu0 0.0
    %1566 = vmatpush1.msra.mxu0 0.0
    %1567 = vmatprep.subr.mxu0 0.0
    %1568 = vmatpush1.msra.mxu0 0.0
    %1569 = vmatprep.subr.mxu0 0.0
    %1570 = vmatpush1.msra.mxu0 0.0
    %1571 = vmatprep.subr.mxu0 0.0
    %1572 = vmatpush1.msra.mxu0 0.0
    %1573 = vmatprep.subr.mxu0 0.0
    %1574 = vmatpush1.msra.mxu0 0.0
    %1575 = vmatprep.subr.mxu0 0.0
    %1576 = vmatpush1.msra.mxu0 0.0
    %1577 = vmatprep.subr.mxu0 0.0
    %1578 = vmatpush1.msra.mxu0 0.0
    %1579 = vmatprep.subr.mxu0 0.0
    %1580 = vmatpush1.msra.mxu0 0.0
    %1581 = vmatprep.subr.mxu0 0.0
    %1582 = vmatpush1.msra.mxu0 0.0
    %1583 = vmatprep.subr.mxu0 0.0
    %1584 = vmatpush1.msra.mxu0 0.0
    %1585 = vmatprep.subr.mxu0 0.0
    %1586 = vmatpush1.msra.mxu0 0.0
    %1587 = vmatprep.subr.mxu0 0.0
    %1588 = vmatpush1.msra.mxu0 0.0
    %1589 = vmatprep.subr.mxu0 0.0
    %1590 = vmatpush1.msra.mxu0 0.0
    %1591 = vmatprep.subr.mxu0 0.0
    %1592 = vmatpush1.msra.mxu0 0.0
    %1593 = vmatprep.subr.mxu0 0.0
    %1594 = vmatpush1.msra.mxu0 0.0
    %1595 = vmatprep.subr.mxu0 0.0
    %1596 = vmatpush1.msra.mxu0 0.0
    %1597 = vmatprep.mubr.f32.mxu0 0.0
    %v1598 = vand.u32 %v1241, 4294901760
    %v1599 = vsub.f32 %v1241, %v1598
    %1600 = vmatmul.mubr.f32.gmra.mrb[0].mxu0 %v1599
    %v1601 = vpop.f32.mrb[0].mxu0
    %v1602 = vadd.f32 %v1492, %v1601
    %v1603 = vpop.f32.mrb[0].mxu0
    %1604 = vmatprep.mubr.f32.mxu0 0.0
    %v1605 = vand.u32 %v1242, 4294901760
    %v1606 = vsub.f32 %v1242, %v1605
    %1607 = vmatmul.mubr.f32.gmra.mrb[0].mxu0 %v1606
    %v1608 = vpop.f32.mrb[0].mxu0
    %v1609 = vadd.f32 %v1498, %v1608
    %v1610 = vpop.f32.mrb[0].mxu0
    %1611 = vdwg.mxu0
    %1612 = vmatprep.subr.mxu0 0.0
    %v1613 = vand.u32 %v36, 4294901760
    %1614 = vmatpush1.msra.mxu0 %v1613
    %1615 = vmatprep.subr.mxu0 0.0
    %v1616 = vand.u32 %v37, 4294901760
    %1617 = vmatpush1.msra.mxu0 %v1616
    %1618 = vmatprep.subr.mxu0 0.0
    %v1619 = vand.u32 %v38, 4294901760
    %1620 = vmatpush1.msra.mxu0 %v1619
    %1621 = vmatprep.subr.mxu0 0.0
    %v1622 = vand.u32 %v39, 4294901760
    %1623 = vmatpush1.msra.mxu0 %v1622
    %1624 = vmatprep.subr.mxu0 0.0
    %v1625 = vand.u32 %v40, 4294901760
    %1626 = vmatpush1.msra.mxu0 %v1625
    %1627 = vmatprep.subr.mxu0 0.0
    %v1628 = vand.u32 %v41, 4294901760
    %1629 = vmatpush1.msra.mxu0 %v1628
    %1630 = vmatprep.subr.mxu0 0.0
    %v1631 = vand.u32 %v42, 4294901760
    %1632 = vmatpush1.msra.mxu0 %v1631
    %1633 = vmatprep.subr.mxu0 0.0
    %v1634 = vand.u32 %v43, 4294901760
    %1635 = vmatpush1.msra.mxu0 %v1634
    %1636 = vmatprep.subr.mxu0 0.0
    %v1637 = vand.u32 %v44, 4294901760
    %1638 = vmatpush1.msra.mxu0 %v1637
    %1639 = vmatprep.subr.mxu0 0.0
    %v1640 = vand.u32 %v45, 4294901760
    %1641 = vmatpush1.msra.mxu0 %v1640
    %1642 = vmatprep.subr.mxu0 0.0
    %v1643 = vand.u32 %v46, 4294901760
    %1644 = vmatpush1.msra.mxu0 %v1643
    %1645 = vmatprep.subr.mxu0 0.0
    %v1646 = vand.u32 %v47, 4294901760
    %1647 = vmatpush1.msra.mxu0 %v1646
    %1648 = vmatprep.subr.mxu0 0.0
    %v1649 = vand.u32 %v48, 4294901760
    %1650 = vmatpush1.msra.mxu0 %v1649
    %1651 = vmatprep.subr.mxu0 0.0
    %v1652 = vand.u32 %v49, 4294901760
    %1653 = vmatpush1.msra.mxu0 %v1652
    %1654 = vmatprep.subr.mxu0 0.0
    %v1655 = vand.u32 %v50, 4294901760
    %1656 = vmatpush1.msra.mxu0 %v1655
    %1657 = vmatprep.subr.mxu0 0.0
    %v1658 = vand.u32 %v51, 4294901760
    %1659 = vmatpush1.msra.mxu0 %v1658
    %1660 = vmatprep.subr.mxu0 0.0
    %1661 = vmatpush1.msra.mxu0 0.0
    %1662 = vmatprep.subr.mxu0 0.0
    %1663 = vmatpush1.msra.mxu0 0.0
    %1664 = vmatprep.subr.mxu0 0.0
    %1665 = vmatpush1.msra.mxu0 0.0
    %1666 = vmatprep.subr.mxu0 0.0
    %1667 = vmatpush1.msra.mxu0 0.0
    %1668 = vmatprep.subr.mxu0 0.0
    %1669 = vmatpush1.msra.mxu0 0.0
    %1670 = vmatprep.subr.mxu0 0.0
    %1671 = vmatpush1.msra.mxu0 0.0
    %1672 = vmatprep.subr.mxu0 0.0
    %1673 = vmatpush1.msra.mxu0 0.0
    %1674 = vmatprep.subr.mxu0 0.0
    %1675 = vmatpush1.msra.mxu0 0.0
    %1676 = vmatprep.subr.mxu0 0.0
    %1677 = vmatpush1.msra.mxu0 0.0
    %1678 = vmatprep.subr.mxu0 0.0
    %1679 = vmatpush1.msra.mxu0 0.0
    %1680 = vmatprep.subr.mxu0 0.0
    %1681 = vmatpush1.msra.mxu0 0.0
    %1682 = vmatprep.subr.mxu0 0.0
    %1683 = vmatpush1.msra.mxu0 0.0
    %1684 = vmatprep.subr.mxu0 0.0
    %1685 = vmatpush1.msra.mxu0 0.0
    %1686 = vmatprep.subr.mxu0 0.0
    %1687 = vmatpush1.msra.mxu0 0.0
    %1688 = vmatprep.subr.mxu0 0.0
    %1689 = vmatpush1.msra.mxu0 0.0
    %1690 = vmatprep.subr.mxu0 0.0
    %1691 = vmatpush1.msra.mxu0 0.0
    %1692 = vmatprep.mubr.f32.mxu0 0.0
    %v1693 = vand.u32 %v1241, 4294901760
    %v1694 = vsub.f32 %v1241, %v1693
    %v1695 = vand.u32 %v1694, 4294901760
    %1696 = vmatmul.mubr.f32.gmra.mrb[0].mxu0 %v1695
    %v1697 = vpop.f32.mrb[0].mxu0
    %v1698 = vadd.f32 %v1602, %v1697
    %v1699 = vpop.f32.mrb[0].mxu0
    %1700 = vmatprep.mubr.f32.mxu0 0.0
    %v1701 = vand.u32 %v1242, 4294901760
    %v1702 = vsub.f32 %v1242, %v1701
    %v1703 = vand.u32 %v1702, 4294901760
    %1704 = vmatmul.mubr.f32.gmra.mrb[0].mxu0 %v1703
    %v1705 = vpop.f32.mrb[0].mxu0
    %v1706 = vadd.f32 %v1609, %v1705
    %v1707 = vpop.f32.mrb[0].mxu0
    %1708 = vdwg.mxu0
    %1709 = vmatprep.subr.mxu0 0.0
    %v1710 = vand.u32 %v36, 4294901760
    %v1711 = vsub.f32 %v36, %v1710
    %v1712 = vand.u32 %v1711, 4294901760
    %1713 = vmatpush1.msra.mxu0 %v1712
    %1714 = vmatprep.subr.mxu0 0.0
    %v1715 = vand.u32 %v37, 4294901760
    %v1716 = vsub.f32 %v37, %v1715
    %v1717 = vand.u32 %v1716, 4294901760
    %1718 = vmatpush1.msra.mxu0 %v1717
    %1719 = vmatprep.subr.mxu0 0.0
    %v1720 = vand.u32 %v38, 4294901760
    %v1721 = vsub.f32 %v38, %v1720
    %v1722 = vand.u32 %v1721, 4294901760
    %1723 = vmatpush1.msra.mxu0 %v1722
    %1724 = vmatprep.subr.mxu0 0.0
    %v1725 = vand.u32 %v39, 4294901760
    %v1726 = vsub.f32 %v39, %v1725
    %v1727 = vand.u32 %v1726, 4294901760
    %1728 = vmatpush1.msra.mxu0 %v1727
    %1729 = vmatprep.subr.mxu0 0.0
    %v1730 = vand.u32 %v40, 4294901760
    %v1731 = vsub.f32 %v40, %v1730
    %v1732 = vand.u32 %v1731, 4294901760
    %1733 = vmatpush1.msra.mxu0 %v1732
    %1734 = vmatprep.subr.mxu0 0.0
    %v1735 = vand.u32 %v41, 4294901760
    %v1736 = vsub.f32 %v41, %v1735
    %v1737 = vand.u32 %v1736, 4294901760
    %1738 = vmatpush1.msra.mxu0 %v1737
    %1739 = vmatprep.subr.mxu0 0.0
    %v1740 = vand.u32 %v42, 4294901760
    %v1741 = vsub.f32 %v42, %v1740
    %v1742 = vand.u32 %v1741, 4294901760
    %1743 = vmatpush1.msra.mxu0 %v1742
    %1744 = vmatprep.subr.mxu0 0.0
    %v1745 = vand.u32 %v43, 4294901760
    %v1746 = vsub.f32 %v43, %v1745
    %v1747 = vand.u32 %v1746, 4294901760
    %1748 = vmatpush1.msra.mxu0 %v1747
    %1749 = vmatprep.subr.mxu0 0.0
    %v1750 = vand.u32 %v44, 4294901760
    %v1751 = vsub.f32 %v44, %v1750
    %v1752 = vand.u32 %v1751, 4294901760
    %1753 = vmatpush1.msra.mxu0 %v1752
    %1754 = vmatprep.subr.mxu0 0.0
    %v1755 = vand.u32 %v45, 4294901760
    %v1756 = vsub.f32 %v45, %v1755
    %v1757 = vand.u32 %v1756, 4294901760
    %1758 = vmatpush1.msra.mxu0 %v1757
    %1759 = vmatprep.subr.mxu0 0.0
    %v1760 = vand.u32 %v46, 4294901760
    %v1761 = vsub.f32 %v46, %v1760
    %v1762 = vand.u32 %v1761, 4294901760
    %1763 = vmatpush1.msra.mxu0 %v1762
    %1764 = vmatprep.subr.mxu0 0.0
    %v1765 = vand.u32 %v47, 4294901760
    %v1766 = vsub.f32 %v47, %v1765
    %v1767 = vand.u32 %v1766, 4294901760
    %1768 = vmatpush1.msra.mxu0 %v1767
    %1769 = vmatprep.subr.mxu0 0.0
    %v1770 = vand.u32 %v48, 4294901760
    %v1771 = vsub.f32 %v48, %v1770
    %v1772 = vand.u32 %v1771, 4294901760
    %1773 = vmatpush1.msra.mxu0 %v1772
    %1774 = vmatprep.subr.mxu0 0.0
    %v1775 = vand.u32 %v49, 4294901760
    %v1776 = vsub.f32 %v49, %v1775
    %v1777 = vand.u32 %v1776, 4294901760
    %1778 = vmatpush1.msra.mxu0 %v1777
    %1779 = vmatprep.subr.mxu0 0.0
    %v1780 = vand.u32 %v50, 4294901760
    %v1781 = vsub.f32 %v50, %v1780
    %v1782 = vand.u32 %v1781, 4294901760
    %1783 = vmatpush1.msra.mxu0 %v1782
    %1784 = vmatprep.subr.mxu0 0.0
    %v1785 = vand.u32 %v51, 4294901760
    %v1786 = vsub.f32 %v51, %v1785
    %v1787 = vand.u32 %v1786, 4294901760
    %1788 = vmatpush1.msra.mxu0 %v1787
    %1789 = vmatprep.subr.mxu0 0.0
    %1790 = vmatpush1.msra.mxu0 0.0
    %1791 = vmatprep.subr.mxu0 0.0
    %1792 = vmatpush1.msra.mxu0 0.0
    %1793 = vmatprep.subr.mxu0 0.0
    %1794 = vmatpush1.msra.mxu0 0.0
    %1795 = vmatprep.subr.mxu0 0.0
    %1796 = vmatpush1.msra.mxu0 0.0
    %1797 = vmatprep.subr.mxu0 0.0
    %1798 = vmatpush1.msra.mxu0 0.0
    %1799 = vmatprep.subr.mxu0 0.0
    %1800 = vmatpush1.msra.mxu0 0.0
    %1801 = vmatprep.subr.mxu0 0.0
    %1802 = vmatpush1.msra.mxu0 0.0
    %1803 = vmatprep.subr.mxu0 0.0
    %1804 = vmatpush1.msra.mxu0 0.0
    %1805 = vmatprep.subr.mxu0 0.0
    %1806 = vmatpush1.msra.mxu0 0.0
    %1807 = vmatprep.subr.mxu0 0.0
    %1808 = vmatpush1.msra.mxu0 0.0
    %1809 = vmatprep.subr.mxu0 0.0
    %1810 = vmatpush1.msra.mxu0 0.0
    %1811 = vmatprep.subr.mxu0 0.0
    %1812 = vmatpush1.msra.mxu0 0.0
    %1813 = vmatprep.subr.mxu0 0.0
    %1814 = vmatpush1.msra.mxu0 0.0
    %1815 = vmatprep.subr.mxu0 0.0
    %1816 = vmatpush1.msra.mxu0 0.0
    %1817 = vmatprep.subr.mxu0 0.0
    %1818 = vmatpush1.msra.mxu0 0.0
    %1819 = vmatprep.subr.mxu0 0.0
    %1820 = vmatpush1.msra.mxu0 0.0
    %1821 = vmatprep.mubr.f32.mxu0 0.0
    %v1822 = vand.u32 %v1241, 4294901760
    %1823 = vmatmul.mubr.f32.gmra.mrb[0].mxu0 %v1822
    %v1824 = vpop.f32.mrb[0].mxu0
    %v1825 = vadd.f32 %v1698, %v1824
    %v1826 = vpop.f32.mrb[0].mxu0
    %1827 = vmatprep.mubr.f32.mxu0 0.0
    %v1828 = vand.u32 %v1242, 4294901760
    %1829 = vmatmul.mubr.f32.gmra.mrb[0].mxu0 %v1828
    %v1830 = vpop.f32.mrb[0].mxu0
    %v1831 = vadd.f32 %v1706, %v1830
    %v1832 = vpop.f32.mrb[0].mxu0
    %1833 = vdwg.mxu0
    %1834 = vmatprep.subr.mxu0 0.0
    %v1835 = vand.u32 %v36, 4294901760
    %1836 = vmatpush1.msra.mxu0 %v1835
    %1837 = vmatprep.subr.mxu0 0.0
    %v1838 = vand.u32 %v37, 4294901760
    %1839 = vmatpush1.msra.mxu0 %v1838
    %1840 = vmatprep.subr.mxu0 0.0
    %v1841 = vand.u32 %v38, 4294901760
    %1842 = vmatpush1.msra.mxu0 %v1841
    %1843 = vmatprep.subr.mxu0 0.0
    %v1844 = vand.u32 %v39, 4294901760
    %1845 = vmatpush1.msra.mxu0 %v1844
    %1846 = vmatprep.subr.mxu0 0.0
    %v1847 = vand.u32 %v40, 4294901760
    %1848 = vmatpush1.msra.mxu0 %v1847
    %1849 = vmatprep.subr.mxu0 0.0
    %v1850 = vand.u32 %v41, 4294901760
    %1851 = vmatpush1.msra.mxu0 %v1850
    %1852 = vmatprep.subr.mxu0 0.0
    %v1853 = vand.u32 %v42, 4294901760
    %1854 = vmatpush1.msra.mxu0 %v1853
    %1855 = vmatprep.subr.mxu0 0.0
    %v1856 = vand.u32 %v43, 4294901760
    %1857 = vmatpush1.msra.mxu0 %v1856
    %1858 = vmatprep.subr.mxu0 0.0
    %v1859 = vand.u32 %v44, 4294901760
    %1860 = vmatpush1.msra.mxu0 %v1859
    %1861 = vmatprep.subr.mxu0 0.0
    %v1862 = vand.u32 %v45, 4294901760
    %1863 = vmatpush1.msra.mxu0 %v1862
    %1864 = vmatprep.subr.mxu0 0.0
    %v1865 = vand.u32 %v46, 4294901760
    %1866 = vmatpush1.msra.mxu0 %v1865
    %1867 = vmatprep.subr.mxu0 0.0
    %v1868 = vand.u32 %v47, 4294901760
    %1869 = vmatpush1.msra.mxu0 %v1868
    %1870 = vmatprep.subr.mxu0 0.0
    %v1871 = vand.u32 %v48, 4294901760
    %1872 = vmatpush1.msra.mxu0 %v1871
    %1873 = vmatprep.subr.mxu0 0.0
    %v1874 = vand.u32 %v49, 4294901760
    %1875 = vmatpush1.msra.mxu0 %v1874
    %1876 = vmatprep.subr.mxu0 0.0
    %v1877 = vand.u32 %v50, 4294901760
    %1878 = vmatpush1.msra.mxu0 %v1877
    %1879 = vmatprep.subr.mxu0 0.0
    %v1880 = vand.u32 %v51, 4294901760
    %1881 = vmatpush1.msra.mxu0 %v1880
    %1882 = vmatprep.subr.mxu0 0.0
    %1883 = vmatpush1.msra.mxu0 0.0
    %1884 = vmatprep.subr.mxu0 0.0
    %1885 = vmatpush1.msra.mxu0 0.0
    %1886 = vmatprep.subr.mxu0 0.0
    %1887 = vmatpush1.msra.mxu0 0.0
    %1888 = vmatprep.subr.mxu0 0.0
    %1889 = vmatpush1.msra.mxu0 0.0
    %1890 = vmatprep.subr.mxu0 0.0
    %1891 = vmatpush1.msra.mxu0 0.0
    %1892 = vmatprep.subr.mxu0 0.0
    %1893 = vmatpush1.msra.mxu0 0.0
    %1894 = vmatprep.subr.mxu0 0.0
    %1895 = vmatpush1.msra.mxu0 0.0
    %1896 = vmatprep.subr.mxu0 0.0
    %1897 = vmatpush1.msra.mxu0 0.0
    %1898 = vmatprep.subr.mxu0 0.0
    %1899 = vmatpush1.msra.mxu0 0.0
    %1900 = vmatprep.subr.mxu0 0.0
    %1901 = vmatpush1.msra.mxu0 0.0
    %1902 = vmatprep.subr.mxu0 0.0
    %1903 = vmatpush1.msra.mxu0 0.0
    %1904 = vmatprep.subr.mxu0 0.0
    %1905 = vmatpush1.msra.mxu0 0.0
    %1906 = vmatprep.subr.mxu0 0.0
    %1907 = vmatpush1.msra.mxu0 0.0
    %1908 = vmatprep.subr.mxu0 0.0
    %1909 = vmatpush1.msra.mxu0 0.0
    %1910 = vmatprep.subr.mxu0 0.0
    %1911 = vmatpush1.msra.mxu0 0.0
    %1912 = vmatprep.subr.mxu0 0.0
    %1913 = vmatpush1.msra.mxu0 0.0
    %1914 = vmatprep.mubr.f32.mxu0 0.0
    %v1915 = vand.u32 %v1241, 4294901760
    %1916 = vmatmul.mubr.f32.gmra.mrb[0].mxu0 %v1915
    %v1917 = vpop.f32.mrb[0].mxu0
    %v1918 = vadd.f32 %v1825, %v1917
    %v1919 = vpop.f32.mrb[0].mxu0
    %1920 = vmatprep.mubr.f32.mxu0 0.0
    %v1921 = vand.u32 %v1242, 4294901760
    %1922 = vmatmul.mubr.f32.gmra.mrb[0].mxu0 %v1921
    %v1923 = vpop.f32.mrb[0].mxu0
    %v1924 = vadd.f32 %v1831, %v1923
    %v1925 = vpop.f32.mrb[0].mxu0
    %1926 = vdwg.mxu0
    %v1928 = vsel %vm737, %v1918, 0
    %v1931 = vsel %vm737, %v1924, 0
    %1933 = vmatprep.subr.mxu0 0.0
    %v1934 = vand.u32 %v746, 4294901760
    %1935 = vmatpush1.msra.mxu0 %v1934
    %1936 = vmatprep.subr.mxu0 0.0
    %1937 = vmatpush1.msra.mxu0 0.0
    %1938 = vmatprep.subr.mxu0 0.0
    %1939 = vmatpush1.msra.mxu0 0.0
    %1940 = vmatprep.subr.mxu0 0.0
    %1941 = vmatpush1.msra.mxu0 0.0
    %1942 = vmatprep.subr.mxu0 0.0
    %1943 = vmatpush1.msra.mxu0 0.0
    %1944 = vmatprep.subr.mxu0 0.0
    %1945 = vmatpush1.msra.mxu0 0.0
    %1946 = vmatprep.subr.mxu0 0.0
    %1947 = vmatpush1.msra.mxu0 0.0
    %1948 = vmatprep.subr.mxu0 0.0
    %1949 = vmatpush1.msra.mxu0 0.0
    %1950 = vmatprep.subr.mxu0 0.0
    %1951 = vmatpush1.msra.mxu0 0.0
    %1952 = vmatprep.subr.mxu0 0.0
    %1953 = vmatpush1.msra.mxu0 0.0
    %1954 = vmatprep.subr.mxu0 0.0
    %1955 = vmatpush1.msra.mxu0 0.0
    %1956 = vmatprep.subr.mxu0 0.0
    %1957 = vmatpush1.msra.mxu0 0.0
    %1958 = vmatprep.subr.mxu0 0.0
    %1959 = vmatpush1.msra.mxu0 0.0
    %1960 = vmatprep.subr.mxu0 0.0
    %1961 = vmatpush1.msra.mxu0 0.0
    %1962 = vmatprep.subr.mxu0 0.0
    %1963 = vmatpush1.msra.mxu0 0.0
    %1964 = vmatprep.subr.mxu0 0.0
    %1965 = vmatpush1.msra.mxu0 0.0
    %1966 = vmatprep.subr.mxu0 0.0
    %1967 = vmatpush1.msra.mxu0 0.0
    %1968 = vmatprep.subr.mxu0 0.0
    %1969 = vmatpush1.msra.mxu0 0.0
    %1970 = vmatprep.subr.mxu0 0.0
    %1971 = vmatpush1.msra.mxu0 0.0
    %1972 = vmatprep.subr.mxu0 0.0
    %1973 = vmatpush1.msra.mxu0 0.0
    %1974 = vmatprep.subr.mxu0 0.0
    %1975 = vmatpush1.msra.mxu0 0.0
    %1976 = vmatprep.subr.mxu0 0.0
    %1977 = vmatpush1.msra.mxu0 0.0
    %1978 = vmatprep.subr.mxu0 0.0
    %1979 = vmatpush1.msra.mxu0 0.0
    %1980 = vmatprep.subr.mxu0 0.0
    %1981 = vmatpush1.msra.mxu0 0.0
    %1982 = vmatprep.subr.mxu0 0.0
    %1983 = vmatpush1.msra.mxu0 0.0
    %1984 = vmatprep.subr.mxu0 0.0
    %1985 = vmatpush1.msra.mxu0 0.0
    %1986 = vmatprep.subr.mxu0 0.0
    %1987 = vmatpush1.msra.mxu0 0.0
    %1988 = vmatprep.subr.mxu0 0.0
    %1989 = vmatpush1.msra.mxu0 0.0
    %1990 = vmatprep.subr.mxu0 0.0
    %1991 = vmatpush1.msra.mxu0 0.0
    %1992 = vmatprep.subr.mxu0 0.0
    %1993 = vmatpush1.msra.mxu0 0.0
    %1994 = vmatprep.subr.mxu0 0.0
    %1995 = vmatpush1.msra.mxu0 0.0
    %1996 = vmatprep.subr.mxu0 0.0
    %1997 = vmatpush1.msra.mxu0 0.0
    %1998 = vmatprep.mubr.f32.mxu0 0.0
    %v1999 = vand.u32 %v1928, 4294901760
    %v2000 = vsub.f32 %v1928, %v1999
    %v2001 = vand.u32 %v2000, 4294901760
    %v2002 = vsub.f32 %v2000, %v2001
    %v2003 = vand.u32 %v2002, 4294901760
    %2004 = vmatmul.mubr.f32.gmra.mrb[0].mxu0 %v2003
    %v2005 = vpop.f32.mrb[0].mxu0
    %v2006 = vadd.f32 0.0, %v2005
    %v2007 = vpop.f32.mrb[0].mxu0
    %2008 = vmatprep.mubr.f32.mxu0 0.0
    %v2009 = vand.u32 %v1931, 4294901760
    %v2010 = vsub.f32 %v1931, %v2009
    %v2011 = vand.u32 %v2010, 4294901760
    %v2012 = vsub.f32 %v2010, %v2011
    %v2013 = vand.u32 %v2012, 4294901760
    %2014 = vmatmul.mubr.f32.gmra.mrb[0].mxu0 %v2013
    %v2015 = vpop.f32.mrb[0].mxu0
    %v2016 = vadd.f32 0.0, %v2015
    %v2017 = vpop.f32.mrb[0].mxu0
    %2018 = vdwg.mxu0
    %2019 = vmatprep.subr.mxu0 0.0
    %v2020 = vand.u32 %v746, 4294901760
    %v2021 = vsub.f32 %v746, %v2020
    %v2022 = vand.u32 %v2021, 4294901760
    %v2023 = vsub.f32 %v2021, %v2022
    %v2024 = vand.u32 %v2023, 4294901760
    %2025 = vmatpush1.msra.mxu0 %v2024
    %2026 = vmatprep.subr.mxu0 0.0
    %2027 = vmatpush1.msra.mxu0 0.0
    %2028 = vmatprep.subr.mxu0 0.0
    %2029 = vmatpush1.msra.mxu0 0.0
    %2030 = vmatprep.subr.mxu0 0.0
    %2031 = vmatpush1.msra.mxu0 0.0
    %2032 = vmatprep.subr.mxu0 0.0
    %2033 = vmatpush1.msra.mxu0 0.0
    %2034 = vmatprep.subr.mxu0 0.0
    %2035 = vmatpush1.msra.mxu0 0.0
    %2036 = vmatprep.subr.mxu0 0.0
    %2037 = vmatpush1.msra.mxu0 0.0
    %2038 = vmatprep.subr.mxu0 0.0
    %2039 = vmatpush1.msra.mxu0 0.0
    %2040 = vmatprep.subr.mxu0 0.0
    %2041 = vmatpush1.msra.mxu0 0.0
    %2042 = vmatprep.subr.mxu0 0.0
    %2043 = vmatpush1.msra.mxu0 0.0
    %2044 = vmatprep.subr.mxu0 0.0
    %2045 = vmatpush1.msra.mxu0 0.0
    %2046 = vmatprep.subr.mxu0 0.0
    %2047 = vmatpush1.msra.mxu0 0.0
    %2048 = vmatprep.subr.mxu0 0.0
    %2049 = vmatpush1.msra.mxu0 0.0
    %2050 = vmatprep.subr.mxu0 0.0
    %2051 = vmatpush1.msra.mxu0 0.0
    %2052 = vmatprep.subr.mxu0 0.0
    %2053 = vmatpush1.msra.mxu0 0.0
    %2054 = vmatprep.subr.mxu0 0.0
    %2055 = vmatpush1.msra.mxu0 0.0
    %2056 = vmatprep.subr.mxu0 0.0
    %2057 = vmatpush1.msra.mxu0 0.0
    %2058 = vmatprep.subr.mxu0 0.0
    %2059 = vmatpush1.msra.mxu0 0.0
    %2060 = vmatprep.subr.mxu0 0.0
    %2061 = vmatpush1.msra.mxu0 0.0
    %2062 = vmatprep.subr.mxu0 0.0
    %2063 = vmatpush1.msra.mxu0 0.0
    %2064 = vmatprep.subr.mxu0 0.0
    %2065 = vmatpush1.msra.mxu0 0.0
    %2066 = vmatprep.subr.mxu0 0.0
    %2067 = vmatpush1.msra.mxu0 0.0
    %2068 = vmatprep.subr.mxu0 0.0
    %2069 = vmatpush1.msra.mxu0 0.0
    %2070 = vmatprep.subr.mxu0 0.0
    %2071 = vmatpush1.msra.mxu0 0.0
    %2072 = vmatprep.subr.mxu0 0.0
    %2073 = vmatpush1.msra.mxu0 0.0
    %2074 = vmatprep.subr.mxu0 0.0
    %2075 = vmatpush1.msra.mxu0 0.0
    %2076 = vmatprep.subr.mxu0 0.0
    %2077 = vmatpush1.msra.mxu0 0.0
    %2078 = vmatprep.subr.mxu0 0.0
    %2079 = vmatpush1.msra.mxu0 0.0
    %2080 = vmatprep.subr.mxu0 0.0
    %2081 = vmatpush1.msra.mxu0 0.0
    %2082 = vmatprep.subr.mxu0 0.0
    %2083 = vmatpush1.msra.mxu0 0.0
    %2084 = vmatprep.subr.mxu0 0.0
    %2085 = vmatpush1.msra.mxu0 0.0
    %2086 = vmatprep.subr.mxu0 0.0
    %2087 = vmatpush1.msra.mxu0 0.0
    %2088 = vmatprep.mubr.f32.mxu0 0.0
    %v2089 = vand.u32 %v1928, 4294901760
    %2090 = vmatmul.mubr.f32.gmra.mrb[0].mxu0 %v2089
    %v2091 = vpop.f32.mrb[0].mxu0
    %v2092 = vadd.f32 %v2006, %v2091
    %v2093 = vpop.f32.mrb[0].mxu0
    %2094 = vmatprep.mubr.f32.mxu0 0.0
    %v2095 = vand.u32 %v1931, 4294901760
    %2096 = vmatmul.mubr.f32.gmra.mrb[0].mxu0 %v2095
    %v2097 = vpop.f32.mrb[0].mxu0
    %v2098 = vadd.f32 %v2016, %v2097
    %v2099 = vpop.f32.mrb[0].mxu0
    %2100 = vdwg.mxu0
    %2101 = vmatprep.subr.mxu0 0.0
    %v2102 = vand.u32 %v746, 4294901760
    %v2103 = vsub.f32 %v746, %v2102
    %2104 = vmatpush1.msra.mxu0 %v2103
    %2105 = vmatprep.subr.mxu0 0.0
    %2106 = vmatpush1.msra.mxu0 0.0
    %2107 = vmatprep.subr.mxu0 0.0
    %2108 = vmatpush1.msra.mxu0 0.0
    %2109 = vmatprep.subr.mxu0 0.0
    %2110 = vmatpush1.msra.mxu0 0.0
    %2111 = vmatprep.subr.mxu0 0.0
    %2112 = vmatpush1.msra.mxu0 0.0
    %2113 = vmatprep.subr.mxu0 0.0
    %2114 = vmatpush1.msra.mxu0 0.0
    %2115 = vmatprep.subr.mxu0 0.0
    %2116 = vmatpush1.msra.mxu0 0.0
    %2117 = vmatprep.subr.mxu0 0.0
    %2118 = vmatpush1.msra.mxu0 0.0
    %2119 = vmatprep.subr.mxu0 0.0
    %2120 = vmatpush1.msra.mxu0 0.0
    %2121 = vmatprep.subr.mxu0 0.0
    %2122 = vmatpush1.msra.mxu0 0.0
    %2123 = vmatprep.subr.mxu0 0.0
    %2124 = vmatpush1.msra.mxu0 0.0
    %2125 = vmatprep.subr.mxu0 0.0
    %2126 = vmatpush1.msra.mxu0 0.0
    %2127 = vmatprep.subr.mxu0 0.0
    %2128 = vmatpush1.msra.mxu0 0.0
    %2129 = vmatprep.subr.mxu0 0.0
    %2130 = vmatpush1.msra.mxu0 0.0
    %2131 = vmatprep.subr.mxu0 0.0
    %2132 = vmatpush1.msra.mxu0 0.0
    %2133 = vmatprep.subr.mxu0 0.0
    %2134 = vmatpush1.msra.mxu0 0.0
    %2135 = vmatprep.subr.mxu0 0.0
    %2136 = vmatpush1.msra.mxu0 0.0
    %2137 = vmatprep.subr.mxu0 0.0
    %2138 = vmatpush1.msra.mxu0 0.0
    %2139 = vmatprep.subr.mxu0 0.0
    %2140 = vmatpush1.msra.mxu0 0.0
    %2141 = vmatprep.subr.mxu0 0.0
    %2142 = vmatpush1.msra.mxu0 0.0
    %2143 = vmatprep.subr.mxu0 0.0
    %2144 = vmatpush1.msra.mxu0 0.0
    %2145 = vmatprep.subr.mxu0 0.0
    %2146 = vmatpush1.msra.mxu0 0.0
    %2147 = vmatprep.subr.mxu0 0.0
    %2148 = vmatpush1.msra.mxu0 0.0
    %2149 = vmatprep.subr.mxu0 0.0
    %2150 = vmatpush1.msra.mxu0 0.0
    %2151 = vmatprep.subr.mxu0 0.0
    %2152 = vmatpush1.msra.mxu0 0.0
    %2153 = vmatprep.subr.mxu0 0.0
    %2154 = vmatpush1.msra.mxu0 0.0
    %2155 = vmatprep.subr.mxu0 0.0
    %2156 = vmatpush1.msra.mxu0 0.0
    %2157 = vmatprep.subr.mxu0 0.0
    %2158 = vmatpush1.msra.mxu0 0.0
    %2159 = vmatprep.subr.mxu0 0.0
    %2160 = vmatpush1.msra.mxu0 0.0
    %2161 = vmatprep.subr.mxu0 0.0
    %2162 = vmatpush1.msra.mxu0 0.0
    %2163 = vmatprep.subr.mxu0 0.0
    %2164 = vmatpush1.msra.mxu0 0.0
    %2165 = vmatprep.subr.mxu0 0.0
    %2166 = vmatpush1.msra.mxu0 0.0
    %2167 = vmatprep.mubr.f32.mxu0 0.0
    %v2168 = vand.u32 %v1928, 4294901760
    %v2169 = vsub.f32 %v1928, %v2168
    %2170 = vmatmul.mubr.f32.gmra.mrb[0].mxu0 %v2169
    %v2171 = vpop.f32.mrb[0].mxu0
    %v2172 = vadd.f32 %v2092, %v2171
    %v2173 = vpop.f32.mrb[0].mxu0
    %2174 = vmatprep.mubr.f32.mxu0 0.0
    %v2175 = vand.u32 %v1931, 4294901760
    %v2176 = vsub.f32 %v1931, %v2175
    %2177 = vmatmul.mubr.f32.gmra.mrb[0].mxu0 %v2176
    %v2178 = vpop.f32.mrb[0].mxu0
    %v2179 = vadd.f32 %v2098, %v2178
    %v2180 = vpop.f32.mrb[0].mxu0
    %2181 = vdwg.mxu0
    %2182 = vmatprep.subr.mxu0 0.0
    %v2183 = vand.u32 %v746, 4294901760
    %2184 = vmatpush1.msra.mxu0 %v2183
    %2185 = vmatprep.subr.mxu0 0.0
    %2186 = vmatpush1.msra.mxu0 0.0
    %2187 = vmatprep.subr.mxu0 0.0
    %2188 = vmatpush1.msra.mxu0 0.0
    %2189 = vmatprep.subr.mxu0 0.0
    %2190 = vmatpush1.msra.mxu0 0.0
    %2191 = vmatprep.subr.mxu0 0.0
    %2192 = vmatpush1.msra.mxu0 0.0
    %2193 = vmatprep.subr.mxu0 0.0
    %2194 = vmatpush1.msra.mxu0 0.0
    %2195 = vmatprep.subr.mxu0 0.0
    %2196 = vmatpush1.msra.mxu0 0.0
    %2197 = vmatprep.subr.mxu0 0.0
    %2198 = vmatpush1.msra.mxu0 0.0
    %2199 = vmatprep.subr.mxu0 0.0
    %2200 = vmatpush1.msra.mxu0 0.0
    %2201 = vmatprep.subr.mxu0 0.0
    %2202 = vmatpush1.msra.mxu0 0.0
    %2203 = vmatprep.subr.mxu0 0.0
    %2204 = vmatpush1.msra.mxu0 0.0
    %2205 = vmatprep.subr.mxu0 0.0
    %2206 = vmatpush1.msra.mxu0 0.0
    %2207 = vmatprep.subr.mxu0 0.0
    %2208 = vmatpush1.msra.mxu0 0.0
    %2209 = vmatprep.subr.mxu0 0.0
    %2210 = vmatpush1.msra.mxu0 0.0
    %2211 = vmatprep.subr.mxu0 0.0
    %2212 = vmatpush1.msra.mxu0 0.0
    %2213 = vmatprep.subr.mxu0 0.0
    %2214 = vmatpush1.msra.mxu0 0.0
    %2215 = vmatprep.subr.mxu0 0.0
    %2216 = vmatpush1.msra.mxu0 0.0
    %2217 = vmatprep.subr.mxu0 0.0
    %2218 = vmatpush1.msra.mxu0 0.0
    %2219 = vmatprep.subr.mxu0 0.0
    %2220 = vmatpush1.msra.mxu0 0.0
    %2221 = vmatprep.subr.mxu0 0.0
    %2222 = vmatpush1.msra.mxu0 0.0
    %2223 = vmatprep.subr.mxu0 0.0
    %2224 = vmatpush1.msra.mxu0 0.0
    %2225 = vmatprep.subr.mxu0 0.0
    %2226 = vmatpush1.msra.mxu0 0.0
    %2227 = vmatprep.subr.mxu0 0.0
    %2228 = vmatpush1.msra.mxu0 0.0
    %2229 = vmatprep.subr.mxu0 0.0
    %2230 = vmatpush1.msra.mxu0 0.0
    %2231 = vmatprep.subr.mxu0 0.0
    %2232 = vmatpush1.msra.mxu0 0.0
    %2233 = vmatprep.subr.mxu0 0.0
    %2234 = vmatpush1.msra.mxu0 0.0
    %2235 = vmatprep.subr.mxu0 0.0
    %2236 = vmatpush1.msra.mxu0 0.0
    %2237 = vmatprep.subr.mxu0 0.0
    %2238 = vmatpush1.msra.mxu0 0.0
    %2239 = vmatprep.subr.mxu0 0.0
    %2240 = vmatpush1.msra.mxu0 0.0
    %2241 = vmatprep.subr.mxu0 0.0
    %2242 = vmatpush1.msra.mxu0 0.0
    %2243 = vmatprep.subr.mxu0 0.0
    %2244 = vmatpush1.msra.mxu0 0.0
    %2245 = vmatprep.subr.mxu0 0.0
    %2246 = vmatpush1.msra.mxu0 0.0
    %2247 = vmatprep.mubr.f32.mxu0 0.0
    %v2248 = vand.u32 %v1928, 4294901760
    %v2249 = vsub.f32 %v1928, %v2248
    %v2250 = vand.u32 %v2249, 4294901760
    %2251 = vmatmul.mubr.f32.gmra.mrb[0].mxu0 %v2250
    %v2252 = vpop.f32.mrb[0].mxu0
    %v2253 = vadd.f32 %v2172, %v2252
    %v2254 = vpop.f32.mrb[0].mxu0
    %2255 = vmatprep.mubr.f32.mxu0 0.0
    %v2256 = vand.u32 %v1931, 4294901760
    %v2257 = vsub.f32 %v1931, %v2256
    %v2258 = vand.u32 %v2257, 4294901760
    %2259 = vmatmul.mubr.f32.gmra.mrb[0].mxu0 %v2258
    %v2260 = vpop.f32.mrb[0].mxu0
    %v2261 = vadd.f32 %v2179, %v2260
    %v2262 = vpop.f32.mrb[0].mxu0
    %2263 = vdwg.mxu0
    %2264 = vmatprep.subr.mxu0 0.0
    %v2265 = vand.u32 %v746, 4294901760
    %v2266 = vsub.f32 %v746, %v2265
    %v2267 = vand.u32 %v2266, 4294901760
    %2268 = vmatpush1.msra.mxu0 %v2267
    %2269 = vmatprep.subr.mxu0 0.0
    %2270 = vmatpush1.msra.mxu0 0.0
    %2271 = vmatprep.subr.mxu0 0.0
    %2272 = vmatpush1.msra.mxu0 0.0
    %2273 = vmatprep.subr.mxu0 0.0
    %2274 = vmatpush1.msra.mxu0 0.0
    %2275 = vmatprep.subr.mxu0 0.0
    %2276 = vmatpush1.msra.mxu0 0.0
    %2277 = vmatprep.subr.mxu0 0.0
    %2278 = vmatpush1.msra.mxu0 0.0
    %2279 = vmatprep.subr.mxu0 0.0
    %2280 = vmatpush1.msra.mxu0 0.0
    %2281 = vmatprep.subr.mxu0 0.0
    %2282 = vmatpush1.msra.mxu0 0.0
    %2283 = vmatprep.subr.mxu0 0.0
    %2284 = vmatpush1.msra.mxu0 0.0
    %2285 = vmatprep.subr.mxu0 0.0
    %2286 = vmatpush1.msra.mxu0 0.0
    %2287 = vmatprep.subr.mxu0 0.0
    %2288 = vmatpush1.msra.mxu0 0.0
    %2289 = vmatprep.subr.mxu0 0.0
    %2290 = vmatpush1.msra.mxu0 0.0
    %2291 = vmatprep.subr.mxu0 0.0
    %2292 = vmatpush1.msra.mxu0 0.0
    %2293 = vmatprep.subr.mxu0 0.0
    %2294 = vmatpush1.msra.mxu0 0.0
    %2295 = vmatprep.subr.mxu0 0.0
    %2296 = vmatpush1.msra.mxu0 0.0
    %2297 = vmatprep.subr.mxu0 0.0
    %2298 = vmatpush1.msra.mxu0 0.0
    %2299 = vmatprep.subr.mxu0 0.0
    %2300 = vmatpush1.msra.mxu0 0.0
    %2301 = vmatprep.subr.mxu0 0.0
    %2302 = vmatpush1.msra.mxu0 0.0
    %2303 = vmatprep.subr.mxu0 0.0
    %2304 = vmatpush1.msra.mxu0 0.0
    %2305 = vmatprep.subr.mxu0 0.0
    %2306 = vmatpush1.msra.mxu0 0.0
    %2307 = vmatprep.subr.mxu0 0.0
    %2308 = vmatpush1.msra.mxu0 0.0
    %2309 = vmatprep.subr.mxu0 0.0
    %2310 = vmatpush1.msra.mxu0 0.0
    %2311 = vmatprep.subr.mxu0 0.0
    %2312 = vmatpush1.msra.mxu0 0.0
    %2313 = vmatprep.subr.mxu0 0.0
    %2314 = vmatpush1.msra.mxu0 0.0
    %2315 = vmatprep.subr.mxu0 0.0
    %2316 = vmatpush1.msra.mxu0 0.0
    %2317 = vmatprep.subr.mxu0 0.0
    %2318 = vmatpush1.msra.mxu0 0.0
    %2319 = vmatprep.subr.mxu0 0.0
    %2320 = vmatpush1.msra.mxu0 0.0
    %2321 = vmatprep.subr.mxu0 0.0
    %2322 = vmatpush1.msra.mxu0 0.0
    %2323 = vmatprep.subr.mxu0 0.0
    %2324 = vmatpush1.msra.mxu0 0.0
    %2325 = vmatprep.subr.mxu0 0.0
    %2326 = vmatpush1.msra.mxu0 0.0
    %2327 = vmatprep.subr.mxu0 0.0
    %2328 = vmatpush1.msra.mxu0 0.0
    %2329 = vmatprep.subr.mxu0 0.0
    %2330 = vmatpush1.msra.mxu0 0.0
    %2331 = vmatprep.mubr.f32.mxu0 0.0
    %v2332 = vand.u32 %v1928, 4294901760
    %2333 = vmatmul.mubr.f32.gmra.mrb[0].mxu0 %v2332
    %v2334 = vpop.f32.mrb[0].mxu0
    %v2335 = vadd.f32 %v2253, %v2334
    %v2336 = vpop.f32.mrb[0].mxu0
    %2337 = vmatprep.mubr.f32.mxu0 0.0
    %v2338 = vand.u32 %v1931, 4294901760
    %2339 = vmatmul.mubr.f32.gmra.mrb[0].mxu0 %v2338
    %v2340 = vpop.f32.mrb[0].mxu0
    %v2341 = vadd.f32 %v2261, %v2340
    %v2342 = vpop.f32.mrb[0].mxu0
    %2343 = vdwg.mxu0
    %2344 = vmatprep.subr.mxu0 0.0
    %v2345 = vand.u32 %v746, 4294901760
    %2346 = vmatpush1.msra.mxu0 %v2345
    %2347 = vmatprep.subr.mxu0 0.0
    %2348 = vmatpush1.msra.mxu0 0.0
    %2349 = vmatprep.subr.mxu0 0.0
    %2350 = vmatpush1.msra.mxu0 0.0
    %2351 = vmatprep.subr.mxu0 0.0
    %2352 = vmatpush1.msra.mxu0 0.0
    %2353 = vmatprep.subr.mxu0 0.0
    %2354 = vmatpush1.msra.mxu0 0.0
    %2355 = vmatprep.subr.mxu0 0.0
    %2356 = vmatpush1.msra.mxu0 0.0
    %2357 = vmatprep.subr.mxu0 0.0
    %2358 = vmatpush1.msra.mxu0 0.0
    %2359 = vmatprep.subr.mxu0 0.0
    %2360 = vmatpush1.msra.mxu0 0.0
    %2361 = vmatprep.subr.mxu0 0.0
    %2362 = vmatpush1.msra.mxu0 0.0
    %2363 = vmatprep.subr.mxu0 0.0
    %2364 = vmatpush1.msra.mxu0 0.0
    %2365 = vmatprep.subr.mxu0 0.0
    %2366 = vmatpush1.msra.mxu0 0.0
    %2367 = vmatprep.subr.mxu0 0.0
    %2368 = vmatpush1.msra.mxu0 0.0
    %2369 = vmatprep.subr.mxu0 0.0
    %2370 = vmatpush1.msra.mxu0 0.0
    %2371 = vmatprep.subr.mxu0 0.0
    %2372 = vmatpush1.msra.mxu0 0.0
    %2373 = vmatprep.subr.mxu0 0.0
    %2374 = vmatpush1.msra.mxu0 0.0
    %2375 = vmatprep.subr.mxu0 0.0
    %2376 = vmatpush1.msra.mxu0 0.0
    %2377 = vmatprep.subr.mxu0 0.0
    %2378 = vmatpush1.msra.mxu0 0.0
    %2379 = vmatprep.subr.mxu0 0.0
    %2380 = vmatpush1.msra.mxu0 0.0
    %2381 = vmatprep.subr.mxu0 0.0
    %2382 = vmatpush1.msra.mxu0 0.0
    %2383 = vmatprep.subr.mxu0 0.0
    %2384 = vmatpush1.msra.mxu0 0.0
    %2385 = vmatprep.subr.mxu0 0.0
    %2386 = vmatpush1.msra.mxu0 0.0
    %2387 = vmatprep.subr.mxu0 0.0
    %2388 = vmatpush1.msra.mxu0 0.0
    %2389 = vmatprep.subr.mxu0 0.0
    %2390 = vmatpush1.msra.mxu0 0.0
    %2391 = vmatprep.subr.mxu0 0.0
    %2392 = vmatpush1.msra.mxu0 0.0
    %2393 = vmatprep.subr.mxu0 0.0
    %2394 = vmatpush1.msra.mxu0 0.0
    %2395 = vmatprep.subr.mxu0 0.0
    %2396 = vmatpush1.msra.mxu0 0.0
    %2397 = vmatprep.subr.mxu0 0.0
    %2398 = vmatpush1.msra.mxu0 0.0
    %2399 = vmatprep.subr.mxu0 0.0
    %2400 = vmatpush1.msra.mxu0 0.0
    %2401 = vmatprep.subr.mxu0 0.0
    %2402 = vmatpush1.msra.mxu0 0.0
    %2403 = vmatprep.subr.mxu0 0.0
    %2404 = vmatpush1.msra.mxu0 0.0
    %2405 = vmatprep.subr.mxu0 0.0
    %2406 = vmatpush1.msra.mxu0 0.0
    %2407 = vmatprep.subr.mxu0 0.0
    %2408 = vmatpush1.msra.mxu0 0.0
    %2409 = vmatprep.mubr.f32.mxu0 0.0
    %v2410 = vand.u32 %v1928, 4294901760
    %2411 = vmatmul.mubr.f32.gmra.mrb[0].mxu0 %v2410
    %v2412 = vpop.f32.mrb[0].mxu0
    %v2413 = vadd.f32 %v2335, %v2412
    %v2414 = vpop.f32.mrb[0].mxu0
    %2415 = vmatprep.mubr.f32.mxu0 0.0
    %v2416 = vand.u32 %v1931, 4294901760
    %2417 = vmatmul.mubr.f32.gmra.mrb[0].mxu0 %v2416
    %v2418 = vpop.f32.mrb[0].mxu0
    %v2419 = vadd.f32 %v2341, %v2418
    %v2420 = vpop.f32.mrb[0].mxu0
    %2421 = vdwg.mxu0
    %v2422 = vmul.f32 %v2413, 0.03125
    %v2423 = vmul.f32 %v2419, 0.03125
    %v2424 = vadd.f32 %v2422, 1e-05
    %v2425 = vadd.f32 %v2423, 1e-05
    %v2426 = vrsqrt.pop %v2424
    %v2427 = vrsqrt.pop %v2425
    %v2428 = vmul.f32 %v1239, %v2426
    %v2429 = vmul.f32 %v1240, %v2427
    %v2430 = vld [vmem:[%s1] sm:$0x1]
    %v2432 = vlaneseq
    %v2433 = vshrl.u32 %v2432, 7
    %v2434 = vsub.s32 0, %v2433
    %v2435 = vrot.slane %v2430, %v2434
    %v2437 = vmul.f32 %v2428, %v2435
    %v2438 = vmul.f32 %v2429, %v2435
    %v2439 = vld [vmem:[%s2] sm:$0x1]
    %v2441 = vlaneseq
    %v2442 = vshrl.u32 %v2441, 7
    %v2443 = vsub.s32 0, %v2442
    %v2444 = vrot.slane %v2439, %v2443
    %v2446 = vadd.f32 %v2437, %v2444
    %v2447 = vadd.f32 %v2438, %v2444
    %v2448 = vld [vmem:[%s5] sm:$0xf]
    %v2449 = vld [vmem:[%s5 + $0x4] sm:$0xf]
    %v2450 = vld [vmem:[%s5 + $0x8] sm:$0xf]
    %v2451 = vld [vmem:[%s5 + $0xc] sm:$0xf]
    %v2452 = vld [vmem:[%s5 + $0x10] sm:$0xf]
    %v2453 = vld [vmem:[%s5 + $0x14] sm:$0xf]
    %v2454 = vld [vmem:[%s5 + $0x18] sm:$0xf]
    %v2455 = vld [vmem:[%s5 + $0x1c] sm:$0xf]
    %v2456 = vpack.c.bf16 %v2447, %v2446
    %v2457 = vld [vmem:[%s6] sm:$0xff]
    %v2458 = vld [vmem:[%s6 + $0x8] sm:$0xff]
    %v2459 = vld [vmem:[%s6 + $0x10] sm:$0xff]
    %v2460 = vld [vmem:[%s6 + $0x18] sm:$0xff]
    %v2461 = vld [vmem:[%s6 + $0x20] sm:$0xff]
    %v2462 = vld [vmem:[%s6 + $0x28] sm:$0xff]
    %v2463 = vld [vmem:[%s6 + $0x30] sm:$0xff]
    %v2464 = vld [vmem:[%s6 + $0x38] sm:$0xff]
    %2466 = vset.pattern.permute.xlu0 0
    %2467 = vperm.xlu0 %2466, %v2457
    %v2468 = vpop.permute.xlu0 %2467
    %2471 = vset.pattern.permute.xlu0 0
    %2472 = vperm.xlu0 %2471, %v2458
    %v2473 = vpop.permute.xlu0 %2472
    %2476 = vset.pattern.permute.xlu0 0
    %2477 = vperm.xlu0 %2476, %v2459
    %v2478 = vpop.permute.xlu0 %2477
    %2481 = vset.pattern.permute.xlu0 0
    %2482 = vperm.xlu0 %2481, %v2460
    %v2483 = vpop.permute.xlu0 %2482
    %2486 = vset.pattern.permute.xlu0 0
    %2487 = vperm.xlu0 %2486, %v2461
    %v2488 = vpop.permute.xlu0 %2487
    %2491 = vset.pattern.permute.xlu0 0
    %2492 = vperm.xlu0 %2491, %v2462
    %v2493 = vpop.permute.xlu0 %2492
    %2496 = vset.pattern.permute.xlu0 0
    %2497 = vperm.xlu0 %2496, %v2463
    %v2498 = vpop.permute.xlu0 %2497
    %2501 = vset.pattern.permute.xlu0 0
    %2502 = vperm.xlu0 %2501, %v2464
    %v2503 = vpop.permute.xlu0 %2502
    %v2513 = vunpack.c.l.b16 %v2448
    %v2514 = vunpack.c.l.b16 %v2449
    %v2515 = vunpack.c.l.b16 %v2450
    %v2516 = vunpack.c.l.b16 %v2451
    %v2517 = vunpack.c.l.b16 %v2452
    %v2518 = vunpack.c.l.b16 %v2453
    %v2519 = vunpack.c.l.b16 %v2454
    %v2520 = vunpack.c.l.b16 %v2455
    %v2521 = vpack.c.b16 %v2514, %v2513
    %v2522 = vpack.c.b16 %v2516, %v2515
    %v2523 = vpack.c.b16 %v2518, %v2517
    %v2524 = vpack.c.b16 %v2520, %v2519
    %vm2525 = vcmask 130048
    %v2527 = vsel %vm2525, %v2521, 0
    %v2530 = vsel %vm2525, %v2522, 0
    %v2533 = vsel %vm2525, %v2523, 0
    %v2536 = vsel %vm2525, %v2524, 0
    %2538 = vmatprep.subr.bf16.mxu0 0
    %2539 = vmatpush1.bf16.msra.mxu0 %v2456
    %2540 = vmatprep.subr.bf16.mxu0 0
    %2541 = vmatpush1.bf16.msra.mxu0 0
    %2542 = vmatprep.subr.bf16.mxu0 0
    %2543 = vmatpush1.bf16.msra.mxu0 0
    %2544 = vmatprep.subr.bf16.mxu0 0
    %2545 = vmatpush1.bf16.msra.mxu0 0
    %2546 = vmatprep.subr.bf16.mxu0 0
    %2547 = vmatpush1.bf16.msra.mxu0 0
    %2548 = vmatprep.subr.bf16.mxu0 0
    %2549 = vmatpush1.bf16.msra.mxu0 0
    %2550 = vmatprep.subr.bf16.mxu0 0
    %2551 = vmatpush1.bf16.msra.mxu0 0
    %2552 = vmatprep.subr.bf16.mxu0 0
    %2553 = vmatpush1.bf16.msra.mxu0 0
    %2554 = vmatprep.subr.bf16.mxu0 0
    %2555 = vmatpush1.bf16.msra.mxu0 0
    %2556 = vmatprep.subr.bf16.mxu0 0
    %2557 = vmatpush1.bf16.msra.mxu0 0
    %2558 = vmatprep.subr.bf16.mxu0 0
    %2559 = vmatpush1.bf16.msra.mxu0 0
    %2560 = vmatprep.subr.bf16.mxu0 0
    %2561 = vmatpush1.bf16.msra.mxu0 0
    %2562 = vmatprep.subr.bf16.mxu0 0
    %2563 = vmatpush1.bf16.msra.mxu0 0
    %2564 = vmatprep.subr.bf16.mxu0 0
    %2565 = vmatpush1.bf16.msra.mxu0 0
    %2566 = vmatprep.subr.bf16.mxu0 0
    %2567 = vmatpush1.bf16.msra.mxu0 0
    %2568 = vmatprep.subr.bf16.mxu0 0
    %2569 = vmatpush1.bf16.msra.mxu0 0
    %2570 = vmatprep.mubr.bf16.mxu0 0
    %2571 = vmatmul.mubr.bf16.gmra.mrb[0].mxu0 %v2527
    %v2572 = vpop.f32.mrb[0].mxu0
    %v2573 = vadd.f32 %v2468, %v2572
    %v2574 = vpop.f32.mrb[0].mxu0
    %v2575 = vpop.f32.mrb[0].mxu0
    %v2576 = vadd.f32 %v2473, %v2575
    %v2577 = vpop.f32.mrb[0].mxu0
    %2578 = vmatprep.mubr.bf16.mxu0 0
    %2579 = vmatmul.mubr.bf16.gmra.mrb[0].mxu0 %v2530
    %v2580 = vpop.f32.mrb[0].mxu0
    %v2581 = vadd.f32 %v2478, %v2580
    %v2582 = vpop.f32.mrb[0].mxu0
    %v2583 = vpop.f32.mrb[0].mxu0
    %v2584 = vadd.f32 %v2483, %v2583
    %v2585 = vpop.f32.mrb[0].mxu0
    %2586 = vmatprep.mubr.bf16.mxu0 0
    %2587 = vmatmul.mubr.bf16.gmra.mrb[0].mxu0 %v2533
    %v2588 = vpop.f32.mrb[0].mxu0
    %v2589 = vadd.f32 %v2488, %v2588
    %v2590 = vpop.f32.mrb[0].mxu0
    %v2591 = vpop.f32.mrb[0].mxu0
    %v2592 = vadd.f32 %v2493, %v2591
    %v2593 = vpop.f32.mrb[0].mxu0
    %2594 = vmatprep.mubr.bf16.mxu0 0
    %2595 = vmatmul.mubr.bf16.gmra.mrb[0].mxu0 %v2536
    %v2596 = vpop.f32.mrb[0].mxu0
    %v2597 = vadd.f32 %v2498, %v2596
    %v2598 = vpop.f32.mrb[0].mxu0
    %v2599 = vpop.f32.mrb[0].mxu0
    %v2600 = vadd.f32 %v2503, %v2599
    %v2601 = vpop.f32.mrb[0].mxu0
    %2602 = vdwg.mxu0
    %v2603 = vmul.f32 %v2573, 0.5
    %v2604 = vmul.f32 %v2576, 0.5
    %v2605 = vmul.f32 %v2581, 0.5
    %v2606 = vmul.f32 %v2584, 0.5
    %v2607 = vmul.f32 %v2589, 0.5
    %v2608 = vmul.f32 %v2592, 0.5
    %v2609 = vmul.f32 %v2597, 0.5
    %v2610 = vmul.f32 %v2600, 0.5
    %v2611 = vmul.f32 %v2573, 0.70710677
    %v2612 = vmul.f32 %v2576, 0.70710677
    %v2613 = vmul.f32 %v2581, 0.70710677
    %v2614 = vmul.f32 %v2584, 0.70710677
    %v2615 = vmul.f32 %v2589, 0.70710677
    %v2616 = vmul.f32 %v2592, 0.70710677
    %v2617 = vmul.f32 %v2597, 0.70710677
    %v2618 = vmul.f32 %v2600, 0.70710677
    %v2619 = verf.f32.pop %v2611
    %v2620 = verf.f32.pop %v2612
    %v2621 = verf.f32.pop %v2613
    %v2622 = verf.f32.pop %v2614
    %v2623 = verf.f32.pop %v2615
    %v2624 = verf.f32.pop %v2616
    %v2625 = verf.f32.pop %v2617
    %v2626 = verf.f32.pop %v2618
    %v2627 = vadd.f32 %v2619, 1.0
    %v2628 = vadd.f32 %v2620, 1.0
    %v2629 = vadd.f32 %v2621, 1.0
    %v2630 = vadd.f32 %v2622, 1.0
    %v2631 = vadd.f32 %v2623, 1.0
    %v2632 = vadd.f32 %v2624, 1.0
    %v2633 = vadd.f32 %v2625, 1.0
    %v2634 = vadd.f32 %v2626, 1.0
    %v2635 = vmul.f32 %v2603, %v2627
    %v2636 = vmul.f32 %v2604, %v2628
    %v2637 = vmul.f32 %v2605, %v2629
    %v2638 = vmul.f32 %v2606, %v2630
    %v2639 = vmul.f32 %v2607, %v2631
    %v2640 = vmul.f32 %v2608, %v2632
    %v2641 = vmul.f32 %v2609, %v2633
    %v2642 = vmul.f32 %v2610, %v2634
    %v2643 = vld [vmem:[%s7] sm:$0xf]
    %v2644 = vld [vmem:[%s7 + $0x4] sm:$0xf]
    %v2645 = vpack.c.bf16 %v2636, %v2635
    %v2646 = vpack.c.bf16 %v2638, %v2637
    %v2647 = vpack.c.bf16 %v2640, %v2639
    %v2648 = vpack.c.bf16 %v2642, %v2641
    %v2649 = vld [vmem:[%s8] sm:$0xff]
    %v2650 = vld [vmem:[%s8 + $0x8] sm:$0xff]
    %2652 = vset.pattern.permute.xlu0 0
    %2653 = vperm.xlu0 %2652, %v2649
    %v2654 = vpop.permute.xlu0 %2653
    %2657 = vset.pattern.permute.xlu0 0
    %2658 = vperm.xlu0 %2657, %v2650
    %v2659 = vpop.permute.xlu0 %2658
    %v2663 = vunpack.c.l.b16 %v2643
    %v2664 = vunpack.c.l.b16 %v2644
    %v2665 = vpack.c.b16 %v2664, %v2663
    %vm2666 = vcmask 523264
    %v2668 = vsel %vm2666, %v2665, 0
    %2670 = vmatprep.subr.bf16.mxu0 0
    %2671 = vmatpush1.bf16.msra.mxu0 %v2645
    %2672 = vmatprep.subr.bf16.mxu0 0
    %2673 = vmatpush1.bf16.msra.mxu0 %v2646
    %2674 = vmatprep.subr.bf16.mxu0 0
    %2675 = vmatpush1.bf16.msra.mxu0 %v2647
    %2676 = vmatprep.subr.bf16.mxu0 0
    %2677 = vmatpush1.bf16.msra.mxu0 %v2648
    %2678 = vmatprep.subr.bf16.mxu0 0
    %2679 = vmatpush1.bf16.msra.mxu0 0
    %2680 = vmatprep.subr.bf16.mxu0 0
    %2681 = vmatpush1.bf16.msra.mxu0 0
    %2682 = vmatprep.subr.bf16.mxu0 0
    %2683 = vmatpush1.bf16.msra.mxu0 0
    %2684 = vmatprep.subr.bf16.mxu0 0
    %2685 = vmatpush1.bf16.msra.mxu0 0
    %2686 = vmatprep.subr.bf16.mxu0 0
    %2687 = vmatpush1.bf16.msra.mxu0 0
    %2688 = vmatprep.subr.bf16.mxu0 0
    %2689 = vmatpush1.bf16.msra.mxu0 0
    %2690 = vmatprep.subr.bf16.mxu0 0
    %2691 = vmatpush1.bf16.msra.mxu0 0
    %2692 = vmatprep.subr.bf16.mxu0 0
    %2693 = vmatpush1.bf16.msra.mxu0 0
    %2694 = vmatprep.subr.bf16.mxu0 0
    %2695 = vmatpush1.bf16.msra.mxu0 0
    %2696 = vmatprep.subr.bf16.mxu0 0
    %2697 = vmatpush1.bf16.msra.mxu0 0
    %2698 = vmatprep.subr.bf16.mxu0 0
    %2699 = vmatpush1.bf16.msra.mxu0 0
    %2700 = vmatprep.subr.bf16.mxu0 0
    %2701 = vmatpush1.bf16.msra.mxu0 0
    %2702 = vmatprep.mubr.bf16.mxu0 0
    %2703 = vmatmul.mubr.bf16.gmra.mrb[0].mxu0 %v2668
    %v2704 = vpop.f32.mrb[0].mxu0
    %v2705 = vadd.f32 %v2654, %v2704
    %v2706 = vpop.f32.mrb[0].mxu0
    %v2707 = vpop.f32.mrb[0].mxu0
    %v2708 = vadd.f32 %v2659, %v2707
    %v2709 = vpop.f32.mrb[0].mxu0
    %2710 = vdwg.mxu0
    %v2711 = vadd.f32 %v2705, %v34
    %v2712 = vadd.f32 %v2708, %v35
    %2713 = vst [vmem:[#allocation2] sm:$0xff] %v2711
    %2714 = vst [vmem:[#allocation2 + $0x8] sm:$0xff] %v2712
    // Predicated region
    $region38: #{tpu_custom_call.1} parent=1 // pred_check
      _
    $region39: #{tpu_custom_call.1} parent=1 // pred_check_branch
      %2716 = sbr.rel (0) target = $region41
    $region40: #{tpu_custom_call.1} parent=1 // pred_region
      %s2718 = ssub.s32 256, 256
      %2719 = vsyncadd [#allocation3], %s2718
      %s2720 = sshll.u32 [#allocation2], 4
      %s2721 = int_to_ptr.vmem [resolvable:$true] %s2720
      %2726 = dma.vmem_to_hbm [thread:$0]  %s2721, 256, %s9, [#allocation3], 128, 128, 8
    $region41: #{tpu_custom_call.1} parent=1 // pred_fallthru
      _
    // Predicated region
    $region42: #{tpu_custom_call.1} parent=1 // pred_check
      _
    $region43: #{tpu_custom_call.1} parent=1 // pred_check_branch
      %2728 = sbr.rel (0) target = $region45
    $region44: #{tpu_custom_call.1} parent=1 // pred_region
      %2729 = dma.done [#allocation3], 256
    $region45: #{tpu_custom_call.1} parent=1 // pred_fallthru
      _
    %2730 = vsyncpa [#allocation3], 1

// kernel: tpu_custom_call.1
$region0: #{tpu_custom_call.1}
  #allocation0 [shape = 'u32[]', space=smem, size = 0x4, offset = 0x4, fixed_abs, tag = 'smem constant byte address 0x4 - core index']
  #allocation1 [shape = 'u32[144,128]{1,0:T(1,128)}', space=vmem, size = 0x12000, scoped, tag = 'internal scratch']
  %s0 = inlined_call_operand.vmem [shape: f32[16,128], index: 0, kind: input, shape index: {}]
  %s1 = inlined_call_operand.vmem [shape: f32[1,128], index: 1, kind: input, shape index: {}]
  %s2 = inlined_call_operand.vmem [shape: f32[1,128], index: 2, kind: input, shape index: {}]
  %s3 = inlined_call_operand.vmem [shape: f32[128,4], index: 3, kind: input, shape index: {}]
  %s4 = inlined_call_operand.vmem [shape: f32[4,128], index: 4, kind: input, shape index: {}]
  %s5 = inlined_call_operand.vmem [shape: bf16[64,16], index: 5, kind: input, shape index: {}]
  %s6 = inlined_call_operand.vmem [shape: f32[64,1], index: 6, kind: input, shape index: {}]
  %s7 = inlined_call_operand.vmem [shape: bf16[16,64], index: 7, kind: input, shape index: {}]
  %s8 = inlined_call_operand.vmem [shape: f32[16,1], index: 8, kind: input, shape index: {}]
  %s9 = inlined_call_operand.hbm [shape: f32[16,128], index: 9, kind: output, shape index: {}]
  %s10 = sld [smem:[#allocation0]]
  $region46: #{tpu_custom_call.1} parent=0
    _
  %s12 = ssub.s32 1, %s10
  %s13 = scalar_select 0, %s12, %s10
  $region1: #{tpu_custom_call.1} parent=0
    #allocation2 [shape = 'u8[8192]{0}', space=vmem, size = 0x2000, scoped, tag = 'output window, operand 0, single buffered']
    #allocation3 [shape = 's32[1]{0}', space=sflag, size = 0x4, scoped, tag = 'scoped memory for tpu_custom_call.1']
    %14 = vsyncpa [#allocation3], 0
    // Predicated region
    $region2: #{tpu_custom_call.1} parent=1 // pred_check
      _
    $region3: #{tpu_custom_call.1} parent=1 // pred_check_branch
      %16 = sbr.rel (0) target = $region5
    $region4: #{tpu_custom_call.1} parent=1 // pred_region
      _
    $region5: #{tpu_custom_call.1} parent=1 // pred_fallthru
      _
    // Predicated region
    $region6: #{tpu_custom_call.1} parent=1 // pred_check
      _
    $region7: #{tpu_custom_call.1} parent=1 // pred_check_branch
      %18 = sbr.rel (0) target = $region9
    $region8: #{tpu_custom_call.1} parent=1 // pred_region
      _
    $region9: #{tpu_custom_call.1} parent=1 // pred_fallthru
      _
    // Predicated region
    $region10: #{tpu_custom_call.1} parent=1 // pred_check
      _
    $region11: #{tpu_custom_call.1} parent=1 // pred_check_branch
      %20 = sbr.rel (0) target = $region13
    $region12: #{tpu_custom_call.1} parent=1 // pred_region
      _
    $region13: #{tpu_custom_call.1} parent=1 // pred_fallthru
      _
    // Predicated region
    $region14: #{tpu_custom_call.1} parent=1 // pred_check
      _
    $region15: #{tpu_custom_call.1} parent=1 // pred_check_branch
      %22 = sbr.rel (0) target = $region17
    $region16: #{tpu_custom_call.1} parent=1 // pred_region
      _
    $region17: #{tpu_custom_call.1} parent=1 // pred_fallthru
      _
    // Predicated region
    $region18: #{tpu_custom_call.1} parent=1 // pred_check
      _
    $region19: #{tpu_custom_call.1} parent=1 // pred_check_branch
      %24 = sbr.rel (0) target = $region21
    $region20: #{tpu_custom_call.1} parent=1 // pred_region
      _
    $region21: #{tpu_custom_call.1} parent=1 // pred_fallthru
      _
    // Predicated region
    $region22: #{tpu_custom_call.1} parent=1 // pred_check
      _
    $region23: #{tpu_custom_call.1} parent=1 // pred_check_branch
      %26 = sbr.rel (0) target = $region25
    $region24: #{tpu_custom_call.1} parent=1 // pred_region
      _
    $region25: #{tpu_custom_call.1} parent=1 // pred_fallthru
      _
    // Predicated region
    $region26: #{tpu_custom_call.1} parent=1 // pred_check
      _
    $region27: #{tpu_custom_call.1} parent=1 // pred_check_branch
      %28 = sbr.rel (0) target = $region29
    $region28: #{tpu_custom_call.1} parent=1 // pred_region
      _
    $region29: #{tpu_custom_call.1} parent=1 // pred_fallthru
      _
    // Predicated region
    $region30: #{tpu_custom_call.1} parent=1 // pred_check
      _
    $region31: #{tpu_custom_call.1} parent=1 // pred_check_branch
      %30 = sbr.rel (0) target = $region33
    $region32: #{tpu_custom_call.1} parent=1 // pred_region
      _
    $region33: #{tpu_custom_call.1} parent=1 // pred_fallthru
      _
    // Predicated region
    $region34: #{tpu_custom_call.1} parent=1 // pred_check
      _
    $region35: #{tpu_custom_call.1} parent=1 // pred_check_branch
      %32 = sbr.rel (0) target = $region37
    $region36: #{tpu_custom_call.1} parent=1 // pred_region
      _
    $region37: #{tpu_custom_call.1} parent=1 // pred_fallthru
      _
    %v34 = vld [vmem:[%s0] sm:$0xff]
    %v35 = vld [vmem:[%s0 + $0x8] sm:$0xff]
    %v36 = vld [vmem:[%s3] sm:$0xff]
    %v37 = vld [vmem:[%s3 + $0x8] sm:$0xff]
    %v38 = vld [vmem:[%s3 + $0x10] sm:$0xff]
    %v39 = vld [vmem:[%s3 + $0x18] sm:$0xff]
    %v40 = vld [vmem:[%s3 + $0x20] sm:$0xff]
    %v41 = vld [vmem:[%s3 + $0x28] sm:$0xff]
    %v42 = vld [vmem:[%s3 + $0x30] sm:$0xff]
    %v43 = vld [vmem:[%s3 + $0x38] sm:$0xff]
    %v44 = vld [vmem:[%s3 + $0x40] sm:$0xff]
    %v45 = vld [vmem:[%s3 + $0x48] sm:$0xff]
    %v46 = vld [vmem:[%s3 + $0x50] sm:$0xff]
    %v47 = vld [vmem:[%s3 + $0x58] sm:$0xff]
    %v48 = vld [vmem:[%s3 + $0x60] sm:$0xff]
    %v49 = vld [vmem:[%s3 + $0x68] sm:$0xff]
    %v50 = vld [vmem:[%s3 + $0x70] sm:$0xff]
    %v51 = vld [vmem:[%s3 + $0x78] sm:$0xff]
    %52 = vmatprep.subr.mxu0 0.0
    %v53 = vand.u32 %v36, 4294901760
    %54 = vmatpush1.msra.mxu0 %v53
    %55 = vmatprep.subr.mxu0 0.0
    %v56 = vand.u32 %v37, 4294901760
    %57 = vmatpush1.msra.mxu0 %v56
    %58 = vmatprep.subr.mxu0 0.0
    %v59 = vand.u32 %v38, 4294901760
    %60 = vmatpush1.msra.mxu0 %v59
    %61 = vmatprep.subr.mxu0 0.0
    %v62 = vand.u32 %v39, 4294901760
    %63 = vmatpush1.msra.mxu0 %v62
    %64 = vmatprep.subr.mxu0 0.0
    %v65 = vand.u32 %v40, 4294901760
    %66 = vmatpush1.msra.mxu0 %v65
    %67 = vmatprep.subr.mxu0 0.0
    %v68 = vand.u32 %v41, 4294901760
    %69 = vmatpush1.msra.mxu0 %v68
    %70 = vmatprep.subr.mxu0 0.0
    %v71 = vand.u32 %v42, 4294901760
    %72 = vmatpush1.msra.mxu0 %v71
    %73 = vmatprep.subr.mxu0 0.0
    %v74 = vand.u32 %v43, 4294901760
    %75 = vmatpush1.msra.mxu0 %v74
    %76 = vmatprep.subr.mxu0 0.0
    %v77 = vand.u32 %v44, 4294901760
    %78 = vmatpush1.msra.mxu0 %v77
    %79 = vmatprep.subr.mxu0 0.0
    %v80 = vand.u32 %v45, 4294901760
    %81 = vmatpush1.msra.mxu0 %v80
    %82 = vmatprep.subr.mxu0 0.0
    %v83 = vand.u32 %v46, 4294901760
    %84 = vmatpush1.msra.mxu0 %v83
    %85 = vmatprep.subr.mxu0 0.0
    %v86 = vand.u32 %v47, 4294901760
    %87 = vmatpush1.msra.mxu0 %v86
    %88 = vmatprep.subr.mxu0 0.0
    %v89 = vand.u32 %v48, 4294901760
    %90 = vmatpush1.msra.mxu0 %v89
    %91 = vmatprep.subr.mxu0 0.0
    %v92 = vand.u32 %v49, 4294901760
    %93 = vmatpush1.msra.mxu0 %v92
    %94 = vmatprep.subr.mxu0 0.0
    %v95 = vand.u32 %v50, 4294901760
    %96 = vmatpush1.msra.mxu0 %v95
    %97 = vmatprep.subr.mxu0 0.0
    %v98 = vand.u32 %v51, 4294901760
    %99 = vmatpush1.msra.mxu0 %v98
    %100 = vmatprep.subr.mxu0 0.0
    %101 = vmatpush1.msra.mxu0 0.0
    %102 = vmatprep.subr.mxu0 0.0
    %103 = vmatpush1.msra.mxu0 0.0
    %104 = vmatprep.subr.mxu0 0.0
    %105 = vmatpush1.msra.mxu0 0.0
    %106 = vmatprep.subr.mxu0 0.0
    %107 = vmatpush1.msra.mxu0 0.0
    %108 = vmatprep.subr.mxu0 0.0
    %109 = vmatpush1.msra.mxu0 0.0
    %110 = vmatprep.subr.mxu0 0.0
    %111 = vmatpush1.msra.mxu0 0.0
    %112 = vmatprep.subr.mxu0 0.0
    %113 = vmatpush1.msra.mxu0 0.0
    %114 = vmatprep.subr.mxu0 0.0
    %115 = vmatpush1.msra.mxu0 0.0
    %116 = vmatprep.subr.mxu0 0.0
    %117 = vmatpush1.msra.mxu0 0.0
    %118 = vmatprep.subr.mxu0 0.0
    %119 = vmatpush1.msra.mxu0 0.0
    %120 = vmatprep.subr.mxu0 0.0
    %121 = vmatpush1.msra.mxu0 0.0
    %122 = vmatprep.subr.mxu0 0.0
    %123 = vmatpush1.msra.mxu0 0.0
    %124 = vmatprep.subr.mxu0 0.0
    %125 = vmatpush1.msra.mxu0 0.0
    %126 = vmatprep.subr.mxu0 0.0
    %127 = vmatpush1.msra.mxu0 0.0
    %128 = vmatprep.subr.mxu0 0.0
    %129 = vmatpush1.msra.mxu0 0.0
    %130 = vmatprep.subr.mxu0 0.0
    %131 = vmatpush1.msra.mxu0 0.0
    %132 = vmatprep.mubr.f32.mxu0 0.0
    %v133 = vand.u32 %v34, 4294901760
    %v134 = vsub.f32 %v34, %v133
    %v135 = vand.u32 %v134, 4294901760
    %v136 = vsub.f32 %v134, %v135
    %v137 = vand.u32 %v136, 4294901760
    %138 = vmatmul.mubr.f32.gmra.mrb[0].mxu0 %v137
    %v139 = vpop.f32.mrb[0].mxu0
    %v140 = vadd.f32 0.0, %v139
    %v141 = vpop.f32.mrb[0].mxu0
    %142 = vmatprep.mubr.f32.mxu0 0.0
    %v143 = vand.u32 %v35, 4294901760
    %v144 = vsub.f32 %v35, %v143
    %v145 = vand.u32 %v144, 4294901760
    %v146 = vsub.f32 %v144, %v145
    %v147 = vand.u32 %v146, 4294901760
    %148 = vmatmul.mubr.f32.gmra.mrb[0].mxu0 %v147
    %v149 = vpop.f32.mrb[0].mxu0
    %v150 = vadd.f32 0.0, %v149
    %v151 = vpop.f32.mrb[0].mxu0
    %152 = vdwg.mxu0
    %153 = vmatprep.subr.mxu0 0.0
    %v154 = vand.u32 %v36, 4294901760
    %v155 = vsub.f32 %v36, %v154
    %v156 = vand.u32 %v155, 4294901760
    %v157 = vsub.f32 %v155, %v156
    %v158 = vand.u32 %v157, 4294901760
    %159 = vmatpush1.msra.mxu0 %v158
    %160 = vmatprep.subr.mxu0 0.0
    %v161 = vand.u32 %v37, 4294901760
    %v162 = vsub.f32 %v37, %v161
    %v163 = vand.u32 %v162, 4294901760
    %v164 = vsub.f32 %v162, %v163
    %v165 = vand.u32 %v164, 4294901760
    %166 = vmatpush1.msra.mxu0 %v165
    %167 = vmatprep.subr.mxu0 0.0
    %v168 = vand.u32 %v38, 4294901760
    %v169 = vsub.f32 %v38, %v168
    %v170 = vand.u32 %v169, 4294901760
    %v171 = vsub.f32 %v169, %v170
    %v172 = vand.u32 %v171, 4294901760
    %173 = vmatpush1.msra.mxu0 %v172
    %174 = vmatprep.subr.mxu0 0.0
    %v175 = vand.u32 %v39, 4294901760
    %v176 = vsub.f32 %v39, %v175
    %v177 = vand.u32 %v176, 4294901760
    %v178 = vsub.f32 %v176, %v177
    %v179 = vand.u32 %v178, 4294901760
    %180 = vmatpush1.msra.mxu0 %v179
    %181 = vmatprep.subr.mxu0 0.0
    %v182 = vand.u32 %v40, 4294901760
    %v183 = vsub.f32 %v40, %v182
    %v184 = vand.u32 %v183, 4294901760
    %v185 = vsub.f32 %v183, %v184
    %v186 = vand.u32 %v185, 4294901760
    %187 = vmatpush1.msra.mxu0 %v186
    %188 = vmatprep.subr.mxu0 0.0
    %v189 = vand.u32 %v41, 4294901760
    %v190 = vsub.f32 %v41, %v189
    %v191 = vand.u32 %v190, 4294901760
    %v192 = vsub.f32 %v190, %v191
    %v193 = vand.u32 %v192, 4294901760
    %194 = vmatpush1.msra.mxu0 %v193
    %195 = vmatprep.subr.mxu0 0.0
    %v196 = vand.u32 %v42, 4294901760
    %v197 = vsub.f32 %v42, %v196
    %v198 = vand.u32 %v197, 4294901760
    %v199 = vsub.f32 %v197, %v198
    %v200 = vand.u32 %v199, 4294901760
    %201 = vmatpush1.msra.mxu0 %v200
    %202 = vmatprep.subr.mxu0 0.0
    %v203 = vand.u32 %v43, 4294901760
    %v204 = vsub.f32 %v43, %v203
    %v205 = vand.u32 %v204, 4294901760
    %v206 = vsub.f32 %v204, %v205
    %v207 = vand.u32 %v206, 4294901760
    %208 = vmatpush1.msra.mxu0 %v207
    %209 = vmatprep.subr.mxu0 0.0
    %v210 = vand.u32 %v44, 4294901760
    %v211 = vsub.f32 %v44, %v210
    %v212 = vand.u32 %v211, 4294901760
    %v213 = vsub.f32 %v211, %v212
    %v214 = vand.u32 %v213, 4294901760
    %215 = vmatpush1.msra.mxu0 %v214
    %216 = vmatprep.subr.mxu0 0.0
    %v217 = vand.u32 %v45, 4294901760
    %v218 = vsub.f32 %v45, %v217
    %v219 = vand.u32 %v218, 4294901760
    %v220 = vsub.f32 %v218, %v219
    %v221 = vand.u32 %v220, 4294901760
    %222 = vmatpush1.msra.mxu0 %v221
    %223 = vmatprep.subr.mxu0 0.0
    %v224 = vand.u32 %v46, 4294901760
    %v225 = vsub.f32 %v46, %v224
    %v226 = vand.u32 %v225, 4294901760
    %v227 = vsub.f32 %v225, %v226
    %v228 = vand.u32 %v227, 4294901760
    %229 = vmatpush1.msra.mxu0 %v228
    %230 = vmatprep.subr.mxu0 0.0
    %v231 = vand.u32 %v47, 4294901760
    %v232 = vsub.f32 %v47, %v231
    %v233 = vand.u32 %v232, 4294901760
    %v234 = vsub.f32 %v232, %v233
    %v235 = vand.u32 %v234, 4294901760
    %236 = vmatpush1.msra.mxu0 %v235
    %237 = vmatprep.subr.mxu0 0.0
    %v238 = vand.u32 %v48, 4294901760
    %v239 = vsub.f32 %v48, %v238
    %v240 = vand.u32 %v239, 4294901760
    %v241 = vsub.f32 %v239, %v240
    %v242 = vand.u32 %v241, 4294901760
    %243 = vmatpush1.msra.mxu0 %v242
    %244 = vmatprep.subr.mxu0 0.0
    %v245 = vand.u32 %v49, 4294901760
    %v246 = vsub.f32 %v49, %v245
    %v247 = vand.u32 %v246, 4294901760
    %v248 = vsub.f32 %v246, %v247
    %v249 = vand.u32 %v248, 4294901760
    %250 = vmatpush1.msra.mxu0 %v249
    %251 = vmatprep.subr.mxu0 0.0
    %v252 = vand.u32 %v50, 4294901760
    %v253 = vsub.f32 %v50, %v252
    %v254 = vand.u32 %v253, 4294901760
    %v255 = vsub.f32 %v253, %v254
    %v256 = vand.u32 %v255, 4294901760
    %257 = vmatpush1.msra.mxu0 %v256
    %258 = vmatprep.subr.mxu0 0.0
    %v259 = vand.u32 %v51, 4294901760
    %v260 = vsub.f32 %v51, %v259
    %v261 = vand.u32 %v260, 4294901760
    %v262 = vsub.f32 %v260, %v261
    %v263 = vand.u32 %v262, 4294901760
    %264 = vmatpush1.msra.mxu0 %v263
    %265 = vmatprep.subr.mxu0 0.0
    %266 = vmatpush1.msra.mxu0 0.0
    %267 = vmatprep.subr.mxu0 0.0
    %268 = vmatpush1.msra.mxu0 0.0
    %269 = vmatprep.subr.mxu0 0.0
    %270 = vmatpush1.msra.mxu0 0.0
    %271 = vmatprep.subr.mxu0 0.0
    %272 = vmatpush1.msra.mxu0 0.0
    %273 = vmatprep.subr.mxu0 0.0
    %274 = vmatpush1.msra.mxu0 0.0
    %275 = vmatprep.subr.mxu0 0.0
    %276 = vmatpush1.msra.mxu0 0.0
    %277 = vmatprep.subr.mxu0 0.0
    %278 = vmatpush1.msra.mxu0 0.0
    %279 = vmatprep.subr.mxu0 0.0
    %280 = vmatpush1.msra.mxu0 0.0
    %281 = vmatprep.subr.mxu0 0.0
    %282 = vmatpush1.msra.mxu0 0.0
    %283 = vmatprep.subr.mxu0 0.0
    %284 = vmatpush1.msra.mxu0 0.0
    %285 = vmatprep.subr.mxu0 0.0
    %286 = vmatpush1.msra.mxu0 0.0
    %287 = vmatprep.subr.mxu0 0.0
    %288 = vmatpush1.msra.mxu0 0.0
    %289 = vmatprep.subr.mxu0 0.0
    %290 = vmatpush1.msra.mxu0 0.0
    %291 = vmatprep.subr.mxu0 0.0
    %292 = vmatpush1.msra.mxu0 0.0
    %293 = vmatprep.subr.mxu0 0.0
    %294 = vmatpush1.msra.mxu0 0.0
    %295 = vmatprep.subr.mxu0 0.0
    %296 = vmatpush1.msra.mxu0 0.0
    %297 = vmatprep.mubr.f32.mxu0 0.0
    %v298 = vand.u32 %v34, 4294901760
    %299 = vmatmul.mubr.f32.gmra.mrb[0].mxu0 %v298
    %v300 = vpop.f32.mrb[0].mxu0
    %v301 = vadd.f32 %v140, %v300
    %v302 = vpop.f32.mrb[0].mxu0
    %303 = vmatprep.mubr.f32.mxu0 0.0
    %v304 = vand.u32 %v35, 4294901760
    %305 = vmatmul.mubr.f32.gmra.mrb[0].mxu0 %v304
    %v306 = vpop.f32.mrb[0].mxu0
    %v307 = vadd.f32 %v150, %v306
    %v308 = vpop.f32.mrb[0].mxu0
    %309 = vdwg.mxu0
    %310 = vmatprep.subr.mxu0 0.0
    %v311 = vand.u32 %v36, 4294901760
    %v312 = vsub.f32 %v36, %v311
    %313 = vmatpush1.msra.mxu0 %v312
    %314 = vmatprep.subr.mxu0 0.0
    %v315 = vand.u32 %v37, 4294901760
    %v316 = vsub.f32 %v37, %v315
    %317 = vmatpush1.msra.mxu0 %v316
    %318 = vmatprep.subr.mxu0 0.0
    %v319 = vand.u32 %v38, 4294901760
    %v320 = vsub.f32 %v38, %v319
    %321 = vmatpush1.msra.mxu0 %v320
    %322 = vmatprep.subr.mxu0 0.0
    %v323 = vand.u32 %v39, 4294901760
    %v324 = vsub.f32 %v39, %v323
    %325 = vmatpush1.msra.mxu0 %v324
    %326 = vmatprep.subr.mxu0 0.0
    %v327 = vand.u32 %v40, 4294901760
    %v328 = vsub.f32 %v40, %v327
    %329 = vmatpush1.msra.mxu0 %v328
    %330 = vmatprep.subr.mxu0 0.0
    %v331 = vand.u32 %v41, 4294901760
    %v332 = vsub.f32 %v41, %v331
    %333 = vmatpush1.msra.mxu0 %v332
    %334 = vmatprep.subr.mxu0 0.0
    %v335 = vand.u32 %v42, 4294901760
    %v336 = vsub.f32 %v42, %v335
    %337 = vmatpush1.msra.mxu0 %v336
    %338 = vmatprep.subr.mxu0 0.0
    %v339 = vand.u32 %v43, 4294901760
    %v340 = vsub.f32 %v43, %v339
    %341 = vmatpush1.msra.mxu0 %v340
    %342 = vmatprep.subr.mxu0 0.0
    %v343 = vand.u32 %v44, 4294901760
    %v344 = vsub.f32 %v44, %v343
    %345 = vmatpush1.msra.mxu0 %v344
    %346 = vmatprep.subr.mxu0 0.0
    %v347 = vand.u32 %v45, 4294901760
    %v348 = vsub.f32 %v45, %v347
    %349 = vmatpush1.msra.mxu0 %v348
    %350 = vmatprep.subr.mxu0 0.0
    %v351 = vand.u32 %v46, 4294901760
    %v352 = vsub.f32 %v46, %v351
    %353 = vmatpush1.msra.mxu0 %v352
    %354 = vmatprep.subr.mxu0 0.0
    %v355 = vand.u32 %v47, 4294901760
    %v356 = vsub.f32 %v47, %v355
    %357 = vmatpush1.msra.mxu0 %v356
    %358 = vmatprep.subr.mxu0 0.0
    %v359 = vand.u32 %v48, 4294901760
    %v360 = vsub.f32 %v48, %v359
    %361 = vmatpush1.msra.mxu0 %v360
    %362 = vmatprep.subr.mxu0 0.0
    %v363 = vand.u32 %v49, 4294901760
    %v364 = vsub.f32 %v49, %v363
    %365 = vmatpush1.msra.mxu0 %v364
    %366 = vmatprep.subr.mxu0 0.0
    %v367 = vand.u32 %v50, 4294901760
    %v368 = vsub.f32 %v50, %v367
    %369 = vmatpush1.msra.mxu0 %v368
    %370 = vmatprep.subr.mxu0 0.0
    %v371 = vand.u32 %v51, 4294901760
    %v372 = vsub.f32 %v51, %v371
    %373 = vmatpush1.msra.mxu0 %v372
    %374 = vmatprep.subr.mxu0 0.0
    %375 = vmatpush1.msra.mxu0 0.0
    %376 = vmatprep.subr.mxu0 0.0
    %377 = vmatpush1.msra.mxu0 0.0
    %378 = vmatprep.subr.mxu0 0.0
    %379 = vmatpush1.msra.mxu0 0.0
    %380 = vmatprep.subr.mxu0 0.0
    %381 = vmatpush1.msra.mxu0 0.0
    %382 = vmatprep.subr.mxu0 0.0
    %383 = vmatpush1.msra.mxu0 0.0
    %384 = vmatprep.subr.mxu0 0.0
    %385 = vmatpush1.msra.mxu0 0.0
    %386 = vmatprep.subr.mxu0 0.0
    %387 = vmatpush1.msra.mxu0 0.0
    %388 = vmatprep.subr.mxu0 0.0
    %389 = vmatpush1.msra.mxu0 0.0
    %390 = vmatprep.subr.mxu0 0.0
    %391 = vmatpush1.msra.mxu0 0.0
    %392 = vmatprep.subr.mxu0 0.0
    %393 = vmatpush1.msra.mxu0 0.0
    %394 = vmatprep.subr.mxu0 0.0
    %395 = vmatpush1.msra.mxu0 0.0
    %396 = vmatprep.subr.mxu0 0.0
    %397 = vmatpush1.msra.mxu0 0.0
    %398 = vmatprep.subr.mxu0 0.0
    %399 = vmatpush1.msra.mxu0 0.0
    %400 = vmatprep.subr.mxu0 0.0
    %401 = vmatpush1.msra.mxu0 0.0
    %402 = vmatprep.subr.mxu0 0.0
    %403 = vmatpush1.msra.mxu0 0.0
    %404 = vmatprep.subr.mxu0 0.0
    %405 = vmatpush1.msra.mxu0 0.0
    %406 = vmatprep.mubr.f32.mxu0 0.0
    %v407 = vand.u32 %v34, 4294901760
    %v408 = vsub.f32 %v34, %v407
    %409 = vmatmul.mubr.f32.gmra.mrb[0].mxu0 %v408
    %v410 = vpop.f32.mrb[0].mxu0
    %v411 = vadd.f32 %v301, %v410
    %v412 = vpop.f32.mrb[0].mxu0
    %413 = vmatprep.mubr.f32.mxu0 0.0
    %v414 = vand.u32 %v35, 4294901760
    %v415 = vsub.f32 %v35, %v414
    %416 = vmatmul.mubr.f32.gmra.mrb[0].mxu0 %v415
    %v417 = vpop.f32.mrb[0].mxu0
    %v418 = vadd.f32 %v307, %v417
    %v419 = vpop.f32.mrb[0].mxu0
    %420 = vdwg.mxu0
    %421 = vmatprep.subr.mxu0 0.0
    %v422 = vand.u32 %v36, 4294901760
    %423 = vmatpush1.msra.mxu0 %v422
    %424 = vmatprep.subr.mxu0 0.0
    %v425 = vand.u32 %v37, 4294901760
    %426 = vmatpush1.msra.mxu0 %v425
    %427 = vmatprep.subr.mxu0 0.0
    %v428 = vand.u32 %v38, 4294901760
    %429 = vmatpush1.msra.mxu0 %v428
    %430 = vmatprep.subr.mxu0 0.0
    %v431 = vand.u32 %v39, 4294901760
    %432 = vmatpush1.msra.mxu0 %v431
    %433 = vmatprep.subr.mxu0 0.0
    %v434 = vand.u32 %v40, 4294901760
    %435 = vmatpush1.msra.mxu0 %v434
    %436 = vmatprep.subr.mxu0 0.0
    %v437 = vand.u32 %v41, 4294901760
    %438 = vmatpush1.msra.mxu0 %v437
    %439 = vmatprep.subr.mxu0 0.0
    %v440 = vand.u32 %v42, 4294901760
    %441 = vmatpush1.msra.mxu0 %v440
    %442 = vmatprep.subr.mxu0 0.0
    %v443 = vand.u32 %v43, 4294901760
    %444 = vmatpush1.msra.mxu0 %v443
    %445 = vmatprep.subr.mxu0 0.0
    %v446 = vand.u32 %v44, 4294901760
    %447 = vmatpush1.msra.mxu0 %v446
    %448 = vmatprep.subr.mxu0 0.0
    %v449 = vand.u32 %v45, 4294901760
    %450 = vmatpush1.msra.mxu0 %v449
    %451 = vmatprep.subr.mxu0 0.0
    %v452 = vand.u32 %v46, 4294901760
    %453 = vmatpush1.msra.mxu0 %v452
    %454 = vmatprep.subr.mxu0 0.0
    %v455 = vand.u32 %v47, 4294901760
    %456 = vmatpush1.msra.mxu0 %v455
    %457 = vmatprep.subr.mxu0 0.0
    %v458 = vand.u32 %v48, 4294901760
    %459 = vmatpush1.msra.mxu0 %v458
    %460 = vmatprep.subr.mxu0 0.0
    %v461 = vand.u32 %v49, 4294901760
    %462 = vmatpush1.msra.mxu0 %v461
    %463 = vmatprep.subr.mxu0 0.0
    %v464 = vand.u32 %v50, 4294901760
    %465 = vmatpush1.msra.mxu0 %v464
    %466 = vmatprep.subr.mxu0 0.0
    %v467 = vand.u32 %v51, 4294901760
    %468 = vmatpush1.msra.mxu0 %v467
    %469 = vmatprep.subr.mxu0 0.0
    %470 = vmatpush1.msra.mxu0 0.0
    %471 = vmatprep.subr.mxu0 0.0
    %472 = vmatpush1.msra.mxu0 0.0
    %473 = vmatprep.subr.mxu0 0.0
    %474 = vmatpush1.msra.mxu0 0.0
    %475 = vmatprep.subr.mxu0 0.0
    %476 = vmatpush1.msra.mxu0 0.0
    %477 = vmatprep.subr.mxu0 0.0
    %478 = vmatpush1.msra.mxu0 0.0
    %479 = vmatprep.subr.mxu0 0.0
    %480 = vmatpush1.msra.mxu0 0.0
    %481 = vmatprep.subr.mxu0 0.0
    %482 = vmatpush1.msra.mxu0 0.0
    %483 = vmatprep.subr.mxu0 0.0
    %484 = vmatpush1.msra.mxu0 0.0
    %485 = vmatprep.subr.mxu0 0.0
    %486 = vmatpush1.msra.mxu0 0.0
    %487 = vmatprep.subr.mxu0 0.0
    %488 = vmatpush1.msra.mxu0 0.0
    %489 = vmatprep.subr.mxu0 0.0
    %490 = vmatpush1.msra.mxu0 0.0
    %491 = vmatprep.subr.mxu0 0.0
    %492 = vmatpush1.msra.mxu0 0.0
    %493 = vmatprep.subr.mxu0 0.0
    %494 = vmatpush1.msra.mxu0 0.0
    %495 = vmatprep.subr.mxu0 0.0
    %496 = vmatpush1.msra.mxu0 0.0
    %497 = vmatprep.subr.mxu0 0.0
    %498 = vmatpush1.msra.mxu0 0.0
    %499 = vmatprep.subr.mxu0 0.0
    %500 = vmatpush1.msra.mxu0 0.0
    %501 = vmatprep.mubr.f32.mxu0 0.0
    %v502 = vand.u32 %v34, 4294901760
    %v503 = vsub.f32 %v34, %v502
    %v504 = vand.u32 %v503, 4294901760
    %505 = vmatmul.mubr.f32.gmra.mrb[0].mxu0 %v504
    %v506 = vpop.f32.mrb[0].mxu0
    %v507 = vadd.f32 %v411, %v506
    %v508 = vpop.f32.mrb[0].mxu0
    %509 = vmatprep.mubr.f32.mxu0 0.0
    %v510 = vand.u32 %v35, 4294901760
    %v511 = vsub.f32 %v35, %v510
    %v512 = vand.u32 %v511, 4294901760
    %513 = vmatmul.mubr.f32.gmra.mrb[0].mxu0 %v512
    %v514 = vpop.f32.mrb[0].mxu0
    %v515 = vadd.f32 %v418, %v514
    %v516 = vpop.f32.mrb[0].mxu0
    %517 = vdwg.mxu0
    %518 = vmatprep.subr.mxu0 0.0
    %v519 = vand.u32 %v36, 4294901760
    %v520 = vsub.f32 %v36, %v519
    %v521 = vand.u32 %v520, 4294901760
    %522 = vmatpush1.msra.mxu0 %v521
    %523 = vmatprep.subr.mxu0 0.0
    %v524 = vand.u32 %v37, 4294901760
    %v525 = vsub.f32 %v37, %v524
    %v526 = vand.u32 %v525, 4294901760
    %527 = vmatpush1.msra.mxu0 %v526
    %528 = vmatprep.subr.mxu0 0.0
    %v529 = vand.u32 %v38, 4294901760
    %v530 = vsub.f32 %v38, %v529
    %v531 = vand.u32 %v530, 4294901760
    %532 = vmatpush1.msra.mxu0 %v531
    %533 = vmatprep.subr.mxu0 0.0
    %v534 = vand.u32 %v39, 4294901760
    %v535 = vsub.f32 %v39, %v534
    %v536 = vand.u32 %v535, 4294901760
    %537 = vmatpush1.msra.mxu0 %v536
    %538 = vmatprep.subr.mxu0 0.0
    %v539 = vand.u32 %v40, 4294901760
    %v540 = vsub.f32 %v40, %v539
    %v541 = vand.u32 %v540, 4294901760
    %542 = vmatpush1.msra.mxu0 %v541
    %543 = vmatprep.subr.mxu0 0.0
    %v544 = vand.u32 %v41, 4294901760
    %v545 = vsub.f32 %v41, %v544
    %v546 = vand.u32 %v545, 4294901760
    %547 = vmatpush1.msra.mxu0 %v546
    %548 = vmatprep.subr.mxu0 0.0
    %v549 = vand.u32 %v42, 4294901760
    %v550 = vsub.f32 %v42, %v549
    %v551 = vand.u32 %v550, 4294901760
    %552 = vmatpush1.msra.mxu0 %v551
    %553 = vmatprep.subr.mxu0 0.0
    %v554 = vand.u32 %v43, 4294901760
    %v555 = vsub.f32 %v43, %v554
    %v556 = vand.u32 %v555, 4294901760
    %557 = vmatpush1.msra.mxu0 %v556
    %558 = vmatprep.subr.mxu0 0.0
    %v559 = vand.u32 %v44, 4294901760
    %v560 = vsub.f32 %v44, %v559
    %v561 = vand.u32 %v560, 4294901760
    %562 = vmatpush1.msra.mxu0 %v561
    %563 = vmatprep.subr.mxu0 0.0
    %v564 = vand.u32 %v45, 4294901760
    %v565 = vsub.f32 %v45, %v564
    %v566 = vand.u32 %v565, 4294901760
    %567 = vmatpush1.msra.mxu0 %v566
    %568 = vmatprep.subr.mxu0 0.0
    %v569 = vand.u32 %v46, 4294901760
    %v570 = vsub.f32 %v46, %v569
    %v571 = vand.u32 %v570, 4294901760
    %572 = vmatpush1.msra.mxu0 %v571
    %573 = vmatprep.subr.mxu0 0.0
    %v574 = vand.u32 %v47, 4294901760
    %v575 = vsub.f32 %v47, %v574
    %v576 = vand.u32 %v575, 4294901760
    %577 = vmatpush1.msra.mxu0 %v576
    %578 = vmatprep.subr.mxu0 0.0
    %v579 = vand.u32 %v48, 4294901760
    %v580 = vsub.f32 %v48, %v579
    %v581 = vand.u32 %v580, 4294901760
    %582 = vmatpush1.msra.mxu0 %v581
    %583 = vmatprep.subr.mxu0 0.0
    %v584 = vand.u32 %v49, 4294901760
    %v585 = vsub.f32 %v49, %v584
    %v586 = vand.u32 %v585, 4294901760
    %587 = vmatpush1.msra.mxu0 %v586
    %588 = vmatprep.subr.mxu0 0.0
    %v589 = vand.u32 %v50, 4294901760
    %v590 = vsub.f32 %v50, %v589
    %v591 = vand.u32 %v590, 4294901760
    %592 = vmatpush1.msra.mxu0 %v591
    %593 = vmatprep.subr.mxu0 0.0
    %v594 = vand.u32 %v51, 4294901760
    %v595 = vsub.f32 %v51, %v594
    %v596 = vand.u32 %v595, 4294901760
    %597 = vmatpush1.msra.mxu0 %v596
    %598 = vmatprep.subr.mxu0 0.0
    %599 = vmatpush1.msra.mxu0 0.0
    %600 = vmatprep.subr.mxu0 0.0
    %601 = vmatpush1.msra.mxu0 0.0
    %602 = vmatprep.subr.mxu0 0.0
    %603 = vmatpush1.msra.mxu0 0.0
    %604 = vmatprep.subr.mxu0 0.0
    %605 = vmatpush1.msra.mxu0 0.0
    %606 = vmatprep.subr.mxu0 0.0
    %607 = vmatpush1.msra.mxu0 0.0
    %608 = vmatprep.subr.mxu0 0.0
    %609 = vmatpush1.msra.mxu0 0.0
    %610 = vmatprep.subr.mxu0 0.0
    %611 = vmatpush1.msra.mxu0 0.0
    %612 = vmatprep.subr.mxu0 0.0
    %613 = vmatpush1.msra.mxu0 0.0
    %614 = vmatprep.subr.mxu0 0.0
    %615 = vmatpush1.msra.mxu0 0.0
    %616 = vmatprep.subr.mxu0 0.0
    %617 = vmatpush1.msra.mxu0 0.0
    %618 = vmatprep.subr.mxu0 0.0
    %619 = vmatpush1.msra.mxu0 0.0
    %620 = vmatprep.subr.mxu0 0.0
    %621 = vmatpush1.msra.mxu0 0.0
    %622 = vmatprep.subr.mxu0 0.0
    %623 = vmatpush1.msra.mxu0 0.0
    %624 = vmatprep.subr.mxu0 0.0
    %625 = vmatpush1.msra.mxu0 0.0
    %626 = vmatprep.subr.mxu0 0.0
    %627 = vmatpush1.msra.mxu0 0.0
    %628 = vmatprep.subr.mxu0 0.0
    %629 = vmatpush1.msra.mxu0 0.0
    %630 = vmatprep.mubr.f32.mxu0 0.0
    %v631 = vand.u32 %v34, 4294901760
    %632 = vmatmul.mubr.f32.gmra.mrb[0].mxu0 %v631
    %v633 = vpop.f32.mrb[0].mxu0
    %v634 = vadd.f32 %v507, %v633
    %v635 = vpop.f32.mrb[0].mxu0
    %636 = vmatprep.mubr.f32.mxu0 0.0
    %v637 = vand.u32 %v35, 4294901760
    %638 = vmatmul.mubr.f32.gmra.mrb[0].mxu0 %v637
    %v639 = vpop.f32.mrb[0].mxu0
    %v640 = vadd.f32 %v515, %v639
    %v641 = vpop.f32.mrb[0].mxu0
    %642 = vdwg.mxu0
    %643 = vmatprep.subr.mxu0 0.0
    %v644 = vand.u32 %v36, 4294901760
    %645 = vmatpush1.msra.mxu0 %v644
    %646 = vmatprep.subr.mxu0 0.0
    %v647 = vand.u32 %v37, 4294901760
    %648 = vmatpush1.msra.mxu0 %v647
    %649 = vmatprep.subr.mxu0 0.0
    %v650 = vand.u32 %v38, 4294901760
    %651 = vmatpush1.msra.mxu0 %v650
    %652 = vmatprep.subr.mxu0 0.0
    %v653 = vand.u32 %v39, 4294901760
    %654 = vmatpush1.msra.mxu0 %v653
    %655 = vmatprep.subr.mxu0 0.0
    %v656 = vand.u32 %v40, 4294901760
    %657 = vmatpush1.msra.mxu0 %v656
    %658 = vmatprep.subr.mxu0 0.0
    %v659 = vand.u32 %v41, 4294901760
    %660 = vmatpush1.msra.mxu0 %v659
    %661 = vmatprep.subr.mxu0 0.0
    %v662 = vand.u32 %v42, 4294901760
    %663 = vmatpush1.msra.mxu0 %v662
    %664 = vmatprep.subr.mxu0 0.0
    %v665 = vand.u32 %v43, 4294901760
    %666 = vmatpush1.msra.mxu0 %v665
    %667 = vmatprep.subr.mxu0 0.0
    %v668 = vand.u32 %v44, 4294901760
    %669 = vmatpush1.msra.mxu0 %v668
    %670 = vmatprep.subr.mxu0 0.0
    %v671 = vand.u32 %v45, 4294901760
    %672 = vmatpush1.msra.mxu0 %v671
    %673 = vmatprep.subr.mxu0 0.0
    %v674 = vand.u32 %v46, 4294901760
    %675 = vmatpush1.msra.mxu0 %v674
    %676 = vmatprep.subr.mxu0 0.0
    %v677 = vand.u32 %v47, 4294901760
    %678 = vmatpush1.msra.mxu0 %v677
    %679 = vmatprep.subr.mxu0 0.0
    %v680 = vand.u32 %v48, 4294901760
    %681 = vmatpush1.msra.mxu0 %v680
    %682 = vmatprep.subr.mxu0 0.0
    %v683 = vand.u32 %v49, 4294901760
    %684 = vmatpush1.msra.mxu0 %v683
    %685 = vmatprep.subr.mxu0 0.0
    %v686 = vand.u32 %v50, 4294901760
    %687 = vmatpush1.msra.mxu0 %v686
    %688 = vmatprep.subr.mxu0 0.0
    %v689 = vand.u32 %v51, 4294901760
    %690 = vmatpush1.msra.mxu0 %v689
    %691 = vmatprep.subr.mxu0 0.0
    %692 = vmatpush1.msra.mxu0 0.0
    %693 = vmatprep.subr.mxu0 0.0
    %694 = vmatpush1.msra.mxu0 0.0
    %695 = vmatprep.subr.mxu0 0.0
    %696 = vmatpush1.msra.mxu0 0.0
    %697 = vmatprep.subr.mxu0 0.0
    %698 = vmatpush1.msra.mxu0 0.0
    %699 = vmatprep.subr.mxu0 0.0
    %700 = vmatpush1.msra.mxu0 0.0
    %701 = vmatprep.subr.mxu0 0.0
    %702 = vmatpush1.msra.mxu0 0.0
    %703 = vmatprep.subr.mxu0 0.0
    %704 = vmatpush1.msra.mxu0 0.0
    %705 = vmatprep.subr.mxu0 0.0
    %706 = vmatpush1.msra.mxu0 0.0
    %707 = vmatprep.subr.mxu0 0.0
    %708 = vmatpush1.msra.mxu0 0.0
    %709 = vmatprep.subr.mxu0 0.0
    %710 = vmatpush1.msra.mxu0 0.0
    %711 = vmatprep.subr.mxu0 0.0
    %712 = vmatpush1.msra.mxu0 0.0
    %713 = vmatprep.subr.mxu0 0.0
    %714 = vmatpush1.msra.mxu0 0.0
    %715 = vmatprep.subr.mxu0 0.0
    %716 = vmatpush1.msra.mxu0 0.0
    %717 = vmatprep.subr.mxu0 0.0
    %718 = vmatpush1.msra.mxu0 0.0
    %719 = vmatprep.subr.mxu0 0.0
    %720 = vmatpush1.msra.mxu0 0.0
    %721 = vmatprep.subr.mxu0 0.0
    %722 = vmatpush1.msra.mxu0 0.0
    %723 = vmatprep.mubr.f32.mxu0 0.0
    %v724 = vand.u32 %v34, 4294901760
    %725 = vmatmul.mubr.f32.gmra.mrb[0].mxu0 %v724
    %v726 = vpop.f32.mrb[0].mxu0
    %v727 = vadd.f32 %v634, %v726
    %v728 = vpop.f32.mrb[0].mxu0
    %729 = vmatprep.mubr.f32.mxu0 0.0
    %v730 = vand.u32 %v35, 4294901760
    %731 = vmatmul.mubr.f32.gmra.mrb[0].mxu0 %v730
    %v732 = vpop.f32.mrb[0].mxu0
    %v733 = vadd.f32 %v640, %v732
    %v734 = vpop.f32.mrb[0].mxu0
    %735 = vdwg.mxu0
    %v736 = vld [vmem:[%s4] sm:$0xf]
    %vm737 = vcmask 31744
    %v739 = vsel %vm737, %v727, 0
    %v742 = vsel %vm737, %v733, 0
    %vm744 = vcmask 1043456
    %v746 = vsel %vm744, %v736, 0
    %748 = vmatprep.subr.mxu0 0.0
    %v749 = vand.u32 %v746, 4294901760
    %750 = vmatpush1.msra.mxu0 %v749
    %751 = vmatprep.subr.mxu0 0.0
    %752 = vmatpush1.msra.mxu0 0.0
    %753 = vmatprep.subr.mxu0 0.0
    %754 = vmatpush1.msra.mxu0 0.0
    %755 = vmatprep.subr.mxu0 0.0
    %756 = vmatpush1.msra.mxu0 0.0
    %757 = vmatprep.subr.mxu0 0.0
    %758 = vmatpush1.msra.mxu0 0.0
    %759 = vmatprep.subr.mxu0 0.0
    %760 = vmatpush1.msra.mxu0 0.0
    %761 = vmatprep.subr.mxu0 0.0
    %762 = vmatpush1.msra.mxu0 0.0
    %763 = vmatprep.subr.mxu0 0.0
    %764 = vmatpush1.msra.mxu0 0.0
    %765 = vmatprep.subr.mxu0 0.0
    %766 = vmatpush1.msra.mxu0 0.0
    %767 = vmatprep.subr.mxu0 0.0
    %768 = vmatpush1.msra.mxu0 0.0
    %769 = vmatprep.subr.mxu0 0.0
    %770 = vmatpush1.msra.mxu0 0.0
    %771 = vmatprep.subr.mxu0 0.0
    %772 = vmatpush1.msra.mxu0 0.0
    %773 = vmatprep.subr.mxu0 0.0
    %774 = vmatpush1.msra.mxu0 0.0
    %775 = vmatprep.subr.mxu0 0.0
    %776 = vmatpush1.msra.mxu0 0.0
    %777 = vmatprep.subr.mxu0 0.0
    %778 = vmatpush1.msra.mxu0 0.0
    %779 = vmatprep.subr.mxu0 0.0
    %780 = vmatpush1.msra.mxu0 0.0
    %781 = vmatprep.subr.mxu0 0.0
    %782 = vmatpush1.msra.mxu0 0.0
    %783 = vmatprep.subr.mxu0 0.0
    %784 = vmatpush1.msra.mxu0 0.0
    %785 = vmatprep.subr.mxu0 0.0
    %786 = vmatpush1.msra.mxu0 0.0
    %787 = vmatprep.subr.mxu0 0.0
    %788 = vmatpush1.msra.mxu0 0.0
    %789 = vmatprep.subr.mxu0 0.0
    %790 = vmatpush1.msra.mxu0 0.0
    %791 = vmatprep.subr.mxu0 0.0
    %792 = vmatpush1.msra.mxu0 0.0
    %793 = vmatprep.subr.mxu0 0.0
    %794 = vmatpush1.msra.mxu0 0.0
    %795 = vmatprep.subr.mxu0 0.0
    %796 = vmatpush1.msra.mxu0 0.0
    %797 = vmatprep.subr.mxu0 0.0
    %798 = vmatpush1.msra.mxu0 0.0
    %799 = vmatprep.subr.mxu0 0.0
    %800 = vmatpush1.msra.mxu0 0.0
    %801 = vmatprep.subr.mxu0 0.0
    %802 = vmatpush1.msra.mxu0 0.0
    %803 = vmatprep.subr.mxu0 0.0
    %804 = vmatpush1.msra.mxu0 0.0
    %805 = vmatprep.subr.mxu0 0.0
    %806 = vmatpush1.msra.mxu0 0.0
    %807 = vmatprep.subr.mxu0 0.0
    %808 = vmatpush1.msra.mxu0 0.0
    %809 = vmatprep.subr.mxu0 0.0
    %810 = vmatpush1.msra.mxu0 0.0
    %811 = vmatprep.subr.mxu0 0.0
    %812 = vmatpush1.msra.mxu0 0.0
    %813 = vmatprep.mubr.f32.mxu0 0.0
    %v814 = vand.u32 %v739, 4294901760
    %v815 = vsub.f32 %v739, %v814
    %v816 = vand.u32 %v815, 4294901760
    %v817 = vsub.f32 %v815, %v816
    %v818 = vand.u32 %v817, 4294901760
    %819 = vmatmul.mubr.f32.gmra.mrb[0].mxu0 %v818
    %v820 = vpop.f32.mrb[0].mxu0
    %v821 = vadd.f32 0.0, %v820
    %v822 = vpop.f32.mrb[0].mxu0
    %823 = vmatprep.mubr.f32.mxu0 0.0
    %v824 = vand.u32 %v742, 4294901760
    %v825 = vsub.f32 %v742, %v824
    %v826 = vand.u32 %v825, 4294901760
    %v827 = vsub.f32 %v825, %v826
    %v828 = vand.u32 %v827, 4294901760
    %829 = vmatmul.mubr.f32.gmra.mrb[0].mxu0 %v828
    %v830 = vpop.f32.mrb[0].mxu0
    %v831 = vadd.f32 0.0, %v830
    %v832 = vpop.f32.mrb[0].mxu0
    %833 = vdwg.mxu0
    %834 = vmatprep.subr.mxu0 0.0
    %v835 = vand.u32 %v746, 4294901760
    %v836 = vsub.f32 %v746, %v835
    %v837 = vand.u32 %v836, 4294901760
    %v838 = vsub.f32 %v836, %v837
    %v839 = vand.u32 %v838, 4294901760
    %840 = vmatpush1.msra.mxu0 %v839
    %841 = vmatprep.subr.mxu0 0.0
    %842 = vmatpush1.msra.mxu0 0.0
    %843 = vmatprep.subr.mxu0 0.0
    %844 = vmatpush1.msra.mxu0 0.0
    %845 = vmatprep.subr.mxu0 0.0
    %846 = vmatpush1.msra.mxu0 0.0
    %847 = vmatprep.subr.mxu0 0.0
    %848 = vmatpush1.msra.mxu0 0.0
    %849 = vmatprep.subr.mxu0 0.0
    %850 = vmatpush1.msra.mxu0 0.0
    %851 = vmatprep.subr.mxu0 0.0
    %852 = vmatpush1.msra.mxu0 0.0
    %853 = vmatprep.subr.mxu0 0.0
    %854 = vmatpush1.msra.mxu0 0.0
    %855 = vmatprep.subr.mxu0 0.0
    %856 = vmatpush1.msra.mxu0 0.0
    %857 = vmatprep.subr.mxu0 0.0
    %858 = vmatpush1.msra.mxu0 0.0
    %859 = vmatprep.subr.mxu0 0.0
    %860 = vmatpush1.msra.mxu0 0.0
    %861 = vmatprep.subr.mxu0 0.0
    %862 = vmatpush1.msra.mxu0 0.0
    %863 = vmatprep.subr.mxu0 0.0
    %864 = vmatpush1.msra.mxu0 0.0
    %865 = vmatprep.subr.mxu0 0.0
    %866 = vmatpush1.msra.mxu0 0.0
    %867 = vmatprep.subr.mxu0 0.0
    %868 = vmatpush1.msra.mxu0 0.0
    %869 = vmatprep.subr.mxu0 0.0
    %870 = vmatpush1.msra.mxu0 0.0
    %871 = vmatprep.subr.mxu0 0.0
    %872 = vmatpush1.msra.mxu0 0.0
    %873 = vmatprep.subr.mxu0 0.0
    %874 = vmatpush1.msra.mxu0 0.0
    %875 = vmatprep.subr.mxu0 0.0
    %876 = vmatpush1.msra.mxu0 0.0
    %877 = vmatprep.subr.mxu0 0.0
    %878 = vmatpush1.msra.mxu0 0.0
    %879 = vmatprep.subr.mxu0 0.0
    %880 = vmatpush1.msra.mxu0 0.0
    %881 = vmatprep.subr.mxu0 0.0
    %882 = vmatpush1.msra.mxu0 0.0
    %883 = vmatprep.subr.mxu0 0.0
    %884 = vmatpush1.msra.mxu0 0.0
    %885 = vmatprep.subr.mxu0 0.0
    %886 = vmatpush1.msra.mxu0 0.0
    %887 = vmatprep.subr.mxu0 0.0
    %888 = vmatpush1.msra.mxu0 0.0
    %889 = vmatprep.subr.mxu0 0.0
    %890 = vmatpush1.msra.mxu0 0.0
    %891 = vmatprep.subr.mxu0 0.0
    %892 = vmatpush1.msra.mxu0 0.0
    %893 = vmatprep.subr.mxu0 0.0
    %894 = vmatpush1.msra.mxu0 0.0
    %895 = vmatprep.subr.mxu0 0.0
    %896 = vmatpush1.msra.mxu0 0.0
    %897 = vmatprep.subr.mxu0 0.0
    %898 = vmatpush1.msra.mxu0 0.0
    %899 = vmatprep.subr.mxu0 0.0
    %900 = vmatpush1.msra.mxu0 0.0
    %901 = vmatprep.subr.mxu0 0.0
    %902 = vmatpush1.msra.mxu0 0.0
    %903 = vmatprep.mubr.f32.mxu0 0.0
    %v904 = vand.u32 %v739, 4294901760
    %905 = vmatmul.mubr.f32.gmra.mrb[0].mxu0 %v904
    %v906 = vpop.f32.mrb[0].mxu0
    %v907 = vadd.f32 %v821, %v906
    %v908 = vpop.f32.mrb[0].mxu0
    %909 = vmatprep.mubr.f32.mxu0 0.0
    %v910 = vand.u32 %v742, 4294901760
    %911 = vmatmul.mubr.f32.gmra.mrb[0].mxu0 %v910
    %v912 = vpop.f32.mrb[0].mxu0
    %v913 = vadd.f32 %v831, %v912
    %v914 = vpop.f32.mrb[0].mxu0
    %915 = vdwg.mxu0
    %916 = vmatprep.subr.mxu0 0.0
    %v917 = vand.u32 %v746, 4294901760
    %v918 = vsub.f32 %v746, %v917
    %919 = vmatpush1.msra.mxu0 %v918
    %920 = vmatprep.subr.mxu0 0.0
    %921 = vmatpush1.msra.mxu0 0.0
    %922 = vmatprep.subr.mxu0 0.0
    %923 = vmatpush1.msra.mxu0 0.0
    %924 = vmatprep.subr.mxu0 0.0
    %925 = vmatpush1.msra.mxu0 0.0
    %926 = vmatprep.subr.mxu0 0.0
    %927 = vmatpush1.msra.mxu0 0.0
    %928 = vmatprep.subr.mxu0 0.0
    %929 = vmatpush1.msra.mxu0 0.0
    %930 = vmatprep.subr.mxu0 0.0
    %931 = vmatpush1.msra.mxu0 0.0
    %932 = vmatprep.subr.mxu0 0.0
    %933 = vmatpush1.msra.mxu0 0.0
    %934 = vmatprep.subr.mxu0 0.0
    %935 = vmatpush1.msra.mxu0 0.0
    %936 = vmatprep.subr.mxu0 0.0
    %937 = vmatpush1.msra.mxu0 0.0
    %938 = vmatprep.subr.mxu0 0.0
    %939 = vmatpush1.msra.mxu0 0.0
    %940 = vmatprep.subr.mxu0 0.0
    %941 = vmatpush1.msra.mxu0 0.0
    %942 = vmatprep.subr.mxu0 0.0
    %943 = vmatpush1.msra.mxu0 0.0
    %944 = vmatprep.subr.mxu0 0.0
    %945 = vmatpush1.msra.mxu0 0.0
    %946 = vmatprep.subr.mxu0 0.0
    %947 = vmatpush1.msra.mxu0 0.0
    %948 = vmatprep.subr.mxu0 0.0
    %949 = vmatpush1.msra.mxu0 0.0
    %950 = vmatprep.subr.mxu0 0.0
    %951 = vmatpush1.msra.mxu0 0.0
    %952 = vmatprep.subr.mxu0 0.0
    %953 = vmatpush1.msra.mxu0 0.0
    %954 = vmatprep.subr.mxu0 0.0
    %955 = vmatpush1.msra.mxu0 0.0
    %956 = vmatprep.subr.mxu0 0.0
    %957 = vmatpush1.msra.mxu0 0.0
    %958 = vmatprep.subr.mxu0 0.0
    %959 = vmatpush1.msra.mxu0 0.0
    %960 = vmatprep.subr.mxu0 0.0
    %961 = vmatpush1.msra.mxu0 0.0
    %962 = vmatprep.subr.mxu0 0.0
    %963 = vmatpush1.msra.mxu0 0.0
    %964 = vmatprep.subr.mxu0 0.0
    %965 = vmatpush1.msra.mxu0 0.0
    %966 = vmatprep.subr.mxu0 0.0
    %967 = vmatpush1.msra.mxu0 0.0
    %968 = vmatprep.subr.mxu0 0.0
    %969 = vmatpush1.msra.mxu0 0.0
    %970 = vmatprep.subr.mxu0 0.0
    %971 = vmatpush1.msra.mxu0 0.0
    %972 = vmatprep.subr.mxu0 0.0
    %973 = vmatpush1.msra.mxu0 0.0
    %974 = vmatprep.subr.mxu0 0.0
    %975 = vmatpush1.msra.mxu0 0.0
    %976 = vmatprep.subr.mxu0 0.0
    %977 = vmatpush1.msra.mxu0 0.0
    %978 = vmatprep.subr.mxu0 0.0
    %979 = vmatpush1.msra.mxu0 0.0
    %980 = vmatprep.subr.mxu0 0.0
    %981 = vmatpush1.msra.mxu0 0.0
    %982 = vmatprep.mubr.f32.mxu0 0.0
    %v983 = vand.u32 %v739, 4294901760
    %v984 = vsub.f32 %v739, %v983
    %985 = vmatmul.mubr.f32.gmra.mrb[0].mxu0 %v984
    %v986 = vpop.f32.mrb[0].mxu0
    %v987 = vadd.f32 %v907, %v986
    %v988 = vpop.f32.mrb[0].mxu0
    %989 = vmatprep.mubr.f32.mxu0 0.0
    %v990 = vand.u32 %v742, 4294901760
    %v991 = vsub.f32 %v742, %v990
    %992 = vmatmul.mubr.f32.gmra.mrb[0].mxu0 %v991
    %v993 = vpop.f32.mrb[0].mxu0
    %v994 = vadd.f32 %v913, %v993
    %v995 = vpop.f32.mrb[0].mxu0
    %996 = vdwg.mxu0
    %997 = vmatprep.subr.mxu0 0.0
    %v998 = vand.u32 %v746, 4294901760
    %999 = vmatpush1.msra.mxu0 %v998
    %1000 = vmatprep.subr.mxu0 0.0
    %1001 = vmatpush1.msra.mxu0 0.0
    %1002 = vmatprep.subr.mxu0 0.0
    %1003 = vmatpush1.msra.mxu0 0.0
    %1004 = vmatprep.subr.mxu0 0.0
    %1005 = vmatpush1.msra.mxu0 0.0
    %1006 = vmatprep.subr.mxu0 0.0
    %1007 = vmatpush1.msra.mxu0 0.0
    %1008 = vmatprep.subr.mxu0 0.0
    %1009 = vmatpush1.msra.mxu0 0.0
    %1010 = vmatprep.subr.mxu0 0.0
    %1011 = vmatpush1.msra.mxu0 0.0
    %1012 = vmatprep.subr.mxu0 0.0
    %1013 = vmatpush1.msra.mxu0 0.0
    %1014 = vmatprep.subr.mxu0 0.0
    %1015 = vmatpush1.msra.mxu0 0.0
    %1016 = vmatprep.subr.mxu0 0.0
    %1017 = vmatpush1.msra.mxu0 0.0
    %1018 = vmatprep.subr.mxu0 0.0
    %1019 = vmatpush1.msra.mxu0 0.0
    %1020 = vmatprep.subr.mxu0 0.0
    %1021 = vmatpush1.msra.mxu0 0.0
    %1022 = vmatprep.subr.mxu0 0.0
    %1023 = vmatpush1.msra.mxu0 0.0
    %1024 = vmatprep.subr.mxu0 0.0
    %1025 = vmatpush1.msra.mxu0 0.0
    %1026 = vmatprep.subr.mxu0 0.0
    %1027 = vmatpush1.msra.mxu0 0.0
    %1028 = vmatprep.subr.mxu0 0.0
    %1029 = vmatpush1.msra.mxu0 0.0
    %1030 = vmatprep.subr.mxu0 0.0
    %1031 = vmatpush1.msra.mxu0 0.0
    %1032 = vmatprep.subr.mxu0 0.0
    %1033 = vmatpush1.msra.mxu0 0.0
    %1034 = vmatprep.subr.mxu0 0.0
    %1035 = vmatpush1.msra.mxu0 0.0
    %1036 = vmatprep.subr.mxu0 0.0
    %1037 = vmatpush1.msra.mxu0 0.0
    %1038 = vmatprep.subr.mxu0 0.0
    %1039 = vmatpush1.msra.mxu0 0.0
    %1040 = vmatprep.subr.mxu0 0.0
    %1041 = vmatpush1.msra.mxu0 0.0
    %1042 = vmatprep.subr.mxu0 0.0
    %1043 = vmatpush1.msra.mxu0 0.0
    %1044 = vmatprep.subr.mxu0 0.0
    %1045 = vmatpush1.msra.mxu0 0.0
    %1046 = vmatprep.subr.mxu0 0.0
    %1047 = vmatpush1.msra.mxu0 0.0
    %1048 = vmatprep.subr.mxu0 0.0
    %1049 = vmatpush1.msra.mxu0 0.0
    %1050 = vmatprep.subr.mxu0 0.0
    %1051 = vmatpush1.msra.mxu0 0.0
    %1052 = vmatprep.subr.mxu0 0.0
    %1053 = vmatpush1.msra.mxu0 0.0
    %1054 = vmatprep.subr.mxu0 0.0
    %1055 = vmatpush1.msra.mxu0 0.0
    %1056 = vmatprep.subr.mxu0 0.0
    %1057 = vmatpush1.msra.mxu0 0.0
    %1058 = vmatprep.subr.mxu0 0.0
    %1059 = vmatpush1.msra.mxu0 0.0
    %1060 = vmatprep.subr.mxu0 0.0
    %1061 = vmatpush1.msra.mxu0 0.0
    %1062 = vmatprep.mubr.f32.mxu0 0.0
    %v1063 = vand.u32 %v739, 4294901760
    %v1064 = vsub.f32 %v739, %v1063
    %v1065 = vand.u32 %v1064, 4294901760
    %1066 = vmatmul.mubr.f32.gmra.mrb[0].mxu0 %v1065
    %v1067 = vpop.f32.mrb[0].mxu0
    %v1068 = vadd.f32 %v987, %v1067
    %v1069 = vpop.f32.mrb[0].mxu0
    %1070 = vmatprep.mubr.f32.mxu0 0.0
    %v1071 = vand.u32 %v742, 4294901760
    %v1072 = vsub.f32 %v742, %v1071
    %v1073 = vand.u32 %v1072, 4294901760
    %1074 = vmatmul.mubr.f32.gmra.mrb[0].mxu0 %v1073
    %v1075 = vpop.f32.mrb[0].mxu0
    %v1076 = vadd.f32 %v994, %v1075
    %v1077 = vpop.f32.mrb[0].mxu0
    %1078 = vdwg.mxu0
    %1079 = vmatprep.subr.mxu0 0.0
    %v1080 = vand.u32 %v746, 4294901760
    %v1081 = vsub.f32 %v746, %v1080
    %v1082 = vand.u32 %v1081, 4294901760
    %1083 = vmatpush1.msra.mxu0 %v1082
    %1084 = vmatprep.subr.mxu0 0.0
    %1085 = vmatpush1.msra.mxu0 0.0
    %1086 = vmatprep.subr.mxu0 0.0
    %1087 = vmatpush1.msra.mxu0 0.0
    %1088 = vmatprep.subr.mxu0 0.0
    %1089 = vmatpush1.msra.mxu0 0.0
    %1090 = vmatprep.subr.mxu0 0.0
    %1091 = vmatpush1.msra.mxu0 0.0
    %1092 = vmatprep.subr.mxu0 0.0
    %1093 = vmatpush1.msra.mxu0 0.0
    %1094 = vmatprep.subr.mxu0 0.0
    %1095 = vmatpush1.msra.mxu0 0.0
    %1096 = vmatprep.subr.mxu0 0.0
    %1097 = vmatpush1.msra.mxu0 0.0
    %1098 = vmatprep.subr.mxu0 0.0
    %1099 = vmatpush1.msra.mxu0 0.0
    %1100 = vmatprep.subr.mxu0 0.0
    %1101 = vmatpush1.msra.mxu0 0.0
    %1102 = vmatprep.subr.mxu0 0.0
    %1103 = vmatpush1.msra.mxu0 0.0
    %1104 = vmatprep.subr.mxu0 0.0
    %1105 = vmatpush1.msra.mxu0 0.0
    %1106 = vmatprep.subr.mxu0 0.0
    %1107 = vmatpush1.msra.mxu0 0.0
    %1108 = vmatprep.subr.mxu0 0.0
    %1109 = vmatpush1.msra.mxu0 0.0
    %1110 = vmatprep.subr.mxu0 0.0
    %1111 = vmatpush1.msra.mxu0 0.0
    %1112 = vmatprep.subr.mxu0 0.0
    %1113 = vmatpush1.msra.mxu0 0.0
    %1114 = vmatprep.subr.mxu0 0.0
    %1115 = vmatpush1.msra.mxu0 0.0
    %1116 = vmatprep.subr.mxu0 0.0
    %1117 = vmatpush1.msra.mxu0 0.0
    %1118 = vmatprep.subr.mxu0 0.0
    %1119 = vmatpush1.msra.mxu0 0.0
    %1120 = vmatprep.subr.mxu0 0.0
    %1121 = vmatpush1.msra.mxu0 0.0
    %1122 = vmatprep.subr.mxu0 0.0
    %1123 = vmatpush1.msra.mxu0 0.0
    %1124 = vmatprep.subr.mxu0 0.0
    %1125 = vmatpush1.msra.mxu0 0.0
    %1126 = vmatprep.subr.mxu0 0.0
    %1127 = vmatpush1.msra.mxu0 0.0
    %1128 = vmatprep.subr.mxu0 0.0
    %1129 = vmatpush1.msra.mxu0 0.0
    %1130 = vmatprep.subr.mxu0 0.0
    %1131 = vmatpush1.msra.mxu0 0.0
    %1132 = vmatprep.subr.mxu0 0.0
    %1133 = vmatpush1.msra.mxu0 0.0
    %1134 = vmatprep.subr.mxu0 0.0
    %1135 = vmatpush1.msra.mxu0 0.0
    %1136 = vmatprep.subr.mxu0 0.0
    %1137 = vmatpush1.msra.mxu0 0.0
    %1138 = vmatprep.subr.mxu0 0.0
    %1139 = vmatpush1.msra.mxu0 0.0
    %1140 = vmatprep.subr.mxu0 0.0
    %1141 = vmatpush1.msra.mxu0 0.0
    %1142 = vmatprep.subr.mxu0 0.0
    %1143 = vmatpush1.msra.mxu0 0.0
    %1144 = vmatprep.subr.mxu0 0.0
    %1145 = vmatpush1.msra.mxu0 0.0
    %1146 = vmatprep.mubr.f32.mxu0 0.0
    %v1147 = vand.u32 %v739, 4294901760
    %1148 = vmatmul.mubr.f32.gmra.mrb[0].mxu0 %v1147
    %v1149 = vpop.f32.mrb[0].mxu0
    %v1150 = vadd.f32 %v1068, %v1149
    %v1151 = vpop.f32.mrb[0].mxu0
    %1152 = vmatprep.mubr.f32.mxu0 0.0
    %v1153 = vand.u32 %v742, 4294901760
    %1154 = vmatmul.mubr.f32.gmra.mrb[0].mxu0 %v1153
    %v1155 = vpop.f32.mrb[0].mxu0
    %v1156 = vadd.f32 %v1076, %v1155
    %v1157 = vpop.f32.mrb[0].mxu0
    %1158 = vdwg.mxu0
    %1159 = vmatprep.subr.mxu0 0.0
    %v1160 = vand.u32 %v746, 4294901760
    %1161 = vmatpush1.msra.mxu0 %v1160
    %1162 = vmatprep.subr.mxu0 0.0
    %1163 = vmatpush1.msra.mxu0 0.0
    %1164 = vmatprep.subr.mxu0 0.0
    %1165 = vmatpush1.msra.mxu0 0.0
    %1166 = vmatprep.subr.mxu0 0.0
    %1167 = vmatpush1.msra.mxu0 0.0
    %1168 = vmatprep.subr.mxu0 0.0
    %1169 = vmatpush1.msra.mxu0 0.0
    %1170 = vmatprep.subr.mxu0 0.0
    %1171 = vmatpush1.msra.mxu0 0.0
    %1172 = vmatprep.subr.mxu0 0.0
    %1173 = vmatpush1.msra.mxu0 0.0
    %1174 = vmatprep.subr.mxu0 0.0
    %1175 = vmatpush1.msra.mxu0 0.0
    %1176 = vmatprep.subr.mxu0 0.0
    %1177 = vmatpush1.msra.mxu0 0.0
    %1178 = vmatprep.subr.mxu0 0.0
    %1179 = vmatpush1.msra.mxu0 0.0
    %1180 = vmatprep.subr.mxu0 0.0
    %1181 = vmatpush1.msra.mxu0 0.0
    %1182 = vmatprep.subr.mxu0 0.0
    %1183 = vmatpush1.msra.mxu0 0.0
    %1184 = vmatprep.subr.mxu0 0.0
    %1185 = vmatpush1.msra.mxu0 0.0
    %1186 = vmatprep.subr.mxu0 0.0
    %1187 = vmatpush1.msra.mxu0 0.0
    %1188 = vmatprep.subr.mxu0 0.0
    %1189 = vmatpush1.msra.mxu0 0.0
    %1190 = vmatprep.subr.mxu0 0.0
    %1191 = vmatpush1.msra.mxu0 0.0
    %1192 = vmatprep.subr.mxu0 0.0
    %1193 = vmatpush1.msra.mxu0 0.0
    %1194 = vmatprep.subr.mxu0 0.0
    %1195 = vmatpush1.msra.mxu0 0.0
    %1196 = vmatprep.subr.mxu0 0.0
    %1197 = vmatpush1.msra.mxu0 0.0
    %1198 = vmatprep.subr.mxu0 0.0
    %1199 = vmatpush1.msra.mxu0 0.0
    %1200 = vmatprep.subr.mxu0 0.0
    %1201 = vmatpush1.msra.mxu0 0.0
    %1202 = vmatprep.subr.mxu0 0.0
    %1203 = vmatpush1.msra.mxu0 0.0
    %1204 = vmatprep.subr.mxu0 0.0
    %1205 = vmatpush1.msra.mxu0 0.0
    %1206 = vmatprep.subr.mxu0 0.0
    %1207 = vmatpush1.msra.mxu0 0.0
    %1208 = vmatprep.subr.mxu0 0.0
    %1209 = vmatpush1.msra.mxu0 0.0
    %1210 = vmatprep.subr.mxu0 0.0
    %1211 = vmatpush1.msra.mxu0 0.0
    %1212 = vmatprep.subr.mxu0 0.0
    %1213 = vmatpush1.msra.mxu0 0.0
    %1214 = vmatprep.subr.mxu0 0.0
    %1215 = vmatpush1.msra.mxu0 0.0
    %1216 = vmatprep.subr.mxu0 0.0
    %1217 = vmatpush1.msra.mxu0 0.0
    %1218 = vmatprep.subr.mxu0 0.0
    %1219 = vmatpush1.msra.mxu0 0.0
    %1220 = vmatprep.subr.mxu0 0.0
    %1221 = vmatpush1.msra.mxu0 0.0
    %1222 = vmatprep.subr.mxu0 0.0
    %1223 = vmatpush1.msra.mxu0 0.0
    %1224 = vmatprep.mubr.f32.mxu0 0.0
    %v1225 = vand.u32 %v739, 4294901760
    %1226 = vmatmul.mubr.f32.gmra.mrb[0].mxu0 %v1225
    %v1227 = vpop.f32.mrb[0].mxu0
    %v1228 = vadd.f32 %v1150, %v1227
    %v1229 = vpop.f32.mrb[0].mxu0
    %1230 = vmatprep.mubr.f32.mxu0 0.0
    %v1231 = vand.u32 %v742, 4294901760
    %1232 = vmatmul.mubr.f32.gmra.mrb[0].mxu0 %v1231
    %v1233 = vpop.f32.mrb[0].mxu0
    %v1234 = vadd.f32 %v1156, %v1233
    %v1235 = vpop.f32.mrb[0].mxu0
    %1236 = vdwg.mxu0
    %v1237 = vmul.f32 %v1228, 0.03125
    %v1238 = vmul.f32 %v1234, 0.03125
    %v1239 = vsub.f32 %v34, %v1237
    %v1240 = vsub.f32 %v35, %v1238
    %v1241 = vmul.f32 %v1239, %v1239
    %v1242 = vmul.f32 %v1240, %v1240
    %1243 = vmatprep.subr.mxu0 0.0
    %v1244 = vand.u32 %v36, 4294901760
    %1245 = vmatpush1.msra.mxu0 %v1244
    %1246 = vmatprep.subr.mxu0 0.0
    %v1247 = vand.u32 %v37, 4294901760
    %1248 = vmatpush1.msra.mxu0 %v1247
    %1249 = vmatprep.subr.mxu0 0.0
    %v1250 = vand.u32 %v38, 4294901760
    %1251 = vmatpush1.msra.mxu0 %v1250
    %1252 = vmatprep.subr.mxu0 0.0
    %v1253 = vand.u32 %v39, 4294901760
    %1254 = vmatpush1.msra.mxu0 %v1253
    %1255 = vmatprep.subr.mxu0 0.0
    %v1256 = vand.u32 %v40, 4294901760
    %1257 = vmatpush1.msra.mxu0 %v1256
    %1258 = vmatprep.subr.mxu0 0.0
    %v1259 = vand.u32 %v41, 4294901760
    %1260 = vmatpush1.msra.mxu0 %v1259
    %1261 = vmatprep.subr.mxu0 0.0
    %v1262 = vand.u32 %v42, 4294901760
    %1263 = vmatpush1.msra.mxu0 %v1262
    %1264 = vmatprep.subr.mxu0 0.0
    %v1265 = vand.u32 %v43, 4294901760
    %1266 = vmatpush1.msra.mxu0 %v1265
    %1267 = vmatprep.subr.mxu0 0.0
    %v1268 = vand.u32 %v44, 4294901760
    %1269 = vmatpush1.msra.mxu0 %v1268
    %1270 = vmatprep.subr.mxu0 0.0
    %v1271 = vand.u32 %v45, 4294901760
    %1272 = vmatpush1.msra.mxu0 %v1271
    %1273 = vmatprep.subr.mxu0 0.0
    %v1274 = vand.u32 %v46, 4294901760
    %1275 = vmatpush1.msra.mxu0 %v1274
    %1276 = vmatprep.subr.mxu0 0.0
    %v1277 = vand.u32 %v47, 4294901760
    %1278 = vmatpush1.msra.mxu0 %v1277
    %1279 = vmatprep.subr.mxu0 0.0
    %v1280 = vand.u32 %v48, 4294901760
    %1281 = vmatpush1.msra.mxu0 %v1280
    %1282 = vmatprep.subr.mxu0 0.0
    %v1283 = vand.u32 %v49, 4294901760
    %1284 = vmatpush1.msra.mxu0 %v1283
    %1285 = vmatprep.subr.mxu0 0.0
    %v1286 = vand.u32 %v50, 4294901760
    %1287 = vmatpush1.msra.mxu0 %v1286
    %1288 = vmatprep.subr.mxu0 0.0
    %v1289 = vand.u32 %v51, 4294901760
    %1290 = vmatpush1.msra.mxu0 %v1289
    %1291 = vmatprep.subr.mxu0 0.0
    %1292 = vmatpush1.msra.mxu0 0.0
    %1293 = vmatprep.subr.mxu0 0.0
    %1294 = vmatpush1.msra.mxu0 0.0
    %1295 = vmatprep.subr.mxu0 0.0
    %1296 = vmatpush1.msra.mxu0 0.0
    %1297 = vmatprep.subr.mxu0 0.0
    %1298 = vmatpush1.msra.mxu0 0.0
    %1299 = vmatprep.subr.mxu0 0.0
    %1300 = vmatpush1.msra.mxu0 0.0
    %1301 = vmatprep.subr.mxu0 0.0
    %1302 = vmatpush1.msra.mxu0 0.0
    %1303 = vmatprep.subr.mxu0 0.0
    %1304 = vmatpush1.msra.mxu0 0.0
    %1305 = vmatprep.subr.mxu0 0.0
    %1306 = vmatpush1.msra.mxu0 0.0
    %1307 = vmatprep.subr.mxu0 0.0
    %1308 = vmatpush1.msra.mxu0 0.0
    %1309 = vmatprep.subr.mxu0 0.0
    %1310 = vmatpush1.msra.mxu0 0.0
    %1311 = vmatprep.subr.mxu0 0.0
    %1312 = vmatpush1.msra.mxu0 0.0
    %1313 = vmatprep.subr.mxu0 0.0
    %1314 = vmatpush1.msra.mxu0 0.0
    %1315 = vmatprep.subr.mxu0 0.0
    %1316 = vmatpush1.msra.mxu0 0.0
    %1317 = vmatprep.subr.mxu0 0.0
    %1318 = vmatpush1.msra.mxu0 0.0
    %1319 = vmatprep.subr.mxu0 0.0
    %1320 = vmatpush1.msra.mxu0 0.0
    %1321 = vmatprep.subr.mxu0 0.0
    %1322 = vmatpush1.msra.mxu0 0.0
    %1323 = vmatprep.mubr.f32.mxu0 0.0
    %v1324 = vand.u32 %v1241, 4294901760
    %v1325 = vsub.f32 %v1241, %v1324
    %v1326 = vand.u32 %v1325, 4294901760
    %v1327 = vsub.f32 %v1325, %v1326
    %v1328 = vand.u32 %v1327, 4294901760
    %1329 = vmatmul.mubr.f32.gmra.mrb[0].mxu0 %v1328
    %v1330 = vpop.f32.mrb[0].mxu0
    %v1331 = vadd.f32 0.0, %v1330
    %v1332 = vpop.f32.mrb[0].mxu0
    %1333 = vmatprep.mubr.f32.mxu0 0.0
    %v1334 = vand.u32 %v1242, 4294901760
    %v1335 = vsub.f32 %v1242, %v1334
    %v1336 = vand.u32 %v1335, 4294901760
    %v1337 = vsub.f32 %v1335, %v1336
    %v1338 = vand.u32 %v1337, 4294901760
    %1339 = vmatmul.mubr.f32.gmra.mrb[0].mxu0 %v1338
    %v1340 = vpop.f32.mrb[0].mxu0
    %v1341 = vadd.f32 0.0, %v1340
    %v1342 = vpop.f32.mrb[0].mxu0
    %1343 = vdwg.mxu0
    %1344 = vmatprep.subr.mxu0 0.0
    %v1345 = vand.u32 %v36, 4294901760
    %v1346 = vsub.f32 %v36, %v1345
    %v1347 = vand.u32 %v1346, 4294901760
    %v1348 = vsub.f32 %v1346, %v1347
    %v1349 = vand.u32 %v1348, 4294901760
    %1350 = vmatpush1.msra.mxu0 %v1349
    %1351 = vmatprep.subr.mxu0 0.0
    %v1352 = vand.u32 %v37, 4294901760
    %v1353 = vsub.f32 %v37, %v1352
    %v1354 = vand.u32 %v1353, 4294901760
    %v1355 = vsub.f32 %v1353, %v1354
    %v1356 = vand.u32 %v1355, 4294901760
    %1357 = vmatpush1.msra.mxu0 %v1356
    %1358 = vmatprep.subr.mxu0 0.0
    %v1359 = vand.u32 %v38, 4294901760
    %v1360 = vsub.f32 %v38, %v1359
    %v1361 = vand.u32 %v1360, 4294901760
    %v1362 = vsub.f32 %v1360, %v1361
    %v1363 = vand.u32 %v1362, 4294901760
    %1364 = vmatpush1.msra.mxu0 %v1363
    %1365 = vmatprep.subr.mxu0 0.0
    %v1366 = vand.u32 %v39, 4294901760
    %v1367 = vsub.f32 %v39, %v1366
    %v1368 = vand.u32 %v1367, 4294901760
    %v1369 = vsub.f32 %v1367, %v1368
    %v1370 = vand.u32 %v1369, 4294901760
    %1371 = vmatpush1.msra.mxu0 %v1370
    %1372 = vmatprep.subr.mxu0 0.0
    %v1373 = vand.u32 %v40, 4294901760
    %v1374 = vsub.f32 %v40, %v1373
    %v1375 = vand.u32 %v1374, 4294901760
    %v1376 = vsub.f32 %v1374, %v1375
    %v1377 = vand.u32 %v1376, 4294901760
    %1378 = vmatpush1.msra.mxu0 %v1377
    %1379 = vmatprep.subr.mxu0 0.0
    %v1380 = vand.u32 %v41, 4294901760
    %v1381 = vsub.f32 %v41, %v1380
    %v1382 = vand.u32 %v1381, 4294901760
    %v1383 = vsub.f32 %v1381, %v1382
    %v1384 = vand.u32 %v1383, 4294901760
    %1385 = vmatpush1.msra.mxu0 %v1384
    %1386 = vmatprep.subr.mxu0 0.0
    %v1387 = vand.u32 %v42, 4294901760
    %v1388 = vsub.f32 %v42, %v1387
    %v1389 = vand.u32 %v1388, 4294901760
    %v1390 = vsub.f32 %v1388, %v1389
    %v1391 = vand.u32 %v1390, 4294901760
    %1392 = vmatpush1.msra.mxu0 %v1391
    %1393 = vmatprep.subr.mxu0 0.0
    %v1394 = vand.u32 %v43, 4294901760
    %v1395 = vsub.f32 %v43, %v1394
    %v1396 = vand.u32 %v1395, 4294901760
    %v1397 = vsub.f32 %v1395, %v1396
    %v1398 = vand.u32 %v1397, 4294901760
    %1399 = vmatpush1.msra.mxu0 %v1398
    %1400 = vmatprep.subr.mxu0 0.0
    %v1401 = vand.u32 %v44, 4294901760
    %v1402 = vsub.f32 %v44, %v1401
    %v1403 = vand.u32 %v1402, 4294901760
    %v1404 = vsub.f32 %v1402, %v1403
    %v1405 = vand.u32 %v1404, 4294901760
    %1406 = vmatpush1.msra.mxu0 %v1405
    %1407 = vmatprep.subr.mxu0 0.0
    %v1408 = vand.u32 %v45, 4294901760
    %v1409 = vsub.f32 %v45, %v1408
    %v1410 = vand.u32 %v1409, 4294901760
    %v1411 = vsub.f32 %v1409, %v1410
    %v1412 = vand.u32 %v1411, 4294901760
    %1413 = vmatpush1.msra.mxu0 %v1412
    %1414 = vmatprep.subr.mxu0 0.0
    %v1415 = vand.u32 %v46, 4294901760
    %v1416 = vsub.f32 %v46, %v1415
    %v1417 = vand.u32 %v1416, 4294901760
    %v1418 = vsub.f32 %v1416, %v1417
    %v1419 = vand.u32 %v1418, 4294901760
    %1420 = vmatpush1.msra.mxu0 %v1419
    %1421 = vmatprep.subr.mxu0 0.0
    %v1422 = vand.u32 %v47, 4294901760
    %v1423 = vsub.f32 %v47, %v1422
    %v1424 = vand.u32 %v1423, 4294901760
    %v1425 = vsub.f32 %v1423, %v1424
    %v1426 = vand.u32 %v1425, 4294901760
    %1427 = vmatpush1.msra.mxu0 %v1426
    %1428 = vmatprep.subr.mxu0 0.0
    %v1429 = vand.u32 %v48, 4294901760
    %v1430 = vsub.f32 %v48, %v1429
    %v1431 = vand.u32 %v1430, 4294901760
    %v1432 = vsub.f32 %v1430, %v1431
    %v1433 = vand.u32 %v1432, 4294901760
    %1434 = vmatpush1.msra.mxu0 %v1433
    %1435 = vmatprep.subr.mxu0 0.0
    %v1436 = vand.u32 %v49, 4294901760
    %v1437 = vsub.f32 %v49, %v1436
    %v1438 = vand.u32 %v1437, 4294901760
    %v1439 = vsub.f32 %v1437, %v1438
    %v1440 = vand.u32 %v1439, 4294901760
    %1441 = vmatpush1.msra.mxu0 %v1440
    %1442 = vmatprep.subr.mxu0 0.0
    %v1443 = vand.u32 %v50, 4294901760
    %v1444 = vsub.f32 %v50, %v1443
    %v1445 = vand.u32 %v1444, 4294901760
    %v1446 = vsub.f32 %v1444, %v1445
    %v1447 = vand.u32 %v1446, 4294901760
    %1448 = vmatpush1.msra.mxu0 %v1447
    %1449 = vmatprep.subr.mxu0 0.0
    %v1450 = vand.u32 %v51, 4294901760
    %v1451 = vsub.f32 %v51, %v1450
    %v1452 = vand.u32 %v1451, 4294901760
    %v1453 = vsub.f32 %v1451, %v1452
    %v1454 = vand.u32 %v1453, 4294901760
    %1455 = vmatpush1.msra.mxu0 %v1454
    %1456 = vmatprep.subr.mxu0 0.0
    %1457 = vmatpush1.msra.mxu0 0.0
    %1458 = vmatprep.subr.mxu0 0.0
    %1459 = vmatpush1.msra.mxu0 0.0
    %1460 = vmatprep.subr.mxu0 0.0
    %1461 = vmatpush1.msra.mxu0 0.0
    %1462 = vmatprep.subr.mxu0 0.0
    %1463 = vmatpush1.msra.mxu0 0.0
    %1464 = vmatprep.subr.mxu0 0.0
    %1465 = vmatpush1.msra.mxu0 0.0
    %1466 = vmatprep.subr.mxu0 0.0
    %1467 = vmatpush1.msra.mxu0 0.0
    %1468 = vmatprep.subr.mxu0 0.0
    %1469 = vmatpush1.msra.mxu0 0.0
    %1470 = vmatprep.subr.mxu0 0.0
    %1471 = vmatpush1.msra.mxu0 0.0
    %1472 = vmatprep.subr.mxu0 0.0
    %1473 = vmatpush1.msra.mxu0 0.0
    %1474 = vmatprep.subr.mxu0 0.0
    %1475 = vmatpush1.msra.mxu0 0.0
    %1476 = vmatprep.subr.mxu0 0.0
    %1477 = vmatpush1.msra.mxu0 0.0
    %1478 = vmatprep.subr.mxu0 0.0
    %1479 = vmatpush1.msra.mxu0 0.0
    %1480 = vmatprep.subr.mxu0 0.0
    %1481 = vmatpush1.msra.mxu0 0.0
    %1482 = vmatprep.subr.mxu0 0.0
    %1483 = vmatpush1.msra.mxu0 0.0
    %1484 = vmatprep.subr.mxu0 0.0
    %1485 = vmatpush1.msra.mxu0 0.0
    %1486 = vmatprep.subr.mxu0 0.0
    %1487 = vmatpush1.msra.mxu0 0.0
    %1488 = vmatprep.mubr.f32.mxu0 0.0
    %v1489 = vand.u32 %v1241, 4294901760
    %1490 = vmatmul.mubr.f32.gmra.mrb[0].mxu0 %v1489
    %v1491 = vpop.f32.mrb[0].mxu0
    %v1492 = vadd.f32 %v1331, %v1491
    %v1493 = vpop.f32.mrb[0].mxu0
    %1494 = vmatprep.mubr.f32.mxu0 0.0
    %v1495 = vand.u32 %v1242, 4294901760
    %1496 = vmatmul.mubr.f32.gmra.mrb[0].mxu0 %v1495
    %v1497 = vpop.f32.mrb[0].mxu0
    %v1498 = vadd.f32 %v1341, %v1497
    %v1499 = vpop.f32.mrb[0].mxu0
    %1500 = vdwg.mxu0
    %1501 = vmatprep.subr.mxu0 0.0
    %v1502 = vand.u32 %v36, 4294901760
    %v1503 = vsub.f32 %v36, %v1502
    %1504 = vmatpush1.msra.mxu0 %v1503
    %1505 = vmatprep.subr.mxu0 0.0
    %v1506 = vand.u32 %v37, 4294901760
    %v1507 = vsub.f32 %v37, %v1506
    %1508 = vmatpush1.msra.mxu0 %v1507
    %1509 = vmatprep.subr.mxu0 0.0
    %v1510 = vand.u32 %v38, 4294901760
    %v1511 = vsub.f32 %v38, %v1510
    %1512 = vmatpush1.msra.mxu0 %v1511
    %1513 = vmatprep.subr.mxu0 0.0
    %v1514 = vand.u32 %v39, 4294901760
    %v1515 = vsub.f32 %v39, %v1514
    %1516 = vmatpush1.msra.mxu0 %v1515
    %1517 = vmatprep.subr.mxu0 0.0
    %v1518 = vand.u32 %v40, 4294901760
    %v1519 = vsub.f32 %v40, %v1518
    %1520 = vmatpush1.msra.mxu0 %v1519
    %1521 = vmatprep.subr.mxu0 0.0
    %v1522 = vand.u32 %v41, 4294901760
    %v1523 = vsub.f32 %v41, %v1522
    %1524 = vmatpush1.msra.mxu0 %v1523
    %1525 = vmatprep.subr.mxu0 0.0
    %v1526 = vand.u32 %v42, 4294901760
    %v1527 = vsub.f32 %v42, %v1526
    %1528 = vmatpush1.msra.mxu0 %v1527
    %1529 = vmatprep.subr.mxu0 0.0
    %v1530 = vand.u32 %v43, 4294901760
    %v1531 = vsub.f32 %v43, %v1530
    %1532 = vmatpush1.msra.mxu0 %v1531
    %1533 = vmatprep.subr.mxu0 0.0
    %v1534 = vand.u32 %v44, 4294901760
    %v1535 = vsub.f32 %v44, %v1534
    %1536 = vmatpush1.msra.mxu0 %v1535
    %1537 = vmatprep.subr.mxu0 0.0
    %v1538 = vand.u32 %v45, 4294901760
    %v1539 = vsub.f32 %v45, %v1538
    %1540 = vmatpush1.msra.mxu0 %v1539
    %1541 = vmatprep.subr.mxu0 0.0
    %v1542 = vand.u32 %v46, 4294901760
    %v1543 = vsub.f32 %v46, %v1542
    %1544 = vmatpush1.msra.mxu0 %v1543
    %1545 = vmatprep.subr.mxu0 0.0
    %v1546 = vand.u32 %v47, 4294901760
    %v1547 = vsub.f32 %v47, %v1546
    %1548 = vmatpush1.msra.mxu0 %v1547
    %1549 = vmatprep.subr.mxu0 0.0
    %v1550 = vand.u32 %v48, 4294901760
    %v1551 = vsub.f32 %v48, %v1550
    %1552 = vmatpush1.msra.mxu0 %v1551
    %1553 = vmatprep.subr.mxu0 0.0
    %v1554 = vand.u32 %v49, 4294901760
    %v1555 = vsub.f32 %v49, %v1554
    %1556 = vmatpush1.msra.mxu0 %v1555
    %1557 = vmatprep.subr.mxu0 0.0
    %v1558 = vand.u32 %v50, 4294901760
    %v1559 = vsub.f32 %v50, %v1558
    %1560 = vmatpush1.msra.mxu0 %v1559
    %1561 = vmatprep.subr.mxu0 0.0
    %v1562 = vand.u32 %v51, 4294901760
    %v1563 = vsub.f32 %v51, %v1562
    %1564 = vmatpush1.msra.mxu0 %v1563
    %1565 = vmatprep.subr.mxu0 0.0
    %1566 = vmatpush1.msra.mxu0 0.0
    %1567 = vmatprep.subr.mxu0 0.0
    %1568 = vmatpush1.msra.mxu0 0.0
    %1569 = vmatprep.subr.mxu0 0.0
    %1570 = vmatpush1.msra.mxu0 0.0
    %1571 = vmatprep.subr.mxu0 0.0
    %1572 = vmatpush1.msra.mxu0 0.0
    %1573 = vmatprep.subr.mxu0 0.0
    %1574 = vmatpush1.msra.mxu0 0.0
    %1575 = vmatprep.subr.mxu0 0.0
    %1576 = vmatpush1.msra.mxu0 0.0
    %1577 = vmatprep.subr.mxu0 0.0
    %1578 = vmatpush1.msra.mxu0 0.0
    %1579 = vmatprep.subr.mxu0 0.0
    %1580 = vmatpush1.msra.mxu0 0.0
    %1581 = vmatprep.subr.mxu0 0.0
    %1582 = vmatpush1.msra.mxu0 0.0
    %1583 = vmatprep.subr.mxu0 0.0
    %1584 = vmatpush1.msra.mxu0 0.0
    %1585 = vmatprep.subr.mxu0 0.0
    %1586 = vmatpush1.msra.mxu0 0.0
    %1587 = vmatprep.subr.mxu0 0.0
    %1588 = vmatpush1.msra.mxu0 0.0
    %1589 = vmatprep.subr.mxu0 0.0
    %1590 = vmatpush1.msra.mxu0 0.0
    %1591 = vmatprep.subr.mxu0 0.0
    %1592 = vmatpush1.msra.mxu0 0.0
    %1593 = vmatprep.subr.mxu0 0.0
    %1594 = vmatpush1.msra.mxu0 0.0
    %1595 = vmatprep.subr.mxu0 0.0
    %1596 = vmatpush1.msra.mxu0 0.0
    %1597 = vmatprep.mubr.f32.mxu0 0.0
    %v1598 = vand.u32 %v1241, 4294901760
    %v1599 = vsub.f32 %v1241, %v1598
    %1600 = vmatmul.mubr.f32.gmra.mrb[0].mxu0 %v1599
    %v1601 = vpop.f32.mrb[0].mxu0
    %v1602 = vadd.f32 %v1492, %v1601
    %v1603 = vpop.f32.mrb[0].mxu0
    %1604 = vmatprep.mubr.f32.mxu0 0.0
    %v1605 = vand.u32 %v1242, 4294901760
    %v1606 = vsub.f32 %v1242, %v1605
    %1607 = vmatmul.mubr.f32.gmra.mrb[0].mxu0 %v1606
    %v1608 = vpop.f32.mrb[0].mxu0
    %v1609 = vadd.f32 %v1498, %v1608
    %v1610 = vpop.f32.mrb[0].mxu0
    %1611 = vdwg.mxu0
    %1612 = vmatprep.subr.mxu0 0.0
    %v1613 = vand.u32 %v36, 4294901760
    %1614 = vmatpush1.msra.mxu0 %v1613
    %1615 = vmatprep.subr.mxu0 0.0
    %v1616 = vand.u32 %v37, 4294901760
    %1617 = vmatpush1.msra.mxu0 %v1616
    %1618 = vmatprep.subr.mxu0 0.0
    %v1619 = vand.u32 %v38, 4294901760
    %1620 = vmatpush1.msra.mxu0 %v1619
    %1621 = vmatprep.subr.mxu0 0.0
    %v1622 = vand.u32 %v39, 4294901760
    %1623 = vmatpush1.msra.mxu0 %v1622
    %1624 = vmatprep.subr.mxu0 0.0
    %v1625 = vand.u32 %v40, 4294901760
    %1626 = vmatpush1.msra.mxu0 %v1625
    %1627 = vmatprep.subr.mxu0 0.0
    %v1628 = vand.u32 %v41, 4294901760
    %1629 = vmatpush1.msra.mxu0 %v1628
    %1630 = vmatprep.subr.mxu0 0.0
    %v1631 = vand.u32 %v42, 4294901760
    %1632 = vmatpush1.msra.mxu0 %v1631
    %1633 = vmatprep.subr.mxu0 0.0
    %v1634 = vand.u32 %v43, 4294901760
    %1635 = vmatpush1.msra.mxu0 %v1634
    %1636 = vmatprep.subr.mxu0 0.0
    %v1637 = vand.u32 %v44, 4294901760
    %1638 = vmatpush1.msra.mxu0 %v1637
    %1639 = vmatprep.subr.mxu0 0.0
    %v1640 = vand.u32 %v45, 4294901760
    %1641 = vmatpush1.msra.mxu0 %v1640
    %1642 = vmatprep.subr.mxu0 0.0
    %v1643 = vand.u32 %v46, 4294901760
    %1644 = vmatpush1.msra.mxu0 %v1643
    %1645 = vmatprep.subr.mxu0 0.0
    %v1646 = vand.u32 %v47, 4294901760
    %1647 = vmatpush1.msra.mxu0 %v1646
    %1648 = vmatprep.subr.mxu0 0.0
    %v1649 = vand.u32 %v48, 4294901760
    %1650 = vmatpush1.msra.mxu0 %v1649
    %1651 = vmatprep.subr.mxu0 0.0
    %v1652 = vand.u32 %v49, 4294901760
    %1653 = vmatpush1.msra.mxu0 %v1652
    %1654 = vmatprep.subr.mxu0 0.0
    %v1655 = vand.u32 %v50, 4294901760
    %1656 = vmatpush1.msra.mxu0 %v1655
    %1657 = vmatprep.subr.mxu0 0.0
    %v1658 = vand.u32 %v51, 4294901760
    %1659 = vmatpush1.msra.mxu0 %v1658
    %1660 = vmatprep.subr.mxu0 0.0
    %1661 = vmatpush1.msra.mxu0 0.0
    %1662 = vmatprep.subr.mxu0 0.0
    %1663 = vmatpush1.msra.mxu0 0.0
    %1664 = vmatprep.subr.mxu0 0.0
    %1665 = vmatpush1.msra.mxu0 0.0
    %1666 = vmatprep.subr.mxu0 0.0
    %1667 = vmatpush1.msra.mxu0 0.0
    %1668 = vmatprep.subr.mxu0 0.0
    %1669 = vmatpush1.msra.mxu0 0.0
    %1670 = vmatprep.subr.mxu0 0.0
    %1671 = vmatpush1.msra.mxu0 0.0
    %1672 = vmatprep.subr.mxu0 0.0
    %1673 = vmatpush1.msra.mxu0 0.0
    %1674 = vmatprep.subr.mxu0 0.0
    %1675 = vmatpush1.msra.mxu0 0.0
    %1676 = vmatprep.subr.mxu0 0.0
    %1677 = vmatpush1.msra.mxu0 0.0
    %1678 = vmatprep.subr.mxu0 0.0
    %1679 = vmatpush1.msra.mxu0 0.0
    %1680 = vmatprep.subr.mxu0 0.0
    %1681 = vmatpush1.msra.mxu0 0.0
    %1682 = vmatprep.subr.mxu0 0.0
    %1683 = vmatpush1.msra.mxu0 0.0
    %1684 = vmatprep.subr.mxu0 0.0
    %1685 = vmatpush1.msra.mxu0 0.0
    %1686 = vmatprep.subr.mxu0 0.0
    %1687 = vmatpush1.msra.mxu0 0.0
    %1688 = vmatprep.subr.mxu0 0.0
    %1689 = vmatpush1.msra.mxu0 0.0
    %1690 = vmatprep.subr.mxu0 0.0
    %1691 = vmatpush1.msra.mxu0 0.0
    %1692 = vmatprep.mubr.f32.mxu0 0.0
    %v1693 = vand.u32 %v1241, 4294901760
    %v1694 = vsub.f32 %v1241, %v1693
    %v1695 = vand.u32 %v1694, 4294901760
    %1696 = vmatmul.mubr.f32.gmra.mrb[0].mxu0 %v1695
    %v1697 = vpop.f32.mrb[0].mxu0
    %v1698 = vadd.f32 %v1602, %v1697
    %v1699 = vpop.f32.mrb[0].mxu0
    %1700 = vmatprep.mubr.f32.mxu0 0.0
    %v1701 = vand.u32 %v1242, 4294901760
    %v1702 = vsub.f32 %v1242, %v1701
    %v1703 = vand.u32 %v1702, 4294901760
    %1704 = vmatmul.mubr.f32.gmra.mrb[0].mxu0 %v1703
    %v1705 = vpop.f32.mrb[0].mxu0
    %v1706 = vadd.f32 %v1609, %v1705
    %v1707 = vpop.f32.mrb[0].mxu0
    %1708 = vdwg.mxu0
    %1709 = vmatprep.subr.mxu0 0.0
    %v1710 = vand.u32 %v36, 4294901760
    %v1711 = vsub.f32 %v36, %v1710
    %v1712 = vand.u32 %v1711, 4294901760
    %1713 = vmatpush1.msra.mxu0 %v1712
    %1714 = vmatprep.subr.mxu0 0.0
    %v1715 = vand.u32 %v37, 4294901760
    %v1716 = vsub.f32 %v37, %v1715
    %v1717 = vand.u32 %v1716, 4294901760
    %1718 = vmatpush1.msra.mxu0 %v1717
    %1719 = vmatprep.subr.mxu0 0.0
    %v1720 = vand.u32 %v38, 4294901760
    %v1721 = vsub.f32 %v38, %v1720
    %v1722 = vand.u32 %v1721, 4294901760
    %1723 = vmatpush1.msra.mxu0 %v1722
    %1724 = vmatprep.subr.mxu0 0.0
    %v1725 = vand.u32 %v39, 4294901760
    %v1726 = vsub.f32 %v39, %v1725
    %v1727 = vand.u32 %v1726, 4294901760
    %1728 = vmatpush1.msra.mxu0 %v1727
    %1729 = vmatprep.subr.mxu0 0.0
    %v1730 = vand.u32 %v40, 4294901760
    %v1731 = vsub.f32 %v40, %v1730
    %v1732 = vand.u32 %v1731, 4294901760
    %1733 = vmatpush1.msra.mxu0 %v1732
    %1734 = vmatprep.subr.mxu0 0.0
    %v1735 = vand.u32 %v41, 4294901760
    %v1736 = vsub.f32 %v41, %v1735
    %v1737 = vand.u32 %v1736, 4294901760
    %1738 = vmatpush1.msra.mxu0 %v1737
    %1739 = vmatprep.subr.mxu0 0.0
    %v1740 = vand.u32 %v42, 4294901760
    %v1741 = vsub.f32 %v42, %v1740
    %v1742 = vand.u32 %v1741, 4294901760
    %1743 = vmatpush1.msra.mxu0 %v1742
    %1744 = vmatprep.subr.mxu0 0.0
    %v1745 = vand.u32 %v43, 4294901760
    %v1746 = vsub.f32 %v43, %v1745
    %v1747 = vand.u32 %v1746, 4294901760
    %1748 = vmatpush1.msra.mxu0 %v1747
    %1749 = vmatprep.subr.mxu0 0.0
    %v1750 = vand.u32 %v44, 4294901760
    %v1751 = vsub.f32 %v44, %v1750
    %v1752 = vand.u32 %v1751, 4294901760
    %1753 = vmatpush1.msra.mxu0 %v1752
    %1754 = vmatprep.subr.mxu0 0.0
    %v1755 = vand.u32 %v45, 4294901760
    %v1756 = vsub.f32 %v45, %v1755
    %v1757 = vand.u32 %v1756, 4294901760
    %1758 = vmatpush1.msra.mxu0 %v1757
    %1759 = vmatprep.subr.mxu0 0.0
    %v1760 = vand.u32 %v46, 4294901760
    %v1761 = vsub.f32 %v46, %v1760
    %v1762 = vand.u32 %v1761, 4294901760
    %1763 = vmatpush1.msra.mxu0 %v1762
    %1764 = vmatprep.subr.mxu0 0.0
    %v1765 = vand.u32 %v47, 4294901760
    %v1766 = vsub.f32 %v47, %v1765
    %v1767 = vand.u32 %v1766, 4294901760
    %1768 = vmatpush1.msra.mxu0 %v1767
    %1769 = vmatprep.subr.mxu0 0.0
    %v1770 = vand.u32 %v48, 4294901760
    %v1771 = vsub.f32 %v48, %v1770
    %v1772 = vand.u32 %v1771, 4294901760
    %1773 = vmatpush1.msra.mxu0 %v1772
    %1774 = vmatprep.subr.mxu0 0.0
    %v1775 = vand.u32 %v49, 4294901760
    %v1776 = vsub.f32 %v49, %v1775
    %v1777 = vand.u32 %v1776, 4294901760
    %1778 = vmatpush1.msra.mxu0 %v1777
    %1779 = vmatprep.subr.mxu0 0.0
    %v1780 = vand.u32 %v50, 4294901760
    %v1781 = vsub.f32 %v50, %v1780
    %v1782 = vand.u32 %v1781, 4294901760
    %1783 = vmatpush1.msra.mxu0 %v1782
    %1784 = vmatprep.subr.mxu0 0.0
    %v1785 = vand.u32 %v51, 4294901760
    %v1786 = vsub.f32 %v51, %v1785
    %v1787 = vand.u32 %v1786, 4294901760
    %1788 = vmatpush1.msra.mxu0 %v1787
    %1789 = vmatprep.subr.mxu0 0.0
    %1790 = vmatpush1.msra.mxu0 0.0
    %1791 = vmatprep.subr.mxu0 0.0
    %1792 = vmatpush1.msra.mxu0 0.0
    %1793 = vmatprep.subr.mxu0 0.0
    %1794 = vmatpush1.msra.mxu0 0.0
    %1795 = vmatprep.subr.mxu0 0.0
    %1796 = vmatpush1.msra.mxu0 0.0
    %1797 = vmatprep.subr.mxu0 0.0
    %1798 = vmatpush1.msra.mxu0 0.0
    %1799 = vmatprep.subr.mxu0 0.0
    %1800 = vmatpush1.msra.mxu0 0.0
    %1801 = vmatprep.subr.mxu0 0.0
    %1802 = vmatpush1.msra.mxu0 0.0
    %1803 = vmatprep.subr.mxu0 0.0
    %1804 = vmatpush1.msra.mxu0 0.0
    %1805 = vmatprep.subr.mxu0 0.0
    %1806 = vmatpush1.msra.mxu0 0.0
    %1807 = vmatprep.subr.mxu0 0.0
    %1808 = vmatpush1.msra.mxu0 0.0
    %1809 = vmatprep.subr.mxu0 0.0
    %1810 = vmatpush1.msra.mxu0 0.0
    %1811 = vmatprep.subr.mxu0 0.0
    %1812 = vmatpush1.msra.mxu0 0.0
    %1813 = vmatprep.subr.mxu0 0.0
    %1814 = vmatpush1.msra.mxu0 0.0
    %1815 = vmatprep.subr.mxu0 0.0
    %1816 = vmatpush1.msra.mxu0 0.0
    %1817 = vmatprep.subr.mxu0 0.0
    %1818 = vmatpush1.msra.mxu0 0.0
    %1819 = vmatprep.subr.mxu0 0.0
    %1820 = vmatpush1.msra.mxu0 0.0
    %1821 = vmatprep.mubr.f32.mxu0 0.0
    %v1822 = vand.u32 %v1241, 4294901760
    %1823 = vmatmul.mubr.f32.gmra.mrb[0].mxu0 %v1822
    %v1824 = vpop.f32.mrb[0].mxu0
    %v1825 = vadd.f32 %v1698, %v1824
    %v1826 = vpop.f32.mrb[0].mxu0
    %1827 = vmatprep.mubr.f32.mxu0 0.0
    %v1828 = vand.u32 %v1242, 4294901760
    %1829 = vmatmul.mubr.f32.gmra.mrb[0].mxu0 %v1828
    %v1830 = vpop.f32.mrb[0].mxu0
    %v1831 = vadd.f32 %v1706, %v1830
    %v1832 = vpop.f32.mrb[0].mxu0
    %1833 = vdwg.mxu0
    %1834 = vmatprep.subr.mxu0 0.0
    %v1835 = vand.u32 %v36, 4294901760
    %1836 = vmatpush1.msra.mxu0 %v1835
    %1837 = vmatprep.subr.mxu0 0.0
    %v1838 = vand.u32 %v37, 4294901760
    %1839 = vmatpush1.msra.mxu0 %v1838
    %1840 = vmatprep.subr.mxu0 0.0
    %v1841 = vand.u32 %v38, 4294901760
    %1842 = vmatpush1.msra.mxu0 %v1841
    %1843 = vmatprep.subr.mxu0 0.0
    %v1844 = vand.u32 %v39, 4294901760
    %1845 = vmatpush1.msra.mxu0 %v1844
    %1846 = vmatprep.subr.mxu0 0.0
    %v1847 = vand.u32 %v40, 4294901760
    %1848 = vmatpush1.msra.mxu0 %v1847
    %1849 = vmatprep.subr.mxu0 0.0
    %v1850 = vand.u32 %v41, 4294901760
    %1851 = vmatpush1.msra.mxu0 %v1850
    %1852 = vmatprep.subr.mxu0 0.0
    %v1853 = vand.u32 %v42, 4294901760
    %1854 = vmatpush1.msra.mxu0 %v1853
    %1855 = vmatprep.subr.mxu0 0.0
    %v1856 = vand.u32 %v43, 4294901760
    %1857 = vmatpush1.msra.mxu0 %v1856
    %1858 = vmatprep.subr.mxu0 0.0
    %v1859 = vand.u32 %v44, 4294901760
    %1860 = vmatpush1.msra.mxu0 %v1859
    %1861 = vmatprep.subr.mxu0 0.0
    %v1862 = vand.u32 %v45, 4294901760
    %1863 = vmatpush1.msra.mxu0 %v1862
    %1864 = vmatprep.subr.mxu0 0.0
    %v1865 = vand.u32 %v46, 4294901760
    %1866 = vmatpush1.msra.mxu0 %v1865
    %1867 = vmatprep.subr.mxu0 0.0
    %v1868 = vand.u32 %v47, 4294901760
    %1869 = vmatpush1.msra.mxu0 %v1868
    %1870 = vmatprep.subr.mxu0 0.0
    %v1871 = vand.u32 %v48, 4294901760
    %1872 = vmatpush1.msra.mxu0 %v1871
    %1873 = vmatprep.subr.mxu0 0.0
    %v1874 = vand.u32 %v49, 4294901760
    %1875 = vmatpush1.msra.mxu0 %v1874
    %1876 = vmatprep.subr.mxu0 0.0
    %v1877 = vand.u32 %v50, 4294901760
    %1878 = vmatpush1.msra.mxu0 %v1877
    %1879 = vmatprep.subr.mxu0 0.0
    %v1880 = vand.u32 %v51, 4294901760
    %1881 = vmatpush1.msra.mxu0 %v1880
    %1882 = vmatprep.subr.mxu0 0.0
    %1883 = vmatpush1.msra.mxu0 0.0
    %1884 = vmatprep.subr.mxu0 0.0
    %1885 = vmatpush1.msra.mxu0 0.0
    %1886 = vmatprep.subr.mxu0 0.0
    %1887 = vmatpush1.msra.mxu0 0.0
    %1888 = vmatprep.subr.mxu0 0.0
    %1889 = vmatpush1.msra.mxu0 0.0
    %1890 = vmatprep.subr.mxu0 0.0
    %1891 = vmatpush1.msra.mxu0 0.0
    %1892 = vmatprep.subr.mxu0 0.0
    %1893 = vmatpush1.msra.mxu0 0.0
    %1894 = vmatprep.subr.mxu0 0.0
    %1895 = vmatpush1.msra.mxu0 0.0
    %1896 = vmatprep.subr.mxu0 0.0
    %1897 = vmatpush1.msra.mxu0 0.0
    %1898 = vmatprep.subr.mxu0 0.0
    %1899 = vmatpush1.msra.mxu0 0.0
    %1900 = vmatprep.subr.mxu0 0.0
    %1901 = vmatpush1.msra.mxu0 0.0
    %1902 = vmatprep.subr.mxu0 0.0
    %1903 = vmatpush1.msra.mxu0 0.0
    %1904 = vmatprep.subr.mxu0 0.0
    %1905 = vmatpush1.msra.mxu0 0.0
    %1906 = vmatprep.subr.mxu0 0.0
    %1907 = vmatpush1.msra.mxu0 0.0
    %1908 = vmatprep.subr.mxu0 0.0
    %1909 = vmatpush1.msra.mxu0 0.0
    %1910 = vmatprep.subr.mxu0 0.0
    %1911 = vmatpush1.msra.mxu0 0.0
    %1912 = vmatprep.subr.mxu0 0.0
    %1913 = vmatpush1.msra.mxu0 0.0
    %1914 = vmatprep.mubr.f32.mxu0 0.0
    %v1915 = vand.u32 %v1241, 4294901760
    %1916 = vmatmul.mubr.f32.gmra.mrb[0].mxu0 %v1915
    %v1917 = vpop.f32.mrb[0].mxu0
    %v1918 = vadd.f32 %v1825, %v1917
    %v1919 = vpop.f32.mrb[0].mxu0
    %1920 = vmatprep.mubr.f32.mxu0 0.0
    %v1921 = vand.u32 %v1242, 4294901760
    %1922 = vmatmul.mubr.f32.gmra.mrb[0].mxu0 %v1921
    %v1923 = vpop.f32.mrb[0].mxu0
    %v1924 = vadd.f32 %v1831, %v1923
    %v1925 = vpop.f32.mrb[0].mxu0
    %1926 = vdwg.mxu0
    %v1928 = vsel %vm737, %v1918, 0
    %v1931 = vsel %vm737, %v1924, 0
    %1933 = vmatprep.subr.mxu0 0.0
    %v1934 = vand.u32 %v746, 4294901760
    %1935 = vmatpush1.msra.mxu0 %v1934
    %1936 = vmatprep.subr.mxu0 0.0
    %1937 = vmatpush1.msra.mxu0 0.0
    %1938 = vmatprep.subr.mxu0 0.0
    %1939 = vmatpush1.msra.mxu0 0.0
    %1940 = vmatprep.subr.mxu0 0.0
    %1941 = vmatpush1.msra.mxu0 0.0
    %1942 = vmatprep.subr.mxu0 0.0
    %1943 = vmatpush1.msra.mxu0 0.0
    %1944 = vmatprep.subr.mxu0 0.0
    %1945 = vmatpush1.msra.mxu0 0.0
    %1946 = vmatprep.subr.mxu0 0.0
    %1947 = vmatpush1.msra.mxu0 0.0
    %1948 = vmatprep.subr.mxu0 0.0
    %1949 = vmatpush1.msra.mxu0 0.0
    %1950 = vmatprep.subr.mxu0 0.0
    %1951 = vmatpush1.msra.mxu0 0.0
    %1952 = vmatprep.subr.mxu0 0.0
    %1953 = vmatpush1.msra.mxu0 0.0
    %1954 = vmatprep.subr.mxu0 0.0
    %1955 = vmatpush1.msra.mxu0 0.0
    %1956 = vmatprep.subr.mxu0 0.0
    %1957 = vmatpush1.msra.mxu0 0.0
    %1958 = vmatprep.subr.mxu0 0.0
    %1959 = vmatpush1.msra.mxu0 0.0
    %1960 = vmatprep.subr.mxu0 0.0
    %1961 = vmatpush1.msra.mxu0 0.0
    %1962 = vmatprep.subr.mxu0 0.0
    %1963 = vmatpush1.msra.mxu0 0.0
    %1964 = vmatprep.subr.mxu0 0.0
    %1965 = vmatpush1.msra.mxu0 0.0
    %1966 = vmatprep.subr.mxu0 0.0
    %1967 = vmatpush1.msra.mxu0 0.0
    %1968 = vmatprep.subr.mxu0 0.0
    %1969 = vmatpush1.msra.mxu0 0.0
    %1970 = vmatprep.subr.mxu0 0.0
    %1971 = vmatpush1.msra.mxu0 0.0
    %1972 = vmatprep.subr.mxu0 0.0
    %1973 = vmatpush1.msra.mxu0 0.0
    %1974 = vmatprep.subr.mxu0 0.0
    %1975 = vmatpush1.msra.mxu0 0.0
    %1976 = vmatprep.subr.mxu0 0.0
    %1977 = vmatpush1.msra.mxu0 0.0
    %1978 = vmatprep.subr.mxu0 0.0
    %1979 = vmatpush1.msra.mxu0 0.0
    %1980 = vmatprep.subr.mxu0 0.0
    %1981 = vmatpush1.msra.mxu0 0.0
    %1982 = vmatprep.subr.mxu0 0.0
    %1983 = vmatpush1.msra.mxu0 0.0
    %1984 = vmatprep.subr.mxu0 0.0
    %1985 = vmatpush1.msra.mxu0 0.0
    %1986 = vmatprep.subr.mxu0 0.0
    %1987 = vmatpush1.msra.mxu0 0.0
    %1988 = vmatprep.subr.mxu0 0.0
    %1989 = vmatpush1.msra.mxu0 0.0
    %1990 = vmatprep.subr.mxu0 0.0
    %1991 = vmatpush1.msra.mxu0 0.0
    %1992 = vmatprep.subr.mxu0 0.0
    %1993 = vmatpush1.msra.mxu0 0.0
    %1994 = vmatprep.subr.mxu0 0.0
    %1995 = vmatpush1.msra.mxu0 0.0
    %1996 = vmatprep.subr.mxu0 0.0
    %1997 = vmatpush1.msra.mxu0 0.0
    %1998 = vmatprep.mubr.f32.mxu0 0.0
    %v1999 = vand.u32 %v1928, 4294901760
    %v2000 = vsub.f32 %v1928, %v1999
    %v2001 = vand.u32 %v2000, 4294901760
    %v2002 = vsub.f32 %v2000, %v2001
    %v2003 = vand.u32 %v2002, 4294901760
    %2004 = vmatmul.mubr.f32.gmra.mrb[0].mxu0 %v2003
    %v2005 = vpop.f32.mrb[0].mxu0
    %v2006 = vadd.f32 0.0, %v2005
    %v2007 = vpop.f32.mrb[0].mxu0
    %2008 = vmatprep.mubr.f32.mxu0 0.0
    %v2009 = vand.u32 %v1931, 4294901760
    %v2010 = vsub.f32 %v1931, %v2009
    %v2011 = vand.u32 %v2010, 4294901760
    %v2012 = vsub.f32 %v2010, %v2011
    %v2013 = vand.u32 %v2012, 4294901760
    %2014 = vmatmul.mubr.f32.gmra.mrb[0].mxu0 %v2013
    %v2015 = vpop.f32.mrb[0].mxu0
    %v2016 = vadd.f32 0.0, %v2015
    %v2017 = vpop.f32.mrb[0].mxu0
    %2018 = vdwg.mxu0
    %2019 = vmatprep.subr.mxu0 0.0
    %v2020 = vand.u32 %v746, 4294901760
    %v2021 = vsub.f32 %v746, %v2020
    %v2022 = vand.u32 %v2021, 4294901760
    %v2023 = vsub.f32 %v2021, %v2022
    %v2024 = vand.u32 %v2023, 4294901760
    %2025 = vmatpush1.msra.mxu0 %v2024
    %2026 = vmatprep.subr.mxu0 0.0
    %2027 = vmatpush1.msra.mxu0 0.0
    %2028 = vmatprep.subr.mxu0 0.0
    %2029 = vmatpush1.msra.mxu0 0.0
    %2030 = vmatprep.subr.mxu0 0.0
    %2031 = vmatpush1.msra.mxu0 0.0
    %2032 = vmatprep.subr.mxu0 0.0
    %2033 = vmatpush1.msra.mxu0 0.0
    %2034 = vmatprep.subr.mxu0 0.0
    %2035 = vmatpush1.msra.mxu0 0.0
    %2036 = vmatprep.subr.mxu0 0.0
    %2037 = vmatpush1.msra.mxu0 0.0
    %2038 = vmatprep.subr.mxu0 0.0
    %2039 = vmatpush1.msra.mxu0 0.0
    %2040 = vmatprep.subr.mxu0 0.0
    %2041 = vmatpush1.msra.mxu0 0.0
    %2042 = vmatprep.subr.mxu0 0.0
    %2043 = vmatpush1.msra.mxu0 0.0
    %2044 = vmatprep.subr.mxu0 0.0
    %2045 = vmatpush1.msra.mxu0 0.0
    %2046 = vmatprep.subr.mxu0 0.0
    %2047 = vmatpush1.msra.mxu0 0.0
    %2048 = vmatprep.subr.mxu0 0.0
    %2049 = vmatpush1.msra.mxu0 0.0
    %2050 = vmatprep.subr.mxu0 0.0
    %2051 = vmatpush1.msra.mxu0 0.0
    %2052 = vmatprep.subr.mxu0 0.0
    %2053 = vmatpush1.msra.mxu0 0.0
    %2054 = vmatprep.subr.mxu0 0.0
    %2055 = vmatpush1.msra.mxu0 0.0
    %2056 = vmatprep.subr.mxu0 0.0
    %2057 = vmatpush1.msra.mxu0 0.0
    %2058 = vmatprep.subr.mxu0 0.0
    %2059 = vmatpush1.msra.mxu0 0.0
    %2060 = vmatprep.subr.mxu0 0.0
    %2061 = vmatpush1.msra.mxu0 0.0
    %2062 = vmatprep.subr.mxu0 0.0
    %2063 = vmatpush1.msra.mxu0 0.0
    %2064 = vmatprep.subr.mxu0 0.0
    %2065 = vmatpush1.msra.mxu0 0.0
    %2066 = vmatprep.subr.mxu0 0.0
    %2067 = vmatpush1.msra.mxu0 0.0
    %2068 = vmatprep.subr.mxu0 0.0
    %2069 = vmatpush1.msra.mxu0 0.0
    %2070 = vmatprep.subr.mxu0 0.0
    %2071 = vmatpush1.msra.mxu0 0.0
    %2072 = vmatprep.subr.mxu0 0.0
    %2073 = vmatpush1.msra.mxu0 0.0
    %2074 = vmatprep.subr.mxu0 0.0
    %2075 = vmatpush1.msra.mxu0 0.0
    %2076 = vmatprep.subr.mxu0 0.0
    %2077 = vmatpush1.msra.mxu0 0.0
    %2078 = vmatprep.subr.mxu0 0.0
    %2079 = vmatpush1.msra.mxu0 0.0
    %2080 = vmatprep.subr.mxu0 0.0
    %2081 = vmatpush1.msra.mxu0 0.0
    %2082 = vmatprep.subr.mxu0 0.0
    %2083 = vmatpush1.msra.mxu0 0.0
    %2084 = vmatprep.subr.mxu0 0.0
    %2085 = vmatpush1.msra.mxu0 0.0
    %2086 = vmatprep.subr.mxu0 0.0
    %2087 = vmatpush1.msra.mxu0 0.0
    %2088 = vmatprep.mubr.f32.mxu0 0.0
    %v2089 = vand.u32 %v1928, 4294901760
    %2090 = vmatmul.mubr.f32.gmra.mrb[0].mxu0 %v2089
    %v2091 = vpop.f32.mrb[0].mxu0
    %v2092 = vadd.f32 %v2006, %v2091
    %v2093 = vpop.f32.mrb[0].mxu0
    %2094 = vmatprep.mubr.f32.mxu0 0.0
    %v2095 = vand.u32 %v1931, 4294901760
    %2096 = vmatmul.mubr.f32.gmra.mrb[0].mxu0 %v2095
    %v2097 = vpop.f32.mrb[0].mxu0
    %v2098 = vadd.f32 %v2016, %v2097
    %v2099 = vpop.f32.mrb[0].mxu0
    %2100 = vdwg.mxu0
    %2101 = vmatprep.subr.mxu0 0.0
    %v2102 = vand.u32 %v746, 4294901760
    %v2103 = vsub.f32 %v746, %v2102
    %2104 = vmatpush1.msra.mxu0 %v2103
    %2105 = vmatprep.subr.mxu0 0.0
    %2106 = vmatpush1.msra.mxu0 0.0
    %2107 = vmatprep.subr.mxu0 0.0
    %2108 = vmatpush1.msra.mxu0 0.0
    %2109 = vmatprep.subr.mxu0 0.0
    %2110 = vmatpush1.msra.mxu0 0.0
    %2111 = vmatprep.subr.mxu0 0.0
    %2112 = vmatpush1.msra.mxu0 0.0
    %2113 = vmatprep.subr.mxu0 0.0
    %2114 = vmatpush1.msra.mxu0 0.0
    %2115 = vmatprep.subr.mxu0 0.0
    %2116 = vmatpush1.msra.mxu0 0.0
    %2117 = vmatprep.subr.mxu0 0.0
    %2118 = vmatpush1.msra.mxu0 0.0
    %2119 = vmatprep.subr.mxu0 0.0
    %2120 = vmatpush1.msra.mxu0 0.0
    %2121 = vmatprep.subr.mxu0 0.0
    %2122 = vmatpush1.msra.mxu0 0.0
    %2123 = vmatprep.subr.mxu0 0.0
    %2124 = vmatpush1.msra.mxu0 0.0
    %2125 = vmatprep.subr.mxu0 0.0
    %2126 = vmatpush1.msra.mxu0 0.0
    %2127 = vmatprep.subr.mxu0 0.0
    %2128 = vmatpush1.msra.mxu0 0.0
    %2129 = vmatprep.subr.mxu0 0.0
    %2130 = vmatpush1.msra.mxu0 0.0
    %2131 = vmatprep.subr.mxu0 0.0
    %2132 = vmatpush1.msra.mxu0 0.0
    %2133 = vmatprep.subr.mxu0 0.0
    %2134 = vmatpush1.msra.mxu0 0.0
    %2135 = vmatprep.subr.mxu0 0.0
    %2136 = vmatpush1.msra.mxu0 0.0
    %2137 = vmatprep.subr.mxu0 0.0
    %2138 = vmatpush1.msra.mxu0 0.0
    %2139 = vmatprep.subr.mxu0 0.0
    %2140 = vmatpush1.msra.mxu0 0.0
    %2141 = vmatprep.subr.mxu0 0.0
    %2142 = vmatpush1.msra.mxu0 0.0
    %2143 = vmatprep.subr.mxu0 0.0
    %2144 = vmatpush1.msra.mxu0 0.0
    %2145 = vmatprep.subr.mxu0 0.0
    %2146 = vmatpush1.msra.mxu0 0.0
    %2147 = vmatprep.subr.mxu0 0.0
    %2148 = vmatpush1.msra.mxu0 0.0
    %2149 = vmatprep.subr.mxu0 0.0
    %2150 = vmatpush1.msra.mxu0 0.0
    %2151 = vmatprep.subr.mxu0 0.0
    %2152 = vmatpush1.msra.mxu0 0.0
    %2153 = vmatprep.subr.mxu0 0.0
    %2154 = vmatpush1.msra.mxu0 0.0
    %2155 = vmatprep.subr.mxu0 0.0
    %2156 = vmatpush1.msra.mxu0 0.0
    %2157 = vmatprep.subr.mxu0 0.0
    %2158 = vmatpush1.msra.mxu0 0.0
    %2159 = vmatprep.subr.mxu0 0.0
    %2160 = vmatpush1.msra.mxu0 0.0
    %2161 = vmatprep.subr.mxu0 0.0
    %2162 = vmatpush1.msra.mxu0 0.0
    %2163 = vmatprep.subr.mxu0 0.0
    %2164 = vmatpush1.msra.mxu0 0.0
    %2165 = vmatprep.subr.mxu0 0.0
    %2166 = vmatpush1.msra.mxu0 0.0
    %2167 = vmatprep.mubr.f32.mxu0 0.0
    %v2168 = vand.u32 %v1928, 4294901760
    %v2169 = vsub.f32 %v1928, %v2168
    %2170 = vmatmul.mubr.f32.gmra.mrb[0].mxu0 %v2169
    %v2171 = vpop.f32.mrb[0].mxu0
    %v2172 = vadd.f32 %v2092, %v2171
    %v2173 = vpop.f32.mrb[0].mxu0
    %2174 = vmatprep.mubr.f32.mxu0 0.0
    %v2175 = vand.u32 %v1931, 4294901760
    %v2176 = vsub.f32 %v1931, %v2175
    %2177 = vmatmul.mubr.f32.gmra.mrb[0].mxu0 %v2176
    %v2178 = vpop.f32.mrb[0].mxu0
    %v2179 = vadd.f32 %v2098, %v2178
    %v2180 = vpop.f32.mrb[0].mxu0
    %2181 = vdwg.mxu0
    %2182 = vmatprep.subr.mxu0 0.0
    %v2183 = vand.u32 %v746, 4294901760
    %2184 = vmatpush1.msra.mxu0 %v2183
    %2185 = vmatprep.subr.mxu0 0.0
    %2186 = vmatpush1.msra.mxu0 0.0
    %2187 = vmatprep.subr.mxu0 0.0
    %2188 = vmatpush1.msra.mxu0 0.0
    %2189 = vmatprep.subr.mxu0 0.0
    %2190 = vmatpush1.msra.mxu0 0.0
    %2191 = vmatprep.subr.mxu0 0.0
    %2192 = vmatpush1.msra.mxu0 0.0
    %2193 = vmatprep.subr.mxu0 0.0
    %2194 = vmatpush1.msra.mxu0 0.0
    %2195 = vmatprep.subr.mxu0 0.0
    %2196 = vmatpush1.msra.mxu0 0.0
    %2197 = vmatprep.subr.mxu0 0.0
    %2198 = vmatpush1.msra.mxu0 0.0
    %2199 = vmatprep.subr.mxu0 0.0
    %2200 = vmatpush1.msra.mxu0 0.0
    %2201 = vmatprep.subr.mxu0 0.0
    %2202 = vmatpush1.msra.mxu0 0.0
    %2203 = vmatprep.subr.mxu0 0.0
    %2204 = vmatpush1.msra.mxu0 0.0
    %2205 = vmatprep.subr.mxu0 0.0
    %2206 = vmatpush1.msra.mxu0 0.0
    %2207 = vmatprep.subr.mxu0 0.0
    %2208 = vmatpush1.msra.mxu0 0.0
    %2209 = vmatprep.subr.mxu0 0.0
    %2210 = vmatpush1.msra.mxu0 0.0
    %2211 = vmatprep.subr.mxu0 0.0
    %2212 = vmatpush1.msra.mxu0 0.0
    %2213 = vmatprep.subr.mxu0 0.0
    %2214 = vmatpush1.msra.mxu0 0.0
    %2215 = vmatprep.subr.mxu0 0.0
    %2216 = vmatpush1.msra.mxu0 0.0
    %2217 = vmatprep.subr.mxu0 0.0
    %2218 = vmatpush1.msra.mxu0 0.0
    %2219 = vmatprep.subr.mxu0 0.0
    %2220 = vmatpush1.msra.mxu0 0.0
    %2221 = vmatprep.subr.mxu0 0.0
    %2222 = vmatpush1.msra.mxu0 0.0
    %2223 = vmatprep.subr.mxu0 0.0
    %2224 = vmatpush1.msra.mxu0 0.0
    %2225 = vmatprep.subr.mxu0 0.0
    %2226 = vmatpush1.msra.mxu0 0.0
    %2227 = vmatprep.subr.mxu0 0.0
    %2228 = vmatpush1.msra.mxu0 0.0
    %2229 = vmatprep.subr.mxu0 0.0
    %2230 = vmatpush1.msra.mxu0 0.0
    %2231 = vmatprep.subr.mxu0 0.0
    %2232 = vmatpush1.msra.mxu0 0.0
    %2233 = vmatprep.subr.mxu0 0.0
    %2234 = vmatpush1.msra.mxu0 0.0
    %2235 = vmatprep.subr.mxu0 0.0
    %2236 = vmatpush1.msra.mxu0 0.0
    %2237 = vmatprep.subr.mxu0 0.0
    %2238 = vmatpush1.msra.mxu0 0.0
    %2239 = vmatprep.subr.mxu0 0.0
    %2240 = vmatpush1.msra.mxu0 0.0
    %2241 = vmatprep.subr.mxu0 0.0
    %2242 = vmatpush1.msra.mxu0 0.0
    %2243 = vmatprep.subr.mxu0 0.0
    %2244 = vmatpush1.msra.mxu0 0.0
    %2245 = vmatprep.subr.mxu0 0.0
    %2246 = vmatpush1.msra.mxu0 0.0
    %2247 = vmatprep.mubr.f32.mxu0 0.0
    %v2248 = vand.u32 %v1928, 4294901760
    %v2249 = vsub.f32 %v1928, %v2248
    %v2250 = vand.u32 %v2249, 4294901760
    %2251 = vmatmul.mubr.f32.gmra.mrb[0].mxu0 %v2250
    %v2252 = vpop.f32.mrb[0].mxu0
    %v2253 = vadd.f32 %v2172, %v2252
    %v2254 = vpop.f32.mrb[0].mxu0
    %2255 = vmatprep.mubr.f32.mxu0 0.0
    %v2256 = vand.u32 %v1931, 4294901760
    %v2257 = vsub.f32 %v1931, %v2256
    %v2258 = vand.u32 %v2257, 4294901760
    %2259 = vmatmul.mubr.f32.gmra.mrb[0].mxu0 %v2258
    %v2260 = vpop.f32.mrb[0].mxu0
    %v2261 = vadd.f32 %v2179, %v2260
    %v2262 = vpop.f32.mrb[0].mxu0
    %2263 = vdwg.mxu0
    %2264 = vmatprep.subr.mxu0 0.0
    %v2265 = vand.u32 %v746, 4294901760
    %v2266 = vsub.f32 %v746, %v2265
    %v2267 = vand.u32 %v2266, 4294901760
    %2268 = vmatpush1.msra.mxu0 %v2267
    %2269 = vmatprep.subr.mxu0 0.0
    %2270 = vmatpush1.msra.mxu0 0.0
    %2271 = vmatprep.subr.mxu0 0.0
    %2272 = vmatpush1.msra.mxu0 0.0
    %2273 = vmatprep.subr.mxu0 0.0
    %2274 = vmatpush1.msra.mxu0 0.0
    %2275 = vmatprep.subr.mxu0 0.0
    %2276 = vmatpush1.msra.mxu0 0.0
    %2277 = vmatprep.subr.mxu0 0.0
    %2278 = vmatpush1.msra.mxu0 0.0
    %2279 = vmatprep.subr.mxu0 0.0
    %2280 = vmatpush1.msra.mxu0 0.0
    %2281 = vmatprep.subr.mxu0 0.0
    %2282 = vmatpush1.msra.mxu0 0.0
    %2283 = vmatprep.subr.mxu0 0.0
    %2284 = vmatpush1.msra.mxu0 0.0
    %2285 = vmatprep.subr.mxu0 0.0
    %2286 = vmatpush1.msra.mxu0 0.0
    %2287 = vmatprep.subr.mxu0 0.0
    %2288 = vmatpush1.msra.mxu0 0.0
    %2289 = vmatprep.subr.mxu0 0.0
    %2290 = vmatpush1.msra.mxu0 0.0
    %2291 = vmatprep.subr.mxu0 0.0
    %2292 = vmatpush1.msra.mxu0 0.0
    %2293 = vmatprep.subr.mxu0 0.0
    %2294 = vmatpush1.msra.mxu0 0.0
    %2295 = vmatprep.subr.mxu0 0.0
    %2296 = vmatpush1.msra.mxu0 0.0
    %2297 = vmatprep.subr.mxu0 0.0
    %2298 = vmatpush1.msra.mxu0 0.0
    %2299 = vmatprep.subr.mxu0 0.0
    %2300 = vmatpush1.msra.mxu0 0.0
    %2301 = vmatprep.subr.mxu0 0.0
    %2302 = vmatpush1.msra.mxu0 0.0
    %2303 = vmatprep.subr.mxu0 0.0
    %2304 = vmatpush1.msra.mxu0 0.0
    %2305 = vmatprep.subr.mxu0 0.0
    %2306 = vmatpush1.msra.mxu0 0.0
    %2307 = vmatprep.subr.mxu0 0.0
    %2308 = vmatpush1.msra.mxu0 0.0
    %2309 = vmatprep.subr.mxu0 0.0
    %2310 = vmatpush1.msra.mxu0 0.0
    %2311 = vmatprep.subr.mxu0 0.0
    %2312 = vmatpush1.msra.mxu0 0.0
    %2313 = vmatprep.subr.mxu0 0.0
    %2314 = vmatpush1.msra.mxu0 0.0
    %2315 = vmatprep.subr.mxu0 0.0
    %2316 = vmatpush1.msra.mxu0 0.0
    %2317 = vmatprep.subr.mxu0 0.0
    %2318 = vmatpush1.msra.mxu0 0.0
    %2319 = vmatprep.subr.mxu0 0.0
    %2320 = vmatpush1.msra.mxu0 0.0
    %2321 = vmatprep.subr.mxu0 0.0
    %2322 = vmatpush1.msra.mxu0 0.0
    %2323 = vmatprep.subr.mxu0 0.0
    %2324 = vmatpush1.msra.mxu0 0.0
    %2325 = vmatprep.subr.mxu0 0.0
    %2326 = vmatpush1.msra.mxu0 0.0
    %2327 = vmatprep.subr.mxu0 0.0
    %2328 = vmatpush1.msra.mxu0 0.0
    %2329 = vmatprep.subr.mxu0 0.0
    %2330 = vmatpush1.msra.mxu0 0.0
    %2331 = vmatprep.mubr.f32.mxu0 0.0
    %v2332 = vand.u32 %v1928, 4294901760
    %2333 = vmatmul.mubr.f32.gmra.mrb[0].mxu0 %v2332
    %v2334 = vpop.f32.mrb[0].mxu0
    %v2335 = vadd.f32 %v2253, %v2334
    %v2336 = vpop.f32.mrb[0].mxu0
    %2337 = vmatprep.mubr.f32.mxu0 0.0
    %v2338 = vand.u32 %v1931, 4294901760
    %2339 = vmatmul.mubr.f32.gmra.mrb[0].mxu0 %v2338
    %v2340 = vpop.f32.mrb[0].mxu0
    %v2341 = vadd.f32 %v2261, %v2340
    %v2342 = vpop.f32.mrb[0].mxu0
    %2343 = vdwg.mxu0
    %2344 = vmatprep.subr.mxu0 0.0
    %v2345 = vand.u32 %v746, 4294901760
    %2346 = vmatpush1.msra.mxu0 %v2345
    %2347 = vmatprep.subr.mxu0 0.0
    %2348 = vmatpush1.msra.mxu0 0.0
    %2349 = vmatprep.subr.mxu0 0.0
    %2350 = vmatpush1.msra.mxu0 0.0
    %2351 = vmatprep.subr.mxu0 0.0
    %2352 = vmatpush1.msra.mxu0 0.0
    %2353 = vmatprep.subr.mxu0 0.0
    %2354 = vmatpush1.msra.mxu0 0.0
    %2355 = vmatprep.subr.mxu0 0.0
    %2356 = vmatpush1.msra.mxu0 0.0
    %2357 = vmatprep.subr.mxu0 0.0
    %2358 = vmatpush1.msra.mxu0 0.0
    %2359 = vmatprep.subr.mxu0 0.0
    %2360 = vmatpush1.msra.mxu0 0.0
    %2361 = vmatprep.subr.mxu0 0.0
    %2362 = vmatpush1.msra.mxu0 0.0
    %2363 = vmatprep.subr.mxu0 0.0
    %2364 = vmatpush1.msra.mxu0 0.0
    %2365 = vmatprep.subr.mxu0 0.0
    %2366 = vmatpush1.msra.mxu0 0.0
    %2367 = vmatprep.subr.mxu0 0.0
    %2368 = vmatpush1.msra.mxu0 0.0
    %2369 = vmatprep.subr.mxu0 0.0
    %2370 = vmatpush1.msra.mxu0 0.0
    %2371 = vmatprep.subr.mxu0 0.0
    %2372 = vmatpush1.msra.mxu0 0.0
    %2373 = vmatprep.subr.mxu0 0.0
    %2374 = vmatpush1.msra.mxu0 0.0
    %2375 = vmatprep.subr.mxu0 0.0
    %2376 = vmatpush1.msra.mxu0 0.0
    %2377 = vmatprep.subr.mxu0 0.0
    %2378 = vmatpush1.msra.mxu0 0.0
    %2379 = vmatprep.subr.mxu0 0.0
    %2380 = vmatpush1.msra.mxu0 0.0
    %2381 = vmatprep.subr.mxu0 0.0
    %2382 = vmatpush1.msra.mxu0 0.0
    %2383 = vmatprep.subr.mxu0 0.0
    %2384 = vmatpush1.msra.mxu0 0.0
    %2385 = vmatprep.subr.mxu0 0.0
    %2386 = vmatpush1.msra.mxu0 0.0
    %2387 = vmatprep.subr.mxu0 0.0
    %2388 = vmatpush1.msra.mxu0 0.0
    %2389 = vmatprep.subr.mxu0 0.0
    %2390 = vmatpush1.msra.mxu0 0.0
    %2391 = vmatprep.subr.mxu0 0.0
    %2392 = vmatpush1.msra.mxu0 0.0
    %2393 = vmatprep.subr.mxu0 0.0
    %2394 = vmatpush1.msra.mxu0 0.0
    %2395 = vmatprep.subr.mxu0 0.0
    %2396 = vmatpush1.msra.mxu0 0.0
    %2397 = vmatprep.subr.mxu0 0.0
    %2398 = vmatpush1.msra.mxu0 0.0
    %2399 = vmatprep.subr.mxu0 0.0
    %2400 = vmatpush1.msra.mxu0 0.0
    %2401 = vmatprep.subr.mxu0 0.0
    %2402 = vmatpush1.msra.mxu0 0.0
    %2403 = vmatprep.subr.mxu0 0.0
    %2404 = vmatpush1.msra.mxu0 0.0
    %2405 = vmatprep.subr.mxu0 0.0
    %2406 = vmatpush1.msra.mxu0 0.0
    %2407 = vmatprep.subr.mxu0 0.0
    %2408 = vmatpush1.msra.mxu0 0.0
    %2409 = vmatprep.mubr.f32.mxu0 0.0
    %v2410 = vand.u32 %v1928, 4294901760
    %2411 = vmatmul.mubr.f32.gmra.mrb[0].mxu0 %v2410
    %v2412 = vpop.f32.mrb[0].mxu0
    %v2413 = vadd.f32 %v2335, %v2412
    %v2414 = vpop.f32.mrb[0].mxu0
    %2415 = vmatprep.mubr.f32.mxu0 0.0
    %v2416 = vand.u32 %v1931, 4294901760
    %2417 = vmatmul.mubr.f32.gmra.mrb[0].mxu0 %v2416
    %v2418 = vpop.f32.mrb[0].mxu0
    %v2419 = vadd.f32 %v2341, %v2418
    %v2420 = vpop.f32.mrb[0].mxu0
    %2421 = vdwg.mxu0
    %v2422 = vmul.f32 %v2413, 0.03125
    %v2423 = vmul.f32 %v2419, 0.03125
    %v2424 = vadd.f32 %v2422, 1e-05
    %v2425 = vadd.f32 %v2423, 1e-05
    %v2426 = vrsqrt.pop %v2424
    %v2427 = vrsqrt.pop %v2425
    %v2428 = vmul.f32 %v1239, %v2426
    %v2429 = vmul.f32 %v1240, %v2427
    %v2430 = vld [vmem:[%s1] sm:$0x1]
    %v2432 = vlaneseq
    %v2433 = vshrl.u32 %v2432, 7
    %v2434 = vsub.s32 0, %v2433
    %v2435 = vrot.slane %v2430, %v2434
    %v2437 = vmul.f32 %v2428, %v2435
    %v2438 = vmul.f32 %v2429, %v2435
    %v2439 = vld [vmem:[%s2] sm:$0x1]
    %v2441 = vlaneseq
    %v2442 = vshrl.u32 %v2441, 7
    %v2443 = vsub.s32 0, %v2442
    %v2444 = vrot.slane %v2439, %v2443
    %v2446 = vadd.f32 %v2437, %v2444
    %v2447 = vadd.f32 %v2438, %v2444
    %v2448 = vld [vmem:[%s5] sm:$0xf]
    %v2449 = vld [vmem:[%s5 + $0x4] sm:$0xf]
    %v2450 = vld [vmem:[%s5 + $0x8] sm:$0xf]
    %v2451 = vld [vmem:[%s5 + $0xc] sm:$0xf]
    %v2452 = vld [vmem:[%s5 + $0x10] sm:$0xf]
    %v2453 = vld [vmem:[%s5 + $0x14] sm:$0xf]
    %v2454 = vld [vmem:[%s5 + $0x18] sm:$0xf]
    %v2455 = vld [vmem:[%s5 + $0x1c] sm:$0xf]
    %v2456 = vpack.c.bf16 %v2447, %v2446
    %v2457 = vld [vmem:[%s6] sm:$0xff]
    %v2458 = vld [vmem:[%s6 + $0x8] sm:$0xff]
    %v2459 = vld [vmem:[%s6 + $0x10] sm:$0xff]
    %v2460 = vld [vmem:[%s6 + $0x18] sm:$0xff]
    %v2461 = vld [vmem:[%s6 + $0x20] sm:$0xff]
    %v2462 = vld [vmem:[%s6 + $0x28] sm:$0xff]
    %v2463 = vld [vmem:[%s6 + $0x30] sm:$0xff]
    %v2464 = vld [vmem:[%s6 + $0x38] sm:$0xff]
    %2466 = vset.pattern.permute.xlu0 0
    %2467 = vperm.xlu0 %2466, %v2457
    %v2468 = vpop.permute.xlu0 %2467
    %2471 = vset.pattern.permute.xlu0 0
    %2472 = vperm.xlu0 %2471, %v2458
    %v2473 = vpop.permute.xlu0 %2472
    %2476 = vset.pattern.permute.xlu0 0
    %2477 = vperm.xlu0 %2476, %v2459
    %v2478 = vpop.permute.xlu0 %2477
    %2481 = vset.pattern.permute.xlu0 0
    %2482 = vperm.xlu0 %2481, %v2460
    %v2483 = vpop.permute.xlu0 %2482
    %2486 = vset.pattern.permute.xlu0 0
    %2487 = vperm.xlu0 %2486, %v2461
    %v2488 = vpop.permute.xlu0 %2487
    %2491 = vset.pattern.permute.xlu0 0
    %2492 = vperm.xlu0 %2491, %v2462
    %v2493 = vpop.permute.xlu0 %2492
    %2496 = vset.pattern.permute.xlu0 0
    %2497 = vperm.xlu0 %2496, %v2463
    %v2498 = vpop.permute.xlu0 %2497
    %2501 = vset.pattern.permute.xlu0 0
    %2502 = vperm.xlu0 %2501, %v2464
    %v2503 = vpop.permute.xlu0 %2502
    %v2513 = vunpack.c.l.b16 %v2448
    %v2514 = vunpack.c.l.b16 %v2449
    %v2515 = vunpack.c.l.b16 %v2450
    %v2516 = vunpack.c.l.b16 %v2451
    %v2517 = vunpack.c.l.b16 %v2452
    %v2518 = vunpack.c.l.b16 %v2453
    %v2519 = vunpack.c.l.b16 %v2454
    %v2520 = vunpack.c.l.b16 %v2455
    %v2521 = vpack.c.b16 %v2514, %v2513
    %v2522 = vpack.c.b16 %v2516, %v2515
    %v2523 = vpack.c.b16 %v2518, %v2517
    %v2524 = vpack.c.b16 %v2520, %v2519
    %vm2525 = vcmask 130048
    %v2527 = vsel %vm2525, %v2521, 0
    %v2530 = vsel %vm2525, %v2522, 0
    %v2533 = vsel %vm2525, %v2523, 0
    %v2536 = vsel %vm2525, %v2524, 0
    %2538 = vmatprep.subr.bf16.mxu0 0
    %2539 = vmatpush1.bf16.msra.mxu0 %v2456
    %2540 = vmatprep.subr.bf16.mxu0 0
    %2541 = vmatpush1.bf16.msra.mxu0 0
    %2542 = vmatprep.subr.bf16.mxu0 0
    %2543 = vmatpush1.bf16.msra.mxu0 0
    %2544 = vmatprep.subr.bf16.mxu0 0
    %2545 = vmatpush1.bf16.msra.mxu0 0
    %2546 = vmatprep.subr.bf16.mxu0 0
    %2547 = vmatpush1.bf16.msra.mxu0 0
    %2548 = vmatprep.subr.bf16.mxu0 0
    %2549 = vmatpush1.bf16.msra.mxu0 0
    %2550 = vmatprep.subr.bf16.mxu0 0
    %2551 = vmatpush1.bf16.msra.mxu0 0
    %2552 = vmatprep.subr.bf16.mxu0 0
    %2553 = vmatpush1.bf16.msra.mxu0 0
    %2554 = vmatprep.subr.bf16.mxu0 0
    %2555 = vmatpush1.bf16.msra.mxu0 0
    %2556 = vmatprep.subr.bf16.mxu0 0
    %2557 = vmatpush1.bf16.msra.mxu0 0
    %2558 = vmatprep.subr.bf16.mxu0 0
    %2559 = vmatpush1.bf16.msra.mxu0 0
    %2560 = vmatprep.subr.bf16.mxu0 0
    %2561 = vmatpush1.bf16.msra.mxu0 0
    %2562 = vmatprep.subr.bf16.mxu0 0
    %2563 = vmatpush1.bf16.msra.mxu0 0
    %2564 = vmatprep.subr.bf16.mxu0 0
    %2565 = vmatpush1.bf16.msra.mxu0 0
    %2566 = vmatprep.subr.bf16.mxu0 0
    %2567 = vmatpush1.bf16.msra.mxu0 0
    %2568 = vmatprep.subr.bf16.mxu0 0
    %2569 = vmatpush1.bf16.msra.mxu0 0
    %2570 = vmatprep.mubr.bf16.mxu0 0
    %2571 = vmatmul.mubr.bf16.gmra.mrb[0].mxu0 %v2527
    %v2572 = vpop.f32.mrb[0].mxu0
    %v2573 = vadd.f32 %v2468, %v2572
    %v2574 = vpop.f32.mrb[0].mxu0
    %v2575 = vpop.f32.mrb[0].mxu0
    %v2576 = vadd.f32 %v2473, %v2575
    %v2577 = vpop.f32.mrb[0].mxu0
    %2578 = vmatprep.mubr.bf16.mxu0 0
    %2579 = vmatmul.mubr.bf16.gmra.mrb[0].mxu0 %v2530
    %v2580 = vpop.f32.mrb[0].mxu0
    %v2581 = vadd.f32 %v2478, %v2580
    %v2582 = vpop.f32.mrb[0].mxu0
    %v2583 = vpop.f32.mrb[0].mxu0
    %v2584 = vadd.f32 %v2483, %v2583
    %v2585 = vpop.f32.mrb[0].mxu0
    %2586 = vmatprep.mubr.bf16.mxu0 0
    %2587 = vmatmul.mubr.bf16.gmra.mrb[0].mxu0 %v2533
    %v2588 = vpop.f32.mrb[0].mxu0
    %v2589 = vadd.f32 %v2488, %v2588
    %v2590 = vpop.f32.mrb[0].mxu0
    %v2591 = vpop.f32.mrb[0].mxu0
    %v2592 = vadd.f32 %v2493, %v2591
    %v2593 = vpop.f32.mrb[0].mxu0
    %2594 = vmatprep.mubr.bf16.mxu0 0
    %2595 = vmatmul.mubr.bf16.gmra.mrb[0].mxu0 %v2536
    %v2596 = vpop.f32.mrb[0].mxu0
    %v2597 = vadd.f32 %v2498, %v2596
    %v2598 = vpop.f32.mrb[0].mxu0
    %v2599 = vpop.f32.mrb[0].mxu0
    %v2600 = vadd.f32 %v2503, %v2599
    %v2601 = vpop.f32.mrb[0].mxu0
    %2602 = vdwg.mxu0
    %v2603 = vmul.f32 %v2573, 0.5
    %v2604 = vmul.f32 %v2576, 0.5
    %v2605 = vmul.f32 %v2581, 0.5
    %v2606 = vmul.f32 %v2584, 0.5
    %v2607 = vmul.f32 %v2589, 0.5
    %v2608 = vmul.f32 %v2592, 0.5
    %v2609 = vmul.f32 %v2597, 0.5
    %v2610 = vmul.f32 %v2600, 0.5
    %v2611 = vmul.f32 %v2573, 0.70710677
    %v2612 = vmul.f32 %v2576, 0.70710677
    %v2613 = vmul.f32 %v2581, 0.70710677
    %v2614 = vmul.f32 %v2584, 0.70710677
    %v2615 = vmul.f32 %v2589, 0.70710677
    %v2616 = vmul.f32 %v2592, 0.70710677
    %v2617 = vmul.f32 %v2597, 0.70710677
    %v2618 = vmul.f32 %v2600, 0.70710677
    %v2619 = verf.f32.pop %v2611
    %v2620 = verf.f32.pop %v2612
    %v2621 = verf.f32.pop %v2613
    %v2622 = verf.f32.pop %v2614
    %v2623 = verf.f32.pop %v2615
    %v2624 = verf.f32.pop %v2616
    %v2625 = verf.f32.pop %v2617
    %v2626 = verf.f32.pop %v2618
    %v2627 = vadd.f32 %v2619, 1.0
    %v2628 = vadd.f32 %v2620, 1.0
    %v2629 = vadd.f32 %v2621, 1.0
    %v2630 = vadd.f32 %v2622, 1.0
    %v2631 = vadd.f32 %v2623, 1.0
    %v2632 = vadd.f32 %v2624, 1.0
    %v2633 = vadd.f32 %v2625, 1.0
    %v2634 = vadd.f32 %v2626, 1.0
    %v2635 = vmul.f32 %v2603, %v2627
    %v2636 = vmul.f32 %v2604, %v2628
    %v2637 = vmul.f32 %v2605, %v2629
    %v2638 = vmul.f32 %v2606, %v2630
    %v2639 = vmul.f32 %v2607, %v2631
    %v2640 = vmul.f32 %v2608, %v2632
    %v2641 = vmul.f32 %v2609, %v2633
    %v2642 = vmul.f32 %v2610, %v2634
    %v2643 = vld [vmem:[%s7] sm:$0xf]
    %v2644 = vld [vmem:[%s7 + $0x4] sm:$0xf]
    %v2645 = vpack.c.bf16 %v2636, %v2635
    %v2646 = vpack.c.bf16 %v2638, %v2637
    %v2647 = vpack.c.bf16 %v2640, %v2639
    %v2648 = vpack.c.bf16 %v2642, %v2641
    %v2649 = vld [vmem:[%s8] sm:$0xff]
    %v2650 = vld [vmem:[%s8 + $0x8] sm:$0xff]
    %2652 = vset.pattern.permute.xlu0 0
    %2653 = vperm.xlu0 %2652, %v2649
    %v2654 = vpop.permute.xlu0 %2653
    %2657 = vset.pattern.permute.xlu0 0
    %2658 = vperm.xlu0 %2657, %v2650
    %v2659 = vpop.permute.xlu0 %2658
    %v2663 = vunpack.c.l.b16 %v2643
    %v2664 = vunpack.c.l.b16 %v2644
    %v2665 = vpack.c.b16 %v2664, %v2663
    %vm2666 = vcmask 523264
    %v2668 = vsel %vm2666, %v2665, 0
    %2670 = vmatprep.subr.bf16.mxu0 0
    %2671 = vmatpush1.bf16.msra.mxu0 %v2645
    %2672 = vmatprep.subr.bf16.mxu0 0
    %2673 = vmatpush1.bf16.msra.mxu0 %v2646
    %2674 = vmatprep.subr.bf16.mxu0 0
    %2675 = vmatpush1.bf16.msra.mxu0 %v2647
    %2676 = vmatprep.subr.bf16.mxu0 0
    %2677 = vmatpush1.bf16.msra.mxu0 %v2648
    %2678 = vmatprep.subr.bf16.mxu0 0
    %2679 = vmatpush1.bf16.msra.mxu0 0
    %2680 = vmatprep.subr.bf16.mxu0 0
    %2681 = vmatpush1.bf16.msra.mxu0 0
    %2682 = vmatprep.subr.bf16.mxu0 0
    %2683 = vmatpush1.bf16.msra.mxu0 0
    %2684 = vmatprep.subr.bf16.mxu0 0
    %2685 = vmatpush1.bf16.msra.mxu0 0
    %2686 = vmatprep.subr.bf16.mxu0 0
    %2687 = vmatpush1.bf16.msra.mxu0 0
    %2688 = vmatprep.subr.bf16.mxu0 0
    %2689 = vmatpush1.bf16.msra.mxu0 0
    %2690 = vmatprep.subr.bf16.mxu0 0
    %2691 = vmatpush1.bf16.msra.mxu0 0
    %2692 = vmatprep.subr.bf16.mxu0 0
    %2693 = vmatpush1.bf16.msra.mxu0 0
    %2694 = vmatprep.subr.bf16.mxu0 0
    %2695 = vmatpush1.bf16.msra.mxu0 0
    %2696 = vmatprep.subr.bf16.mxu0 0
    %2697 = vmatpush1.bf16.msra.mxu0 0
    %2698 = vmatprep.subr.bf16.mxu0 0
    %2699 = vmatpush1.bf16.msra.mxu0 0
    %2700 = vmatprep.subr.bf16.mxu0 0
    %2701 = vmatpush1.bf16.msra.mxu0 0
    %2702 = vmatprep.mubr.bf16.mxu0 0
    %2703 = vmatmul.mubr.bf16.gmra.mrb[0].mxu0 %v2668
    %v2704 = vpop.f32.mrb[0].mxu0
    %v2705 = vadd.f32 %v2654, %v2704
    %v2706 = vpop.f32.mrb[0].mxu0
    %v2707 = vpop.f32.mrb[0].mxu0
    %v2708 = vadd.f32 %v2659, %v2707
    %v2709 = vpop.f32.mrb[0].mxu0
    %2710 = vdwg.mxu0
    %v2711 = vadd.f32 %v2705, %v34
    %v2712 = vadd.f32 %v2708, %v35
    %2713 = vst [vmem:[#allocation2] sm:$0xff] %v2711
    %2714 = vst [vmem:[#allocation2 + $0x8] sm:$0xff] %v2712
    // Predicated region
    $region38: #{tpu_custom_call.1} parent=1 // pred_check
      _
    $region39: #{tpu_custom_call.1} parent=1 // pred_check_branch
      %2716 = sbr.rel (0) target = $region41
    $region40: #{tpu_custom_call.1} parent=1 // pred_region
      %s2718 = ssub.s32 256, 256
      %2719 = vsyncadd [#allocation3], %s2718
      %s2720 = sshll.u32 [#allocation2], 4
      %s2721 = int_to_ptr.vmem [resolvable:$true] %s2720
      %2726 = dma.vmem_to_hbm [thread:$0]  %s2721, 256, %s9, [#allocation3], 128, 128, 8
    $region41: #{tpu_custom_call.1} parent=1 // pred_fallthru
      _
    // Predicated region
    $region42: #{tpu_custom_call.1} parent=1 // pred_check
      _
    $region43: #{tpu_custom_call.1} parent=1 // pred_check_branch
      %2728 = sbr.rel (0) target = $region45
    $region44: #{tpu_custom_call.1} parent=1 // pred_region
      %2729 = dma.done [#allocation3], 256
    $region45: #{tpu_custom_call.1} parent=1 // pred_fallthru
      _
    %2730 = vsyncpa [#allocation3], 1

// kernel: tpu_custom_call.1
$region0: #{tpu_custom_call.1}
  #allocation0 [shape = 'u32[]', space=smem, size = 0x4, offset = 0x4, fixed_abs, tag = 'smem constant byte address 0x4 - core index']
  #allocation1 [shape = 'u32[144,128]{1,0:T(1,128)}', space=vmem, size = 0x12000, scoped, tag = 'internal scratch']
  %s0 = inlined_call_operand.vmem [shape: f32[16,128], index: 0, kind: input, shape index: {}]
  %s1 = inlined_call_operand.vmem [shape: f32[1,128], index: 1, kind: input, shape index: {}]
  %s2 = inlined_call_operand.vmem [shape: f32[1,128], index: 2, kind: input, shape index: {}]
  %s3 = inlined_call_operand.vmem [shape: f32[128,4], index: 3, kind: input, shape index: {}]
  %s4 = inlined_call_operand.vmem [shape: f32[4,128], index: 4, kind: input, shape index: {}]
  %s5 = inlined_call_operand.vmem [shape: bf16[64,16], index: 5, kind: input, shape index: {}]
  %s6 = inlined_call_operand.vmem [shape: f32[64,1], index: 6, kind: input, shape index: {}]
  %s7 = inlined_call_operand.vmem [shape: bf16[16,64], index: 7, kind: input, shape index: {}]
  %s8 = inlined_call_operand.vmem [shape: f32[16,1], index: 8, kind: input, shape index: {}]
  %s9 = inlined_call_operand.hbm [shape: f32[16,128], index: 9, kind: output, shape index: {}]
  %s10 = sld [smem:[#allocation0]]
  $region46: #{tpu_custom_call.1} parent=0
    _
  %s12 = ssub.s32 1, %s10
  %s13 = scalar_select 0, %s12, %s10
  $region1: #{tpu_custom_call.1} parent=0
    #allocation2 [shape = 'u8[8192]{0}', space=vmem, size = 0x2000, scoped, tag = 'output window, operand 0, single buffered']
    #allocation3 [shape = 's32[1]{0}', space=sflag, size = 0x4, scoped, tag = 'scoped memory for tpu_custom_call.1']
    %14 = vsyncpa [#allocation3], 0
    // Predicated region
    $region2: #{tpu_custom_call.1} parent=1 // pred_check
      _
    $region3: #{tpu_custom_call.1} parent=1 // pred_check_branch
      %16 = sbr.rel (0) target = $region5
    $region4: #{tpu_custom_call.1} parent=1 // pred_region
      _
    $region5: #{tpu_custom_call.1} parent=1 // pred_fallthru
      _
    // Predicated region
    $region6: #{tpu_custom_call.1} parent=1 // pred_check
      _
    $region7: #{tpu_custom_call.1} parent=1 // pred_check_branch
      %18 = sbr.rel (0) target = $region9
    $region8: #{tpu_custom_call.1} parent=1 // pred_region
      _
    $region9: #{tpu_custom_call.1} parent=1 // pred_fallthru
      _
    // Predicated region
    $region10: #{tpu_custom_call.1} parent=1 // pred_check
      _
    $region11: #{tpu_custom_call.1} parent=1 // pred_check_branch
      %20 = sbr.rel (0) target = $region13
    $region12: #{tpu_custom_call.1} parent=1 // pred_region
      _
    $region13: #{tpu_custom_call.1} parent=1 // pred_fallthru
      _
    // Predicated region
    $region14: #{tpu_custom_call.1} parent=1 // pred_check
      _
    $region15: #{tpu_custom_call.1} parent=1 // pred_check_branch
      %22 = sbr.rel (0) target = $region17
    $region16: #{tpu_custom_call.1} parent=1 // pred_region
      _
    $region17: #{tpu_custom_call.1} parent=1 // pred_fallthru
      _
    // Predicated region
    $region18: #{tpu_custom_call.1} parent=1 // pred_check
      _
    $region19: #{tpu_custom_call.1} parent=1 // pred_check_branch
      %24 = sbr.rel (0) target = $region21
    $region20: #{tpu_custom_call.1} parent=1 // pred_region
      _
    $region21: #{tpu_custom_call.1} parent=1 // pred_fallthru
      _
    // Predicated region
    $region22: #{tpu_custom_call.1} parent=1 // pred_check
      _
    $region23: #{tpu_custom_call.1} parent=1 // pred_check_branch
      %26 = sbr.rel (0) target = $region25
    $region24: #{tpu_custom_call.1} parent=1 // pred_region
      _
    $region25: #{tpu_custom_call.1} parent=1 // pred_fallthru
      _
    // Predicated region
    $region26: #{tpu_custom_call.1} parent=1 // pred_check
      _
    $region27: #{tpu_custom_call.1} parent=1 // pred_check_branch
      %28 = sbr.rel (0) target = $region29
    $region28: #{tpu_custom_call.1} parent=1 // pred_region
      _
    $region29: #{tpu_custom_call.1} parent=1 // pred_fallthru
      _
    // Predicated region
    $region30: #{tpu_custom_call.1} parent=1 // pred_check
      _
    $region31: #{tpu_custom_call.1} parent=1 // pred_check_branch
      %30 = sbr.rel (0) target = $region33
    $region32: #{tpu_custom_call.1} parent=1 // pred_region
      _
    $region33: #{tpu_custom_call.1} parent=1 // pred_fallthru
      _
    // Predicated region
    $region34: #{tpu_custom_call.1} parent=1 // pred_check
      _
    $region35: #{tpu_custom_call.1} parent=1 // pred_check_branch
      %32 = sbr.rel (0) target = $region37
    $region36: #{tpu_custom_call.1} parent=1 // pred_region
      _
    $region37: #{tpu_custom_call.1} parent=1 // pred_fallthru
      _
    %v34 = vld [vmem:[%s0] sm:$0xff]
    %v35 = vld [vmem:[%s0 + $0x8] sm:$0xff]
    %v36 = vld [vmem:[%s3] sm:$0xff]
    %v37 = vld [vmem:[%s3 + $0x8] sm:$0xff]
    %v38 = vld [vmem:[%s3 + $0x10] sm:$0xff]
    %v39 = vld [vmem:[%s3 + $0x18] sm:$0xff]
    %v40 = vld [vmem:[%s3 + $0x20] sm:$0xff]
    %v41 = vld [vmem:[%s3 + $0x28] sm:$0xff]
    %v42 = vld [vmem:[%s3 + $0x30] sm:$0xff]
    %v43 = vld [vmem:[%s3 + $0x38] sm:$0xff]
    %v44 = vld [vmem:[%s3 + $0x40] sm:$0xff]
    %v45 = vld [vmem:[%s3 + $0x48] sm:$0xff]
    %v46 = vld [vmem:[%s3 + $0x50] sm:$0xff]
    %v47 = vld [vmem:[%s3 + $0x58] sm:$0xff]
    %v48 = vld [vmem:[%s3 + $0x60] sm:$0xff]
    %v49 = vld [vmem:[%s3 + $0x68] sm:$0xff]
    %v50 = vld [vmem:[%s3 + $0x70] sm:$0xff]
    %v51 = vld [vmem:[%s3 + $0x78] sm:$0xff]
    %52 = vmatprep.subr.mxu0 0.0
    %53 = vmatpush1.msra.mxu0 %v36
    %54 = vmatprep.subr.mxu0 0.0
    %55 = vmatpush1.msra.mxu0 %v37
    %56 = vmatprep.subr.mxu0 0.0
    %57 = vmatpush1.msra.mxu0 %v38
    %58 = vmatprep.subr.mxu0 0.0
    %59 = vmatpush1.msra.mxu0 %v39
    %60 = vmatprep.subr.mxu0 0.0
    %61 = vmatpush1.msra.mxu0 %v40
    %62 = vmatprep.subr.mxu0 0.0
    %63 = vmatpush1.msra.mxu0 %v41
    %64 = vmatprep.subr.mxu0 0.0
    %65 = vmatpush1.msra.mxu0 %v42
    %66 = vmatprep.subr.mxu0 0.0
    %67 = vmatpush1.msra.mxu0 %v43
    %68 = vmatprep.subr.mxu0 0.0
    %69 = vmatpush1.msra.mxu0 %v44
    %70 = vmatprep.subr.mxu0 0.0
    %71 = vmatpush1.msra.mxu0 %v45
    %72 = vmatprep.subr.mxu0 0.0
    %73 = vmatpush1.msra.mxu0 %v46
    %74 = vmatprep.subr.mxu0 0.0
    %75 = vmatpush1.msra.mxu0 %v47
    %76 = vmatprep.subr.mxu0 0.0
    %77 = vmatpush1.msra.mxu0 %v48
    %78 = vmatprep.subr.mxu0 0.0
    %79 = vmatpush1.msra.mxu0 %v49
    %80 = vmatprep.subr.mxu0 0.0
    %81 = vmatpush1.msra.mxu0 %v50
    %82 = vmatprep.subr.mxu0 0.0
    %83 = vmatpush1.msra.mxu0 %v51
    %84 = vmatprep.subr.mxu0 0.0
    %85 = vmatpush1.msra.mxu0 0.0
    %86 = vmatprep.subr.mxu0 0.0
    %87 = vmatpush1.msra.mxu0 0.0
    %88 = vmatprep.subr.mxu0 0.0
    %89 = vmatpush1.msra.mxu0 0.0
    %90 = vmatprep.subr.mxu0 0.0
    %91 = vmatpush1.msra.mxu0 0.0
    %92 = vmatprep.subr.mxu0 0.0
    %93 = vmatpush1.msra.mxu0 0.0
    %94 = vmatprep.subr.mxu0 0.0
    %95 = vmatpush1.msra.mxu0 0.0
    %96 = vmatprep.subr.mxu0 0.0
    %97 = vmatpush1.msra.mxu0 0.0
    %98 = vmatprep.subr.mxu0 0.0
    %99 = vmatpush1.msra.mxu0 0.0
    %100 = vmatprep.subr.mxu0 0.0
    %101 = vmatpush1.msra.mxu0 0.0
    %102 = vmatprep.subr.mxu0 0.0
    %103 = vmatpush1.msra.mxu0 0.0
    %104 = vmatprep.subr.mxu0 0.0
    %105 = vmatpush1.msra.mxu0 0.0
    %106 = vmatprep.subr.mxu0 0.0
    %107 = vmatpush1.msra.mxu0 0.0
    %108 = vmatprep.subr.mxu0 0.0
    %109 = vmatpush1.msra.mxu0 0.0
    %110 = vmatprep.subr.mxu0 0.0
    %111 = vmatpush1.msra.mxu0 0.0
    %112 = vmatprep.subr.mxu0 0.0
    %113 = vmatpush1.msra.mxu0 0.0
    %114 = vmatprep.subr.mxu0 0.0
    %115 = vmatpush1.msra.mxu0 0.0
    %116 = vmatprep.mubr.f32.mxu0 0.0
    %117 = vmatmul.mubr.f32.gmra.mrb[0].mxu0 %v34
    %v118 = vpop.f32.mrb[0].mxu0
    %v119 = vadd.f32 0.0, %v118
    %v120 = vpop.f32.mrb[0].mxu0
    %121 = vmatprep.mubr.f32.mxu0 0.0
    %122 = vmatmul.mubr.f32.gmra.mrb[0].mxu0 %v35
    %v123 = vpop.f32.mrb[0].mxu0
    %v124 = vadd.f32 0.0, %v123
    %v125 = vpop.f32.mrb[0].mxu0
    %126 = vdwg.mxu0
    %v127 = vld [vmem:[%s4] sm:$0xf]
    %vm128 = vcmask 31744
    %v130 = vsel %vm128, %v119, 0
    %v133 = vsel %vm128, %v124, 0
    %vm135 = vcmask 1043456
    %v137 = vsel %vm135, %v127, 0
    %139 = vmatprep.subr.mxu0 0.0
    %140 = vmatpush1.msra.mxu0 %v137
    %141 = vmatprep.subr.mxu0 0.0
    %142 = vmatpush1.msra.mxu0 0.0
    %143 = vmatprep.subr.mxu0 0.0
    %144 = vmatpush1.msra.mxu0 0.0
    %145 = vmatprep.subr.mxu0 0.0
    %146 = vmatpush1.msra.mxu0 0.0
    %147 = vmatprep.subr.mxu0 0.0
    %148 = vmatpush1.msra.mxu0 0.0
    %149 = vmatprep.subr.mxu0 0.0
    %150 = vmatpush1.msra.mxu0 0.0
    %151 = vmatprep.subr.mxu0 0.0
    %152 = vmatpush1.msra.mxu0 0.0
    %153 = vmatprep.subr.mxu0 0.0
    %154 = vmatpush1.msra.mxu0 0.0
    %155 = vmatprep.subr.mxu0 0.0
    %156 = vmatpush1.msra.mxu0 0.0
    %157 = vmatprep.subr.mxu0 0.0
    %158 = vmatpush1.msra.mxu0 0.0
    %159 = vmatprep.subr.mxu0 0.0
    %160 = vmatpush1.msra.mxu0 0.0
    %161 = vmatprep.subr.mxu0 0.0
    %162 = vmatpush1.msra.mxu0 0.0
    %163 = vmatprep.subr.mxu0 0.0
    %164 = vmatpush1.msra.mxu0 0.0
    %165 = vmatprep.subr.mxu0 0.0
    %166 = vmatpush1.msra.mxu0 0.0
    %167 = vmatprep.subr.mxu0 0.0
    %168 = vmatpush1.msra.mxu0 0.0
    %169 = vmatprep.subr.mxu0 0.0
    %170 = vmatpush1.msra.mxu0 0.0
    %171 = vmatprep.subr.mxu0 0.0
    %172 = vmatpush1.msra.mxu0 0.0
    %173 = vmatprep.subr.mxu0 0.0
    %174 = vmatpush1.msra.mxu0 0.0
    %175 = vmatprep.subr.mxu0 0.0
    %176 = vmatpush1.msra.mxu0 0.0
    %177 = vmatprep.subr.mxu0 0.0
    %178 = vmatpush1.msra.mxu0 0.0
    %179 = vmatprep.subr.mxu0 0.0
    %180 = vmatpush1.msra.mxu0 0.0
    %181 = vmatprep.subr.mxu0 0.0
    %182 = vmatpush1.msra.mxu0 0.0
    %183 = vmatprep.subr.mxu0 0.0
    %184 = vmatpush1.msra.mxu0 0.0
    %185 = vmatprep.subr.mxu0 0.0
    %186 = vmatpush1.msra.mxu0 0.0
    %187 = vmatprep.subr.mxu0 0.0
    %188 = vmatpush1.msra.mxu0 0.0
    %189 = vmatprep.subr.mxu0 0.0
    %190 = vmatpush1.msra.mxu0 0.0
    %191 = vmatprep.subr.mxu0 0.0
    %192 = vmatpush1.msra.mxu0 0.0
    %193 = vmatprep.subr.mxu0 0.0
    %194 = vmatpush1.msra.mxu0 0.0
    %195 = vmatprep.subr.mxu0 0.0
    %196 = vmatpush1.msra.mxu0 0.0
    %197 = vmatprep.subr.mxu0 0.0
    %198 = vmatpush1.msra.mxu0 0.0
    %199 = vmatprep.subr.mxu0 0.0
    %200 = vmatpush1.msra.mxu0 0.0
    %201 = vmatprep.subr.mxu0 0.0
    %202 = vmatpush1.msra.mxu0 0.0
    %203 = vmatprep.mubr.f32.mxu0 0.0
    %204 = vmatmul.mubr.f32.gmra.mrb[0].mxu0 %v130
    %v205 = vpop.f32.mrb[0].mxu0
    %v206 = vadd.f32 0.0, %v205
    %v207 = vpop.f32.mrb[0].mxu0
    %208 = vmatprep.mubr.f32.mxu0 0.0
    %209 = vmatmul.mubr.f32.gmra.mrb[0].mxu0 %v133
    %v210 = vpop.f32.mrb[0].mxu0
    %v211 = vadd.f32 0.0, %v210
    %v212 = vpop.f32.mrb[0].mxu0
    %213 = vdwg.mxu0
    %v214 = vmul.f32 %v206, 0.03125
    %v215 = vmul.f32 %v211, 0.03125
    %v216 = vsub.f32 %v34, %v214
    %v217 = vsub.f32 %v35, %v215
    %v218 = vmul.f32 %v216, %v216
    %v219 = vmul.f32 %v217, %v217
    %220 = vmatprep.subr.mxu0 0.0
    %221 = vmatpush1.msra.mxu0 %v36
    %222 = vmatprep.subr.mxu0 0.0
    %223 = vmatpush1.msra.mxu0 %v37
    %224 = vmatprep.subr.mxu0 0.0
    %225 = vmatpush1.msra.mxu0 %v38
    %226 = vmatprep.subr.mxu0 0.0
    %227 = vmatpush1.msra.mxu0 %v39
    %228 = vmatprep.subr.mxu0 0.0
    %229 = vmatpush1.msra.mxu0 %v40
    %230 = vmatprep.subr.mxu0 0.0
    %231 = vmatpush1.msra.mxu0 %v41
    %232 = vmatprep.subr.mxu0 0.0
    %233 = vmatpush1.msra.mxu0 %v42
    %234 = vmatprep.subr.mxu0 0.0
    %235 = vmatpush1.msra.mxu0 %v43
    %236 = vmatprep.subr.mxu0 0.0
    %237 = vmatpush1.msra.mxu0 %v44
    %238 = vmatprep.subr.mxu0 0.0
    %239 = vmatpush1.msra.mxu0 %v45
    %240 = vmatprep.subr.mxu0 0.0
    %241 = vmatpush1.msra.mxu0 %v46
    %242 = vmatprep.subr.mxu0 0.0
    %243 = vmatpush1.msra.mxu0 %v47
    %244 = vmatprep.subr.mxu0 0.0
    %245 = vmatpush1.msra.mxu0 %v48
    %246 = vmatprep.subr.mxu0 0.0
    %247 = vmatpush1.msra.mxu0 %v49
    %248 = vmatprep.subr.mxu0 0.0
    %249 = vmatpush1.msra.mxu0 %v50
    %250 = vmatprep.subr.mxu0 0.0
    %251 = vmatpush1.msra.mxu0 %v51
    %252 = vmatprep.subr.mxu0 0.0
    %253 = vmatpush1.msra.mxu0 0.0
    %254 = vmatprep.subr.mxu0 0.0
    %255 = vmatpush1.msra.mxu0 0.0
    %256 = vmatprep.subr.mxu0 0.0
    %257 = vmatpush1.msra.mxu0 0.0
    %258 = vmatprep.subr.mxu0 0.0
    %259 = vmatpush1.msra.mxu0 0.0
    %260 = vmatprep.subr.mxu0 0.0
    %261 = vmatpush1.msra.mxu0 0.0
    %262 = vmatprep.subr.mxu0 0.0
    %263 = vmatpush1.msra.mxu0 0.0
    %264 = vmatprep.subr.mxu0 0.0
    %265 = vmatpush1.msra.mxu0 0.0
    %266 = vmatprep.subr.mxu0 0.0
    %267 = vmatpush1.msra.mxu0 0.0
    %268 = vmatprep.subr.mxu0 0.0
    %269 = vmatpush1.msra.mxu0 0.0
    %270 = vmatprep.subr.mxu0 0.0
    %271 = vmatpush1.msra.mxu0 0.0
    %272 = vmatprep.subr.mxu0 0.0
    %273 = vmatpush1.msra.mxu0 0.0
    %274 = vmatprep.subr.mxu0 0.0
    %275 = vmatpush1.msra.mxu0 0.0
    %276 = vmatprep.subr.mxu0 0.0
    %277 = vmatpush1.msra.mxu0 0.0
    %278 = vmatprep.subr.mxu0 0.0
    %279 = vmatpush1.msra.mxu0 0.0
    %280 = vmatprep.subr.mxu0 0.0
    %281 = vmatpush1.msra.mxu0 0.0
    %282 = vmatprep.subr.mxu0 0.0
    %283 = vmatpush1.msra.mxu0 0.0
    %284 = vmatprep.mubr.f32.mxu0 0.0
    %285 = vmatmul.mubr.f32.gmra.mrb[0].mxu0 %v218
    %v286 = vpop.f32.mrb[0].mxu0
    %v287 = vadd.f32 0.0, %v286
    %v288 = vpop.f32.mrb[0].mxu0
    %289 = vmatprep.mubr.f32.mxu0 0.0
    %290 = vmatmul.mubr.f32.gmra.mrb[0].mxu0 %v219
    %v291 = vpop.f32.mrb[0].mxu0
    %v292 = vadd.f32 0.0, %v291
    %v293 = vpop.f32.mrb[0].mxu0
    %294 = vdwg.mxu0
    %v296 = vsel %vm128, %v287, 0
    %v299 = vsel %vm128, %v292, 0
    %301 = vmatprep.subr.mxu0 0.0
    %302 = vmatpush1.msra.mxu0 %v137
    %303 = vmatprep.subr.mxu0 0.0
    %304 = vmatpush1.msra.mxu0 0.0
    %305 = vmatprep.subr.mxu0 0.0
    %306 = vmatpush1.msra.mxu0 0.0
    %307 = vmatprep.subr.mxu0 0.0
    %308 = vmatpush1.msra.mxu0 0.0
    %309 = vmatprep.subr.mxu0 0.0
    %310 = vmatpush1.msra.mxu0 0.0
    %311 = vmatprep.subr.mxu0 0.0
    %312 = vmatpush1.msra.mxu0 0.0
    %313 = vmatprep.subr.mxu0 0.0
    %314 = vmatpush1.msra.mxu0 0.0
    %315 = vmatprep.subr.mxu0 0.0
    %316 = vmatpush1.msra.mxu0 0.0
    %317 = vmatprep.subr.mxu0 0.0
    %318 = vmatpush1.msra.mxu0 0.0
    %319 = vmatprep.subr.mxu0 0.0
    %320 = vmatpush1.msra.mxu0 0.0
    %321 = vmatprep.subr.mxu0 0.0
    %322 = vmatpush1.msra.mxu0 0.0
    %323 = vmatprep.subr.mxu0 0.0
    %324 = vmatpush1.msra.mxu0 0.0
    %325 = vmatprep.subr.mxu0 0.0
    %326 = vmatpush1.msra.mxu0 0.0
    %327 = vmatprep.subr.mxu0 0.0
    %328 = vmatpush1.msra.mxu0 0.0
    %329 = vmatprep.subr.mxu0 0.0
    %330 = vmatpush1.msra.mxu0 0.0
    %331 = vmatprep.subr.mxu0 0.0
    %332 = vmatpush1.msra.mxu0 0.0
    %333 = vmatprep.subr.mxu0 0.0
    %334 = vmatpush1.msra.mxu0 0.0
    %335 = vmatprep.subr.mxu0 0.0
    %336 = vmatpush1.msra.mxu0 0.0
    %337 = vmatprep.subr.mxu0 0.0
    %338 = vmatpush1.msra.mxu0 0.0
    %339 = vmatprep.subr.mxu0 0.0
    %340 = vmatpush1.msra.mxu0 0.0
    %341 = vmatprep.subr.mxu0 0.0
    %342 = vmatpush1.msra.mxu0 0.0
    %343 = vmatprep.subr.mxu0 0.0
    %344 = vmatpush1.msra.mxu0 0.0
    %345 = vmatprep.subr.mxu0 0.0
    %346 = vmatpush1.msra.mxu0 0.0
    %347 = vmatprep.subr.mxu0 0.0
    %348 = vmatpush1.msra.mxu0 0.0
    %349 = vmatprep.subr.mxu0 0.0
    %350 = vmatpush1.msra.mxu0 0.0
    %351 = vmatprep.subr.mxu0 0.0
    %352 = vmatpush1.msra.mxu0 0.0
    %353 = vmatprep.subr.mxu0 0.0
    %354 = vmatpush1.msra.mxu0 0.0
    %355 = vmatprep.subr.mxu0 0.0
    %356 = vmatpush1.msra.mxu0 0.0
    %357 = vmatprep.subr.mxu0 0.0
    %358 = vmatpush1.msra.mxu0 0.0
    %359 = vmatprep.subr.mxu0 0.0
    %360 = vmatpush1.msra.mxu0 0.0
    %361 = vmatprep.subr.mxu0 0.0
    %362 = vmatpush1.msra.mxu0 0.0
    %363 = vmatprep.subr.mxu0 0.0
    %364 = vmatpush1.msra.mxu0 0.0
    %365 = vmatprep.mubr.f32.mxu0 0.0
    %366 = vmatmul.mubr.f32.gmra.mrb[0].mxu0 %v296
    %v367 = vpop.f32.mrb[0].mxu0
    %v368 = vadd.f32 0.0, %v367
    %v369 = vpop.f32.mrb[0].mxu0
    %370 = vmatprep.mubr.f32.mxu0 0.0
    %371 = vmatmul.mubr.f32.gmra.mrb[0].mxu0 %v299
    %v372 = vpop.f32.mrb[0].mxu0
    %v373 = vadd.f32 0.0, %v372
    %v374 = vpop.f32.mrb[0].mxu0
    %375 = vdwg.mxu0
    %v376 = vmul.f32 %v368, 0.03125
    %v377 = vmul.f32 %v373, 0.03125
    %v378 = vadd.f32 %v376, 1e-05
    %v379 = vadd.f32 %v377, 1e-05
    %v380 = vrsqrt.pop %v378
    %v381 = vrsqrt.pop %v379
    %v382 = vmul.f32 %v216, %v380
    %v383 = vmul.f32 %v217, %v381
    %v384 = vld [vmem:[%s1] sm:$0x1]
    %v386 = vlaneseq
    %v387 = vshrl.u32 %v386, 7
    %v388 = vsub.s32 0, %v387
    %v389 = vrot.slane %v384, %v388
    %v391 = vmul.f32 %v382, %v389
    %v392 = vmul.f32 %v383, %v389
    %v393 = vld [vmem:[%s2] sm:$0x1]
    %v395 = vlaneseq
    %v396 = vshrl.u32 %v395, 7
    %v397 = vsub.s32 0, %v396
    %v398 = vrot.slane %v393, %v397
    %v400 = vadd.f32 %v391, %v398
    %v401 = vadd.f32 %v392, %v398
    %v402 = vld [vmem:[%s5] sm:$0xf]
    %v403 = vld [vmem:[%s5 + $0x4] sm:$0xf]
    %v404 = vld [vmem:[%s5 + $0x8] sm:$0xf]
    %v405 = vld [vmem:[%s5 + $0xc] sm:$0xf]
    %v406 = vld [vmem:[%s5 + $0x10] sm:$0xf]
    %v407 = vld [vmem:[%s5 + $0x14] sm:$0xf]
    %v408 = vld [vmem:[%s5 + $0x18] sm:$0xf]
    %v409 = vld [vmem:[%s5 + $0x1c] sm:$0xf]
    %v410 = vpack.c.bf16 %v401, %v400
    %v411 = vld [vmem:[%s6] sm:$0xff]
    %v412 = vld [vmem:[%s6 + $0x8] sm:$0xff]
    %v413 = vld [vmem:[%s6 + $0x10] sm:$0xff]
    %v414 = vld [vmem:[%s6 + $0x18] sm:$0xff]
    %v415 = vld [vmem:[%s6 + $0x20] sm:$0xff]
    %v416 = vld [vmem:[%s6 + $0x28] sm:$0xff]
    %v417 = vld [vmem:[%s6 + $0x30] sm:$0xff]
    %v418 = vld [vmem:[%s6 + $0x38] sm:$0xff]
    %420 = vset.pattern.permute.xlu0 0
    %421 = vperm.xlu0 %420, %v411
    %v422 = vpop.permute.xlu0 %421
    %425 = vset.pattern.permute.xlu0 0
    %426 = vperm.xlu0 %425, %v412
    %v427 = vpop.permute.xlu0 %426
    %430 = vset.pattern.permute.xlu0 0
    %431 = vperm.xlu0 %430, %v413
    %v432 = vpop.permute.xlu0 %431
    %435 = vset.pattern.permute.xlu0 0
    %436 = vperm.xlu0 %435, %v414
    %v437 = vpop.permute.xlu0 %436
    %440 = vset.pattern.permute.xlu0 0
    %441 = vperm.xlu0 %440, %v415
    %v442 = vpop.permute.xlu0 %441
    %445 = vset.pattern.permute.xlu0 0
    %446 = vperm.xlu0 %445, %v416
    %v447 = vpop.permute.xlu0 %446
    %450 = vset.pattern.permute.xlu0 0
    %451 = vperm.xlu0 %450, %v417
    %v452 = vpop.permute.xlu0 %451
    %455 = vset.pattern.permute.xlu0 0
    %456 = vperm.xlu0 %455, %v418
    %v457 = vpop.permute.xlu0 %456
    %v467 = vunpack.c.l.b16 %v402
    %v468 = vunpack.c.l.b16 %v403
    %v469 = vunpack.c.l.b16 %v404
    %v470 = vunpack.c.l.b16 %v405
    %v471 = vunpack.c.l.b16 %v406
    %v472 = vunpack.c.l.b16 %v407
    %v473 = vunpack.c.l.b16 %v408
    %v474 = vunpack.c.l.b16 %v409
    %v475 = vpack.c.b16 %v468, %v467
    %v476 = vpack.c.b16 %v470, %v469
    %v477 = vpack.c.b16 %v472, %v471
    %v478 = vpack.c.b16 %v474, %v473
    %vm479 = vcmask 130048
    %v481 = vsel %vm479, %v475, 0
    %v484 = vsel %vm479, %v476, 0
    %v487 = vsel %vm479, %v477, 0
    %v490 = vsel %vm479, %v478, 0
    %492 = vmatprep.subr.bf16.mxu0 0
    %493 = vmatpush1.bf16.msra.mxu0 %v410
    %494 = vmatprep.subr.bf16.mxu0 0
    %495 = vmatpush1.bf16.msra.mxu0 0
    %496 = vmatprep.subr.bf16.mxu0 0
    %497 = vmatpush1.bf16.msra.mxu0 0
    %498 = vmatprep.subr.bf16.mxu0 0
    %499 = vmatpush1.bf16.msra.mxu0 0
    %500 = vmatprep.subr.bf16.mxu0 0
    %501 = vmatpush1.bf16.msra.mxu0 0
    %502 = vmatprep.subr.bf16.mxu0 0
    %503 = vmatpush1.bf16.msra.mxu0 0
    %504 = vmatprep.subr.bf16.mxu0 0
    %505 = vmatpush1.bf16.msra.mxu0 0
    %506 = vmatprep.subr.bf16.mxu0 0
    %507 = vmatpush1.bf16.msra.mxu0 0
    %508 = vmatprep.subr.bf16.mxu0 0
    %509 = vmatpush1.bf16.msra.mxu0 0
    %510 = vmatprep.subr.bf16.mxu0 0
    %511 = vmatpush1.bf16.msra.mxu0 0
    %512 = vmatprep.subr.bf16.mxu0 0
    %513 = vmatpush1.bf16.msra.mxu0 0
    %514 = vmatprep.subr.bf16.mxu0 0
    %515 = vmatpush1.bf16.msra.mxu0 0
    %516 = vmatprep.subr.bf16.mxu0 0
    %517 = vmatpush1.bf16.msra.mxu0 0
    %518 = vmatprep.subr.bf16.mxu0 0
    %519 = vmatpush1.bf16.msra.mxu0 0
    %520 = vmatprep.subr.bf16.mxu0 0
    %521 = vmatpush1.bf16.msra.mxu0 0
    %522 = vmatprep.subr.bf16.mxu0 0
    %523 = vmatpush1.bf16.msra.mxu0 0
    %524 = vmatprep.mubr.bf16.mxu0 0
    %525 = vmatmul.mubr.bf16.gmra.mrb[0].mxu0 %v481
    %v526 = vpop.f32.mrb[0].mxu0
    %v527 = vadd.f32 %v422, %v526
    %v528 = vpop.f32.mrb[0].mxu0
    %v529 = vpop.f32.mrb[0].mxu0
    %v530 = vadd.f32 %v427, %v529
    %v531 = vpop.f32.mrb[0].mxu0
    %532 = vmatprep.mubr.bf16.mxu0 0
    %533 = vmatmul.mubr.bf16.gmra.mrb[0].mxu0 %v484
    %v534 = vpop.f32.mrb[0].mxu0
    %v535 = vadd.f32 %v432, %v534
    %v536 = vpop.f32.mrb[0].mxu0
    %v537 = vpop.f32.mrb[0].mxu0
    %v538 = vadd.f32 %v437, %v537
    %v539 = vpop.f32.mrb[0].mxu0
    %540 = vmatprep.mubr.bf16.mxu0 0
    %541 = vmatmul.mubr.bf16.gmra.mrb[0].mxu0 %v487
    %v542 = vpop.f32.mrb[0].mxu0
    %v543 = vadd.f32 %v442, %v542
    %v544 = vpop.f32.mrb[0].mxu0
    %v545 = vpop.f32.mrb[0].mxu0
    %v546 = vadd.f32 %v447, %v545
    %v547 = vpop.f32.mrb[0].mxu0
    %548 = vmatprep.mubr.bf16.mxu0 0
    %549 = vmatmul.mubr.bf16.gmra.mrb[0].mxu0 %v490
    %v550 = vpop.f32.mrb[0].mxu0
    %v551 = vadd.f32 %v452, %v550
    %v552 = vpop.f32.mrb[0].mxu0
    %v553 = vpop.f32.mrb[0].mxu0
    %v554 = vadd.f32 %v457, %v553
    %v555 = vpop.f32.mrb[0].mxu0
    %556 = vdwg.mxu0
    %v557 = vmul.f32 %v527, 0.5
    %v558 = vmul.f32 %v530, 0.5
    %v559 = vmul.f32 %v535, 0.5
    %v560 = vmul.f32 %v538, 0.5
    %v561 = vmul.f32 %v543, 0.5
    %v562 = vmul.f32 %v546, 0.5
    %v563 = vmul.f32 %v551, 0.5
    %v564 = vmul.f32 %v554, 0.5
    %v565 = vmul.f32 %v527, 0.70710677
    %v566 = vmul.f32 %v530, 0.70710677
    %v567 = vmul.f32 %v535, 0.70710677
    %v568 = vmul.f32 %v538, 0.70710677
    %v569 = vmul.f32 %v543, 0.70710677
    %v570 = vmul.f32 %v546, 0.70710677
    %v571 = vmul.f32 %v551, 0.70710677
    %v572 = vmul.f32 %v554, 0.70710677
    %v573 = verf.f32.pop %v565
    %v574 = verf.f32.pop %v566
    %v575 = verf.f32.pop %v567
    %v576 = verf.f32.pop %v568
    %v577 = verf.f32.pop %v569
    %v578 = verf.f32.pop %v570
    %v579 = verf.f32.pop %v571
    %v580 = verf.f32.pop %v572
    %v581 = vadd.f32 %v573, 1.0
    %v582 = vadd.f32 %v574, 1.0
    %v583 = vadd.f32 %v575, 1.0
    %v584 = vadd.f32 %v576, 1.0
    %v585 = vadd.f32 %v577, 1.0
    %v586 = vadd.f32 %v578, 1.0
    %v587 = vadd.f32 %v579, 1.0
    %v588 = vadd.f32 %v580, 1.0
    %v589 = vmul.f32 %v557, %v581
    %v590 = vmul.f32 %v558, %v582
    %v591 = vmul.f32 %v559, %v583
    %v592 = vmul.f32 %v560, %v584
    %v593 = vmul.f32 %v561, %v585
    %v594 = vmul.f32 %v562, %v586
    %v595 = vmul.f32 %v563, %v587
    %v596 = vmul.f32 %v564, %v588
    %v597 = vld [vmem:[%s7] sm:$0xf]
    %v598 = vld [vmem:[%s7 + $0x4] sm:$0xf]
    %v599 = vpack.c.bf16 %v590, %v589
    %v600 = vpack.c.bf16 %v592, %v591
    %v601 = vpack.c.bf16 %v594, %v593
    %v602 = vpack.c.bf16 %v596, %v595
    %v603 = vld [vmem:[%s8] sm:$0xff]
    %v604 = vld [vmem:[%s8 + $0x8] sm:$0xff]
    %606 = vset.pattern.permute.xlu0 0
    %607 = vperm.xlu0 %606, %v603
    %v608 = vpop.permute.xlu0 %607
    %611 = vset.pattern.permute.xlu0 0
    %612 = vperm.xlu0 %611, %v604
    %v613 = vpop.permute.xlu0 %612
    %v617 = vunpack.c.l.b16 %v597
    %v618 = vunpack.c.l.b16 %v598
    %v619 = vpack.c.b16 %v618, %v617
    %vm620 = vcmask 523264
    %v622 = vsel %vm620, %v619, 0
    %624 = vmatprep.subr.bf16.mxu0 0
    %625 = vmatpush1.bf16.msra.mxu0 %v599
    %626 = vmatprep.subr.bf16.mxu0 0
    %627 = vmatpush1.bf16.msra.mxu0 %v600
    %628 = vmatprep.subr.bf16.mxu0 0
    %629 = vmatpush1.bf16.msra.mxu0 %v601
    %630 = vmatprep.subr.bf16.mxu0 0
    %631 = vmatpush1.bf16.msra.mxu0 %v602
    %632 = vmatprep.subr.bf16.mxu0 0
    %633 = vmatpush1.bf16.msra.mxu0 0
    %634 = vmatprep.subr.bf16.mxu0 0
    %635 = vmatpush1.bf16.msra.mxu0 0
    %636 = vmatprep.subr.bf16.mxu0 0
    %637 = vmatpush1.bf16.msra.mxu0 0
    %638 = vmatprep.subr.bf16.mxu0 0
    %639 = vmatpush1.bf16.msra.mxu0 0
    %640 = vmatprep.subr.bf16.mxu0 0
    %641 = vmatpush1.bf16.msra.mxu0 0
    %642 = vmatprep.subr.bf16.mxu0 0
    %643 = vmatpush1.bf16.msra.mxu0 0
    %644 = vmatprep.subr.bf16.mxu0 0
    %645 = vmatpush1.bf16.msra.mxu0 0
    %646 = vmatprep.subr.bf16.mxu0 0
    %647 = vmatpush1.bf16.msra.mxu0 0
    %648 = vmatprep.subr.bf16.mxu0 0
    %649 = vmatpush1.bf16.msra.mxu0 0
    %650 = vmatprep.subr.bf16.mxu0 0
    %651 = vmatpush1.bf16.msra.mxu0 0
    %652 = vmatprep.subr.bf16.mxu0 0
    %653 = vmatpush1.bf16.msra.mxu0 0
    %654 = vmatprep.subr.bf16.mxu0 0
    %655 = vmatpush1.bf16.msra.mxu0 0
    %656 = vmatprep.mubr.bf16.mxu0 0
    %657 = vmatmul.mubr.bf16.gmra.mrb[0].mxu0 %v622
    %v658 = vpop.f32.mrb[0].mxu0
    %v659 = vadd.f32 %v608, %v658
    %v660 = vpop.f32.mrb[0].mxu0
    %v661 = vpop.f32.mrb[0].mxu0
    %v662 = vadd.f32 %v613, %v661
    %v663 = vpop.f32.mrb[0].mxu0
    %664 = vdwg.mxu0
    %v665 = vadd.f32 %v659, %v34
    %v666 = vadd.f32 %v662, %v35
    %667 = vst [vmem:[#allocation2] sm:$0xff] %v665
    %668 = vst [vmem:[#allocation2 + $0x8] sm:$0xff] %v666
    // Predicated region
    $region38: #{tpu_custom_call.1} parent=1 // pred_check
      _
    $region39: #{tpu_custom_call.1} parent=1 // pred_check_branch
      %670 = sbr.rel (0) target = $region41
    $region40: #{tpu_custom_call.1} parent=1 // pred_region
      %s672 = ssub.s32 256, 256
      %673 = vsyncadd [#allocation3], %s672
      %s674 = sshll.u32 [#allocation2], 4
      %s675 = int_to_ptr.vmem [resolvable:$true] %s674
      %680 = dma.vmem_to_hbm [thread:$0]  %s675, 256, %s9, [#allocation3], 128, 128, 8
    $region41: #{tpu_custom_call.1} parent=1 // pred_fallthru
      _
    // Predicated region
    $region42: #{tpu_custom_call.1} parent=1 // pred_check
      _
    $region43: #{tpu_custom_call.1} parent=1 // pred_check_branch
      %682 = sbr.rel (0) target = $region45
    $region44: #{tpu_custom_call.1} parent=1 // pred_region
      %683 = dma.done [#allocation3], 256
    $region45: #{tpu_custom_call.1} parent=1 // pred_fallthru
      _
    %684 = vsyncpa [#allocation3], 1

</llo_original>
